<compile_context>
chip_gen: v7x
topology: tpu7x:2x2x1
jax: 0.10.0
libtpu: 0.0.40
codegen_flags: <defaults>
</compile_context>

<pallas_src>
import functools
import math

import jax
import jax.numpy as jnp
import numpy as np
from jax.experimental import pallas as pl
from jax.experimental.pallas import tpu as pltpu


_NEG_INF = -1e30  # finite stand-in for masked_fill(mask, -inf); avoids NaN if a row is fully masked


def _layer_norm(x, g, b, eps=1e-5):
    mu = jnp.mean(x, axis=-1, keepdims=True)
    var = jnp.mean((x - mu) ** 2, axis=-1, keepdims=True)
    return (x - mu) * jax.lax.rsqrt(var + eps) * g + b


# --------------------- kernel 1: fc + relu + LN + masked_fill ---------------------

def _entry_kernel(x_ref, wfc_ref, bfc_ref, g_ref, b_ref, o_ref, *, eps):
    x = x_ref[0]                                              # (seq, d_in)
    is_pad = jnp.sum(x, axis=-1, keepdims=True) == 0.0        # (seq, 1)  mask from raw input
    y = jnp.dot(x, wfc_ref[...], preferred_element_type=jnp.float32) + bfc_ref[...]
    y = jnp.maximum(y, 0.0)
    y = _layer_norm(y, g_ref[...], b_ref[...], eps)
    o_ref[0] = jnp.where(is_pad, 0.0, y)                      # masked_fill(mask, 0)


def entry_pallas(x, wfc, bfc, g0, b0, eps=1e-5):
    bs, seq, d_in = x.shape
    d_model = wfc.shape[1]
    return pl.pallas_call(
        functools.partial(_entry_kernel, eps=eps),
        out_shape=jax.ShapeDtypeStruct((bs, seq, d_model), jnp.float32),
        grid=(bs,),
        in_specs=[
            pl.BlockSpec((1, seq, d_in), lambda b: (b, 0, 0)),
            pl.BlockSpec((d_in, d_model), lambda b: (0, 0)),
            pl.BlockSpec((1, d_model), lambda b: (0, 0)),
            pl.BlockSpec((1, d_model), lambda b: (0, 0)),
            pl.BlockSpec((1, d_model), lambda b: (0, 0)),
        ],
        out_specs=pl.BlockSpec((1, seq, d_model), lambda b: (b, 0, 0)),
        compiler_params=pltpu.CompilerParams(dimension_semantics=("parallel",)),
    )(x, wfc, bfc.reshape(1, -1), g0.reshape(1, -1), b0.reshape(1, -1))


# ------------- kernel 2: geometry log-weights  log(clamp(relu(rel@WG+b))) ----------

def _geom_kernel(rel_ref, wg_ref, bg_ref, o_ref, *, h):
    rel = rel_ref[...]                                        # (seq, seq, dim_g)
    for hh in range(h):                                       # h is tiny; unrolled
        y = jnp.sum(rel * wg_ref[hh], axis=-1) + bg_ref[hh]   # (seq, seq)
        y = jnp.maximum(y, 0.0)                               # F.relu
        o_ref[hh] = jnp.log(jnp.maximum(y, 1e-6))             # log(clamp(., 1e-6))


def geom_pallas(rel, wg, bg):
    seq, _, dim_g = rel.shape
    h = wg.shape[1]
    return pl.pallas_call(
        functools.partial(_geom_kernel, h=h),
        out_shape=jax.ShapeDtypeStruct((h, seq, seq), jnp.float32),
        grid=(1,),
        in_specs=[
            pl.BlockSpec((seq, seq, dim_g), lambda i: (0, 0, 0)),
            pl.BlockSpec((h, dim_g), lambda i: (0, 0)),
            pl.BlockSpec((h, 1, 1), lambda i: (0, 0, 0)),
        ],
        out_specs=pl.BlockSpec((h, seq, seq), lambda i: (0, 0, 0)),
    )(rel, wg.T, bg.reshape(h, 1, 1))


# ---------------- kernel 3: one fused EncoderLayer (per batch element) -------------

def _layer_kernel(x_ref, pos_ref, glog_ref, mb_ref,
                  wqk_ref, bqk_ref, wv_ref, bv_ref, wo_ref, bo_ref,
                  gm_ref, bm_ref, ge_ref, be_ref,
                  w1_ref, b1_ref, w2_ref, b2_ref, gf_ref, bf_ref,
                  o_ref, *, h, d_k, d_v, scale, eps):
    x = x_ref[0]                                              # (seq, d_model)  = queries/keys/values
    qk_in = x + pos_ref[0]                                    # queries + pos (also keys + pos)
    mb = mb_ref[0]                                            # (1, seq) additive key-mask bias

    # fused Q|K projection (lane-dense 2*h*d_k output) and V projection (no +pos)
    qk = jnp.dot(qk_in, wqk_ref[...], preferred_element_type=jnp.float32) + bqk_ref[...]
    vv = jnp.dot(x, wv_ref[...], preferred_element_type=jnp.float32) + bv_ref[...]

    ctx = []
    for hh in range(h):                                       # unrolled per-head attention
        q_h = qk[:, hh * d_k:(hh + 1) * d_k]
        k_h = qk[:, h * d_k + hh * d_k: h * d_k + (hh + 1) * d_k]
        v_h = vv[:, hh * d_v:(hh + 1) * d_v]
        s = jax.lax.dot_general(q_h, k_h, (((1,), (1,)), ((), ())),
                                preferred_element_type=jnp.float32) * scale
        s = s + mb + glog_ref[hh]                             # masked_fill + geometry bias
        s = s - jnp.max(s, axis=-1, keepdims=True)            # stable softmax
        e = jnp.exp(s)
        p = e / jnp.sum(e, axis=-1, keepdims=True)
        ctx.append(jnp.dot(p, v_h, preferred_element_type=jnp.float32))
    ctx = jnp.concatenate(ctx, axis=-1)                       # (seq, h*d_v)

    att = jnp.dot(ctx, wo_ref[...], preferred_element_type=jnp.float32) + bo_ref[...]
    # MHA internal residual uses (queries + pos); EncoderLayer residual uses queries.
    mha = _layer_norm(att + qk_in, gm_ref[...], bm_ref[...], eps)
    enc = _layer_norm(mha + x, ge_ref[...], be_ref[...], eps)
    f1 = jnp.maximum(jnp.dot(enc, w1_ref[...], preferred_element_type=jnp.float32) + b1_ref[...], 0.0)
    f2 = jnp.dot(f1, w2_ref[...], preferred_element_type=jnp.float32) + b2_ref[...]
    o_ref[0] = _layer_norm(f2 + enc, gf_ref[...], bf_ref[...], eps)


def layer_pallas(out, pos, glog, mask_bias, lp, *, h, d_k, d_v, scale, eps=1e-5):
    bs, seq, d_model = out.shape
    d_ff = lp["fc1"][0].shape[1]
    d_qk = 2 * h * d_k
    d_hv = h * d_v

    wqk = jnp.concatenate([lp["wq"][0], lp["wk"][0]], axis=1)           # (d_model, 2*h*d_k)
    bqk = jnp.concatenate([lp["wq"][1], lp["wk"][1]]).reshape(1, d_qk)
    row = lambda v: v.reshape(1, -1)

    def full(shape):
        nd = len(shape)
        return pl.BlockSpec(shape, lambda b, _nd=nd: (0,) * _nd)

    def per_batch(shape):
        nd = len(shape)
        return pl.BlockSpec((1,) + tuple(shape[1:]),
                            lambda b, _nd=nd: (b,) + (0,) * (_nd - 1))

    return pl.pallas_call(
        functools.partial(_layer_kernel, h=h, d_k=d_k, d_v=d_v, scale=scale, eps=eps),
        out_shape=jax.ShapeDtypeStruct((bs, seq, d_model), jnp.float32),
        grid=(bs,),
        in_specs=[
            per_batch((bs, seq, d_model)),            # out (queries/keys/values)
            per_batch((bs, seq, d_model)),            # pos
            full((h, seq, seq)),                      # geometry log-weights
            per_batch((bs, 1, seq)),                  # additive key-mask bias
            full((d_model, d_qk)), full((1, d_qk)),   # Wq|Wk
            full((d_model, d_hv)), full((1, d_hv)),   # Wv
            full((d_hv, d_model)), full((1, d_model)),# Wo
            full((1, d_model)), full((1, d_model)),   # ln_mha
            full((1, d_model)), full((1, d_model)),   # ln_enc
            full((d_model, d_ff)), full((1, d_ff)),   # fc1
            full((d_ff, d_model)), full((1, d_model)),# fc2
            full((1, d_model)), full((1, d_model)),   # ln_ff
        ],
        out_specs=pl.BlockSpec((1, seq, d_model), lambda b: (b, 0, 0)),
        compiler_params=pltpu.CompilerParams(dimension_semantics=("parallel",)),
    )(out, pos, glog, mask_bias,
      wqk, bqk, lp["wv"][0], row(lp["wv"][1]), lp["wo"][0], row(lp["wo"][1]),
      row(lp["ln_mha"][0]), row(lp["ln_mha"][1]),
      row(lp["ln_enc"][0]), row(lp["ln_enc"][1]),
      lp["fc1"][0], row(lp["fc1"][1]), lp["fc2"][0], row(lp["fc2"][1]),
      row(lp["ln_ff"][0]), row(lp["ln_ff"][1]))


# ------------------------------- model pieces --------------------------------------

def box_relational_embedding(seq_len, dim_g=64, wave_len=1000.0):
    # TODO(synk): BoxRelationalEmbedding body not given in the reference module; this is
    # the standard rstnet grid-box relative-geometry embedding (trignometric, dim_g=64).
    g = int(math.sqrt(seq_len))
    a = jnp.arange(g, dtype=jnp.float32)
    row = jnp.repeat(a, g)
    col = jnp.tile(a, g)
    x_min, y_min = col / g, row / g
    x_max, y_max = (col + 1.0) / g, (row + 1.0) / g
    cx = (x_min + x_max) * 0.5
    cy = (y_min + y_max) * 0.5
    w = (x_max - x_min) + 1.0
    h = (y_max - y_min) + 1.0
    dx = jnp.log(jnp.maximum(jnp.abs((cx[:, None] - cx[None, :]) / w[:, None]), 1e-3))
    dy = jnp.log(jnp.maximum(jnp.abs((cy[:, None] - cy[None, :]) / h[:, None]), 1e-3))
    dw = jnp.log(w[:, None] / w[None, :])
    dh = jnp.log(h[:, None] / h[None, :])
    pos_mat = jnp.stack([dx, dy, dw, dh], axis=-1)                    # (S, S, 4)
    feat_range = jnp.arange(dim_g // 8, dtype=jnp.float32)
    dim_mat = 1.0 / (wave_len ** (feat_range / (dim_g / 8.0)))        # (8,)
    mul = (100.0 * pos_mat)[..., None] * dim_mat                      # (S, S, 4, 8)
    mul = mul.reshape(seq_len, seq_len, -1)
    return jnp.concatenate([jnp.sin(mul), jnp.cos(mul)], axis=-1)     # (S, S, dim_g)


def init_params(key, N, d_in, d_model, d_k, d_v, h, d_ff, dim_g=64):
    keys = iter(jax.random.split(key, 8 + 20 * N))

    def lin(k_in, k_out):
        lim = 1.0 / math.sqrt(k_in)
        return (jax.random.uniform(next(keys), (k_in, k_out), jnp.float32, -lim, lim),
                jax.random.uniform(next(keys), (k_out,), jnp.float32, -lim, lim))

    def ln(dim):
        return (1.0 + 0.1 * jax.random.normal(next(keys), (dim,), jnp.float32),
                0.1 * jax.random.normal(next(keys), (dim,), jnp.float32))

    params = {
        "fc": lin(d_in, d_model),       # TransformerEncoder.fc
        "ln0": ln(d_model),             # TransformerEncoder.layer_norm
        "WG": lin(dim_g, h),            # h stacked Linear(64, 1) heads
        "layers": [],
    }
    for _ in range(N):
        params["layers"].append({
            "wq": lin(d_model, h * d_k),
            "wk": lin(d_model, h * d_k),
            "wv": lin(d_model, h * d_v),
            "wo": lin(h * d_v, d_model),
            "ln_mha": ln(d_model),      # MultiHeadGeometryAttention.layer_norm
            "ln_enc": ln(d_model),      # EncoderLayer.lnorm
            "fc1": lin(d_model, d_ff),
            "fc2": lin(d_ff, d_model),
            "ln_ff": ln(d_model),       # PositionWiseFeedForward.layer_norm
        })
    return params


def forward_pallas(params, x, pos, *, padding_idx, h, d_k, d_v):
    bs, seq, _ = x.shape

    # TransformerEncoder entry: relu(fc(x)) -> dropout(id) -> LN -> masked_fill
    out = entry_pallas(x, params["fc"][0], params["fc"][1],
                       params["ln0"][0], params["ln0"][1])

    # MultiLevelEncoder: attention mask and geometry bias (layer-invariant, computed once)
    attention_mask = (jnp.sum(out, axis=-1) == float(padding_idx))        # (bs, seq)
    mask_bias = jnp.where(attention_mask, _NEG_INF, 0.0).astype(jnp.float32).reshape(bs, 1, seq)

    rel = box_relational_embedding(seq)                                   # (seq, seq, 64)
    glog = geom_pallas(rel, params["WG"][0], params["WG"][1])             # (h, seq, seq)

    scale = 1.0 / math.sqrt(d_k)
    for lp in params["layers"]:
        out = layer_pallas(out, pos, glog, mask_bias, lp,
                           h=h, d_k=d_k, d_v=d_v, scale=scale)
    return out, attention_mask[:, None, None, :]


# ----------------------------- plain-JAX reference ---------------------------------

def forward_ref(params, x, pos, *, padding_idx, h, d_k, d_v):
    bs, seq, _ = x.shape
    is_pad = (jnp.sum(x, axis=-1, keepdims=True) == 0.0)
    y = jnp.maximum(x @ params["fc"][0] + params["fc"][1], 0.0)
    y = _layer_norm(y, params["ln0"][0], params["ln0"][1])
    out = jnp.where(is_pad, 0.0, y)

    attention_mask = (jnp.sum(out, axis=-1) == float(padding_idx))
    mask_bias = jnp.where(attention_mask, _NEG_INF, 0.0)[:, None, None, :]

    rel = box_relational_embedding(seq)
    wg = jnp.einsum("ijc,ch->ijh", rel, params["WG"][0]) + params["WG"][1]
    glog = jnp.log(jnp.maximum(jnp.maximum(wg, 0.0), 1e-6)).transpose(2, 0, 1)

    scale = 1.0 / math.sqrt(d_k)
    for lp in params["layers"]:
        q_in = out + pos
        q = (q_in @ lp["wq"][0] + lp["wq"][1]).reshape(bs, seq, h, d_k).transpose(0, 2, 1, 3)
        k = (q_in @ lp["wk"][0] + lp["wk"][1]).reshape(bs, seq, h, d_k).transpose(0, 2, 1, 3)
        v = (out @ lp["wv"][0] + lp["wv"][1]).reshape(bs, seq, h, d_v).transpose(0, 2, 1, 3)
        s = jnp.einsum("bhqd,bhkd->bhqk", q, k) * scale
        s = s + mask_bias + glog[None]
        s = s - jnp.max(s, axis=-1, keepdims=True)
        p = jnp.exp(s)
        p = p / jnp.sum(p, axis=-1, keepdims=True)
        ctx = jnp.einsum("bhqk,bhkd->bhqd", p, v).transpose(0, 2, 1, 3).reshape(bs, seq, h * d_v)
        att = ctx @ lp["wo"][0] + lp["wo"][1]
        mha = _layer_norm(att + q_in, *lp["ln_mha"])
        enc = _layer_norm(mha + out, *lp["ln_enc"])
        f1 = jnp.maximum(enc @ lp["fc1"][0] + lp["fc1"][1], 0.0)
        f2 = f1 @ lp["fc2"][0] + lp["fc2"][1]
        out = _layer_norm(f2 + enc, *lp["ln_ff"])
    return out, attention_mask[:, None, None, :]


# ------------------------------------ main ------------------------------------------

if __name__ == "__main__":
    N = 2
    padding_idx = 0
    d_in, d_model, d_k, d_v, h, d_ff = 64, 32, 16, 16, 4, 64
    bs, seq = 2, 16   # seq = 4x4 grid (perfect square -> no iu_xray path)

    key = jax.random.PRNGKey(0)
    kp, kx, kpos = jax.random.split(key, 3)
    params = init_params(kp, N, d_in, d_model, d_k, d_v, h, d_ff)

    x = jax.random.normal(kx, (bs, seq, d_in), jnp.float32)
    x = x.at[:, -1, :].set(0.0)   # one padded token per sample to exercise masking
    pos = 0.02 * jax.random.normal(kpos, (bs, seq, d_model), jnp.float32)

    fwd = jax.jit(functools.partial(forward_pallas, padding_idx=padding_idx,
                                    h=h, d_k=d_k, d_v=d_v))
    out, amask = fwd(params, x, pos)
    out = jax.block_until_ready(out)

    ref_out, ref_mask = forward_ref(params, x, pos, padding_idx=padding_idx,
                                    h=h, d_k=d_k, d_v=d_v)

    assert out.shape == (bs, seq, d_model)
    np.testing.assert_allclose(np.asarray(out), np.asarray(ref_out),
                               atol=2e-2, rtol=2e-2)
    assert bool(jnp.all(amask == ref_mask))
    print("KERNEL_OK")
</pallas_src>

<mosaic_0001>
module attributes {stable_mosaic.version = 11 : i64} {
  func.func @_entry_kernel(%arg0: i32, %arg1: memref<1x16x64xf32, #tpu.memory_space<vmem>>, %arg2: memref<64x32xf32, #tpu.memory_space<vmem>>, %arg3: memref<1x32xf32, #tpu.memory_space<vmem>>, %arg4: memref<1x32xf32, #tpu.memory_space<vmem>>, %arg5: memref<1x32xf32, #tpu.memory_space<vmem>>, %arg6: memref<1x16x32xf32, #tpu.memory_space<vmem>>) attributes {dimension_semantics = [#tpu.dimension_semantics<parallel>], iteration_bounds = array<i64: 2>, scalar_prefetch = 0 : i64, scratch_operands = 0 : i64, tpu.core_type = #tpu.core_type<tc>, window_params = [{transform_indices = @transform_0, window_bounds = array<i64: 1, 16, 64>}, {pipeline_mode = #tpu.pipeline_mode<synchronous>, transform_indices = @transform_1, window_bounds = array<i64: 64, 32>}, {pipeline_mode = #tpu.pipeline_mode<synchronous>, transform_indices = @transform_2, window_bounds = array<i64: 1, 32>}, {pipeline_mode = #tpu.pipeline_mode<synchronous>, transform_indices = @transform_3, window_bounds = array<i64: 1, 32>}, {pipeline_mode = #tpu.pipeline_mode<synchronous>, transform_indices = @transform_4, window_bounds = array<i64: 1, 32>}, {transform_indices = @transform_5, window_bounds = array<i64: 1, 16, 32>}]} {
    %c0 = arith.constant 0 : index
    %c0_0 = arith.constant 0 : index
    %c0_1 = arith.constant 0 : index
    %0 = vector.load %arg1[%c0, %c0_0, %c0_1] : memref<1x16x64xf32, #tpu.memory_space<vmem>>, vector<1x16x64xf32>
    %1 = vector.shape_cast %0 : vector<1x16x64xf32> to vector<16x64xf32>
    %cst = arith.constant dense<0.000000e+00> : vector<16xf32>
    %2 = vector.multi_reduction <add>, %1, %cst [1] : vector<16x64xf32> to vector<16xf32>
    %3 = vector.shape_cast %2 : vector<16xf32> to vector<16x1xf32>
    %cst_2 = arith.constant 0.000000e+00 : f32
    %4 = vector.broadcast %cst_2 : f32 to vector<16x1xf32>
    %5 = arith.cmpf oeq, %3, %4 : vector<16x1xf32>
    %c0_3 = arith.constant 0 : index
    %c0_4 = arith.constant 0 : index
    %6 = vector.load %arg2[%c0_3, %c0_4] : memref<64x32xf32, #tpu.memory_space<vmem>>, vector<64x32xf32>
    %cst_5 = arith.constant dense<0.000000e+00> : vector<16x32xf32>
    %7 = tpu.matmul %1, %6, %cst_5 {dimension_numbers = #tpu.dot_dimension_numbers<[1], [0], [0], [1], [0, 0, 1, 1], [], []>} : vector<16x64xf32>, vector<64x32xf32>, vector<16x32xf32> -> vector<16x32xf32>
    %c0_6 = arith.constant 0 : index
    %c0_7 = arith.constant 0 : index
    %8 = vector.load %arg3[%c0_6, %c0_7] : memref<1x32xf32, #tpu.memory_space<vmem>>, vector<1x32xf32>
    %9 = vector.broadcast %8 : vector<1x32xf32> to vector<16x32xf32>
    %10 = arith.addf %7, %9 : vector<16x32xf32>
    %cst_8 = arith.constant 0.000000e+00 : f32
    %11 = vector.broadcast %cst_8 : f32 to vector<16x32xf32>
    %12 = arith.maximumf %10, %11 : vector<16x32xf32>
    %c0_9 = arith.constant 0 : index
    %c0_10 = arith.constant 0 : index
    %13 = vector.load %arg4[%c0_9, %c0_10] : memref<1x32xf32, #tpu.memory_space<vmem>>, vector<1x32xf32>
    %c0_11 = arith.constant 0 : index
    %c0_12 = arith.constant 0 : index
    %14 = vector.load %arg5[%c0_11, %c0_12] : memref<1x32xf32, #tpu.memory_space<vmem>>, vector<1x32xf32>
    %cst_13 = arith.constant dense<0.000000e+00> : vector<16xf32>
    %15 = vector.multi_reduction <add>, %12, %cst_13 [1] : vector<16x32xf32> to vector<16xf32>
    %16 = vector.shape_cast %15 : vector<16xf32> to vector<16x1xf32>
    %cst_14 = arith.constant 3.200000e+01 : f32
    %17 = vector.broadcast %cst_14 : f32 to vector<16x1xf32>
    %18 = arith.divf %16, %17 : vector<16x1xf32>
    %19 = vector.broadcast %18 : vector<16x1xf32> to vector<16x32xf32>
    %20 = arith.subf %12, %19 : vector<16x32xf32>
    %21 = arith.mulf %20, %20 : vector<16x32xf32>
    %cst_15 = arith.constant dense<0.000000e+00> : vector<16xf32>
    %22 = vector.multi_reduction <add>, %21, %cst_15 [1] : vector<16x32xf32> to vector<16xf32>
    %23 = vector.shape_cast %22 : vector<16xf32> to vector<16x1xf32>
    %cst_16 = arith.constant 3.200000e+01 : f32
    %24 = vector.broadcast %cst_16 : f32 to vector<16x1xf32>
    %25 = arith.divf %23, %24 : vector<16x1xf32>
    %26 = vector.broadcast %18 : vector<16x1xf32> to vector<16x32xf32>
    %27 = arith.subf %12, %26 : vector<16x32xf32>
    %cst_17 = arith.constant 9.99999974E-6 : f32
    %28 = vector.broadcast %cst_17 : f32 to vector<16x1xf32>
    %29 = arith.addf %25, %28 : vector<16x1xf32>
    %30 = math.rsqrt %29 : vector<16x1xf32>
    %31 = vector.broadcast %30 : vector<16x1xf32> to vector<16x32xf32>
    %32 = arith.mulf %27, %31 : vector<16x32xf32>
    %33 = vector.broadcast %13 : vector<1x32xf32> to vector<16x32xf32>
    %34 = arith.mulf %32, %33 : vector<16x32xf32>
    %35 = vector.broadcast %14 : vector<1x32xf32> to vector<16x32xf32>
    %36 = arith.addf %34, %35 : vector<16x32xf32>
    %cst_18 = arith.constant 0.000000e+00 : f32
    %37 = vector.shape_cast %5 : vector<16x1xi1> to vector<16x1xi1>
    %38 = vector.broadcast %37 : vector<16x1xi1> to vector<16x32xi1>
    %39 = vector.broadcast %cst_18 : f32 to vector<16x32xf32>
    %40 = arith.select %38, %39, %36 : vector<16x32xi1>, vector<16x32xf32>
    %c0_19 = arith.constant 0 : index
    %c0_20 = arith.constant 0 : index
    %c0_21 = arith.constant 0 : index
    %41 = vector.load %arg6[%c0_19, %c0_20, %c0_21] : memref<1x16x32xf32, #tpu.memory_space<vmem>>, vector<1x16x32xf32>
    %42 = vector.shape_cast %41 : vector<1x16x32xf32> to vector<16x32xf32>
    %43 = vector.shape_cast %40 : vector<16x32xf32> to vector<1x16x32xf32>
    tpu.vector_store %arg6[%c0_19, %c0_20, %c0_21], %43 {strides = array<i32>} : memref<1x16x32xf32, #tpu.memory_space<vmem>>, vector<1x16x32xf32>,
    return
  }
  func.func @transform_0(%arg0: i32) -> (i32, i32, i32) {
    %c0_i32 = arith.constant 0 : i32
    %c0_i32_0 = arith.constant 0 : i32
    %c0_i32_1 = arith.constant 0 : i32
    return %arg0, %c0_i32, %c0_i32_0 : i32, i32, i32
  }
  func.func @transform_1(%arg0: i32) -> (i32, i32) {
    %c0_i32 = arith.constant 0 : i32
    %c0_i32_0 = arith.constant 0 : i32
    %c0_i32_1 = arith.constant 0 : i32
    return %c0_i32, %c0_i32_0 : i32, i32
  }
  func.func @transform_2(%arg0: i32) -> (i32, i32) {
    %c0_i32 = arith.constant 0 : i32
    %c0_i32_0 = arith.constant 0 : i32
    %c0_i32_1 = arith.constant 0 : i32
    return %c0_i32, %c0_i32_0 : i32, i32
  }
  func.func @transform_3(%arg0: i32) -> (i32, i32) {
    %c0_i32 = arith.constant 0 : i32
    %c0_i32_0 = arith.constant 0 : i32
    %c0_i32_1 = arith.constant 0 : i32
    return %c0_i32, %c0_i32_0 : i32, i32
  }
  func.func @transform_4(%arg0: i32) -> (i32, i32) {
    %c0_i32 = arith.constant 0 : i32
    %c0_i32_0 = arith.constant 0 : i32
    %c0_i32_1 = arith.constant 0 : i32
    return %c0_i32, %c0_i32_0 : i32, i32
  }
  func.func @transform_5(%arg0: i32) -> (i32, i32, i32) {
    %c0_i32 = arith.constant 0 : i32
    %c0_i32_0 = arith.constant 0 : i32
    %c0_i32_1 = arith.constant 0 : i32
    return %arg0, %c0_i32, %c0_i32_0 : i32, i32, i32
  }
}

module attributes {stable_mosaic.version = 11 : i64} {
  func.func @_geom_kernel(%arg0: i32, %arg1: memref<16x16x64xf32, #tpu.memory_space<vmem>>, %arg2: memref<4x64xf32, #tpu.memory_space<vmem>>, %arg3: memref<4x1x1xf32, #tpu.memory_space<vmem>>, %arg4: memref<4x16x16xf32, #tpu.memory_space<vmem>>) attributes {dimension_semantics = [#tpu.dimension_semantics<arbitrary>], iteration_bounds = array<i64: 1>, scalar_prefetch = 0 : i64, scratch_operands = 0 : i64, tpu.core_type = #tpu.core_type<tc>, window_params = [{pipeline_mode = #tpu.pipeline_mode<synchronous>, transform_indices = @transform_0, window_bounds = array<i64: 16, 16, 64>}, {pipeline_mode = #tpu.pipeline_mode<synchronous>, transform_indices = @transform_1, window_bounds = array<i64: 4, 64>}, {pipeline_mode = #tpu.pipeline_mode<synchronous>, transform_indices = @transform_2, window_bounds = array<i64: 4, 1, 1>}, {pipeline_mode = #tpu.pipeline_mode<synchronous>, transform_indices = @transform_3, window_bounds = array<i64: 4, 16, 16>}]} {
    %c0 = arith.constant 0 : index
    %c0_0 = arith.constant 0 : index
    %c0_1 = arith.constant 0 : index
    %0 = vector.load %arg1[%c0, %c0_0, %c0_1] : memref<16x16x64xf32, #tpu.memory_space<vmem>>, vector<16x16x64xf32>
    %c0_2 = arith.constant 0 : index
    %c0_3 = arith.constant 0 : index
    %1 = vector.load %arg2[%c0_2, %c0_3] : memref<4x64xf32, #tpu.memory_space<vmem>>, vector<1x64xf32>
    %2 = vector.shape_cast %1 : vector<1x64xf32> to vector<64xf32>
    %3 = vector.shape_cast %2 : vector<64xf32> to vector<1x1x64xf32>
    %4 = vector.broadcast %3 : vector<1x1x64xf32> to vector<16x16x64xf32>
    %5 = arith.mulf %0, %4 : vector<16x16x64xf32>
    %cst = arith.constant dense<0.000000e+00> : vector<16x16xf32>
    %6 = vector.multi_reduction <add>, %5, %cst [2] : vector<16x16x64xf32> to vector<16x16xf32>
    %c0_4 = arith.constant 0 : index
    %c0_5 = arith.constant 0 : index
    %c0_6 = arith.constant 0 : index
    %7 = vector.load %arg3[%c0_4, %c0_5, %c0_6] : memref<4x1x1xf32, #tpu.memory_space<vmem>>, vector<1x1x1xf32>
    %8 = vector.shape_cast %7 : vector<1x1x1xf32> to vector<1x1xf32>
    %9 = vector.broadcast %8 : vector<1x1xf32> to vector<16x16xf32>
    %10 = arith.addf %6, %9 : vector<16x16xf32>
    %cst_7 = arith.constant 0.000000e+00 : f32
    %11 = vector.broadcast %cst_7 : f32 to vector<16x16xf32>
    %12 = arith.maximumf %10, %11 : vector<16x16xf32>
    %cst_8 = arith.constant 9.99999997E-7 : f32
    %13 = vector.broadcast %cst_8 : f32 to vector<16x16xf32>
    %14 = arith.maximumf %12, %13 : vector<16x16xf32>
    %15 = math.log %14 : vector<16x16xf32>
    %c0_9 = arith.constant 0 : index
    %c0_10 = arith.constant 0 : index
    %c0_11 = arith.constant 0 : index
    %16 = vector.load %arg4[%c0_9, %c0_10, %c0_11] : memref<4x16x16xf32, #tpu.memory_space<vmem>>, vector<1x16x16xf32>
    %17 = vector.shape_cast %16 : vector<1x16x16xf32> to vector<16x16xf32>
    %18 = vector.shape_cast %15 : vector<16x16xf32> to vector<1x16x16xf32>
    tpu.vector_store %arg4[%c0_9, %c0_10, %c0_11], %18 {strides = array<i32>} : memref<4x16x16xf32, #tpu.memory_space<vmem>>, vector<1x16x16xf32>,
    %c1 = arith.constant 1 : index
    %c0_12 = arith.constant 0 : index
    %19 = vector.load %arg2[%c1, %c0_12] : memref<4x64xf32, #tpu.memory_space<vmem>>, vector<1x64xf32>
    %20 = vector.shape_cast %19 : vector<1x64xf32> to vector<64xf32>
    %21 = vector.shape_cast %20 : vector<64xf32> to vector<1x1x64xf32>
    %22 = vector.broadcast %21 : vector<1x1x64xf32> to vector<16x16x64xf32>
    %23 = arith.mulf %0, %22 : vector<16x16x64xf32>
    %cst_13 = arith.constant dense<0.000000e+00> : vector<16x16xf32>
    %24 = vector.multi_reduction <add>, %23, %cst_13 [2] : vector<16x16x64xf32> to vector<16x16xf32>
    %c1_14 = arith.constant 1 : index
    %c0_15 = arith.constant 0 : index
    %c0_16 = arith.constant 0 : index
    %25 = vector.load %arg3[%c1_14, %c0_15, %c0_16] : memref<4x1x1xf32, #tpu.memory_space<vmem>>, vector<1x1x1xf32>
    %26 = vector.shape_cast %25 : vector<1x1x1xf32> to vector<1x1xf32>
    %27 = vector.broadcast %26 : vector<1x1xf32> to vector<16x16xf32>
    %28 = arith.addf %24, %27 : vector<16x16xf32>
    %cst_17 = arith.constant 0.000000e+00 : f32
    %29 = vector.broadcast %cst_17 : f32 to vector<16x16xf32>
    %30 = arith.maximumf %28, %29 : vector<16x16xf32>
    %cst_18 = arith.constant 9.99999997E-7 : f32
    %31 = vector.broadcast %cst_18 : f32 to vector<16x16xf32>
    %32 = arith.maximumf %30, %31 : vector<16x16xf32>
    %33 = math.log %32 : vector<16x16xf32>
    %c1_19 = arith.constant 1 : index
    %c0_20 = arith.constant 0 : index
    %c0_21 = arith.constant 0 : index
    %34 = vector.load %arg4[%c1_19, %c0_20, %c0_21] : memref<4x16x16xf32, #tpu.memory_space<vmem>>, vector<1x16x16xf32>
    %35 = vector.shape_cast %34 : vector<1x16x16xf32> to vector<16x16xf32>
    %36 = vector.shape_cast %33 : vector<16x16xf32> to vector<1x16x16xf32>
    tpu.vector_store %arg4[%c1_19, %c0_20, %c0_21], %36 {strides = array<i32>} : memref<4x16x16xf32, #tpu.memory_space<vmem>>, vector<1x16x16xf32>,
    %c2 = arith.constant 2 : index
    %c0_22 = arith.constant 0 : index
    %37 = vector.load %arg2[%c2, %c0_22] : memref<4x64xf32, #tpu.memory_space<vmem>>, vector<1x64xf32>
    %38 = vector.shape_cast %37 : vector<1x64xf32> to vector<64xf32>
    %39 = vector.shape_cast %38 : vector<64xf32> to vector<1x1x64xf32>
    %40 = vector.broadcast %39 : vector<1x1x64xf32> to vector<16x16x64xf32>
    %41 = arith.mulf %0, %40 : vector<16x16x64xf32>
    %cst_23 = arith.constant dense<0.000000e+00> : vector<16x16xf32>
    %42 = vector.multi_reduction <add>, %41, %cst_23 [2] : vector<16x16x64xf32> to vector<16x16xf32>
    %c2_24 = arith.constant 2 : index
    %c0_25 = arith.constant 0 : index
    %c0_26 = arith.constant 0 : index
    %43 = vector.load %arg3[%c2_24, %c0_25, %c0_26] : memref<4x1x1xf32, #tpu.memory_space<vmem>>, vector<1x1x1xf32>
    %44 = vector.shape_cast %43 : vector<1x1x1xf32> to vector<1x1xf32>
    %45 = vector.broadcast %44 : vector<1x1xf32> to vector<16x16xf32>
    %46 = arith.addf %42, %45 : vector<16x16xf32>
    %cst_27 = arith.constant 0.000000e+00 : f32
    %47 = vector.broadcast %cst_27 : f32 to vector<16x16xf32>
    %48 = arith.maximumf %46, %47 : vector<16x16xf32>
    %cst_28 = arith.constant 9.99999997E-7 : f32
    %49 = vector.broadcast %cst_28 : f32 to vector<16x16xf32>
    %50 = arith.maximumf %48, %49 : vector<16x16xf32>
    %51 = math.log %50 : vector<16x16xf32>
    %c2_29 = arith.constant 2 : index
    %c0_30 = arith.constant 0 : index
    %c0_31 = arith.constant 0 : index
    %52 = vector.load %arg4[%c2_29, %c0_30, %c0_31] : memref<4x16x16xf32, #tpu.memory_space<vmem>>, vector<1x16x16xf32>
    %53 = vector.shape_cast %52 : vector<1x16x16xf32> to vector<16x16xf32>
    %54 = vector.shape_cast %51 : vector<16x16xf32> to vector<1x16x16xf32>
    tpu.vector_store %arg4[%c2_29, %c0_30, %c0_31], %54 {strides = array<i32>} : memref<4x16x16xf32, #tpu.memory_space<vmem>>, vector<1x16x16xf32>,
    %c3 = arith.constant 3 : index
    %c0_32 = arith.constant 0 : index
    %55 = vector.load %arg2[%c3, %c0_32] : memref<4x64xf32, #tpu.memory_space<vmem>>, vector<1x64xf32>
    %56 = vector.shape_cast %55 : vector<1x64xf32> to vector<64xf32>
    %57 = vector.shape_cast %56 : vector<64xf32> to vector<1x1x64xf32>
    %58 = vector.broadcast %57 : vector<1x1x64xf32> to vector<16x16x64xf32>
    %59 = arith.mulf %0, %58 : vector<16x16x64xf32>
    %cst_33 = arith.constant dense<0.000000e+00> : vector<16x16xf32>
    %60 = vector.multi_reduction <add>, %59, %cst_33 [2] : vector<16x16x64xf32> to vector<16x16xf32>
    %c3_34 = arith.constant 3 : index
    %c0_35 = arith.constant 0 : index
    %c0_36 = arith.constant 0 : index
    %61 = vector.load %arg3[%c3_34, %c0_35, %c0_36] : memref<4x1x1xf32, #tpu.memory_space<vmem>>, vector<1x1x1xf32>
    %62 = vector.shape_cast %61 : vector<1x1x1xf32> to vector<1x1xf32>
    %63 = vector.broadcast %62 : vector<1x1xf32> to vector<16x16xf32>
    %64 = arith.addf %60, %63 : vector<16x16xf32>
    %cst_37 = arith.constant 0.000000e+00 : f32
    %65 = vector.broadcast %cst_37 : f32 to vector<16x16xf32>
    %66 = arith.maximumf %64, %65 : vector<16x16xf32>
    %cst_38 = arith.constant 9.99999997E-7 : f32
    %67 = vector.broadcast %cst_38 : f32 to vector<16x16xf32>
    %68 = arith.maximumf %66, %67 : vector<16x16xf32>
    %69 = math.log %68 : vector<16x16xf32>
    %c3_39 = arith.constant 3 : index
    %c0_40 = arith.constant 0 : index
    %c0_41 = arith.constant 0 : index
    %70 = vector.load %arg4[%c3_39, %c0_40, %c0_41] : memref<4x16x16xf32, #tpu.memory_space<vmem>>, vector<1x16x16xf32>
    %71 = vector.shape_cast %70 : vector<1x16x16xf32> to vector<16x16xf32>
    %72 = vector.shape_cast %69 : vector<16x16xf32> to vector<1x16x16xf32>
    tpu.vector_store %arg4[%c3_39, %c0_40, %c0_41], %72 {strides = array<i32>} : memref<4x16x16xf32, #tpu.memory_space<vmem>>, vector<1x16x16xf32>,
    return
  }
  func.func @transform_0(%arg0: i32) -> (i32, i32, i32) {
    %c0_i32 = arith.constant 0 : i32
    %c0_i32_0 = arith.constant 0 : i32
    %c0_i32_1 = arith.constant 0 : i32
    %c0_i32_2 = arith.constant 0 : i32
    return %c0_i32, %c0_i32_0, %c0_i32_1 : i32, i32, i32
  }
  func.func @transform_1(%arg0: i32) -> (i32, i32) {
    %c0_i32 = arith.constant 0 : i32
    %c0_i32_0 = arith.constant 0 : i32
    %c0_i32_1 = arith.constant 0 : i32
    return %c0_i32, %c0_i32_0 : i32, i32
  }
  func.func @transform_2(%arg0: i32) -> (i32, i32, i32) {
    %c0_i32 = arith.constant 0 : i32
    %c0_i32_0 = arith.constant 0 : i32
    %c0_i32_1 = arith.constant 0 : i32
    %c0_i32_2 = arith.constant 0 : i32
    return %c0_i32, %c0_i32_0, %c0_i32_1 : i32, i32, i32
  }
  func.func @transform_3(%arg0: i32) -> (i32, i32, i32) {
    %c0_i32 = arith.constant 0 : i32
    %c0_i32_0 = arith.constant 0 : i32
    %c0_i32_1 = arith.constant 0 : i32
    %c0_i32_2 = arith.constant 0 : i32
    return %c0_i32, %c0_i32_0, %c0_i32_1 : i32, i32, i32
  }
}

module attributes {stable_mosaic.version = 11 : i64} {
  func.func @_layer_kernel(%arg0: i32, %arg1: memref<1x16x32xf32, #tpu.memory_space<vmem>>, %arg2: memref<1x16x32xf32, #tpu.memory_space<vmem>>, %arg3: memref<4x16x16xf32, #tpu.memory_space<vmem>>, %arg4: memref<1x1x16xf32, #tpu.memory_space<vmem>>, %arg5: memref<32x128xf32, #tpu.memory_space<vmem>>, %arg6: memref<1x128xf32, #tpu.memory_space<vmem>>, %arg7: memref<32x64xf32, #tpu.memory_space<vmem>>, %arg8: memref<1x64xf32, #tpu.memory_space<vmem>>, %arg9: memref<64x32xf32, #tpu.memory_space<vmem>>, %arg10: memref<1x32xf32, #tpu.memory_space<vmem>>, %arg11: memref<1x32xf32, #tpu.memory_space<vmem>>, %arg12: memref<1x32xf32, #tpu.memory_space<vmem>>, %arg13: memref<1x32xf32, #tpu.memory_space<vmem>>, %arg14: memref<1x32xf32, #tpu.memory_space<vmem>>, %arg15: memref<32x64xf32, #tpu.memory_space<vmem>>, %arg16: memref<1x64xf32, #tpu.memory_space<vmem>>, %arg17: memref<64x32xf32, #tpu.memory_space<vmem>>, %arg18: memref<1x32xf32, #tpu.memory_space<vmem>>, %arg19: memref<1x32xf32, #tpu.memory_space<vmem>>, %arg20: memref<1x32xf32, #tpu.memory_space<vmem>>, %arg21: memref<1x16x32xf32, #tpu.memory_space<vmem>>) attributes {dimension_semantics = [#tpu.dimension_semantics<parallel>], iteration_bounds = array<i64: 2>, scalar_prefetch = 0 : i64, scratch_operands = 0 : i64, tpu.core_type = #tpu.core_type<tc>, window_params = [{transform_indices = @transform_0, window_bounds = array<i64: 1, 16, 32>}, {transform_indices = @transform_1, window_bounds = array<i64: 1, 16, 32>}, {pipeline_mode = #tpu.pipeline_mode<synchronous>, transform_indices = @transform_2, window_bounds = array<i64: 4, 16, 16>}, {transform_indices = @transform_3, window_bounds = array<i64: 1, 1, 16>}, {pipeline_mode = #tpu.pipeline_mode<synchronous>, transform_indices = @transform_4, window_bounds = array<i64: 32, 128>}, {pipeline_mode = #tpu.pipeline_mode<synchronous>, transform_indices = @transform_5, window_bounds = array<i64: 1, 128>}, {pipeline_mode = #tpu.pipeline_mode<synchronous>, transform_indices = @transform_6, window_bounds = array<i64: 32, 64>}, {pipeline_mode = #tpu.pipeline_mode<synchronous>, transform_indices = @transform_7, window_bounds = array<i64: 1, 64>}, {pipeline_mode = #tpu.pipeline_mode<synchronous>, transform_indices = @transform_8, window_bounds = array<i64: 64, 32>}, {pipeline_mode = #tpu.pipeline_mode<synchronous>, transform_indices = @transform_9, window_bounds = array<i64: 1, 32>}, {pipeline_mode = #tpu.pipeline_mode<synchronous>, transform_indices = @transform_10, window_bounds = array<i64: 1, 32>}, {pipeline_mode = #tpu.pipeline_mode<synchronous>, transform_indices = @transform_11, window_bounds = array<i64: 1, 32>}, {pipeline_mode = #tpu.pipeline_mode<synchronous>, transform_indices = @transform_12, window_bounds = array<i64: 1, 32>}, {pipeline_mode = #tpu.pipeline_mode<synchronous>, transform_indices = @transform_13, window_bounds = array<i64: 1, 32>}, {pipeline_mode = #tpu.pipeline_mode<synchronous>, transform_indices = @transform_14, window_bounds = array<i64: 32, 64>}, {pipeline_mode = #tpu.pipeline_mode<synchronous>, transform_indices = @transform_15, window_bounds = array<i64: 1, 64>}, {pipeline_mode = #tpu.pipeline_mode<synchronous>, transform_indices = @transform_16, window_bounds = array<i64: 64, 32>}, {pipeline_mode = #tpu.pipeline_mode<synchronous>, transform_indices = @transform_17, window_bounds = array<i64: 1, 32>}, {pipeline_mode = #tpu.pipeline_mode<synchronous>, transform_indices = @transform_18, window_bounds = array<i64: 1, 32>}, {pipeline_mode = #tpu.pipeline_mode<synchronous>, transform_indices = @transform_19, window_bounds = array<i64: 1, 32>}, {transform_indices = @transform_20, window_bounds = array<i64: 1, 16, 32>}]} {
    %c0 = arith.constant 0 : index
    %c0_0 = arith.constant 0 : index
    %c0_1 = arith.constant 0 : index
    %0 = vector.load %arg1[%c0, %c0_0, %c0_1] : memref<1x16x32xf32, #tpu.memory_space<vmem>>, vector<1x16x32xf32>
    %1 = vector.shape_cast %0 : vector<1x16x32xf32> to vector<16x32xf32>
    %c0_2 = arith.constant 0 : index
    %c0_3 = arith.constant 0 : index
    %c0_4 = arith.constant 0 : index
    %2 = vector.load %arg2[%c0_2, %c0_3, %c0_4] : memref<1x16x32xf32, #tpu.memory_space<vmem>>, vector<1x16x32xf32>
    %3 = vector.shape_cast %2 : vector<1x16x32xf32> to vector<16x32xf32>
    %4 = arith.addf %1, %3 : vector<16x32xf32>
    %c0_5 = arith.constant 0 : index
    %c0_6 = arith.constant 0 : index
    %c0_7 = arith.constant 0 : index
    %5 = vector.load %arg4[%c0_5, %c0_6, %c0_7] : memref<1x1x16xf32, #tpu.memory_space<vmem>>, vector<1x1x16xf32>
    %6 = vector.shape_cast %5 : vector<1x1x16xf32> to vector<1x16xf32>
    %c0_8 = arith.constant 0 : index
    %c0_9 = arith.constant 0 : index
    %7 = vector.load %arg5[%c0_8, %c0_9] : memref<32x128xf32, #tpu.memory_space<vmem>>, vector<32x128xf32>
    %cst = arith.constant dense<0.000000e+00> : vector<16x128xf32>
    %8 = tpu.matmul %4, %7, %cst {dimension_numbers = #tpu.dot_dimension_numbers<[1], [0], [0], [1], [0, 0, 1, 1], [], []>} : vector<16x32xf32>, vector<32x128xf32>, vector<16x128xf32> -> vector<16x128xf32>
    %c0_10 = arith.constant 0 : index
    %c0_11 = arith.constant 0 : index
    %9 = vector.load %arg6[%c0_10, %c0_11] : memref<1x128xf32, #tpu.memory_space<vmem>>, vector<1x128xf32>
    %10 = vector.broadcast %9 : vector<1x128xf32> to vector<16x128xf32>
    %11 = arith.addf %8, %10 : vector<16x128xf32>
    %c0_12 = arith.constant 0 : index
    %c0_13 = arith.constant 0 : index
    %12 = vector.load %arg7[%c0_12, %c0_13] : memref<32x64xf32, #tpu.memory_space<vmem>>, vector<32x64xf32>
    %cst_14 = arith.constant dense<0.000000e+00> : vector<16x64xf32>
    %13 = tpu.matmul %1, %12, %cst_14 {dimension_numbers = #tpu.dot_dimension_numbers<[1], [0], [0], [1], [0, 0, 1, 1], [], []>} : vector<16x32xf32>, vector<32x64xf32>, vector<16x64xf32> -> vector<16x64xf32>
    %c0_15 = arith.constant 0 : index
    %c0_16 = arith.constant 0 : index
    %14 = vector.load %arg8[%c0_15, %c0_16] : memref<1x64xf32, #tpu.memory_space<vmem>>, vector<1x64xf32>
    %15 = vector.broadcast %14 : vector<1x64xf32> to vector<16x64xf32>
    %16 = arith.addf %13, %15 : vector<16x64xf32>
    %17 = vector.extract_strided_slice %11 {offsets = [0, 0], sizes = [16, 16], strides = [1, 1]} : vector<16x128xf32> to vector<16x16xf32>
    %18 = vector.extract_strided_slice %11 {offsets = [0, 64], sizes = [16, 16], strides = [1, 1]} : vector<16x128xf32> to vector<16x16xf32>
    %19 = vector.extract_strided_slice %16 {offsets = [0, 0], sizes = [16, 16], strides = [1, 1]} : vector<16x64xf32> to vector<16x16xf32>
    %cst_17 = arith.constant dense<0.000000e+00> : vector<16x16xf32>
    %20 = tpu.matmul %17, %18, %cst_17 {dimension_numbers = #tpu.dot_dimension_numbers<[1], [1], [0], [0], [0, 0, 1, 0], [], []>} : vector<16x16xf32>, vector<16x16xf32>, vector<16x16xf32> -> vector<16x16xf32>
    %cst_18 = arith.constant 2.500000e-01 : f32
    %21 = vector.broadcast %cst_18 : f32 to vector<16x16xf32>
    %22 = arith.mulf %20, %21 : vector<16x16xf32>
    %23 = vector.broadcast %6 : vector<1x16xf32> to vector<16x16xf32>
    %24 = arith.addf %22, %23 : vector<16x16xf32>
    %c0_19 = arith.constant 0 : index
    %c0_20 = arith.constant 0 : index
    %c0_21 = arith.constant 0 : index
    %25 = vector.load %arg3[%c0_19, %c0_20, %c0_21] : memref<4x16x16xf32, #tpu.memory_space<vmem>>, vector<1x16x16xf32>
    %26 = vector.shape_cast %25 : vector<1x16x16xf32> to vector<16x16xf32>
    %27 = arith.addf %24, %26 : vector<16x16xf32>
    %cst_22 = arith.constant dense<0xFF800000> : vector<16xf32>
    %28 = vector.multi_reduction <maximumf>, %27, %cst_22 [1] : vector<16x16xf32> to vector<16xf32>
    %29 = vector.shape_cast %28 : vector<16xf32> to vector<16x1xf32>
    %30 = vector.broadcast %29 : vector<16x1xf32> to vector<16x16xf32>
    %31 = arith.subf %27, %30 : vector<16x16xf32>
    %32 = math.exp %31 : vector<16x16xf32>
    %cst_23 = arith.constant dense<0.000000e+00> : vector<16xf32>
    %33 = vector.multi_reduction <add>, %32, %cst_23 [1] : vector<16x16xf32> to vector<16xf32>
    %34 = vector.shape_cast %33 : vector<16xf32> to vector<16x1xf32>
    %35 = vector.broadcast %34 : vector<16x1xf32> to vector<16x16xf32>
    %36 = arith.divf %32, %35 : vector<16x16xf32>
    %cst_24 = arith.constant dense<0.000000e+00> : vector<16x16xf32>
    %37 = tpu.matmul %36, %19, %cst_24 {dimension_numbers = #tpu.dot_dimension_numbers<[1], [0], [0], [1], [0, 0, 1, 1], [], []>} : vector<16x16xf32>, vector<16x16xf32>, vector<16x16xf32> -> vector<16x16xf32>
    %38 = vector.extract_strided_slice %11 {offsets = [0, 16], sizes = [16, 16], strides = [1, 1]} : vector<16x128xf32> to vector<16x16xf32>
    %39 = vector.extract_strided_slice %11 {offsets = [0, 80], sizes = [16, 16], strides = [1, 1]} : vector<16x128xf32> to vector<16x16xf32>
    %40 = vector.extract_strided_slice %16 {offsets = [0, 16], sizes = [16, 16], strides = [1, 1]} : vector<16x64xf32> to vector<16x16xf32>
    %cst_25 = arith.constant dense<0.000000e+00> : vector<16x16xf32>
    %41 = tpu.matmul %38, %39, %cst_25 {dimension_numbers = #tpu.dot_dimension_numbers<[1], [1], [0], [0], [0, 0, 1, 0], [], []>} : vector<16x16xf32>, vector<16x16xf32>, vector<16x16xf32> -> vector<16x16xf32>
    %cst_26 = arith.constant 2.500000e-01 : f32
    %42 = vector.broadcast %cst_26 : f32 to vector<16x16xf32>
    %43 = arith.mulf %41, %42 : vector<16x16xf32>
    %44 = vector.broadcast %6 : vector<1x16xf32> to vector<16x16xf32>
    %45 = arith.addf %43, %44 : vector<16x16xf32>
    %c1 = arith.constant 1 : index
    %c0_27 = arith.constant 0 : index
    %c0_28 = arith.constant 0 : index
    %46 = vector.load %arg3[%c1, %c0_27, %c0_28] : memref<4x16x16xf32, #tpu.memory_space<vmem>>, vector<1x16x16xf32>
    %47 = vector.shape_cast %46 : vector<1x16x16xf32> to vector<16x16xf32>
    %48 = arith.addf %45, %47 : vector<16x16xf32>
    %cst_29 = arith.constant dense<0xFF800000> : vector<16xf32>
    %49 = vector.multi_reduction <maximumf>, %48, %cst_29 [1] : vector<16x16xf32> to vector<16xf32>
    %50 = vector.shape_cast %49 : vector<16xf32> to vector<16x1xf32>
    %51 = vector.broadcast %50 : vector<16x1xf32> to vector<16x16xf32>
    %52 = arith.subf %48, %51 : vector<16x16xf32>
    %53 = math.exp %52 : vector<16x16xf32>
    %cst_30 = arith.constant dense<0.000000e+00> : vector<16xf32>
    %54 = vector.multi_reduction <add>, %53, %cst_30 [1] : vector<16x16xf32> to vector<16xf32>
    %55 = vector.shape_cast %54 : vector<16xf32> to vector<16x1xf32>
    %56 = vector.broadcast %55 : vector<16x1xf32> to vector<16x16xf32>
    %57 = arith.divf %53, %56 : vector<16x16xf32>
    %cst_31 = arith.constant dense<0.000000e+00> : vector<16x16xf32>
    %58 = tpu.matmul %57, %40, %cst_31 {dimension_numbers = #tpu.dot_dimension_numbers<[1], [0], [0], [1], [0, 0, 1, 1], [], []>} : vector<16x16xf32>, vector<16x16xf32>, vector<16x16xf32> -> vector<16x16xf32>
    %59 = vector.extract_strided_slice %11 {offsets = [0, 32], sizes = [16, 16], strides = [1, 1]} : vector<16x128xf32> to vector<16x16xf32>
    %60 = vector.extract_strided_slice %11 {offsets = [0, 96], sizes = [16, 16], strides = [1, 1]} : vector<16x128xf32> to vector<16x16xf32>
    %61 = vector.extract_strided_slice %16 {offsets = [0, 32], sizes = [16, 16], strides = [1, 1]} : vector<16x64xf32> to vector<16x16xf32>
    %cst_32 = arith.constant dense<0.000000e+00> : vector<16x16xf32>
    %62 = tpu.matmul %59, %60, %cst_32 {dimension_numbers = #tpu.dot_dimension_numbers<[1], [1], [0], [0], [0, 0, 1, 0], [], []>} : vector<16x16xf32>, vector<16x16xf32>, vector<16x16xf32> -> vector<16x16xf32>
    %cst_33 = arith.constant 2.500000e-01 : f32
    %63 = vector.broadcast %cst_33 : f32 to vector<16x16xf32>
    %64 = arith.mulf %62, %63 : vector<16x16xf32>
    %65 = vector.broadcast %6 : vector<1x16xf32> to vector<16x16xf32>
    %66 = arith.addf %64, %65 : vector<16x16xf32>
    %c2 = arith.constant 2 : index
    %c0_34 = arith.constant 0 : index
    %c0_35 = arith.constant 0 : index
    %67 = vector.load %arg3[%c2, %c0_34, %c0_35] : memref<4x16x16xf32, #tpu.memory_space<vmem>>, vector<1x16x16xf32>
    %68 = vector.shape_cast %67 : vector<1x16x16xf32> to vector<16x16xf32>
    %69 = arith.addf %66, %68 : vector<16x16xf32>
    %cst_36 = arith.constant dense<0xFF800000> : vector<16xf32>
    %70 = vector.multi_reduction <maximumf>, %69, %cst_36 [1] : vector<16x16xf32> to vector<16xf32>
    %71 = vector.shape_cast %70 : vector<16xf32> to vector<16x1xf32>
    %72 = vector.broadcast %71 : vector<16x1xf32> to vector<16x16xf32>
    %73 = arith.subf %69, %72 : vector<16x16xf32>
    %74 = math.exp %73 : vector<16x16xf32>
    %cst_37 = arith.constant dense<0.000000e+00> : vector<16xf32>
    %75 = vector.multi_reduction <add>, %74, %cst_37 [1] : vector<16x16xf32> to vector<16xf32>
    %76 = vector.shape_cast %75 : vector<16xf32> to vector<16x1xf32>
    %77 = vector.broadcast %76 : vector<16x1xf32> to vector<16x16xf32>
    %78 = arith.divf %74, %77 : vector<16x16xf32>
    %cst_38 = arith.constant dense<0.000000e+00> : vector<16x16xf32>
    %79 = tpu.matmul %78, %61, %cst_38 {dimension_numbers = #tpu.dot_dimension_numbers<[1], [0], [0], [1], [0, 0, 1, 1], [], []>} : vector<16x16xf32>, vector<16x16xf32>, vector<16x16xf32> -> vector<16x16xf32>
    %80 = vector.extract_strided_slice %11 {offsets = [0, 48], sizes = [16, 16], strides = [1, 1]} : vector<16x128xf32> to vector<16x16xf32>
    %81 = vector.extract_strided_slice %11 {offsets = [0, 112], sizes = [16, 16], strides = [1, 1]} : vector<16x128xf32> to vector<16x16xf32>
    %82 = vector.extract_strided_slice %16 {offsets = [0, 48], sizes = [16, 16], strides = [1, 1]} : vector<16x64xf32> to vector<16x16xf32>
    %cst_39 = arith.constant dense<0.000000e+00> : vector<16x16xf32>
    %83 = tpu.matmul %80, %81, %cst_39 {dimension_numbers = #tpu.dot_dimension_numbers<[1], [1], [0], [0], [0, 0, 1, 0], [], []>} : vector<16x16xf32>, vector<16x16xf32>, vector<16x16xf32> -> vector<16x16xf32>
    %cst_40 = arith.constant 2.500000e-01 : f32
    %84 = vector.broadcast %cst_40 : f32 to vector<16x16xf32>
    %85 = arith.mulf %83, %84 : vector<16x16xf32>
    %86 = vector.broadcast %6 : vector<1x16xf32> to vector<16x16xf32>
    %87 = arith.addf %85, %86 : vector<16x16xf32>
    %c3 = arith.constant 3 : index
    %c0_41 = arith.constant 0 : index
    %c0_42 = arith.constant 0 : index
    %88 = vector.load %arg3[%c3, %c0_41, %c0_42] : memref<4x16x16xf32, #tpu.memory_space<vmem>>, vector<1x16x16xf32>
    %89 = vector.shape_cast %88 : vector<1x16x16xf32> to vector<16x16xf32>
    %90 = arith.addf %87, %89 : vector<16x16xf32>
    %cst_43 = arith.constant dense<0xFF800000> : vector<16xf32>
    %91 = vector.multi_reduction <maximumf>, %90, %cst_43 [1] : vector<16x16xf32> to vector<16xf32>
    %92 = vector.shape_cast %91 : vector<16xf32> to vector<16x1xf32>
    %93 = vector.broadcast %92 : vector<16x1xf32> to vector<16x16xf32>
    %94 = arith.subf %90, %93 : vector<16x16xf32>
    %95 = math.exp %94 : vector<16x16xf32>
    %cst_44 = arith.constant dense<0.000000e+00> : vector<16xf32>
    %96 = vector.multi_reduction <add>, %95, %cst_44 [1] : vector<16x16xf32> to vector<16xf32>
    %97 = vector.shape_cast %96 : vector<16xf32> to vector<16x1xf32>
    %98 = vector.broadcast %97 : vector<16x1xf32> to vector<16x16xf32>
    %99 = arith.divf %95, %98 : vector<16x16xf32>
    %cst_45 = arith.constant dense<0.000000e+00> : vector<16x16xf32>
    %100 = tpu.matmul %99, %82, %cst_45 {dimension_numbers = #tpu.dot_dimension_numbers<[1], [0], [0], [1], [0, 0, 1, 1], [], []>} : vector<16x16xf32>, vector<16x16xf32>, vector<16x16xf32> -> vector<16x16xf32>
    %101 = tpu.concatenate %37, %58, %79, %100 in 1 : vector<16x16xf32>, vector<16x16xf32>, vector<16x16xf32>, vector<16x16xf32> -> vector<16x64xf32>
    %c0_46 = arith.constant 0 : index
    %c0_47 = arith.constant 0 : index
    %102 = vector.load %arg9[%c0_46, %c0_47] : memref<64x32xf32, #tpu.memory_space<vmem>>, vector<64x32xf32>
    %cst_48 = arith.constant dense<0.000000e+00> : vector<16x32xf32>
    %103 = tpu.matmul %101, %102, %cst_48 {dimension_numbers = #tpu.dot_dimension_numbers<[1], [0], [0], [1], [0, 0, 1, 1], [], []>} : vector<16x64xf32>, vector<64x32xf32>, vector<16x32xf32> -> vector<16x32xf32>
    %c0_49 = arith.constant 0 : index
    %c0_50 = arith.constant 0 : index
    %104 = vector.load %arg10[%c0_49, %c0_50] : memref<1x32xf32, #tpu.memory_space<vmem>>, vector<1x32xf32>
    %105 = vector.broadcast %104 : vector<1x32xf32> to vector<16x32xf32>
    %106 = arith.addf %103, %105 : vector<16x32xf32>
    %107 = arith.addf %106, %4 : vector<16x32xf32>
    %c0_51 = arith.constant 0 : index
    %c0_52 = arith.constant 0 : index
    %108 = vector.load %arg11[%c0_51, %c0_52] : memref<1x32xf32, #tpu.memory_space<vmem>>, vector<1x32xf32>
    %c0_53 = arith.constant 0 : index
    %c0_54 = arith.constant 0 : index
    %109 = vector.load %arg12[%c0_53, %c0_54] : memref<1x32xf32, #tpu.memory_space<vmem>>, vector<1x32xf32>
    %cst_55 = arith.constant dense<0.000000e+00> : vector<16xf32>
    %110 = vector.multi_reduction <add>, %107, %cst_55 [1] : vector<16x32xf32> to vector<16xf32>
    %111 = vector.shape_cast %110 : vector<16xf32> to vector<16x1xf32>
    %cst_56 = arith.constant 3.200000e+01 : f32
    %112 = vector.broadcast %cst_56 : f32 to vector<16x1xf32>
    %113 = arith.divf %111, %112 : vector<16x1xf32>
    %114 = vector.broadcast %113 : vector<16x1xf32> to vector<16x32xf32>
    %115 = arith.subf %107, %114 : vector<16x32xf32>
    %116 = arith.mulf %115, %115 : vector<16x32xf32>
    %cst_57 = arith.constant dense<0.000000e+00> : vector<16xf32>
    %117 = vector.multi_reduction <add>, %116, %cst_57 [1] : vector<16x32xf32> to vector<16xf32>
    %118 = vector.shape_cast %117 : vector<16xf32> to vector<16x1xf32>
    %cst_58 = arith.constant 3.200000e+01 : f32
    %119 = vector.broadcast %cst_58 : f32 to vector<16x1xf32>
    %120 = arith.divf %118, %119 : vector<16x1xf32>
    %121 = vector.broadcast %113 : vector<16x1xf32> to vector<16x32xf32>
    %122 = arith.subf %107, %121 : vector<16x32xf32>
    %cst_59 = arith.constant 9.99999974E-6 : f32
    %123 = vector.broadcast %cst_59 : f32 to vector<16x1xf32>
    %124 = arith.addf %120, %123 : vector<16x1xf32>
    %125 = math.rsqrt %124 : vector<16x1xf32>
    %126 = vector.broadcast %125 : vector<16x1xf32> to vector<16x32xf32>
    %127 = arith.mulf %122, %126 : vector<16x32xf32>
    %128 = vector.broadcast %108 : vector<1x32xf32> to vector<16x32xf32>
    %129 = arith.mulf %127, %128 : vector<16x32xf32>
    %130 = vector.broadcast %109 : vector<1x32xf32> to vector<16x32xf32>
    %131 = arith.addf %129, %130 : vector<16x32xf32>
    %132 = arith.addf %131, %1 : vector<16x32xf32>
    %c0_60 = arith.constant 0 : index
    %c0_61 = arith.constant 0 : index
    %133 = vector.load %arg13[%c0_60, %c0_61] : memref<1x32xf32, #tpu.memory_space<vmem>>, vector<1x32xf32>
    %c0_62 = arith.constant 0 : index
    %c0_63 = arith.constant 0 : index
    %134 = vector.load %arg14[%c0_62, %c0_63] : memref<1x32xf32, #tpu.memory_space<vmem>>, vector<1x32xf32>
    %cst_64 = arith.constant dense<0.000000e+00> : vector<16xf32>
    %135 = vector.multi_reduction <add>, %132, %cst_64 [1] : vector<16x32xf32> to vector<16xf32>
    %136 = vector.shape_cast %135 : vector<16xf32> to vector<16x1xf32>
    %cst_65 = arith.constant 3.200000e+01 : f32
    %137 = vector.broadcast %cst_65 : f32 to vector<16x1xf32>
    %138 = arith.divf %136, %137 : vector<16x1xf32>
    %139 = vector.broadcast %138 : vector<16x1xf32> to vector<16x32xf32>
    %140 = arith.subf %132, %139 : vector<16x32xf32>
    %141 = arith.mulf %140, %140 : vector<16x32xf32>
    %cst_66 = arith.constant dense<0.000000e+00> : vector<16xf32>
    %142 = vector.multi_reduction <add>, %141, %cst_66 [1] : vector<16x32xf32> to vector<16xf32>
    %143 = vector.shape_cast %142 : vector<16xf32> to vector<16x1xf32>
    %cst_67 = arith.constant 3.200000e+01 : f32
    %144 = vector.broadcast %cst_67 : f32 to vector<16x1xf32>
    %145 = arith.divf %143, %144 : vector<16x1xf32>
    %146 = vector.broadcast %138 : vector<16x1xf32> to vector<16x32xf32>
    %147 = arith.subf %132, %146 : vector<16x32xf32>
    %cst_68 = arith.constant 9.99999974E-6 : f32
    %148 = vector.broadcast %cst_68 : f32 to vector<16x1xf32>
    %149 = arith.addf %145, %148 : vector<16x1xf32>
    %150 = math.rsqrt %149 : vector<16x1xf32>
    %151 = vector.broadcast %150 : vector<16x1xf32> to vector<16x32xf32>
    %152 = arith.mulf %147, %151 : vector<16x32xf32>
    %153 = vector.broadcast %133 : vector<1x32xf32> to vector<16x32xf32>
    %154 = arith.mulf %152, %153 : vector<16x32xf32>
    %155 = vector.broadcast %134 : vector<1x32xf32> to vector<16x32xf32>
    %156 = arith.addf %154, %155 : vector<16x32xf32>
    %c0_69 = arith.constant 0 : index
    %c0_70 = arith.constant 0 : index
    %157 = vector.load %arg15[%c0_69, %c0_70] : memref<32x64xf32, #tpu.memory_space<vmem>>, vector<32x64xf32>
    %cst_71 = arith.constant dense<0.000000e+00> : vector<16x64xf32>
    %158 = tpu.matmul %156, %157, %cst_71 {dimension_numbers = #tpu.dot_dimension_numbers<[1], [0], [0], [1], [0, 0, 1, 1], [], []>} : vector<16x32xf32>, vector<32x64xf32>, vector<16x64xf32> -> vector<16x64xf32>
    %c0_72 = arith.constant 0 : index
    %c0_73 = arith.constant 0 : index
    %159 = vector.load %arg16[%c0_72, %c0_73] : memref<1x64xf32, #tpu.memory_space<vmem>>, vector<1x64xf32>
    %160 = vector.broadcast %159 : vector<1x64xf32> to vector<16x64xf32>
    %161 = arith.addf %158, %160 : vector<16x64xf32>
    %cst_74 = arith.constant 0.000000e+00 : f32
    %162 = vector.broadcast %cst_74 : f32 to vector<16x64xf32>
    %163 = arith.maximumf %161, %162 : vector<16x64xf32>
    %c0_75 = arith.constant 0 : index
    %c0_76 = arith.constant 0 : index
    %164 = vector.load %arg17[%c0_75, %c0_76] : memref<64x32xf32, #tpu.memory_space<vmem>>, vector<64x32xf32>
    %cst_77 = arith.constant dense<0.000000e+00> : vector<16x32xf32>
    %165 = tpu.matmul %163, %164, %cst_77 {dimension_numbers = #tpu.dot_dimension_numbers<[1], [0], [0], [1], [0, 0, 1, 1], [], []>} : vector<16x64xf32>, vector<64x32xf32>, vector<16x32xf32> -> vector<16x32xf32>
    %c0_78 = arith.constant 0 : index
    %c0_79 = arith.constant 0 : index
    %166 = vector.load %arg18[%c0_78, %c0_79] : memref<1x32xf32, #tpu.memory_space<vmem>>, vector<1x32xf32>
    %167 = vector.broadcast %166 : vector<1x32xf32> to vector<16x32xf32>
    %168 = arith.addf %165, %167 : vector<16x32xf32>
    %169 = arith.addf %168, %156 : vector<16x32xf32>
    %c0_80 = arith.constant 0 : index
    %c0_81 = arith.constant 0 : index
    %170 = vector.load %arg19[%c0_80, %c0_81] : memref<1x32xf32, #tpu.memory_space<vmem>>, vector<1x32xf32>
    %c0_82 = arith.constant 0 : index
    %c0_83 = arith.constant 0 : index
    %171 = vector.load %arg20[%c0_82, %c0_83] : memref<1x32xf32, #tpu.memory_space<vmem>>, vector<1x32xf32>
    %cst_84 = arith.constant dense<0.000000e+00> : vector<16xf32>
    %172 = vector.multi_reduction <add>, %169, %cst_84 [1] : vector<16x32xf32> to vector<16xf32>
    %173 = vector.shape_cast %172 : vector<16xf32> to vector<16x1xf32>
    %cst_85 = arith.constant 3.200000e+01 : f32
    %174 = vector.broadcast %cst_85 : f32 to vector<16x1xf32>
    %175 = arith.divf %173, %174 : vector<16x1xf32>
    %176 = vector.broadcast %175 : vector<16x1xf32> to vector<16x32xf32>
    %177 = arith.subf %169, %176 : vector<16x32xf32>
    %178 = arith.mulf %177, %177 : vector<16x32xf32>
    %cst_86 = arith.constant dense<0.000000e+00> : vector<16xf32>
    %179 = vector.multi_reduction <add>, %178, %cst_86 [1] : vector<16x32xf32> to vector<16xf32>
    %180 = vector.shape_cast %179 : vector<16xf32> to vector<16x1xf32>
    %cst_87 = arith.constant 3.200000e+01 : f32
    %181 = vector.broadcast %cst_87 : f32 to vector<16x1xf32>
    %182 = arith.divf %180, %181 : vector<16x1xf32>
    %183 = vector.broadcast %175 : vector<16x1xf32> to vector<16x32xf32>
    %184 = arith.subf %169, %183 : vector<16x32xf32>
    %cst_88 = arith.constant 9.99999974E-6 : f32
    %185 = vector.broadcast %cst_88 : f32 to vector<16x1xf32>
    %186 = arith.addf %182, %185 : vector<16x1xf32>
    %187 = math.rsqrt %186 : vector<16x1xf32>
    %188 = vector.broadcast %187 : vector<16x1xf32> to vector<16x32xf32>
    %189 = arith.mulf %184, %188 : vector<16x32xf32>
    %190 = vector.broadcast %170 : vector<1x32xf32> to vector<16x32xf32>
    %191 = arith.mulf %189, %190 : vector<16x32xf32>
    %192 = vector.broadcast %171 : vector<1x32xf32> to vector<16x32xf32>
    %193 = arith.addf %191, %192 : vector<16x32xf32>
    %c0_89 = arith.constant 0 : index
    %c0_90 = arith.constant 0 : index
    %c0_91 = arith.constant 0 : index
    %194 = vector.load %arg21[%c0_89, %c0_90, %c0_91] : memref<1x16x32xf32, #tpu.memory_space<vmem>>, vector<1x16x32xf32>
    %195 = vector.shape_cast %194 : vector<1x16x32xf32> to vector<16x32xf32>
    %196 = vector.shape_cast %193 : vector<16x32xf32> to vector<1x16x32xf32>
    tpu.vector_store %arg21[%c0_89, %c0_90, %c0_91], %196 {strides = array<i32>} : memref<1x16x32xf32, #tpu.memory_space<vmem>>, vector<1x16x32xf32>,
    return
  }
  func.func @transform_0(%arg0: i32) -> (i32, i32, i32) {
    %c0_i32 = arith.constant 0 : i32
    %c0_i32_0 = arith.constant 0 : i32
    %c0_i32_1 = arith.constant 0 : i32
    return %arg0, %c0_i32, %c0_i32_0 : i32, i32, i32
  }
  func.func @transform_1(%arg0: i32) -> (i32, i32, i32) {
    %c0_i32 = arith.constant 0 : i32
    %c0_i32_0 = arith.constant 0 : i32
    %c0_i32_1 = arith.constant 0 : i32
    return %arg0, %c0_i32, %c0_i32_0 : i32, i32, i32
  }
  func.func @transform_2(%arg0: i32) -> (i32, i32, i32) {
    %c0_i32 = arith.constant 0 : i32
    %c0_i32_0 = arith.constant 0 : i32
    %c0_i32_1 = arith.constant 0 : i32
    %c0_i32_2 = arith.constant 0 : i32
    return %c0_i32, %c0_i32_0, %c0_i32_1 : i32, i32, i32
  }
  func.func @transform_3(%arg0: i32) -> (i32, i32, i32) {
    %c0_i32 = arith.constant 0 : i32
    %c0_i32_0 = arith.constant 0 : i32
    %c0_i32_1 = arith.constant 0 : i32
    return %arg0, %c0_i32, %c0_i32_0 : i32, i32, i32
  }
  func.func @transform_4(%arg0: i32) -> (i32, i32) {
    %c0_i32 = arith.constant 0 : i32
    %c0_i32_0 = arith.constant 0 : i32
    %c0_i32_1 = arith.constant 0 : i32
    return %c0_i32, %c0_i32_0 : i32, i32
  }
  func.func @transform_5(%arg0: i32) -> (i32, i32) {
    %c0_i32 = arith.constant 0 : i32
    %c0_i32_0 = arith.constant 0 : i32
    %c0_i32_1 = arith.constant 0 : i32
    return %c0_i32, %c0_i32_0 : i32, i32
  }
  func.func @transform_6(%arg0: i32) -> (i32, i32) {
    %c0_i32 = arith.constant 0 : i32
    %c0_i32_0 = arith.constant 0 : i32
    %c0_i32_1 = arith.constant 0 : i32
    return %c0_i32, %c0_i32_0 : i32, i32
  }
  func.func @transform_7(%arg0: i32) -> (i32, i32) {
    %c0_i32 = arith.constant 0 : i32
    %c0_i32_0 = arith.constant 0 : i32
    %c0_i32_1 = arith.constant 0 : i32
    return %c0_i32, %c0_i32_0 : i32, i32
  }
  func.func @transform_8(%arg0: i32) -> (i32, i32) {
    %c0_i32 = arith.constant 0 : i32
    %c0_i32_0 = arith.constant 0 : i32
    %c0_i32_1 = arith.constant 0 : i32
    return %c0_i32, %c0_i32_0 : i32, i32
  }
  func.func @transform_9(%arg0: i32) -> (i32, i32) {
    %c0_i32 = arith.constant 0 : i32
    %c0_i32_0 = arith.constant 0 : i32
    %c0_i32_1 = arith.constant 0 : i32
    return %c0_i32, %c0_i32_0 : i32, i32
  }
  func.func @transform_10(%arg0: i32) -> (i32, i32) {
    %c0_i32 = arith.constant 0 : i32
    %c0_i32_0 = arith.constant 0 : i32
    %c0_i32_1 = arith.constant 0 : i32
    return %c0_i32, %c0_i32_0 : i32, i32
  }
  func.func @transform_11(%arg0: i32) -> (i32, i32) {
    %c0_i32 = arith.constant 0 : i32
    %c0_i32_0 = arith.constant 0 : i32
    %c0_i32_1 = arith.constant 0 : i32
    return %c0_i32, %c0_i32_0 : i32, i32
  }
  func.func @transform_12(%arg0: i32) -> (i32, i32) {
    %c0_i32 = arith.constant 0 : i32
    %c0_i32_0 = arith.constant 0 : i32
    %c0_i32_1 = arith.constant 0 : i32
    return %c0_i32, %c0_i32_0 : i32, i32
  }
  func.func @transform_13(%arg0: i32) -> (i32, i32) {
    %c0_i32 = arith.constant 0 : i32
    %c0_i32_0 = arith.constant 0 : i32
    %c0_i32_1 = arith.constant 0 : i32
    return %c0_i32, %c0_i32_0 : i32, i32
  }
  func.func @transform_14(%arg0: i32) -> (i32, i32) {
    %c0_i32 = arith.constant 0 : i32
    %c0_i32_0 = arith.constant 0 : i32
    %c0_i32_1 = arith.constant 0 : i32
    return %c0_i32, %c0_i32_0 : i32, i32
  }
  func.func @transform_15(%arg0: i32) -> (i32, i32) {
    %c0_i32 = arith.constant 0 : i32
    %c0_i32_0 = arith.constant 0 : i32
    %c0_i32_1 = arith.constant 0 : i32
    return %c0_i32, %c0_i32_0 : i32, i32
  }
  func.func @transform_16(%arg0: i32) -> (i32, i32) {
    %c0_i32 = arith.constant 0 : i32
    %c0_i32_0 = arith.constant 0 : i32
    %c0_i32_1 = arith.constant 0 : i32
    return %c0_i32, %c0_i32_0 : i32, i32
  }
  func.func @transform_17(%arg0: i32) -> (i32, i32) {
    %c0_i32 = arith.constant 0 : i32
    %c0_i32_0 = arith.constant 0 : i32
    %c0_i32_1 = arith.constant 0 : i32
    return %c0_i32, %c0_i32_0 : i32, i32
  }
  func.func @transform_18(%arg0: i32) -> (i32, i32) {
    %c0_i32 = arith.constant 0 : i32
    %c0_i32_0 = arith.constant 0 : i32
    %c0_i32_1 = arith.constant 0 : i32
    return %c0_i32, %c0_i32_0 : i32, i32
  }
  func.func @transform_19(%arg0: i32) -> (i32, i32) {
    %c0_i32 = arith.constant 0 : i32
    %c0_i32_0 = arith.constant 0 : i32
    %c0_i32_1 = arith.constant 0 : i32
    return %c0_i32, %c0_i32_0 : i32, i32
  }
  func.func @transform_20(%arg0: i32) -> (i32, i32, i32) {
    %c0_i32 = arith.constant 0 : i32
    %c0_i32_0 = arith.constant 0 : i32
    %c0_i32_1 = arith.constant 0 : i32
    return %arg0, %c0_i32, %c0_i32_0 : i32, i32, i32
  }
}

module attributes {stable_mosaic.version = 11 : i64} {
  func.func @_layer_kernel(%arg0: i32, %arg1: memref<1x16x32xf32, #tpu.memory_space<vmem>>, %arg2: memref<1x16x32xf32, #tpu.memory_space<vmem>>, %arg3: memref<4x16x16xf32, #tpu.memory_space<vmem>>, %arg4: memref<1x1x16xf32, #tpu.memory_space<vmem>>, %arg5: memref<32x128xf32, #tpu.memory_space<vmem>>, %arg6: memref<1x128xf32, #tpu.memory_space<vmem>>, %arg7: memref<32x64xf32, #tpu.memory_space<vmem>>, %arg8: memref<1x64xf32, #tpu.memory_space<vmem>>, %arg9: memref<64x32xf32, #tpu.memory_space<vmem>>, %arg10: memref<1x32xf32, #tpu.memory_space<vmem>>, %arg11: memref<1x32xf32, #tpu.memory_space<vmem>>, %arg12: memref<1x32xf32, #tpu.memory_space<vmem>>, %arg13: memref<1x32xf32, #tpu.memory_space<vmem>>, %arg14: memref<1x32xf32, #tpu.memory_space<vmem>>, %arg15: memref<32x64xf32, #tpu.memory_space<vmem>>, %arg16: memref<1x64xf32, #tpu.memory_space<vmem>>, %arg17: memref<64x32xf32, #tpu.memory_space<vmem>>, %arg18: memref<1x32xf32, #tpu.memory_space<vmem>>, %arg19: memref<1x32xf32, #tpu.memory_space<vmem>>, %arg20: memref<1x32xf32, #tpu.memory_space<vmem>>, %arg21: memref<1x16x32xf32, #tpu.memory_space<vmem>>) attributes {dimension_semantics = [#tpu.dimension_semantics<parallel>], iteration_bounds = array<i64: 2>, scalar_prefetch = 0 : i64, scratch_operands = 0 : i64, tpu.core_type = #tpu.core_type<tc>, window_params = [{transform_indices = @transform_0, window_bounds = array<i64: 1, 16, 32>}, {transform_indices = @transform_1, window_bounds = array<i64: 1, 16, 32>}, {pipeline_mode = #tpu.pipeline_mode<synchronous>, transform_indices = @transform_2, window_bounds = array<i64: 4, 16, 16>}, {transform_indices = @transform_3, window_bounds = array<i64: 1, 1, 16>}, {pipeline_mode = #tpu.pipeline_mode<synchronous>, transform_indices = @transform_4, window_bounds = array<i64: 32, 128>}, {pipeline_mode = #tpu.pipeline_mode<synchronous>, transform_indices = @transform_5, window_bounds = array<i64: 1, 128>}, {pipeline_mode = #tpu.pipeline_mode<synchronous>, transform_indices = @transform_6, window_bounds = array<i64: 32, 64>}, {pipeline_mode = #tpu.pipeline_mode<synchronous>, transform_indices = @transform_7, window_bounds = array<i64: 1, 64>}, {pipeline_mode = #tpu.pipeline_mode<synchronous>, transform_indices = @transform_8, window_bounds = array<i64: 64, 32>}, {pipeline_mode = #tpu.pipeline_mode<synchronous>, transform_indices = @transform_9, window_bounds = array<i64: 1, 32>}, {pipeline_mode = #tpu.pipeline_mode<synchronous>, transform_indices = @transform_10, window_bounds = array<i64: 1, 32>}, {pipeline_mode = #tpu.pipeline_mode<synchronous>, transform_indices = @transform_11, window_bounds = array<i64: 1, 32>}, {pipeline_mode = #tpu.pipeline_mode<synchronous>, transform_indices = @transform_12, window_bounds = array<i64: 1, 32>}, {pipeline_mode = #tpu.pipeline_mode<synchronous>, transform_indices = @transform_13, window_bounds = array<i64: 1, 32>}, {pipeline_mode = #tpu.pipeline_mode<synchronous>, transform_indices = @transform_14, window_bounds = array<i64: 32, 64>}, {pipeline_mode = #tpu.pipeline_mode<synchronous>, transform_indices = @transform_15, window_bounds = array<i64: 1, 64>}, {pipeline_mode = #tpu.pipeline_mode<synchronous>, transform_indices = @transform_16, window_bounds = array<i64: 64, 32>}, {pipeline_mode = #tpu.pipeline_mode<synchronous>, transform_indices = @transform_17, window_bounds = array<i64: 1, 32>}, {pipeline_mode = #tpu.pipeline_mode<synchronous>, transform_indices = @transform_18, window_bounds = array<i64: 1, 32>}, {pipeline_mode = #tpu.pipeline_mode<synchronous>, transform_indices = @transform_19, window_bounds = array<i64: 1, 32>}, {transform_indices = @transform_20, window_bounds = array<i64: 1, 16, 32>}]} {
    %c0 = arith.constant 0 : index
    %c0_0 = arith.constant 0 : index
    %c0_1 = arith.constant 0 : index
    %0 = vector.load %arg1[%c0, %c0_0, %c0_1] : memref<1x16x32xf32, #tpu.memory_space<vmem>>, vector<1x16x32xf32>
    %1 = vector.shape_cast %0 : vector<1x16x32xf32> to vector<16x32xf32>
    %c0_2 = arith.constant 0 : index
    %c0_3 = arith.constant 0 : index
    %c0_4 = arith.constant 0 : index
    %2 = vector.load %arg2[%c0_2, %c0_3, %c0_4] : memref<1x16x32xf32, #tpu.memory_space<vmem>>, vector<1x16x32xf32>
    %3 = vector.shape_cast %2 : vector<1x16x32xf32> to vector<16x32xf32>
    %4 = arith.addf %1, %3 : vector<16x32xf32>
    %c0_5 = arith.constant 0 : index
    %c0_6 = arith.constant 0 : index
    %c0_7 = arith.constant 0 : index
    %5 = vector.load %arg4[%c0_5, %c0_6, %c0_7] : memref<1x1x16xf32, #tpu.memory_space<vmem>>, vector<1x1x16xf32>
    %6 = vector.shape_cast %5 : vector<1x1x16xf32> to vector<1x16xf32>
    %c0_8 = arith.constant 0 : index
    %c0_9 = arith.constant 0 : index
    %7 = vector.load %arg5[%c0_8, %c0_9] : memref<32x128xf32, #tpu.memory_space<vmem>>, vector<32x128xf32>
    %cst = arith.constant dense<0.000000e+00> : vector<16x128xf32>
    %8 = tpu.matmul %4, %7, %cst {dimension_numbers = #tpu.dot_dimension_numbers<[1], [0], [0], [1], [0, 0, 1, 1], [], []>} : vector<16x32xf32>, vector<32x128xf32>, vector<16x128xf32> -> vector<16x128xf32>
    %c0_10 = arith.constant 0 : index
    %c0_11 = arith.constant 0 : index
    %9 = vector.load %arg6[%c0_10, %c0_11] : memref<1x128xf32, #tpu.memory_space<vmem>>, vector<1x128xf32>
    %10 = vector.broadcast %9 : vector<1x128xf32> to vector<16x128xf32>
    %11 = arith.addf %8, %10 : vector<16x128xf32>
    %c0_12 = arith.constant 0 : index
    %c0_13 = arith.constant 0 : index
    %12 = vector.load %arg7[%c0_12, %c0_13] : memref<32x64xf32, #tpu.memory_space<vmem>>, vector<32x64xf32>
    %cst_14 = arith.constant dense<0.000000e+00> : vector<16x64xf32>
    %13 = tpu.matmul %1, %12, %cst_14 {dimension_numbers = #tpu.dot_dimension_numbers<[1], [0], [0], [1], [0, 0, 1, 1], [], []>} : vector<16x32xf32>, vector<32x64xf32>, vector<16x64xf32> -> vector<16x64xf32>
    %c0_15 = arith.constant 0 : index
    %c0_16 = arith.constant 0 : index
    %14 = vector.load %arg8[%c0_15, %c0_16] : memref<1x64xf32, #tpu.memory_space<vmem>>, vector<1x64xf32>
    %15 = vector.broadcast %14 : vector<1x64xf32> to vector<16x64xf32>
    %16 = arith.addf %13, %15 : vector<16x64xf32>
    %17 = vector.extract_strided_slice %11 {offsets = [0, 0], sizes = [16, 16], strides = [1, 1]} : vector<16x128xf32> to vector<16x16xf32>
    %18 = vector.extract_strided_slice %11 {offsets = [0, 64], sizes = [16, 16], strides = [1, 1]} : vector<16x128xf32> to vector<16x16xf32>
    %19 = vector.extract_strided_slice %16 {offsets = [0, 0], sizes = [16, 16], strides = [1, 1]} : vector<16x64xf32> to vector<16x16xf32>
    %cst_17 = arith.constant dense<0.000000e+00> : vector<16x16xf32>
    %20 = tpu.matmul %17, %18, %cst_17 {dimension_numbers = #tpu.dot_dimension_numbers<[1], [1], [0], [0], [0, 0, 1, 0], [], []>} : vector<16x16xf32>, vector<16x16xf32>, vector<16x16xf32> -> vector<16x16xf32>
    %cst_18 = arith.constant 2.500000e-01 : f32
    %21 = vector.broadcast %cst_18 : f32 to vector<16x16xf32>
    %22 = arith.mulf %20, %21 : vector<16x16xf32>
    %23 = vector.broadcast %6 : vector<1x16xf32> to vector<16x16xf32>
    %24 = arith.addf %22, %23 : vector<16x16xf32>
    %c0_19 = arith.constant 0 : index
    %c0_20 = arith.constant 0 : index
    %c0_21 = arith.constant 0 : index
    %25 = vector.load %arg3[%c0_19, %c0_20, %c0_21] : memref<4x16x16xf32, #tpu.memory_space<vmem>>, vector<1x16x16xf32>
    %26 = vector.shape_cast %25 : vector<1x16x16xf32> to vector<16x16xf32>
    %27 = arith.addf %24, %26 : vector<16x16xf32>
    %cst_22 = arith.constant dense<0xFF800000> : vector<16xf32>
    %28 = vector.multi_reduction <maximumf>, %27, %cst_22 [1] : vector<16x16xf32> to vector<16xf32>
    %29 = vector.shape_cast %28 : vector<16xf32> to vector<16x1xf32>
    %30 = vector.broadcast %29 : vector<16x1xf32> to vector<16x16xf32>
    %31 = arith.subf %27, %30 : vector<16x16xf32>
    %32 = math.exp %31 : vector<16x16xf32>
    %cst_23 = arith.constant dense<0.000000e+00> : vector<16xf32>
    %33 = vector.multi_reduction <add>, %32, %cst_23 [1] : vector<16x16xf32> to vector<16xf32>
    %34 = vector.shape_cast %33 : vector<16xf32> to vector<16x1xf32>
    %35 = vector.broadcast %34 : vector<16x1xf32> to vector<16x16xf32>
    %36 = arith.divf %32, %35 : vector<16x16xf32>
    %cst_24 = arith.constant dense<0.000000e+00> : vector<16x16xf32>
    %37 = tpu.matmul %36, %19, %cst_24 {dimension_numbers = #tpu.dot_dimension_numbers<[1], [0], [0], [1], [0, 0, 1, 1], [], []>} : vector<16x16xf32>, vector<16x16xf32>, vector<16x16xf32> -> vector<16x16xf32>
    %38 = vector.extract_strided_slice %11 {offsets = [0, 16], sizes = [16, 16], strides = [1, 1]} : vector<16x128xf32> to vector<16x16xf32>
    %39 = vector.extract_strided_slice %11 {offsets = [0, 80], sizes = [16, 16], strides = [1, 1]} : vector<16x128xf32> to vector<16x16xf32>
    %40 = vector.extract_strided_slice %16 {offsets = [0, 16], sizes = [16, 16], strides = [1, 1]} : vector<16x64xf32> to vector<16x16xf32>
    %cst_25 = arith.constant dense<0.000000e+00> : vector<16x16xf32>
    %41 = tpu.matmul %38, %39, %cst_25 {dimension_numbers = #tpu.dot_dimension_numbers<[1], [1], [0], [0], [0, 0, 1, 0], [], []>} : vector<16x16xf32>, vector<16x16xf32>, vector<16x16xf32> -> vector<16x16xf32>
    %cst_26 = arith.constant 2.500000e-01 : f32
    %42 = vector.broadcast %cst_26 : f32 to vector<16x16xf32>
    %43 = arith.mulf %41, %42 : vector<16x16xf32>
    %44 = vector.broadcast %6 : vector<1x16xf32> to vector<16x16xf32>
    %45 = arith.addf %43, %44 : vector<16x16xf32>
    %c1 = arith.constant 1 : index
    %c0_27 = arith.constant 0 : index
    %c0_28 = arith.constant 0 : index
    %46 = vector.load %arg3[%c1, %c0_27, %c0_28] : memref<4x16x16xf32, #tpu.memory_space<vmem>>, vector<1x16x16xf32>
    %47 = vector.shape_cast %46 : vector<1x16x16xf32> to vector<16x16xf32>
    %48 = arith.addf %45, %47 : vector<16x16xf32>
    %cst_29 = arith.constant dense<0xFF800000> : vector<16xf32>
    %49 = vector.multi_reduction <maximumf>, %48, %cst_29 [1] : vector<16x16xf32> to vector<16xf32>
    %50 = vector.shape_cast %49 : vector<16xf32> to vector<16x1xf32>
    %51 = vector.broadcast %50 : vector<16x1xf32> to vector<16x16xf32>
    %52 = arith.subf %48, %51 : vector<16x16xf32>
    %53 = math.exp %52 : vector<16x16xf32>
    %cst_30 = arith.constant dense<0.000000e+00> : vector<16xf32>
    %54 = vector.multi_reduction <add>, %53, %cst_30 [1] : vector<16x16xf32> to vector<16xf32>
    %55 = vector.shape_cast %54 : vector<16xf32> to vector<16x1xf32>
    %56 = vector.broadcast %55 : vector<16x1xf32> to vector<16x16xf32>
    %57 = arith.divf %53, %56 : vector<16x16xf32>
    %cst_31 = arith.constant dense<0.000000e+00> : vector<16x16xf32>
    %58 = tpu.matmul %57, %40, %cst_31 {dimension_numbers = #tpu.dot_dimension_numbers<[1], [0], [0], [1], [0, 0, 1, 1], [], []>} : vector<16x16xf32>, vector<16x16xf32>, vector<16x16xf32> -> vector<16x16xf32>
    %59 = vector.extract_strided_slice %11 {offsets = [0, 32], sizes = [16, 16], strides = [1, 1]} : vector<16x128xf32> to vector<16x16xf32>
    %60 = vector.extract_strided_slice %11 {offsets = [0, 96], sizes = [16, 16], strides = [1, 1]} : vector<16x128xf32> to vector<16x16xf32>
    %61 = vector.extract_strided_slice %16 {offsets = [0, 32], sizes = [16, 16], strides = [1, 1]} : vector<16x64xf32> to vector<16x16xf32>
    %cst_32 = arith.constant dense<0.000000e+00> : vector<16x16xf32>
    %62 = tpu.matmul %59, %60, %cst_32 {dimension_numbers = #tpu.dot_dimension_numbers<[1], [1], [0], [0], [0, 0, 1, 0], [], []>} : vector<16x16xf32>, vector<16x16xf32>, vector<16x16xf32> -> vector<16x16xf32>
    %cst_33 = arith.constant 2.500000e-01 : f32
    %63 = vector.broadcast %cst_33 : f32 to vector<16x16xf32>
    %64 = arith.mulf %62, %63 : vector<16x16xf32>
    %65 = vector.broadcast %6 : vector<1x16xf32> to vector<16x16xf32>
    %66 = arith.addf %64, %65 : vector<16x16xf32>
    %c2 = arith.constant 2 : index
    %c0_34 = arith.constant 0 : index
    %c0_35 = arith.constant 0 : index
    %67 = vector.load %arg3[%c2, %c0_34, %c0_35] : memref<4x16x16xf32, #tpu.memory_space<vmem>>, vector<1x16x16xf32>
    %68 = vector.shape_cast %67 : vector<1x16x16xf32> to vector<16x16xf32>
    %69 = arith.addf %66, %68 : vector<16x16xf32>
    %cst_36 = arith.constant dense<0xFF800000> : vector<16xf32>
    %70 = vector.multi_reduction <maximumf>, %69, %cst_36 [1] : vector<16x16xf32> to vector<16xf32>
    %71 = vector.shape_cast %70 : vector<16xf32> to vector<16x1xf32>
    %72 = vector.broadcast %71 : vector<16x1xf32> to vector<16x16xf32>
    %73 = arith.subf %69, %72 : vector<16x16xf32>
    %74 = math.exp %73 : vector<16x16xf32>
    %cst_37 = arith.constant dense<0.000000e+00> : vector<16xf32>
    %75 = vector.multi_reduction <add>, %74, %cst_37 [1] : vector<16x16xf32> to vector<16xf32>
    %76 = vector.shape_cast %75 : vector<16xf32> to vector<16x1xf32>
    %77 = vector.broadcast %76 : vector<16x1xf32> to vector<16x16xf32>
    %78 = arith.divf %74, %77 : vector<16x16xf32>
    %cst_38 = arith.constant dense<0.000000e+00> : vector<16x16xf32>
    %79 = tpu.matmul %78, %61, %cst_38 {dimension_numbers = #tpu.dot_dimension_numbers<[1], [0], [0], [1], [0, 0, 1, 1], [], []>} : vector<16x16xf32>, vector<16x16xf32>, vector<16x16xf32> -> vector<16x16xf32>
    %80 = vector.extract_strided_slice %11 {offsets = [0, 48], sizes = [16, 16], strides = [1, 1]} : vector<16x128xf32> to vector<16x16xf32>
    %81 = vector.extract_strided_slice %11 {offsets = [0, 112], sizes = [16, 16], strides = [1, 1]} : vector<16x128xf32> to vector<16x16xf32>
    %82 = vector.extract_strided_slice %16 {offsets = [0, 48], sizes = [16, 16], strides = [1, 1]} : vector<16x64xf32> to vector<16x16xf32>
    %cst_39 = arith.constant dense<0.000000e+00> : vector<16x16xf32>
    %83 = tpu.matmul %80, %81, %cst_39 {dimension_numbers = #tpu.dot_dimension_numbers<[1], [1], [0], [0], [0, 0, 1, 0], [], []>} : vector<16x16xf32>, vector<16x16xf32>, vector<16x16xf32> -> vector<16x16xf32>
    %cst_40 = arith.constant 2.500000e-01 : f32
    %84 = vector.broadcast %cst_40 : f32 to vector<16x16xf32>
    %85 = arith.mulf %83, %84 : vector<16x16xf32>
    %86 = vector.broadcast %6 : vector<1x16xf32> to vector<16x16xf32>
    %87 = arith.addf %85, %86 : vector<16x16xf32>
    %c3 = arith.constant 3 : index
    %c0_41 = arith.constant 0 : index
    %c0_42 = arith.constant 0 : index
    %88 = vector.load %arg3[%c3, %c0_41, %c0_42] : memref<4x16x16xf32, #tpu.memory_space<vmem>>, vector<1x16x16xf32>
    %89 = vector.shape_cast %88 : vector<1x16x16xf32> to vector<16x16xf32>
    %90 = arith.addf %87, %89 : vector<16x16xf32>
    %cst_43 = arith.constant dense<0xFF800000> : vector<16xf32>
    %91 = vector.multi_reduction <maximumf>, %90, %cst_43 [1] : vector<16x16xf32> to vector<16xf32>
    %92 = vector.shape_cast %91 : vector<16xf32> to vector<16x1xf32>
    %93 = vector.broadcast %92 : vector<16x1xf32> to vector<16x16xf32>
    %94 = arith.subf %90, %93 : vector<16x16xf32>
    %95 = math.exp %94 : vector<16x16xf32>
    %cst_44 = arith.constant dense<0.000000e+00> : vector<16xf32>
    %96 = vector.multi_reduction <add>, %95, %cst_44 [1] : vector<16x16xf32> to vector<16xf32>
    %97 = vector.shape_cast %96 : vector<16xf32> to vector<16x1xf32>
    %98 = vector.broadcast %97 : vector<16x1xf32> to vector<16x16xf32>
    %99 = arith.divf %95, %98 : vector<16x16xf32>
    %cst_45 = arith.constant dense<0.000000e+00> : vector<16x16xf32>
    %100 = tpu.matmul %99, %82, %cst_45 {dimension_numbers = #tpu.dot_dimension_numbers<[1], [0], [0], [1], [0, 0, 1, 1], [], []>} : vector<16x16xf32>, vector<16x16xf32>, vector<16x16xf32> -> vector<16x16xf32>
    %101 = tpu.concatenate %37, %58, %79, %100 in 1 : vector<16x16xf32>, vector<16x16xf32>, vector<16x16xf32>, vector<16x16xf32> -> vector<16x64xf32>
    %c0_46 = arith.constant 0 : index
    %c0_47 = arith.constant 0 : index
    %102 = vector.load %arg9[%c0_46, %c0_47] : memref<64x32xf32, #tpu.memory_space<vmem>>, vector<64x32xf32>
    %cst_48 = arith.constant dense<0.000000e+00> : vector<16x32xf32>
    %103 = tpu.matmul %101, %102, %cst_48 {dimension_numbers = #tpu.dot_dimension_numbers<[1], [0], [0], [1], [0, 0, 1, 1], [], []>} : vector<16x64xf32>, vector<64x32xf32>, vector<16x32xf32> -> vector<16x32xf32>
    %c0_49 = arith.constant 0 : index
    %c0_50 = arith.constant 0 : index
    %104 = vector.load %arg10[%c0_49, %c0_50] : memref<1x32xf32, #tpu.memory_space<vmem>>, vector<1x32xf32>
    %105 = vector.broadcast %104 : vector<1x32xf32> to vector<16x32xf32>
    %106 = arith.addf %103, %105 : vector<16x32xf32>
    %107 = arith.addf %106, %4 : vector<16x32xf32>
    %c0_51 = arith.constant 0 : index
    %c0_52 = arith.constant 0 : index
    %108 = vector.load %arg11[%c0_51, %c0_52] : memref<1x32xf32, #tpu.memory_space<vmem>>, vector<1x32xf32>
    %c0_53 = arith.constant 0 : index
    %c0_54 = arith.constant 0 : index
    %109 = vector.load %arg12[%c0_53, %c0_54] : memref<1x32xf32, #tpu.memory_space<vmem>>, vector<1x32xf32>
    %cst_55 = arith.constant dense<0.000000e+00> : vector<16xf32>
    %110 = vector.multi_reduction <add>, %107, %cst_55 [1] : vector<16x32xf32> to vector<16xf32>
    %111 = vector.shape_cast %110 : vector<16xf32> to vector<16x1xf32>
    %cst_56 = arith.constant 3.200000e+01 : f32
    %112 = vector.broadcast %cst_56 : f32 to vector<16x1xf32>
    %113 = arith.divf %111, %112 : vector<16x1xf32>
    %114 = vector.broadcast %113 : vector<16x1xf32> to vector<16x32xf32>
    %115 = arith.subf %107, %114 : vector<16x32xf32>
    %116 = arith.mulf %115, %115 : vector<16x32xf32>
    %cst_57 = arith.constant dense<0.000000e+00> : vector<16xf32>
    %117 = vector.multi_reduction <add>, %116, %cst_57 [1] : vector<16x32xf32> to vector<16xf32>
    %118 = vector.shape_cast %117 : vector<16xf32> to vector<16x1xf32>
    %cst_58 = arith.constant 3.200000e+01 : f32
    %119 = vector.broadcast %cst_58 : f32 to vector<16x1xf32>
    %120 = arith.divf %118, %119 : vector<16x1xf32>
    %121 = vector.broadcast %113 : vector<16x1xf32> to vector<16x32xf32>
    %122 = arith.subf %107, %121 : vector<16x32xf32>
    %cst_59 = arith.constant 9.99999974E-6 : f32
    %123 = vector.broadcast %cst_59 : f32 to vector<16x1xf32>
    %124 = arith.addf %120, %123 : vector<16x1xf32>
    %125 = math.rsqrt %124 : vector<16x1xf32>
    %126 = vector.broadcast %125 : vector<16x1xf32> to vector<16x32xf32>
    %127 = arith.mulf %122, %126 : vector<16x32xf32>
    %128 = vector.broadcast %108 : vector<1x32xf32> to vector<16x32xf32>
    %129 = arith.mulf %127, %128 : vector<16x32xf32>
    %130 = vector.broadcast %109 : vector<1x32xf32> to vector<16x32xf32>
    %131 = arith.addf %129, %130 : vector<16x32xf32>
    %132 = arith.addf %131, %1 : vector<16x32xf32>
    %c0_60 = arith.constant 0 : index
    %c0_61 = arith.constant 0 : index
    %133 = vector.load %arg13[%c0_60, %c0_61] : memref<1x32xf32, #tpu.memory_space<vmem>>, vector<1x32xf32>
    %c0_62 = arith.constant 0 : index
    %c0_63 = arith.constant 0 : index
    %134 = vector.load %arg14[%c0_62, %c0_63] : memref<1x32xf32, #tpu.memory_space<vmem>>, vector<1x32xf32>
    %cst_64 = arith.constant dense<0.000000e+00> : vector<16xf32>
    %135 = vector.multi_reduction <add>, %132, %cst_64 [1] : vector<16x32xf32> to vector<16xf32>
    %136 = vector.shape_cast %135 : vector<16xf32> to vector<16x1xf32>
    %cst_65 = arith.constant 3.200000e+01 : f32
    %137 = vector.broadcast %cst_65 : f32 to vector<16x1xf32>
    %138 = arith.divf %136, %137 : vector<16x1xf32>
    %139 = vector.broadcast %138 : vector<16x1xf32> to vector<16x32xf32>
    %140 = arith.subf %132, %139 : vector<16x32xf32>
    %141 = arith.mulf %140, %140 : vector<16x32xf32>
    %cst_66 = arith.constant dense<0.000000e+00> : vector<16xf32>
    %142 = vector.multi_reduction <add>, %141, %cst_66 [1] : vector<16x32xf32> to vector<16xf32>
    %143 = vector.shape_cast %142 : vector<16xf32> to vector<16x1xf32>
    %cst_67 = arith.constant 3.200000e+01 : f32
    %144 = vector.broadcast %cst_67 : f32 to vector<16x1xf32>
    %145 = arith.divf %143, %144 : vector<16x1xf32>
    %146 = vector.broadcast %138 : vector<16x1xf32> to vector<16x32xf32>
    %147 = arith.subf %132, %146 : vector<16x32xf32>
    %cst_68 = arith.constant 9.99999974E-6 : f32
    %148 = vector.broadcast %cst_68 : f32 to vector<16x1xf32>
    %149 = arith.addf %145, %148 : vector<16x1xf32>
    %150 = math.rsqrt %149 : vector<16x1xf32>
    %151 = vector.broadcast %150 : vector<16x1xf32> to vector<16x32xf32>
    %152 = arith.mulf %147, %151 : vector<16x32xf32>
    %153 = vector.broadcast %133 : vector<1x32xf32> to vector<16x32xf32>
    %154 = arith.mulf %152, %153 : vector<16x32xf32>
    %155 = vector.broadcast %134 : vector<1x32xf32> to vector<16x32xf32>
    %156 = arith.addf %154, %155 : vector<16x32xf32>
    %c0_69 = arith.constant 0 : index
    %c0_70 = arith.constant 0 : index
    %157 = vector.load %arg15[%c0_69, %c0_70] : memref<32x64xf32, #tpu.memory_space<vmem>>, vector<32x64xf32>
    %cst_71 = arith.constant dense<0.000000e+00> : vector<16x64xf32>
    %158 = tpu.matmul %156, %157, %cst_71 {dimension_numbers = #tpu.dot_dimension_numbers<[1], [0], [0], [1], [0, 0, 1, 1], [], []>} : vector<16x32xf32>, vector<32x64xf32>, vector<16x64xf32> -> vector<16x64xf32>
    %c0_72 = arith.constant 0 : index
    %c0_73 = arith.constant 0 : index
    %159 = vector.load %arg16[%c0_72, %c0_73] : memref<1x64xf32, #tpu.memory_space<vmem>>, vector<1x64xf32>
    %160 = vector.broadcast %159 : vector<1x64xf32> to vector<16x64xf32>
    %161 = arith.addf %158, %160 : vector<16x64xf32>
    %cst_74 = arith.constant 0.000000e+00 : f32
    %162 = vector.broadcast %cst_74 : f32 to vector<16x64xf32>
    %163 = arith.maximumf %161, %162 : vector<16x64xf32>
    %c0_75 = arith.constant 0 : index
    %c0_76 = arith.constant 0 : index
    %164 = vector.load %arg17[%c0_75, %c0_76] : memref<64x32xf32, #tpu.memory_space<vmem>>, vector<64x32xf32>
    %cst_77 = arith.constant dense<0.000000e+00> : vector<16x32xf32>
    %165 = tpu.matmul %163, %164, %cst_77 {dimension_numbers = #tpu.dot_dimension_numbers<[1], [0], [0], [1], [0, 0, 1, 1], [], []>} : vector<16x64xf32>, vector<64x32xf32>, vector<16x32xf32> -> vector<16x32xf32>
    %c0_78 = arith.constant 0 : index
    %c0_79 = arith.constant 0 : index
    %166 = vector.load %arg18[%c0_78, %c0_79] : memref<1x32xf32, #tpu.memory_space<vmem>>, vector<1x32xf32>
    %167 = vector.broadcast %166 : vector<1x32xf32> to vector<16x32xf32>
    %168 = arith.addf %165, %167 : vector<16x32xf32>
    %169 = arith.addf %168, %156 : vector<16x32xf32>
    %c0_80 = arith.constant 0 : index
    %c0_81 = arith.constant 0 : index
    %170 = vector.load %arg19[%c0_80, %c0_81] : memref<1x32xf32, #tpu.memory_space<vmem>>, vector<1x32xf32>
    %c0_82 = arith.constant 0 : index
    %c0_83 = arith.constant 0 : index
    %171 = vector.load %arg20[%c0_82, %c0_83] : memref<1x32xf32, #tpu.memory_space<vmem>>, vector<1x32xf32>
    %cst_84 = arith.constant dense<0.000000e+00> : vector<16xf32>
    %172 = vector.multi_reduction <add>, %169, %cst_84 [1] : vector<16x32xf32> to vector<16xf32>
    %173 = vector.shape_cast %172 : vector<16xf32> to vector<16x1xf32>
    %cst_85 = arith.constant 3.200000e+01 : f32
    %174 = vector.broadcast %cst_85 : f32 to vector<16x1xf32>
    %175 = arith.divf %173, %174 : vector<16x1xf32>
    %176 = vector.broadcast %175 : vector<16x1xf32> to vector<16x32xf32>
    %177 = arith.subf %169, %176 : vector<16x32xf32>
    %178 = arith.mulf %177, %177 : vector<16x32xf32>
    %cst_86 = arith.constant dense<0.000000e+00> : vector<16xf32>
    %179 = vector.multi_reduction <add>, %178, %cst_86 [1] : vector<16x32xf32> to vector<16xf32>
    %180 = vector.shape_cast %179 : vector<16xf32> to vector<16x1xf32>
    %cst_87 = arith.constant 3.200000e+01 : f32
    %181 = vector.broadcast %cst_87 : f32 to vector<16x1xf32>
    %182 = arith.divf %180, %181 : vector<16x1xf32>
    %183 = vector.broadcast %175 : vector<16x1xf32> to vector<16x32xf32>
    %184 = arith.subf %169, %183 : vector<16x32xf32>
    %cst_88 = arith.constant 9.99999974E-6 : f32
    %185 = vector.broadcast %cst_88 : f32 to vector<16x1xf32>
    %186 = arith.addf %182, %185 : vector<16x1xf32>
    %187 = math.rsqrt %186 : vector<16x1xf32>
    %188 = vector.broadcast %187 : vector<16x1xf32> to vector<16x32xf32>
    %189 = arith.mulf %184, %188 : vector<16x32xf32>
    %190 = vector.broadcast %170 : vector<1x32xf32> to vector<16x32xf32>
    %191 = arith.mulf %189, %190 : vector<16x32xf32>
    %192 = vector.broadcast %171 : vector<1x32xf32> to vector<16x32xf32>
    %193 = arith.addf %191, %192 : vector<16x32xf32>
    %c0_89 = arith.constant 0 : index
    %c0_90 = arith.constant 0 : index
    %c0_91 = arith.constant 0 : index
    %194 = vector.load %arg21[%c0_89, %c0_90, %c0_91] : memref<1x16x32xf32, #tpu.memory_space<vmem>>, vector<1x16x32xf32>
    %195 = vector.shape_cast %194 : vector<1x16x32xf32> to vector<16x32xf32>
    %196 = vector.shape_cast %193 : vector<16x32xf32> to vector<1x16x32xf32>
    tpu.vector_store %arg21[%c0_89, %c0_90, %c0_91], %196 {strides = array<i32>} : memref<1x16x32xf32, #tpu.memory_space<vmem>>, vector<1x16x32xf32>,
    return
  }
  func.func @transform_0(%arg0: i32) -> (i32, i32, i32) {
    %c0_i32 = arith.constant 0 : i32
    %c0_i32_0 = arith.constant 0 : i32
    %c0_i32_1 = arith.constant 0 : i32
    return %arg0, %c0_i32, %c0_i32_0 : i32, i32, i32
  }
  func.func @transform_1(%arg0: i32) -> (i32, i32, i32) {
    %c0_i32 = arith.constant 0 : i32
    %c0_i32_0 = arith.constant 0 : i32
    %c0_i32_1 = arith.constant 0 : i32
    return %arg0, %c0_i32, %c0_i32_0 : i32, i32, i32
  }
  func.func @transform_2(%arg0: i32) -> (i32, i32, i32) {
    %c0_i32 = arith.constant 0 : i32
    %c0_i32_0 = arith.constant 0 : i32
    %c0_i32_1 = arith.constant 0 : i32
    %c0_i32_2 = arith.constant 0 : i32
    return %c0_i32, %c0_i32_0, %c0_i32_1 : i32, i32, i32
  }
  func.func @transform_3(%arg0: i32) -> (i32, i32, i32) {
    %c0_i32 = arith.constant 0 : i32
    %c0_i32_0 = arith.constant 0 : i32
    %c0_i32_1 = arith.constant 0 : i32
    return %arg0, %c0_i32, %c0_i32_0 : i32, i32, i32
  }
  func.func @transform_4(%arg0: i32) -> (i32, i32) {
    %c0_i32 = arith.constant 0 : i32
    %c0_i32_0 = arith.constant 0 : i32
    %c0_i32_1 = arith.constant 0 : i32
    return %c0_i32, %c0_i32_0 : i32, i32
  }
  func.func @transform_5(%arg0: i32) -> (i32, i32) {
    %c0_i32 = arith.constant 0 : i32
    %c0_i32_0 = arith.constant 0 : i32
    %c0_i32_1 = arith.constant 0 : i32
    return %c0_i32, %c0_i32_0 : i32, i32
  }
  func.func @transform_6(%arg0: i32) -> (i32, i32) {
    %c0_i32 = arith.constant 0 : i32
    %c0_i32_0 = arith.constant 0 : i32
    %c0_i32_1 = arith.constant 0 : i32
    return %c0_i32, %c0_i32_0 : i32, i32
  }
  func.func @transform_7(%arg0: i32) -> (i32, i32) {
    %c0_i32 = arith.constant 0 : i32
    %c0_i32_0 = arith.constant 0 : i32
    %c0_i32_1 = arith.constant 0 : i32
    return %c0_i32, %c0_i32_0 : i32, i32
  }
  func.func @transform_8(%arg0: i32) -> (i32, i32) {
    %c0_i32 = arith.constant 0 : i32
    %c0_i32_0 = arith.constant 0 : i32
    %c0_i32_1 = arith.constant 0 : i32
    return %c0_i32, %c0_i32_0 : i32, i32
  }
  func.func @transform_9(%arg0: i32) -> (i32, i32) {
    %c0_i32 = arith.constant 0 : i32
    %c0_i32_0 = arith.constant 0 : i32
    %c0_i32_1 = arith.constant 0 : i32
    return %c0_i32, %c0_i32_0 : i32, i32
  }
  func.func @transform_10(%arg0: i32) -> (i32, i32) {
    %c0_i32 = arith.constant 0 : i32
    %c0_i32_0 = arith.constant 0 : i32
    %c0_i32_1 = arith.constant 0 : i32
    return %c0_i32, %c0_i32_0 : i32, i32
  }
  func.func @transform_11(%arg0: i32) -> (i32, i32) {
    %c0_i32 = arith.constant 0 : i32
    %c0_i32_0 = arith.constant 0 : i32
    %c0_i32_1 = arith.constant 0 : i32
    return %c0_i32, %c0_i32_0 : i32, i32
  }
  func.func @transform_12(%arg0: i32) -> (i32, i32) {
    %c0_i32 = arith.constant 0 : i32
    %c0_i32_0 = arith.constant 0 : i32
    %c0_i32_1 = arith.constant 0 : i32
    return %c0_i32, %c0_i32_0 : i32, i32
  }
  func.func @transform_13(%arg0: i32) -> (i32, i32) {
    %c0_i32 = arith.constant 0 : i32
    %c0_i32_0 = arith.constant 0 : i32
    %c0_i32_1 = arith.constant 0 : i32
    return %c0_i32, %c0_i32_0 : i32, i32
  }
  func.func @transform_14(%arg0: i32) -> (i32, i32) {
    %c0_i32 = arith.constant 0 : i32
    %c0_i32_0 = arith.constant 0 : i32
    %c0_i32_1 = arith.constant 0 : i32
    return %c0_i32, %c0_i32_0 : i32, i32
  }
  func.func @transform_15(%arg0: i32) -> (i32, i32) {
    %c0_i32 = arith.constant 0 : i32
    %c0_i32_0 = arith.constant 0 : i32
    %c0_i32_1 = arith.constant 0 : i32
    return %c0_i32, %c0_i32_0 : i32, i32
  }
  func.func @transform_16(%arg0: i32) -> (i32, i32) {
    %c0_i32 = arith.constant 0 : i32
    %c0_i32_0 = arith.constant 0 : i32
    %c0_i32_1 = arith.constant 0 : i32
    return %c0_i32, %c0_i32_0 : i32, i32
  }
  func.func @transform_17(%arg0: i32) -> (i32, i32) {
    %c0_i32 = arith.constant 0 : i32
    %c0_i32_0 = arith.constant 0 : i32
    %c0_i32_1 = arith.constant 0 : i32
    return %c0_i32, %c0_i32_0 : i32, i32
  }
  func.func @transform_18(%arg0: i32) -> (i32, i32) {
    %c0_i32 = arith.constant 0 : i32
    %c0_i32_0 = arith.constant 0 : i32
    %c0_i32_1 = arith.constant 0 : i32
    return %c0_i32, %c0_i32_0 : i32, i32
  }
  func.func @transform_19(%arg0: i32) -> (i32, i32) {
    %c0_i32 = arith.constant 0 : i32
    %c0_i32_0 = arith.constant 0 : i32
    %c0_i32_1 = arith.constant 0 : i32
    return %c0_i32, %c0_i32_0 : i32, i32
  }
  func.func @transform_20(%arg0: i32) -> (i32, i32, i32) {
    %c0_i32 = arith.constant 0 : i32
    %c0_i32_0 = arith.constant 0 : i32
    %c0_i32_1 = arith.constant 0 : i32
    return %arg0, %c0_i32, %c0_i32_0 : i32, i32, i32
  }
}

</mosaic_0001>

<llo_original>
// kernel: forward_pallas.4
$region0: #{forward_pallas.4}
  #allocation0 [shape = 'u32[]', space=smem, size = 0x4, offset = 0x4, fixed_abs, tag = 'smem constant byte address 0x4 - core index']
  #allocation1 [shape = 'u32[144,128]{1,0:T(1,128)}', space=vmem, size = 0x12000, scoped, tag = 'internal scratch']
  %s0 = inlined_call_operand.vmem [shape: f32[2,16,64], index: 0, kind: input, shape index: {}]
  %s1 = inlined_call_operand.vmem [shape: f32[64,32], index: 1, kind: input, shape index: {}]
  %s2 = inlined_call_operand.vmem [shape: f32[1,32], index: 2, kind: input, shape index: {}]
  %s3 = inlined_call_operand.vmem [shape: f32[1,32], index: 3, kind: input, shape index: {}]
  %s4 = inlined_call_operand.vmem [shape: f32[1,32], index: 4, kind: input, shape index: {}]
  %s5 = inlined_call_operand.vmem [shape: f32[2,16,32], index: 5, kind: output, shape index: {}]
  %s6 = sld [smem:[#allocation0]]
  $region53: #{forward_pallas.4} parent=0
    _
  %s8 = ssub.s32 1, %s6
  %s9 = scalar_select 0, %s8, %s6
  loop: start=0, step=1, limit=4
  $region2: #{forward_pallas.4} parent=0 // loop_pre_header
    _
  $region3: #{forward_pallas.4} parent=0 // loop_header
    %s11 = sphi 0, %s15
    %p12 = scmp.ge.s32.totalorder %s11, 4
    %s21 = sphi 0, %s23
    %s24 = sphi 0, %s21
    %s25 = sphi 0, %s24
    %s41 = sphi 0, %s25
    %s45 = sphi 0, %s45
    %s47 = sphi 0, %s45
    %s48 = sphi 0, %s47
    %s62 = sphi 0, %s48
    %s66 = sphi 0, %s66
    %s68 = sphi 0, %s66
    %s69 = sphi 0, %s68
    %s83 = sphi 0, %s69
    %s87 = sphi 0, %s87
    %s89 = sphi 0, %s87
    %s90 = sphi 0, %s89
    %s104 = sphi 0, %s90
    %s108 = sphi 0, %s108
    %s110 = sphi 0, %s108
    %s111 = sphi 0, %s110
    %s125 = sphi 0, %s111
    %s131 = sphi 0, %s133
    %s134 = sphi 0, %s131
    %s135 = sphi 0, %s134
    %s151 = sphi 0, %s135
  $region4: #{forward_pallas.4} parent=0 // loop_header_branch
    %14 = sbr.rel (%p12) target = $region8
  $region5: #{forward_pallas.4} parent=0 // loop_body
    %s16 = ssub.s32 %s11, 1
    %s17 = ssub.s32 %s11, 2
    %s18 = sadd.s32 %s11, 1
    %s19 = ssub.s32 %s11, %s18
    %p20 = scmp.eq.s32.totalorder %s19, 0
    %s22 = sadd.s32 %s21, 1
    %s23 = scalar_select %p20, %s21, %s22
    %p26 = pneg %p20
    %p27 = scmp.eq.s32.totalorder %s11, 1
    %p28 = por %p26, %p27
    %p29 = scmp.ne.s32.totalorder %s21, %s24
    %p30 = scmp.eq.s32.totalorder %s11, 0
    %p31 = por %p29, %p30
    %p32 = scmp.ne.s32.totalorder %s21, %s24
    %p33 = scmp.eq.s32.totalorder %s16, 1
    %p34 = por %p32, %p33
    %p35 = scmp.ne.s32.totalorder %s24, %s25
    %p36 = scmp.eq.s32.totalorder %s16, 0
    %p37 = por %p35, %p36
    %p38 = scmp.ne.s32.totalorder %s24, %s25
    %p39 = scmp.eq.s32.totalorder %s17, 1
    %p40 = por %p38, %p39
    %p42 = scmp.ne.s32.totalorder %s25, %s41
    %p43 = scmp.eq.s32.totalorder %s17, 0
    %p44 = por %p42, %p43
    %s46 = sadd.s32 %s45, 1
    %p49 = scmp.eq.s32.totalorder %s11, 1
    %p50 = scmp.ne.s32.totalorder %s45, %s47
    %p51 = scmp.eq.s32.totalorder %s11, 0
    %p52 = por %p50, %p51
    %p53 = scmp.ne.s32.totalorder %s45, %s47
    %p54 = scmp.eq.s32.totalorder %s16, 1
    %p55 = por %p53, %p54
    %p56 = scmp.ne.s32.totalorder %s47, %s48
    %p57 = scmp.eq.s32.totalorder %s16, 0
    %p58 = por %p56, %p57
    %p59 = scmp.ne.s32.totalorder %s47, %s48
    %p60 = scmp.eq.s32.totalorder %s17, 1
    %p61 = por %p59, %p60
    %p63 = scmp.ne.s32.totalorder %s48, %s62
    %p64 = scmp.eq.s32.totalorder %s17, 0
    %p65 = por %p63, %p64
    %s67 = sadd.s32 %s66, 1
    %p70 = scmp.eq.s32.totalorder %s11, 1
    %p71 = scmp.ne.s32.totalorder %s66, %s68
    %p72 = scmp.eq.s32.totalorder %s11, 0
    %p73 = por %p71, %p72
    %p74 = scmp.ne.s32.totalorder %s66, %s68
    %p75 = scmp.eq.s32.totalorder %s16, 1
    %p76 = por %p74, %p75
    %p77 = scmp.ne.s32.totalorder %s68, %s69
    %p78 = scmp.eq.s32.totalorder %s16, 0
    %p79 = por %p77, %p78
    %p80 = scmp.ne.s32.totalorder %s68, %s69
    %p81 = scmp.eq.s32.totalorder %s17, 1
    %p82 = por %p80, %p81
    %p84 = scmp.ne.s32.totalorder %s69, %s83
    %p85 = scmp.eq.s32.totalorder %s17, 0
    %p86 = por %p84, %p85
    %s88 = sadd.s32 %s87, 1
    %p91 = scmp.eq.s32.totalorder %s11, 1
    %p92 = scmp.ne.s32.totalorder %s87, %s89
    %p93 = scmp.eq.s32.totalorder %s11, 0
    %p94 = por %p92, %p93
    %p95 = scmp.ne.s32.totalorder %s87, %s89
    %p96 = scmp.eq.s32.totalorder %s16, 1
    %p97 = por %p95, %p96
    %p98 = scmp.ne.s32.totalorder %s89, %s90
    %p99 = scmp.eq.s32.totalorder %s16, 0
    %p100 = por %p98, %p99
    %p101 = scmp.ne.s32.totalorder %s89, %s90
    %p102 = scmp.eq.s32.totalorder %s17, 1
    %p103 = por %p101, %p102
    %p105 = scmp.ne.s32.totalorder %s90, %s104
    %p106 = scmp.eq.s32.totalorder %s17, 0
    %p107 = por %p105, %p106
    %s109 = sadd.s32 %s108, 1
    %p112 = scmp.eq.s32.totalorder %s11, 1
    %p113 = scmp.ne.s32.totalorder %s108, %s110
    %p114 = scmp.eq.s32.totalorder %s11, 0
    %p115 = por %p113, %p114
    %p116 = scmp.ne.s32.totalorder %s108, %s110
    %p117 = scmp.eq.s32.totalorder %s16, 1
    %p118 = por %p116, %p117
    %p119 = scmp.ne.s32.totalorder %s110, %s111
    %p120 = scmp.eq.s32.totalorder %s16, 0
    %p121 = por %p119, %p120
    %p122 = scmp.ne.s32.totalorder %s110, %s111
    %p123 = scmp.eq.s32.totalorder %s17, 1
    %p124 = por %p122, %p123
    %p126 = scmp.ne.s32.totalorder %s111, %s125
    %p127 = scmp.eq.s32.totalorder %s17, 0
    %p128 = por %p126, %p127
    %s129 = ssub.s32 %s11, %s18
    %p130 = scmp.eq.s32.totalorder %s129, 0
    %s132 = sadd.s32 %s131, 1
    %s133 = scalar_select %p130, %s131, %s132
    %p136 = pneg %p130
    %p137 = scmp.eq.s32.totalorder %s11, 1
    %p138 = por %p136, %p137
    %p139 = scmp.ne.s32.totalorder %s131, %s134
    %p140 = scmp.eq.s32.totalorder %s11, 0
    %p141 = por %p139, %p140
    %p142 = scmp.ne.s32.totalorder %s131, %s134
    %p143 = scmp.eq.s32.totalorder %s16, 1
    %p144 = por %p142, %p143
    %p145 = scmp.ne.s32.totalorder %s134, %s135
    %p146 = scmp.eq.s32.totalorder %s16, 0
    %p147 = por %p145, %p146
    %p148 = scmp.ne.s32.totalorder %s134, %s135
    %p149 = scmp.eq.s32.totalorder %s17, 1
    %p150 = por %p148, %p149
    %p152 = scmp.ne.s32.totalorder %s135, %s151
    %p153 = scmp.eq.s32.totalorder %s17, 0
    %p154 = por %p152, %p153
    %p155 = scmp.le.s32.totalorder 1, %s11
    %p156 = scmp.lt.s32.totalorder %s11, 3
    %p157 = pnand %p155, %p156
    %p158 = pneg %p157
    // Predicated region
    $region9: #{forward_pallas.4} parent=5 // pred_check
      _
    $region10: #{forward_pallas.4} parent=5 // pred_check_branch
      %160 = sbr.rel (%p157) target = $region12
    $region11: #{forward_pallas.4} parent=5 // pred_region
      %s161 = ssub.s32 %s11, 1
      // Predicated region
      $region13: #{forward_pallas.4} parent=11 // pred_check
        %p162 = pneg %p58
      $region14: #{forward_pallas.4} parent=11 // pred_check_branch
        %164 = sbr.rel (%p162) target = $region16
      $region15: #{forward_pallas.4} parent=11 // pred_region
        _
      $region16: #{forward_pallas.4} parent=11 // pred_fallthru
        _
      // Predicated region
      $region17: #{forward_pallas.4} parent=11 // pred_check
        %p165 = pneg %p79
      $region18: #{forward_pallas.4} parent=11 // pred_check_branch
        %167 = sbr.rel (%p165) target = $region20
      $region19: #{forward_pallas.4} parent=11 // pred_region
        _
      $region20: #{forward_pallas.4} parent=11 // pred_fallthru
        _
      // Predicated region
      $region21: #{forward_pallas.4} parent=11 // pred_check
        %p168 = pneg %p100
      $region22: #{forward_pallas.4} parent=11 // pred_check_branch
        %170 = sbr.rel (%p168) target = $region24
      $region23: #{forward_pallas.4} parent=11 // pred_region
        _
      $region24: #{forward_pallas.4} parent=11 // pred_fallthru
        _
      // Predicated region
      $region25: #{forward_pallas.4} parent=11 // pred_check
        %p171 = pneg %p121
      $region26: #{forward_pallas.4} parent=11 // pred_check_branch
        %173 = sbr.rel (%p171) target = $region28
      $region27: #{forward_pallas.4} parent=11 // pred_region
        _
      $region28: #{forward_pallas.4} parent=11 // pred_fallthru
        _
    $region12: #{forward_pallas.4} parent=5 // pred_fallthru
      _
    %p174 = scmp.lt.s32.totalorder %s11, 2
    // Predicated region
    $region29: #{forward_pallas.4} parent=5 // pred_check
      %p175 = pneg %p174
    $region30: #{forward_pallas.4} parent=5 // pred_check_branch
      %177 = sbr.rel (%p175) target = $region32
    $region31: #{forward_pallas.4} parent=5 // pred_region
      // Predicated region
      $region33: #{forward_pallas.4} parent=31 // pred_check
        %p178 = pneg %p31
      $region34: #{forward_pallas.4} parent=31 // pred_check_branch
        %180 = sbr.rel (%p178) target = $region36
      $region35: #{forward_pallas.4} parent=31 // pred_region
        %p181 = scmp.lt.s32.totalorder %s11, 1
        %s182 = scalar_select %p181, %s11, 1
        %s183 = smul.addr %s182, 2
        %s184 = smul.addr %s183, 8
        %s185 = scalar_lea.vmem %s0, %s184
      $region36: #{forward_pallas.4} parent=31 // pred_fallthru
        _
    $region32: #{forward_pallas.4} parent=5 // pred_fallthru
      _
    %p186 = scmp.le.s32.totalorder 1, %s11
    %p187 = scmp.lt.s32.totalorder %s11, 3
    %p188 = pnand %p186, %p187
    %p189 = pneg %p188
    // Predicated region
    $region37: #{forward_pallas.4} parent=5 // pred_check
      _
    $region38: #{forward_pallas.4} parent=5 // pred_check_branch
      %191 = sbr.rel (%p188) target = $region40
    $region39: #{forward_pallas.4} parent=5 // pred_region
      %s192 = ssub.s32 %s11, 1
      %p193 = scmp.lt.s32.totalorder %s16, 1
      %s194 = scalar_select %p193, %s16, 1
      %s195 = smul.addr %s194, 2
      %s196 = smul.addr %s195, 8
      %s197 = scalar_lea.vmem %s0, %s196
      %p198 = pneg %p37
      %p199 = pneg %p34
      %p200 = pneg %p58
      %p201 = pneg %p55
      %p202 = pneg %p79
      %p203 = pneg %p76
      %p204 = pneg %p100
      %p205 = pneg %p97
      %p206 = pneg %p121
      %p207 = pneg %p118
      %p208 = pneg %p147
      %p209 = pneg %p144
      %p210 = scmp.lt.s32.totalorder %s16, 1
      %s211 = scalar_select %p210, %s16, 1
      %s212 = smul.addr %s211, 2
      %s213 = smul.addr %s212, 8
      %s214 = scalar_lea.vmem %s5, %s213
      %p215 = scmp.lt.s32.totalorder %s16, 1
      %s216 = scalar_select %p215, %s16, 1
      %s217 = smul.addr %s216, 2
      %s218 = smul.addr %s217, 8
      %s219 = scalar_lea.vmem %s0, %s218
      %p220 = scmp.lt.s32.totalorder %s16, 1
      %s221 = scalar_select %p220, %s16, 1
      %s222 = smul.addr %s221, 2
      %s223 = smul.addr %s222, 8
      %s224 = scalar_lea.vmem %s5, %s223
      %v225 = vld [vmem:[%s219] sm:$0xff]
      %v226 = vld [vmem:[%s219 + $0x8] sm:$0xff]
      %vm227 = vcmask 523264
      %v228 = vsel %vm227, %v225, 0.0
      %229 = vadd.xlane.f32.xlu0 %v228
      %v230 = vpop.xlane.xlu0 %229
      %v231 = vsel %vm227, %v226, 0.0
      %232 = vadd.xlane.f32.xlu0 %v231
      %v233 = vpop.xlane.xlu0 %232
      %vm234 = vcmp.eq.f32.partialorder %v230, 0.0
      %vm235 = vcmp.eq.f32.partialorder %v233, 0.0
      %v236 = vld [vmem:[%s1] sm:$0xff]
      %v237 = vld [vmem:[%s1 + $0x8] sm:$0xff]
      %v238 = vld [vmem:[%s1 + $0x10] sm:$0xff]
      %v239 = vld [vmem:[%s1 + $0x18] sm:$0xff]
      %v240 = vld [vmem:[%s1 + $0x20] sm:$0xff]
      %v241 = vld [vmem:[%s1 + $0x28] sm:$0xff]
      %v242 = vld [vmem:[%s1 + $0x30] sm:$0xff]
      %v243 = vld [vmem:[%s1 + $0x38] sm:$0xff]
      %v244 = vld [vmem:[%s2] sm:$0x1]
      %v246 = vlaneseq
      %v247 = vshrl.u32 %v246, 7
      %v248 = vsub.s32 0, %v247
      %v249 = vrot.slane %v244, %v248
      %v252 = vsel %vm227, %v225, 0
      %v255 = vsel %vm227, %v226, 0
      %257 = vmatprep.subr.mxu0 0.0
      %258 = vmatpush1.msra.mxu0 %v236
      %259 = vmatprep.subr.mxu0 0.0
      %260 = vmatpush1.msra.mxu0 %v237
      %261 = vmatprep.subr.mxu0 0.0
      %262 = vmatpush1.msra.mxu0 %v238
      %263 = vmatprep.subr.mxu0 0.0
      %264 = vmatpush1.msra.mxu0 %v239
      %265 = vmatprep.subr.mxu0 0.0
      %266 = vmatpush1.msra.mxu0 %v240
      %267 = vmatprep.subr.mxu0 0.0
      %268 = vmatpush1.msra.mxu0 %v241
      %269 = vmatprep.subr.mxu0 0.0
      %270 = vmatpush1.msra.mxu0 %v242
      %271 = vmatprep.subr.mxu0 0.0
      %272 = vmatpush1.msra.mxu0 %v243
      %273 = vmatprep.subr.mxu0 0.0
      %274 = vmatpush1.msra.mxu0 0.0
      %275 = vmatprep.subr.mxu0 0.0
      %276 = vmatpush1.msra.mxu0 0.0
      %277 = vmatprep.subr.mxu0 0.0
      %278 = vmatpush1.msra.mxu0 0.0
      %279 = vmatprep.subr.mxu0 0.0
      %280 = vmatpush1.msra.mxu0 0.0
      %281 = vmatprep.subr.mxu0 0.0
      %282 = vmatpush1.msra.mxu0 0.0
      %283 = vmatprep.subr.mxu0 0.0
      %284 = vmatpush1.msra.mxu0 0.0
      %285 = vmatprep.subr.mxu0 0.0
      %286 = vmatpush1.msra.mxu0 0.0
      %287 = vmatprep.subr.mxu0 0.0
      %288 = vmatpush1.msra.mxu0 0.0
      %289 = vmatprep.subr.mxu0 0.0
      %290 = vmatpush1.msra.mxu0 0.0
      %291 = vmatprep.subr.mxu0 0.0
      %292 = vmatpush1.msra.mxu0 0.0
      %293 = vmatprep.subr.mxu0 0.0
      %294 = vmatpush1.msra.mxu0 0.0
      %295 = vmatprep.subr.mxu0 0.0
      %296 = vmatpush1.msra.mxu0 0.0
      %297 = vmatprep.subr.mxu0 0.0
      %298 = vmatpush1.msra.mxu0 0.0
      %299 = vmatprep.subr.mxu0 0.0
      %300 = vmatpush1.msra.mxu0 0.0
      %301 = vmatprep.subr.mxu0 0.0
      %302 = vmatpush1.msra.mxu0 0.0
      %303 = vmatprep.subr.mxu0 0.0
      %304 = vmatpush1.msra.mxu0 0.0
      %305 = vmatprep.subr.mxu0 0.0
      %306 = vmatpush1.msra.mxu0 0.0
      %307 = vmatprep.subr.mxu0 0.0
      %308 = vmatpush1.msra.mxu0 0.0
      %309 = vmatprep.subr.mxu0 0.0
      %310 = vmatpush1.msra.mxu0 0.0
      %311 = vmatprep.subr.mxu0 0.0
      %312 = vmatpush1.msra.mxu0 0.0
      %313 = vmatprep.subr.mxu0 0.0
      %314 = vmatpush1.msra.mxu0 0.0
      %315 = vmatprep.subr.mxu0 0.0
      %316 = vmatpush1.msra.mxu0 0.0
      %317 = vmatprep.subr.mxu0 0.0
      %318 = vmatpush1.msra.mxu0 0.0
      %319 = vmatprep.subr.mxu0 0.0
      %320 = vmatpush1.msra.mxu0 0.0
      %321 = vmatprep.mubr.f32.mxu0 0.0
      %322 = vmatmul.mubr.f32.gmra.mrb[0].mxu0 %v252
      %v323 = vpop.f32.mrb[0].mxu0
      %v324 = vadd.f32 %v249, %v323
      %v325 = vpop.f32.mrb[0].mxu0
      %326 = vmatprep.mubr.f32.mxu0 0.0
      %327 = vmatmul.mubr.f32.gmra.mrb[0].mxu0 %v255
      %v328 = vpop.f32.mrb[0].mxu0
      %v329 = vadd.f32 %v249, %v328
      %v330 = vpop.f32.mrb[0].mxu0
      %331 = vdwg.mxu0
      %v332 = vmax.f32 %v324, 0.0
      %v333 = vmax.f32 %v329, 0.0
      %v334 = vld [vmem:[%s3] sm:$0x1]
      %v335 = vld [vmem:[%s4] sm:$0x1]
      %vm336 = vcmask 261120
      %v337 = vsel %vm336, %v332, 0.0
      %338 = vadd.xlane.f32.xlu0 %v337
      %v339 = vpop.xlane.xlu0 %338
      %v340 = vsel %vm336, %v333, 0.0
      %341 = vadd.xlane.f32.xlu0 %v340
      %v342 = vpop.xlane.xlu0 %341
      %v343 = vrcp.pop 32.0
      %v344 = vmul.f32 %v339, %v343
      %v345 = vmul.f32 %v342, %v343
      %v346 = vsub.f32 %v332, %v344
      %v347 = vsub.f32 %v333, %v345
      %v348 = vmul.f32 %v346, %v346
      %v349 = vmul.f32 %v347, %v347
      %v350 = vsel %vm336, %v348, 0.0
      %351 = vadd.xlane.f32.xlu0 %v350
      %v352 = vpop.xlane.xlu0 %351
      %v353 = vsel %vm336, %v349, 0.0
      %354 = vadd.xlane.f32.xlu0 %v353
      %v355 = vpop.xlane.xlu0 %354
      %v356 = vmul.f32 %v352, %v343
      %v357 = vmul.f32 %v355, %v343
      %v358 = vadd.f32 %v356, 1e-05
      %v359 = vadd.f32 %v357, 1e-05
      %v360 = vrsqrt.pop %v358
      %v361 = vrsqrt.pop %v359
      %v362 = vmul.f32 %v346, %v360
      %v363 = vmul.f32 %v347, %v361
      %v365 = vlaneseq
      %v366 = vshrl.u32 %v365, 7
      %v367 = vsub.s32 0, %v366
      %v368 = vrot.slane %v334, %v367
      %v370 = vmul.f32 %v362, %v368
      %v371 = vmul.f32 %v363, %v368
      %v373 = vlaneseq
      %v374 = vshrl.u32 %v373, 7
      %v375 = vsub.s32 0, %v374
      %v376 = vrot.slane %v335, %v375
      %v378 = vadd.f32 %v370, %v376
      %v379 = vadd.f32 %v371, %v376
      %v380 = vsel %vm234, 1, 0
      %v381 = vsel %vm235, 1, 0
      %vm382 = vcmp.eq.s32.totalorder %v380, 1
      %vm383 = vcmp.eq.s32.totalorder %v381, 1
      %v384 = vsel %vm382, 0.0, %v378
      %v385 = vsel %vm383, 0.0, %v379
      %386 = vst.msk [vmem:[%s224] sm:$0xff] %vm336, %v384
      %387 = vst.msk [vmem:[%s224 + $0x8] sm:$0xff] %vm336, %v385
      %p388 = scmp.lt.s32.totalorder %s16, 1
      %s389 = scalar_select %p388, %s16, 1
      %s390 = smul.addr %s389, 2
      %s391 = smul.addr %s390, 8
      %s392 = scalar_lea.vmem %s5, %s391
      // Predicated region
      $region41: #{forward_pallas.4} parent=39 // pred_check
        %p393 = pneg %p144
      $region42: #{forward_pallas.4} parent=39 // pred_check_branch
        %395 = sbr.rel (%p393) target = $region44
      $region43: #{forward_pallas.4} parent=39 // pred_region
        _
      $region44: #{forward_pallas.4} parent=39 // pred_fallthru
        _
    $region40: #{forward_pallas.4} parent=5 // pred_fallthru
      _
    %p396 = scmp.le.s32.totalorder 2, %s11
    // Predicated region
    $region45: #{forward_pallas.4} parent=5 // pred_check
      %p397 = pneg %p396
    $region46: #{forward_pallas.4} parent=5 // pred_check_branch
      %399 = sbr.rel (%p397) target = $region48
    $region47: #{forward_pallas.4} parent=5 // pred_region
      %s400 = ssub.s32 %s11, 2
      // Predicated region
      $region49: #{forward_pallas.4} parent=47 // pred_check
        %p401 = pneg %p150
      $region50: #{forward_pallas.4} parent=47 // pred_check_branch
        %403 = sbr.rel (%p401) target = $region52
      $region51: #{forward_pallas.4} parent=47 // pred_region
        %p404 = scmp.lt.s32.totalorder %s17, 1
        %s405 = scalar_select %p404, %s17, 1
        %s406 = smul.addr %s405, 2
        %s407 = smul.addr %s406, 8
        %s408 = scalar_lea.vmem %s5, %s407
      $region52: #{forward_pallas.4} parent=47 // pred_fallthru
        _
    $region48: #{forward_pallas.4} parent=5 // pred_fallthru
      _
  $region6: #{forward_pallas.4} parent=0 // loop_footer
    %s15 = sadd.s32 1, %s11
  $region7: #{forward_pallas.4} parent=0 // loop_footer_branch
    %10 = sbr.rel target = $region3
  $region8: #{forward_pallas.4} parent=0 // loop_exit
    _

// kernel: forward_pallas.5
$region0: #{forward_pallas.5}
  #allocation0 [shape = 'u32[]', space=smem, size = 0x4, offset = 0x4, fixed_abs, tag = 'smem constant byte address 0x4 - core index']
  #allocation1 [shape = 'u32[144,128]{1,0:T(1,128)}', space=vmem, size = 0x12000, scoped, tag = 'internal scratch']
  %s0 = inlined_call_operand.vmem [shape: f32[16,16,64], index: 0, kind: input, shape index: {}]
  %s1 = inlined_call_operand.vmem [shape: f32[4,64], index: 1, kind: input, shape index: {}]
  %s2 = inlined_call_operand.vmem [shape: f32[4,1,1], index: 2, kind: input, shape index: {}]
  %s3 = inlined_call_operand.vmem [shape: f32[4,16,16], index: 3, kind: output, shape index: {}]
  %s4 = sld [smem:[#allocation0]]
  $region22: #{forward_pallas.5} parent=0
    _
  %s6 = ssub.s32 1, %s4
  %s7 = scalar_select 0, %s6, %s4
  // Predicated region
  $region2: #{forward_pallas.5} parent=0 // pred_check
    _
  $region3: #{forward_pallas.5} parent=0 // pred_check_branch
    %9 = sbr.rel (0) target = $region5
  $region4: #{forward_pallas.5} parent=0 // pred_region
    _
  $region5: #{forward_pallas.5} parent=0 // pred_fallthru
    _
  // Predicated region
  $region6: #{forward_pallas.5} parent=0 // pred_check
    _
  $region7: #{forward_pallas.5} parent=0 // pred_check_branch
    %11 = sbr.rel (0) target = $region9
  $region8: #{forward_pallas.5} parent=0 // pred_region
    _
  $region9: #{forward_pallas.5} parent=0 // pred_fallthru
    _
  // Predicated region
  $region10: #{forward_pallas.5} parent=0 // pred_check
    _
  $region11: #{forward_pallas.5} parent=0 // pred_check_branch
    %13 = sbr.rel (0) target = $region13
  $region12: #{forward_pallas.5} parent=0 // pred_region
    _
  $region13: #{forward_pallas.5} parent=0 // pred_fallthru
    _
  %v14 = vld [vmem:[%s0] sm:$0xff]
  %v15 = vld [vmem:[%s0 + $0x8] sm:$0xff]
  %v16 = vld [vmem:[%s0 + $0x10] sm:$0xff]
  %v17 = vld [vmem:[%s0 + $0x18] sm:$0xff]
  %v18 = vld [vmem:[%s0 + $0x20] sm:$0xff]
  %v19 = vld [vmem:[%s0 + $0x28] sm:$0xff]
  %v20 = vld [vmem:[%s0 + $0x30] sm:$0xff]
  %v21 = vld [vmem:[%s0 + $0x38] sm:$0xff]
  %v22 = vld [vmem:[%s0 + $0x40] sm:$0xff]
  %v23 = vld [vmem:[%s0 + $0x48] sm:$0xff]
  %v24 = vld [vmem:[%s0 + $0x50] sm:$0xff]
  %v25 = vld [vmem:[%s0 + $0x58] sm:$0xff]
  %v26 = vld [vmem:[%s0 + $0x60] sm:$0xff]
  %v27 = vld [vmem:[%s0 + $0x68] sm:$0xff]
  %v28 = vld [vmem:[%s0 + $0x70] sm:$0xff]
  %v29 = vld [vmem:[%s0 + $0x78] sm:$0xff]
  %v30 = vld [vmem:[%s0 + $0x80] sm:$0xff]
  %v31 = vld [vmem:[%s0 + $0x88] sm:$0xff]
  %v32 = vld [vmem:[%s0 + $0x90] sm:$0xff]
  %v33 = vld [vmem:[%s0 + $0x98] sm:$0xff]
  %v34 = vld [vmem:[%s0 + $0xa0] sm:$0xff]
  %v35 = vld [vmem:[%s0 + $0xa8] sm:$0xff]
  %v36 = vld [vmem:[%s0 + $0xb0] sm:$0xff]
  %v37 = vld [vmem:[%s0 + $0xb8] sm:$0xff]
  %v38 = vld [vmem:[%s0 + $0xc0] sm:$0xff]
  %v39 = vld [vmem:[%s0 + $0xc8] sm:$0xff]
  %v40 = vld [vmem:[%s0 + $0xd0] sm:$0xff]
  %v41 = vld [vmem:[%s0 + $0xd8] sm:$0xff]
  %v42 = vld [vmem:[%s0 + $0xe0] sm:$0xff]
  %v43 = vld [vmem:[%s0 + $0xe8] sm:$0xff]
  %v44 = vld [vmem:[%s0 + $0xf0] sm:$0xff]
  %v45 = vld [vmem:[%s0 + $0xf8] sm:$0xff]
  %v46 = vld [vmem:[%s1] sm:$0x1]
  %v47 = vlaneseq
  %v48 = vshrl.u32 %v47, 7
  %v49 = vsub.s32 0, %v48
  %v50 = vrot.slane %v46, %v49
  %v51 = vmul.f32 %v14, %v50
  %v52 = vmul.f32 %v15, %v50
  %v53 = vmul.f32 %v16, %v50
  %v54 = vmul.f32 %v17, %v50
  %v55 = vmul.f32 %v18, %v50
  %v56 = vmul.f32 %v19, %v50
  %v57 = vmul.f32 %v20, %v50
  %v58 = vmul.f32 %v21, %v50
  %v59 = vmul.f32 %v22, %v50
  %v60 = vmul.f32 %v23, %v50
  %v61 = vmul.f32 %v24, %v50
  %v62 = vmul.f32 %v25, %v50
  %v63 = vmul.f32 %v26, %v50
  %v64 = vmul.f32 %v27, %v50
  %v65 = vmul.f32 %v28, %v50
  %v66 = vmul.f32 %v29, %v50
  %v67 = vmul.f32 %v30, %v50
  %v68 = vmul.f32 %v31, %v50
  %v69 = vmul.f32 %v32, %v50
  %v70 = vmul.f32 %v33, %v50
  %v71 = vmul.f32 %v34, %v50
  %v72 = vmul.f32 %v35, %v50
  %v73 = vmul.f32 %v36, %v50
  %v74 = vmul.f32 %v37, %v50
  %v75 = vmul.f32 %v38, %v50
  %v76 = vmul.f32 %v39, %v50
  %v77 = vmul.f32 %v40, %v50
  %v78 = vmul.f32 %v41, %v50
  %v79 = vmul.f32 %v42, %v50
  %v80 = vmul.f32 %v43, %v50
  %v81 = vmul.f32 %v44, %v50
  %v82 = vmul.f32 %v45, %v50
  %vm83 = vcmask 523264
  %v84 = vsel %vm83, %v51, 0.0
  %85 = vadd.xlane.f32.xlu0 %v84
  %v86 = vpop.xlane.xlu0 %85
  %v87 = vsel %vm83, %v52, 0.0
  %88 = vadd.xlane.f32.xlu0 %v87
  %v89 = vpop.xlane.xlu0 %88
  %v90 = vsel %vm83, %v53, 0.0
  %91 = vadd.xlane.f32.xlu0 %v90
  %v92 = vpop.xlane.xlu0 %91
  %v93 = vsel %vm83, %v54, 0.0
  %94 = vadd.xlane.f32.xlu0 %v93
  %v95 = vpop.xlane.xlu0 %94
  %v96 = vsel %vm83, %v55, 0.0
  %97 = vadd.xlane.f32.xlu0 %v96
  %v98 = vpop.xlane.xlu0 %97
  %v99 = vsel %vm83, %v56, 0.0
  %100 = vadd.xlane.f32.xlu0 %v99
  %v101 = vpop.xlane.xlu0 %100
  %v102 = vsel %vm83, %v57, 0.0
  %103 = vadd.xlane.f32.xlu0 %v102
  %v104 = vpop.xlane.xlu0 %103
  %v105 = vsel %vm83, %v58, 0.0
  %106 = vadd.xlane.f32.xlu0 %v105
  %v107 = vpop.xlane.xlu0 %106
  %v108 = vsel %vm83, %v59, 0.0
  %109 = vadd.xlane.f32.xlu0 %v108
  %v110 = vpop.xlane.xlu0 %109
  %v111 = vsel %vm83, %v60, 0.0
  %112 = vadd.xlane.f32.xlu0 %v111
  %v113 = vpop.xlane.xlu0 %112
  %v114 = vsel %vm83, %v61, 0.0
  %115 = vadd.xlane.f32.xlu0 %v114
  %v116 = vpop.xlane.xlu0 %115
  %v117 = vsel %vm83, %v62, 0.0
  %118 = vadd.xlane.f32.xlu0 %v117
  %v119 = vpop.xlane.xlu0 %118
  %v120 = vsel %vm83, %v63, 0.0
  %121 = vadd.xlane.f32.xlu0 %v120
  %v122 = vpop.xlane.xlu0 %121
  %v123 = vsel %vm83, %v64, 0.0
  %124 = vadd.xlane.f32.xlu0 %v123
  %v125 = vpop.xlane.xlu0 %124
  %v126 = vsel %vm83, %v65, 0.0
  %127 = vadd.xlane.f32.xlu0 %v126
  %v128 = vpop.xlane.xlu0 %127
  %v129 = vsel %vm83, %v66, 0.0
  %130 = vadd.xlane.f32.xlu0 %v129
  %v131 = vpop.xlane.xlu0 %130
  %v132 = vsel %vm83, %v67, 0.0
  %133 = vadd.xlane.f32.xlu0 %v132
  %v134 = vpop.xlane.xlu0 %133
  %v135 = vsel %vm83, %v68, 0.0
  %136 = vadd.xlane.f32.xlu0 %v135
  %v137 = vpop.xlane.xlu0 %136
  %v138 = vsel %vm83, %v69, 0.0
  %139 = vadd.xlane.f32.xlu0 %v138
  %v140 = vpop.xlane.xlu0 %139
  %v141 = vsel %vm83, %v70, 0.0
  %142 = vadd.xlane.f32.xlu0 %v141
  %v143 = vpop.xlane.xlu0 %142
  %v144 = vsel %vm83, %v71, 0.0
  %145 = vadd.xlane.f32.xlu0 %v144
  %v146 = vpop.xlane.xlu0 %145
  %v147 = vsel %vm83, %v72, 0.0
  %148 = vadd.xlane.f32.xlu0 %v147
  %v149 = vpop.xlane.xlu0 %148
  %v150 = vsel %vm83, %v73, 0.0
  %151 = vadd.xlane.f32.xlu0 %v150
  %v152 = vpop.xlane.xlu0 %151
  %v153 = vsel %vm83, %v74, 0.0
  %154 = vadd.xlane.f32.xlu0 %v153
  %v155 = vpop.xlane.xlu0 %154
  %v156 = vsel %vm83, %v75, 0.0
  %157 = vadd.xlane.f32.xlu0 %v156
  %v158 = vpop.xlane.xlu0 %157
  %v159 = vsel %vm83, %v76, 0.0
  %160 = vadd.xlane.f32.xlu0 %v159
  %v161 = vpop.xlane.xlu0 %160
  %v162 = vsel %vm83, %v77, 0.0
  %163 = vadd.xlane.f32.xlu0 %v162
  %v164 = vpop.xlane.xlu0 %163
  %v165 = vsel %vm83, %v78, 0.0
  %166 = vadd.xlane.f32.xlu0 %v165
  %v167 = vpop.xlane.xlu0 %166
  %v168 = vsel %vm83, %v79, 0.0
  %169 = vadd.xlane.f32.xlu0 %v168
  %v170 = vpop.xlane.xlu0 %169
  %v171 = vsel %vm83, %v80, 0.0
  %172 = vadd.xlane.f32.xlu0 %v171
  %v173 = vpop.xlane.xlu0 %172
  %v174 = vsel %vm83, %v81, 0.0
  %175 = vadd.xlane.f32.xlu0 %v174
  %v176 = vpop.xlane.xlu0 %175
  %v177 = vsel %vm83, %v82, 0.0
  %178 = vadd.xlane.f32.xlu0 %v177
  %v179 = vpop.xlane.xlu0 %178
  %v180 = vld [vmem:[%s2] sm:$0x1]
  %v182 = vlaneseq
  %v183 = vshrl.u32 %v182, 7
  %v184 = vsub.s32 0, %v183
  %v185 = vrot.slane %v180, %v184
  %186 = vset.pattern.permute.xlu0 0
  %187 = vperm.xlu0 %186, %v185
  %v188 = vpop.permute.xlu0 %187
  %v190 = vadd.f32 %v86, %v188
  %v191 = vadd.f32 %v89, %v188
  %v192 = vadd.f32 %v92, %v188
  %v193 = vadd.f32 %v95, %v188
  %v194 = vadd.f32 %v98, %v188
  %v195 = vadd.f32 %v101, %v188
  %v196 = vadd.f32 %v104, %v188
  %v197 = vadd.f32 %v107, %v188
  %v198 = vadd.f32 %v110, %v188
  %v199 = vadd.f32 %v113, %v188
  %v200 = vadd.f32 %v116, %v188
  %v201 = vadd.f32 %v119, %v188
  %v202 = vadd.f32 %v122, %v188
  %v203 = vadd.f32 %v125, %v188
  %v204 = vadd.f32 %v128, %v188
  %v205 = vadd.f32 %v131, %v188
  %v206 = vadd.f32 %v134, %v188
  %v207 = vadd.f32 %v137, %v188
  %v208 = vadd.f32 %v140, %v188
  %v209 = vadd.f32 %v143, %v188
  %v210 = vadd.f32 %v146, %v188
  %v211 = vadd.f32 %v149, %v188
  %v212 = vadd.f32 %v152, %v188
  %v213 = vadd.f32 %v155, %v188
  %v214 = vadd.f32 %v158, %v188
  %v215 = vadd.f32 %v161, %v188
  %v216 = vadd.f32 %v164, %v188
  %v217 = vadd.f32 %v167, %v188
  %v218 = vadd.f32 %v170, %v188
  %v219 = vadd.f32 %v173, %v188
  %v220 = vadd.f32 %v176, %v188
  %v221 = vadd.f32 %v179, %v188
  %v222 = vmax.f32 %v190, 0.0
  %v223 = vmax.f32 %v191, 0.0
  %v224 = vmax.f32 %v192, 0.0
  %v225 = vmax.f32 %v193, 0.0
  %v226 = vmax.f32 %v194, 0.0
  %v227 = vmax.f32 %v195, 0.0
  %v228 = vmax.f32 %v196, 0.0
  %v229 = vmax.f32 %v197, 0.0
  %v230 = vmax.f32 %v198, 0.0
  %v231 = vmax.f32 %v199, 0.0
  %v232 = vmax.f32 %v200, 0.0
  %v233 = vmax.f32 %v201, 0.0
  %v234 = vmax.f32 %v202, 0.0
  %v235 = vmax.f32 %v203, 0.0
  %v236 = vmax.f32 %v204, 0.0
  %v237 = vmax.f32 %v205, 0.0
  %v238 = vmax.f32 %v206, 0.0
  %v239 = vmax.f32 %v207, 0.0
  %v240 = vmax.f32 %v208, 0.0
  %v241 = vmax.f32 %v209, 0.0
  %v242 = vmax.f32 %v210, 0.0
  %v243 = vmax.f32 %v211, 0.0
  %v244 = vmax.f32 %v212, 0.0
  %v245 = vmax.f32 %v213, 0.0
  %v246 = vmax.f32 %v214, 0.0
  %v247 = vmax.f32 %v215, 0.0
  %v248 = vmax.f32 %v216, 0.0
  %v249 = vmax.f32 %v217, 0.0
  %v250 = vmax.f32 %v218, 0.0
  %v251 = vmax.f32 %v219, 0.0
  %v252 = vmax.f32 %v220, 0.0
  %v253 = vmax.f32 %v221, 0.0
  %v254 = vmax.f32 %v222, 1e-06
  %v255 = vmax.f32 %v223, 1e-06
  %v256 = vmax.f32 %v224, 1e-06
  %v257 = vmax.f32 %v225, 1e-06
  %v258 = vmax.f32 %v226, 1e-06
  %v259 = vmax.f32 %v227, 1e-06
  %v260 = vmax.f32 %v228, 1e-06
  %v261 = vmax.f32 %v229, 1e-06
  %v262 = vmax.f32 %v230, 1e-06
  %v263 = vmax.f32 %v231, 1e-06
  %v264 = vmax.f32 %v232, 1e-06
  %v265 = vmax.f32 %v233, 1e-06
  %v266 = vmax.f32 %v234, 1e-06
  %v267 = vmax.f32 %v235, 1e-06
  %v268 = vmax.f32 %v236, 1e-06
  %v269 = vmax.f32 %v237, 1e-06
  %v270 = vmax.f32 %v238, 1e-06
  %v271 = vmax.f32 %v239, 1e-06
  %v272 = vmax.f32 %v240, 1e-06
  %v273 = vmax.f32 %v241, 1e-06
  %v274 = vmax.f32 %v242, 1e-06
  %v275 = vmax.f32 %v243, 1e-06
  %v276 = vmax.f32 %v244, 1e-06
  %v277 = vmax.f32 %v245, 1e-06
  %v278 = vmax.f32 %v246, 1e-06
  %v279 = vmax.f32 %v247, 1e-06
  %v280 = vmax.f32 %v248, 1e-06
  %v281 = vmax.f32 %v249, 1e-06
  %v282 = vmax.f32 %v250, 1e-06
  %v283 = vmax.f32 %v251, 1e-06
  %v284 = vmax.f32 %v252, 1e-06
  %v285 = vmax.f32 %v253, 1e-06
  %v286 = vlog2.pop %v254
  %v287 = vmul.f32 %v286, 0.6931472
  %v288 = vlog2.pop %v255
  %v289 = vmul.f32 %v288, 0.6931472
  %v290 = vlog2.pop %v256
  %v291 = vmul.f32 %v290, 0.6931472
  %v292 = vlog2.pop %v257
  %v293 = vmul.f32 %v292, 0.6931472
  %v294 = vlog2.pop %v258
  %v295 = vmul.f32 %v294, 0.6931472
  %v296 = vlog2.pop %v259
  %v297 = vmul.f32 %v296, 0.6931472
  %v298 = vlog2.pop %v260
  %v299 = vmul.f32 %v298, 0.6931472
  %v300 = vlog2.pop %v261
  %v301 = vmul.f32 %v300, 0.6931472
  %v302 = vlog2.pop %v262
  %v303 = vmul.f32 %v302, 0.6931472
  %v304 = vlog2.pop %v263
  %v305 = vmul.f32 %v304, 0.6931472
  %v306 = vlog2.pop %v264
  %v307 = vmul.f32 %v306, 0.6931472
  %v308 = vlog2.pop %v265
  %v309 = vmul.f32 %v308, 0.6931472
  %v310 = vlog2.pop %v266
  %v311 = vmul.f32 %v310, 0.6931472
  %v312 = vlog2.pop %v267
  %v313 = vmul.f32 %v312, 0.6931472
  %v314 = vlog2.pop %v268
  %v315 = vmul.f32 %v314, 0.6931472
  %v316 = vlog2.pop %v269
  %v317 = vmul.f32 %v316, 0.6931472
  %v318 = vlog2.pop %v270
  %v319 = vmul.f32 %v318, 0.6931472
  %v320 = vlog2.pop %v271
  %v321 = vmul.f32 %v320, 0.6931472
  %v322 = vlog2.pop %v272
  %v323 = vmul.f32 %v322, 0.6931472
  %v324 = vlog2.pop %v273
  %v325 = vmul.f32 %v324, 0.6931472
  %v326 = vlog2.pop %v274
  %v327 = vmul.f32 %v326, 0.6931472
  %v328 = vlog2.pop %v275
  %v329 = vmul.f32 %v328, 0.6931472
  %v330 = vlog2.pop %v276
  %v331 = vmul.f32 %v330, 0.6931472
  %v332 = vlog2.pop %v277
  %v333 = vmul.f32 %v332, 0.6931472
  %v334 = vlog2.pop %v278
  %v335 = vmul.f32 %v334, 0.6931472
  %v336 = vlog2.pop %v279
  %v337 = vmul.f32 %v336, 0.6931472
  %v338 = vlog2.pop %v280
  %v339 = vmul.f32 %v338, 0.6931472
  %v340 = vlog2.pop %v281
  %v341 = vmul.f32 %v340, 0.6931472
  %v342 = vlog2.pop %v282
  %v343 = vmul.f32 %v342, 0.6931472
  %v344 = vlog2.pop %v283
  %v345 = vmul.f32 %v344, 0.6931472
  %v346 = vlog2.pop %v284
  %v347 = vmul.f32 %v346, 0.6931472
  %v348 = vlog2.pop %v285
  %v349 = vmul.f32 %v348, 0.6931472
  %v382 = vlaneseq
  %v383 = vand.u32 %v382, 127
  %v384 = vlaneseq
  %v385 = vshrl.u32 %v384, 7
  %v386 = vsub.s32 %v383, %v385
  %v387 = vrot.slane %v287, %v386
  %v388 = vadd.s32 %v383, 4294967288
  %v389 = vlaneseq
  %v390 = vshrl.u32 %v389, 7
  %v391 = vsub.s32 %v388, %v390
  %v392 = vrot.slane %v289, %v391
  %vm393 = vcmask 130112
  %v394 = vsel %vm393, %v392, %v387
  %v395 = vlaneseq
  %v396 = vshrl.u32 %v395, 7
  %v397 = vsub.s32 %v383, %v396
  %v398 = vrot.slane %v291, %v397
  %v399 = vlaneseq
  %v400 = vshrl.u32 %v399, 7
  %v401 = vsub.s32 %v388, %v400
  %v402 = vrot.slane %v293, %v401
  %v403 = vsel %vm393, %v402, %v398
  %v404 = vlaneseq
  %v405 = vshrl.u32 %v404, 7
  %v406 = vsub.s32 %v383, %v405
  %v407 = vrot.slane %v295, %v406
  %v408 = vlaneseq
  %v409 = vshrl.u32 %v408, 7
  %v410 = vsub.s32 %v388, %v409
  %v411 = vrot.slane %v297, %v410
  %v412 = vsel %vm393, %v411, %v407
  %v413 = vlaneseq
  %v414 = vshrl.u32 %v413, 7
  %v415 = vsub.s32 %v383, %v414
  %v416 = vrot.slane %v299, %v415
  %v417 = vlaneseq
  %v418 = vshrl.u32 %v417, 7
  %v419 = vsub.s32 %v388, %v418
  %v420 = vrot.slane %v301, %v419
  %v421 = vsel %vm393, %v420, %v416
  %v422 = vlaneseq
  %v423 = vshrl.u32 %v422, 7
  %v424 = vsub.s32 %v383, %v423
  %v425 = vrot.slane %v303, %v424
  %v426 = vlaneseq
  %v427 = vshrl.u32 %v426, 7
  %v428 = vsub.s32 %v388, %v427
  %v429 = vrot.slane %v305, %v428
  %v430 = vsel %vm393, %v429, %v425
  %v431 = vlaneseq
  %v432 = vshrl.u32 %v431, 7
  %v433 = vsub.s32 %v383, %v432
  %v434 = vrot.slane %v307, %v433
  %v435 = vlaneseq
  %v436 = vshrl.u32 %v435, 7
  %v437 = vsub.s32 %v388, %v436
  %v438 = vrot.slane %v309, %v437
  %v439 = vsel %vm393, %v438, %v434
  %v440 = vlaneseq
  %v441 = vshrl.u32 %v440, 7
  %v442 = vsub.s32 %v383, %v441
  %v443 = vrot.slane %v311, %v442
  %v444 = vlaneseq
  %v445 = vshrl.u32 %v444, 7
  %v446 = vsub.s32 %v388, %v445
  %v447 = vrot.slane %v313, %v446
  %v448 = vsel %vm393, %v447, %v443
  %v449 = vlaneseq
  %v450 = vshrl.u32 %v449, 7
  %v451 = vsub.s32 %v383, %v450
  %v452 = vrot.slane %v315, %v451
  %v453 = vlaneseq
  %v454 = vshrl.u32 %v453, 7
  %v455 = vsub.s32 %v388, %v454
  %v456 = vrot.slane %v317, %v455
  %v457 = vsel %vm393, %v456, %v452
  %v458 = vlaneseq
  %v459 = vshrl.u32 %v458, 7
  %v460 = vsub.s32 %v383, %v459
  %v461 = vrot.slane %v319, %v460
  %v462 = vlaneseq
  %v463 = vshrl.u32 %v462, 7
  %v464 = vsub.s32 %v388, %v463
  %v465 = vrot.slane %v321, %v464
  %v466 = vsel %vm393, %v465, %v461
  %v467 = vlaneseq
  %v468 = vshrl.u32 %v467, 7
  %v469 = vsub.s32 %v383, %v468
  %v470 = vrot.slane %v323, %v469
  %v471 = vlaneseq
  %v472 = vshrl.u32 %v471, 7
  %v473 = vsub.s32 %v388, %v472
  %v474 = vrot.slane %v325, %v473
  %v475 = vsel %vm393, %v474, %v470
  %v476 = vlaneseq
  %v477 = vshrl.u32 %v476, 7
  %v478 = vsub.s32 %v383, %v477
  %v479 = vrot.slane %v327, %v478
  %v480 = vlaneseq
  %v481 = vshrl.u32 %v480, 7
  %v482 = vsub.s32 %v388, %v481
  %v483 = vrot.slane %v329, %v482
  %v484 = vsel %vm393, %v483, %v479
  %v485 = vlaneseq
  %v486 = vshrl.u32 %v485, 7
  %v487 = vsub.s32 %v383, %v486
  %v488 = vrot.slane %v331, %v487
  %v489 = vlaneseq
  %v490 = vshrl.u32 %v489, 7
  %v491 = vsub.s32 %v388, %v490
  %v492 = vrot.slane %v333, %v491
  %v493 = vsel %vm393, %v492, %v488
  %v494 = vlaneseq
  %v495 = vshrl.u32 %v494, 7
  %v496 = vsub.s32 %v383, %v495
  %v497 = vrot.slane %v335, %v496
  %v498 = vlaneseq
  %v499 = vshrl.u32 %v498, 7
  %v500 = vsub.s32 %v388, %v499
  %v501 = vrot.slane %v337, %v500
  %v502 = vsel %vm393, %v501, %v497
  %v503 = vlaneseq
  %v504 = vshrl.u32 %v503, 7
  %v505 = vsub.s32 %v383, %v504
  %v506 = vrot.slane %v339, %v505
  %v507 = vlaneseq
  %v508 = vshrl.u32 %v507, 7
  %v509 = vsub.s32 %v388, %v508
  %v510 = vrot.slane %v341, %v509
  %v511 = vsel %vm393, %v510, %v506
  %v512 = vlaneseq
  %v513 = vshrl.u32 %v512, 7
  %v514 = vsub.s32 %v383, %v513
  %v515 = vrot.slane %v343, %v514
  %v516 = vlaneseq
  %v517 = vshrl.u32 %v516, 7
  %v518 = vsub.s32 %v388, %v517
  %v519 = vrot.slane %v345, %v518
  %v520 = vsel %vm393, %v519, %v515
  %v521 = vlaneseq
  %v522 = vshrl.u32 %v521, 7
  %v523 = vsub.s32 %v383, %v522
  %v524 = vrot.slane %v347, %v523
  %v525 = vlaneseq
  %v526 = vshrl.u32 %v525, 7
  %v527 = vsub.s32 %v388, %v526
  %v528 = vrot.slane %v349, %v527
  %v529 = vsel %vm393, %v528, %v524
  %vm530 = vcmask 1041409
  %v531 = vsel %vm530, %v403, %v394
  %vm532 = vcmask 1042434
  %v533 = vsel %vm532, %v412, %v531
  %vm534 = vcmask 1043459
  %v535 = vsel %vm534, %v421, %v533
  %vm536 = vcmask 1044484
  %v537 = vsel %vm536, %v430, %v535
  %vm538 = vcmask 1045509
  %v539 = vsel %vm538, %v439, %v537
  %vm540 = vcmask 1046534
  %v541 = vsel %vm540, %v448, %v539
  %vm542 = vcmask 1047559
  %v543 = vsel %vm542, %v457, %v541
  %v544 = vsel %vm530, %v475, %v466
  %v545 = vsel %vm532, %v484, %v544
  %v546 = vsel %vm534, %v493, %v545
  %v547 = vsel %vm536, %v502, %v546
  %v548 = vsel %vm538, %v511, %v547
  %v549 = vsel %vm540, %v520, %v548
  %v550 = vsel %vm542, %v529, %v549
  %vm553 = vcmask 130048
  %554 = vst.msk [vmem:[%s3] sm:$0xff] %vm553, %v543
  %555 = vst.msk [vmem:[%s3 + $0x8] sm:$0xff] %vm553, %v550
  %v556 = vld [vmem:[%s1 + $0x1] sm:$0x1]
  %v557 = vlaneseq
  %v558 = vshrl.u32 %v557, 7
  %v559 = vsub.s32 0, %v558
  %v560 = vrot.slane %v556, %v559
  %v561 = vmul.f32 %v14, %v560
  %v562 = vmul.f32 %v15, %v560
  %v563 = vmul.f32 %v16, %v560
  %v564 = vmul.f32 %v17, %v560
  %v565 = vmul.f32 %v18, %v560
  %v566 = vmul.f32 %v19, %v560
  %v567 = vmul.f32 %v20, %v560
  %v568 = vmul.f32 %v21, %v560
  %v569 = vmul.f32 %v22, %v560
  %v570 = vmul.f32 %v23, %v560
  %v571 = vmul.f32 %v24, %v560
  %v572 = vmul.f32 %v25, %v560
  %v573 = vmul.f32 %v26, %v560
  %v574 = vmul.f32 %v27, %v560
  %v575 = vmul.f32 %v28, %v560
  %v576 = vmul.f32 %v29, %v560
  %v577 = vmul.f32 %v30, %v560
  %v578 = vmul.f32 %v31, %v560
  %v579 = vmul.f32 %v32, %v560
  %v580 = vmul.f32 %v33, %v560
  %v581 = vmul.f32 %v34, %v560
  %v582 = vmul.f32 %v35, %v560
  %v583 = vmul.f32 %v36, %v560
  %v584 = vmul.f32 %v37, %v560
  %v585 = vmul.f32 %v38, %v560
  %v586 = vmul.f32 %v39, %v560
  %v587 = vmul.f32 %v40, %v560
  %v588 = vmul.f32 %v41, %v560
  %v589 = vmul.f32 %v42, %v560
  %v590 = vmul.f32 %v43, %v560
  %v591 = vmul.f32 %v44, %v560
  %v592 = vmul.f32 %v45, %v560
  %v593 = vsel %vm83, %v561, 0.0
  %594 = vadd.xlane.f32.xlu0 %v593
  %v595 = vpop.xlane.xlu0 %594
  %v596 = vsel %vm83, %v562, 0.0
  %597 = vadd.xlane.f32.xlu0 %v596
  %v598 = vpop.xlane.xlu0 %597
  %v599 = vsel %vm83, %v563, 0.0
  %600 = vadd.xlane.f32.xlu0 %v599
  %v601 = vpop.xlane.xlu0 %600
  %v602 = vsel %vm83, %v564, 0.0
  %603 = vadd.xlane.f32.xlu0 %v602
  %v604 = vpop.xlane.xlu0 %603
  %v605 = vsel %vm83, %v565, 0.0
  %606 = vadd.xlane.f32.xlu0 %v605
  %v607 = vpop.xlane.xlu0 %606
  %v608 = vsel %vm83, %v566, 0.0
  %609 = vadd.xlane.f32.xlu0 %v608
  %v610 = vpop.xlane.xlu0 %609
  %v611 = vsel %vm83, %v567, 0.0
  %612 = vadd.xlane.f32.xlu0 %v611
  %v613 = vpop.xlane.xlu0 %612
  %v614 = vsel %vm83, %v568, 0.0
  %615 = vadd.xlane.f32.xlu0 %v614
  %v616 = vpop.xlane.xlu0 %615
  %v617 = vsel %vm83, %v569, 0.0
  %618 = vadd.xlane.f32.xlu0 %v617
  %v619 = vpop.xlane.xlu0 %618
  %v620 = vsel %vm83, %v570, 0.0
  %621 = vadd.xlane.f32.xlu0 %v620
  %v622 = vpop.xlane.xlu0 %621
  %v623 = vsel %vm83, %v571, 0.0
  %624 = vadd.xlane.f32.xlu0 %v623
  %v625 = vpop.xlane.xlu0 %624
  %v626 = vsel %vm83, %v572, 0.0
  %627 = vadd.xlane.f32.xlu0 %v626
  %v628 = vpop.xlane.xlu0 %627
  %v629 = vsel %vm83, %v573, 0.0
  %630 = vadd.xlane.f32.xlu0 %v629
  %v631 = vpop.xlane.xlu0 %630
  %v632 = vsel %vm83, %v574, 0.0
  %633 = vadd.xlane.f32.xlu0 %v632
  %v634 = vpop.xlane.xlu0 %633
  %v635 = vsel %vm83, %v575, 0.0
  %636 = vadd.xlane.f32.xlu0 %v635
  %v637 = vpop.xlane.xlu0 %636
  %v638 = vsel %vm83, %v576, 0.0
  %639 = vadd.xlane.f32.xlu0 %v638
  %v640 = vpop.xlane.xlu0 %639
  %v641 = vsel %vm83, %v577, 0.0
  %642 = vadd.xlane.f32.xlu0 %v641
  %v643 = vpop.xlane.xlu0 %642
  %v644 = vsel %vm83, %v578, 0.0
  %645 = vadd.xlane.f32.xlu0 %v644
  %v646 = vpop.xlane.xlu0 %645
  %v647 = vsel %vm83, %v579, 0.0
  %648 = vadd.xlane.f32.xlu0 %v647
  %v649 = vpop.xlane.xlu0 %648
  %v650 = vsel %vm83, %v580, 0.0
  %651 = vadd.xlane.f32.xlu0 %v650
  %v652 = vpop.xlane.xlu0 %651
  %v653 = vsel %vm83, %v581, 0.0
  %654 = vadd.xlane.f32.xlu0 %v653
  %v655 = vpop.xlane.xlu0 %654
  %v656 = vsel %vm83, %v582, 0.0
  %657 = vadd.xlane.f32.xlu0 %v656
  %v658 = vpop.xlane.xlu0 %657
  %v659 = vsel %vm83, %v583, 0.0
  %660 = vadd.xlane.f32.xlu0 %v659
  %v661 = vpop.xlane.xlu0 %660
  %v662 = vsel %vm83, %v584, 0.0
  %663 = vadd.xlane.f32.xlu0 %v662
  %v664 = vpop.xlane.xlu0 %663
  %v665 = vsel %vm83, %v585, 0.0
  %666 = vadd.xlane.f32.xlu0 %v665
  %v667 = vpop.xlane.xlu0 %666
  %v668 = vsel %vm83, %v586, 0.0
  %669 = vadd.xlane.f32.xlu0 %v668
  %v670 = vpop.xlane.xlu0 %669
  %v671 = vsel %vm83, %v587, 0.0
  %672 = vadd.xlane.f32.xlu0 %v671
  %v673 = vpop.xlane.xlu0 %672
  %v674 = vsel %vm83, %v588, 0.0
  %675 = vadd.xlane.f32.xlu0 %v674
  %v676 = vpop.xlane.xlu0 %675
  %v677 = vsel %vm83, %v589, 0.0
  %678 = vadd.xlane.f32.xlu0 %v677
  %v679 = vpop.xlane.xlu0 %678
  %v680 = vsel %vm83, %v590, 0.0
  %681 = vadd.xlane.f32.xlu0 %v680
  %v682 = vpop.xlane.xlu0 %681
  %v683 = vsel %vm83, %v591, 0.0
  %684 = vadd.xlane.f32.xlu0 %v683
  %v685 = vpop.xlane.xlu0 %684
  %v686 = vsel %vm83, %v592, 0.0
  %687 = vadd.xlane.f32.xlu0 %v686
  %v688 = vpop.xlane.xlu0 %687
  %s689 = scalar_lea.vmem %s2, 1
  %v690 = vld [vmem:[%s689] sm:$0x1]
  %v692 = vlaneseq
  %v693 = vshrl.u32 %v692, 7
  %v694 = vsub.s32 0, %v693
  %v695 = vrot.slane %v690, %v694
  %696 = vset.pattern.permute.xlu0 0
  %697 = vperm.xlu0 %696, %v695
  %v698 = vpop.permute.xlu0 %697
  %v700 = vadd.f32 %v595, %v698
  %v701 = vadd.f32 %v598, %v698
  %v702 = vadd.f32 %v601, %v698
  %v703 = vadd.f32 %v604, %v698
  %v704 = vadd.f32 %v607, %v698
  %v705 = vadd.f32 %v610, %v698
  %v706 = vadd.f32 %v613, %v698
  %v707 = vadd.f32 %v616, %v698
  %v708 = vadd.f32 %v619, %v698
  %v709 = vadd.f32 %v622, %v698
  %v710 = vadd.f32 %v625, %v698
  %v711 = vadd.f32 %v628, %v698
  %v712 = vadd.f32 %v631, %v698
  %v713 = vadd.f32 %v634, %v698
  %v714 = vadd.f32 %v637, %v698
  %v715 = vadd.f32 %v640, %v698
  %v716 = vadd.f32 %v643, %v698
  %v717 = vadd.f32 %v646, %v698
  %v718 = vadd.f32 %v649, %v698
  %v719 = vadd.f32 %v652, %v698
  %v720 = vadd.f32 %v655, %v698
  %v721 = vadd.f32 %v658, %v698
  %v722 = vadd.f32 %v661, %v698
  %v723 = vadd.f32 %v664, %v698
  %v724 = vadd.f32 %v667, %v698
  %v725 = vadd.f32 %v670, %v698
  %v726 = vadd.f32 %v673, %v698
  %v727 = vadd.f32 %v676, %v698
  %v728 = vadd.f32 %v679, %v698
  %v729 = vadd.f32 %v682, %v698
  %v730 = vadd.f32 %v685, %v698
  %v731 = vadd.f32 %v688, %v698
  %v732 = vmax.f32 %v700, 0.0
  %v733 = vmax.f32 %v701, 0.0
  %v734 = vmax.f32 %v702, 0.0
  %v735 = vmax.f32 %v703, 0.0
  %v736 = vmax.f32 %v704, 0.0
  %v737 = vmax.f32 %v705, 0.0
  %v738 = vmax.f32 %v706, 0.0
  %v739 = vmax.f32 %v707, 0.0
  %v740 = vmax.f32 %v708, 0.0
  %v741 = vmax.f32 %v709, 0.0
  %v742 = vmax.f32 %v710, 0.0
  %v743 = vmax.f32 %v711, 0.0
  %v744 = vmax.f32 %v712, 0.0
  %v745 = vmax.f32 %v713, 0.0
  %v746 = vmax.f32 %v714, 0.0
  %v747 = vmax.f32 %v715, 0.0
  %v748 = vmax.f32 %v716, 0.0
  %v749 = vmax.f32 %v717, 0.0
  %v750 = vmax.f32 %v718, 0.0
  %v751 = vmax.f32 %v719, 0.0
  %v752 = vmax.f32 %v720, 0.0
  %v753 = vmax.f32 %v721, 0.0
  %v754 = vmax.f32 %v722, 0.0
  %v755 = vmax.f32 %v723, 0.0
  %v756 = vmax.f32 %v724, 0.0
  %v757 = vmax.f32 %v725, 0.0
  %v758 = vmax.f32 %v726, 0.0
  %v759 = vmax.f32 %v727, 0.0
  %v760 = vmax.f32 %v728, 0.0
  %v761 = vmax.f32 %v729, 0.0
  %v762 = vmax.f32 %v730, 0.0
  %v763 = vmax.f32 %v731, 0.0
  %v764 = vmax.f32 %v732, 1e-06
  %v765 = vmax.f32 %v733, 1e-06
  %v766 = vmax.f32 %v734, 1e-06
  %v767 = vmax.f32 %v735, 1e-06
  %v768 = vmax.f32 %v736, 1e-06
  %v769 = vmax.f32 %v737, 1e-06
  %v770 = vmax.f32 %v738, 1e-06
  %v771 = vmax.f32 %v739, 1e-06
  %v772 = vmax.f32 %v740, 1e-06
  %v773 = vmax.f32 %v741, 1e-06
  %v774 = vmax.f32 %v742, 1e-06
  %v775 = vmax.f32 %v743, 1e-06
  %v776 = vmax.f32 %v744, 1e-06
  %v777 = vmax.f32 %v745, 1e-06
  %v778 = vmax.f32 %v746, 1e-06
  %v779 = vmax.f32 %v747, 1e-06
  %v780 = vmax.f32 %v748, 1e-06
  %v781 = vmax.f32 %v749, 1e-06
  %v782 = vmax.f32 %v750, 1e-06
  %v783 = vmax.f32 %v751, 1e-06
  %v784 = vmax.f32 %v752, 1e-06
  %v785 = vmax.f32 %v753, 1e-06
  %v786 = vmax.f32 %v754, 1e-06
  %v787 = vmax.f32 %v755, 1e-06
  %v788 = vmax.f32 %v756, 1e-06
  %v789 = vmax.f32 %v757, 1e-06
  %v790 = vmax.f32 %v758, 1e-06
  %v791 = vmax.f32 %v759, 1e-06
  %v792 = vmax.f32 %v760, 1e-06
  %v793 = vmax.f32 %v761, 1e-06
  %v794 = vmax.f32 %v762, 1e-06
  %v795 = vmax.f32 %v763, 1e-06
  %v796 = vlog2.pop %v764
  %v797 = vmul.f32 %v796, 0.6931472
  %v798 = vlog2.pop %v765
  %v799 = vmul.f32 %v798, 0.6931472
  %v800 = vlog2.pop %v766
  %v801 = vmul.f32 %v800, 0.6931472
  %v802 = vlog2.pop %v767
  %v803 = vmul.f32 %v802, 0.6931472
  %v804 = vlog2.pop %v768
  %v805 = vmul.f32 %v804, 0.6931472
  %v806 = vlog2.pop %v769
  %v807 = vmul.f32 %v806, 0.6931472
  %v808 = vlog2.pop %v770
  %v809 = vmul.f32 %v808, 0.6931472
  %v810 = vlog2.pop %v771
  %v811 = vmul.f32 %v810, 0.6931472
  %v812 = vlog2.pop %v772
  %v813 = vmul.f32 %v812, 0.6931472
  %v814 = vlog2.pop %v773
  %v815 = vmul.f32 %v814, 0.6931472
  %v816 = vlog2.pop %v774
  %v817 = vmul.f32 %v816, 0.6931472
  %v818 = vlog2.pop %v775
  %v819 = vmul.f32 %v818, 0.6931472
  %v820 = vlog2.pop %v776
  %v821 = vmul.f32 %v820, 0.6931472
  %v822 = vlog2.pop %v777
  %v823 = vmul.f32 %v822, 0.6931472
  %v824 = vlog2.pop %v778
  %v825 = vmul.f32 %v824, 0.6931472
  %v826 = vlog2.pop %v779
  %v827 = vmul.f32 %v826, 0.6931472
  %v828 = vlog2.pop %v780
  %v829 = vmul.f32 %v828, 0.6931472
  %v830 = vlog2.pop %v781
  %v831 = vmul.f32 %v830, 0.6931472
  %v832 = vlog2.pop %v782
  %v833 = vmul.f32 %v832, 0.6931472
  %v834 = vlog2.pop %v783
  %v835 = vmul.f32 %v834, 0.6931472
  %v836 = vlog2.pop %v784
  %v837 = vmul.f32 %v836, 0.6931472
  %v838 = vlog2.pop %v785
  %v839 = vmul.f32 %v838, 0.6931472
  %v840 = vlog2.pop %v786
  %v841 = vmul.f32 %v840, 0.6931472
  %v842 = vlog2.pop %v787
  %v843 = vmul.f32 %v842, 0.6931472
  %v844 = vlog2.pop %v788
  %v845 = vmul.f32 %v844, 0.6931472
  %v846 = vlog2.pop %v789
  %v847 = vmul.f32 %v846, 0.6931472
  %v848 = vlog2.pop %v790
  %v849 = vmul.f32 %v848, 0.6931472
  %v850 = vlog2.pop %v791
  %v851 = vmul.f32 %v850, 0.6931472
  %v852 = vlog2.pop %v792
  %v853 = vmul.f32 %v852, 0.6931472
  %v854 = vlog2.pop %v793
  %v855 = vmul.f32 %v854, 0.6931472
  %v856 = vlog2.pop %v794
  %v857 = vmul.f32 %v856, 0.6931472
  %v858 = vlog2.pop %v795
  %v859 = vmul.f32 %v858, 0.6931472
  %v892 = vlaneseq
  %v893 = vshrl.u32 %v892, 7
  %v894 = vsub.s32 %v383, %v893
  %v895 = vrot.slane %v797, %v894
  %v896 = vlaneseq
  %v897 = vshrl.u32 %v896, 7
  %v898 = vsub.s32 %v388, %v897
  %v899 = vrot.slane %v799, %v898
  %v900 = vsel %vm393, %v899, %v895
  %v901 = vlaneseq
  %v902 = vshrl.u32 %v901, 7
  %v903 = vsub.s32 %v383, %v902
  %v904 = vrot.slane %v801, %v903
  %v905 = vlaneseq
  %v906 = vshrl.u32 %v905, 7
  %v907 = vsub.s32 %v388, %v906
  %v908 = vrot.slane %v803, %v907
  %v909 = vsel %vm393, %v908, %v904
  %v910 = vlaneseq
  %v911 = vshrl.u32 %v910, 7
  %v912 = vsub.s32 %v383, %v911
  %v913 = vrot.slane %v805, %v912
  %v914 = vlaneseq
  %v915 = vshrl.u32 %v914, 7
  %v916 = vsub.s32 %v388, %v915
  %v917 = vrot.slane %v807, %v916
  %v918 = vsel %vm393, %v917, %v913
  %v919 = vlaneseq
  %v920 = vshrl.u32 %v919, 7
  %v921 = vsub.s32 %v383, %v920
  %v922 = vrot.slane %v809, %v921
  %v923 = vlaneseq
  %v924 = vshrl.u32 %v923, 7
  %v925 = vsub.s32 %v388, %v924
  %v926 = vrot.slane %v811, %v925
  %v927 = vsel %vm393, %v926, %v922
  %v928 = vlaneseq
  %v929 = vshrl.u32 %v928, 7
  %v930 = vsub.s32 %v383, %v929
  %v931 = vrot.slane %v813, %v930
  %v932 = vlaneseq
  %v933 = vshrl.u32 %v932, 7
  %v934 = vsub.s32 %v388, %v933
  %v935 = vrot.slane %v815, %v934
  %v936 = vsel %vm393, %v935, %v931
  %v937 = vlaneseq
  %v938 = vshrl.u32 %v937, 7
  %v939 = vsub.s32 %v383, %v938
  %v940 = vrot.slane %v817, %v939
  %v941 = vlaneseq
  %v942 = vshrl.u32 %v941, 7
  %v943 = vsub.s32 %v388, %v942
  %v944 = vrot.slane %v819, %v943
  %v945 = vsel %vm393, %v944, %v940
  %v946 = vlaneseq
  %v947 = vshrl.u32 %v946, 7
  %v948 = vsub.s32 %v383, %v947
  %v949 = vrot.slane %v821, %v948
  %v950 = vlaneseq
  %v951 = vshrl.u32 %v950, 7
  %v952 = vsub.s32 %v388, %v951
  %v953 = vrot.slane %v823, %v952
  %v954 = vsel %vm393, %v953, %v949
  %v955 = vlaneseq
  %v956 = vshrl.u32 %v955, 7
  %v957 = vsub.s32 %v383, %v956
  %v958 = vrot.slane %v825, %v957
  %v959 = vlaneseq
  %v960 = vshrl.u32 %v959, 7
  %v961 = vsub.s32 %v388, %v960
  %v962 = vrot.slane %v827, %v961
  %v963 = vsel %vm393, %v962, %v958
  %v964 = vlaneseq
  %v965 = vshrl.u32 %v964, 7
  %v966 = vsub.s32 %v383, %v965
  %v967 = vrot.slane %v829, %v966
  %v968 = vlaneseq
  %v969 = vshrl.u32 %v968, 7
  %v970 = vsub.s32 %v388, %v969
  %v971 = vrot.slane %v831, %v970
  %v972 = vsel %vm393, %v971, %v967
  %v973 = vlaneseq
  %v974 = vshrl.u32 %v973, 7
  %v975 = vsub.s32 %v383, %v974
  %v976 = vrot.slane %v833, %v975
  %v977 = vlaneseq
  %v978 = vshrl.u32 %v977, 7
  %v979 = vsub.s32 %v388, %v978
  %v980 = vrot.slane %v835, %v979
  %v981 = vsel %vm393, %v980, %v976
  %v982 = vlaneseq
  %v983 = vshrl.u32 %v982, 7
  %v984 = vsub.s32 %v383, %v983
  %v985 = vrot.slane %v837, %v984
  %v986 = vlaneseq
  %v987 = vshrl.u32 %v986, 7
  %v988 = vsub.s32 %v388, %v987
  %v989 = vrot.slane %v839, %v988
  %v990 = vsel %vm393, %v989, %v985
  %v991 = vlaneseq
  %v992 = vshrl.u32 %v991, 7
  %v993 = vsub.s32 %v383, %v992
  %v994 = vrot.slane %v841, %v993
  %v995 = vlaneseq
  %v996 = vshrl.u32 %v995, 7
  %v997 = vsub.s32 %v388, %v996
  %v998 = vrot.slane %v843, %v997
  %v999 = vsel %vm393, %v998, %v994
  %v1000 = vlaneseq
  %v1001 = vshrl.u32 %v1000, 7
  %v1002 = vsub.s32 %v383, %v1001
  %v1003 = vrot.slane %v845, %v1002
  %v1004 = vlaneseq
  %v1005 = vshrl.u32 %v1004, 7
  %v1006 = vsub.s32 %v388, %v1005
  %v1007 = vrot.slane %v847, %v1006
  %v1008 = vsel %vm393, %v1007, %v1003
  %v1009 = vlaneseq
  %v1010 = vshrl.u32 %v1009, 7
  %v1011 = vsub.s32 %v383, %v1010
  %v1012 = vrot.slane %v849, %v1011
  %v1013 = vlaneseq
  %v1014 = vshrl.u32 %v1013, 7
  %v1015 = vsub.s32 %v388, %v1014
  %v1016 = vrot.slane %v851, %v1015
  %v1017 = vsel %vm393, %v1016, %v1012
  %v1018 = vlaneseq
  %v1019 = vshrl.u32 %v1018, 7
  %v1020 = vsub.s32 %v383, %v1019
  %v1021 = vrot.slane %v853, %v1020
  %v1022 = vlaneseq
  %v1023 = vshrl.u32 %v1022, 7
  %v1024 = vsub.s32 %v388, %v1023
  %v1025 = vrot.slane %v855, %v1024
  %v1026 = vsel %vm393, %v1025, %v1021
  %v1027 = vlaneseq
  %v1028 = vshrl.u32 %v1027, 7
  %v1029 = vsub.s32 %v383, %v1028
  %v1030 = vrot.slane %v857, %v1029
  %v1031 = vlaneseq
  %v1032 = vshrl.u32 %v1031, 7
  %v1033 = vsub.s32 %v388, %v1032
  %v1034 = vrot.slane %v859, %v1033
  %v1035 = vsel %vm393, %v1034, %v1030
  %v1036 = vsel %vm530, %v909, %v900
  %v1037 = vsel %vm532, %v918, %v1036
  %v1038 = vsel %vm534, %v927, %v1037
  %v1039 = vsel %vm536, %v936, %v1038
  %v1040 = vsel %vm538, %v945, %v1039
  %v1041 = vsel %vm540, %v954, %v1040
  %v1042 = vsel %vm542, %v963, %v1041
  %v1043 = vsel %vm530, %v981, %v972
  %v1044 = vsel %vm532, %v990, %v1043
  %v1045 = vsel %vm534, %v999, %v1044
  %v1046 = vsel %vm536, %v1008, %v1045
  %v1047 = vsel %vm538, %v1017, %v1046
  %v1048 = vsel %vm540, %v1026, %v1047
  %v1049 = vsel %vm542, %v1035, %v1048
  %s1052 = scalar_lea.vmem %s3, 16
  %1053 = vst.msk [vmem:[%s1052] sm:$0xff] %vm553, %v1042
  %1054 = vst.msk [vmem:[%s1052 + $0x8] sm:$0xff] %vm553, %v1049
  %v1055 = vld [vmem:[%s1 + $0x2] sm:$0x1]
  %v1056 = vlaneseq
  %v1057 = vshrl.u32 %v1056, 7
  %v1058 = vsub.s32 0, %v1057
  %v1059 = vrot.slane %v1055, %v1058
  %v1060 = vmul.f32 %v14, %v1059
  %v1061 = vmul.f32 %v15, %v1059
  %v1062 = vmul.f32 %v16, %v1059
  %v1063 = vmul.f32 %v17, %v1059
  %v1064 = vmul.f32 %v18, %v1059
  %v1065 = vmul.f32 %v19, %v1059
  %v1066 = vmul.f32 %v20, %v1059
  %v1067 = vmul.f32 %v21, %v1059
  %v1068 = vmul.f32 %v22, %v1059
  %v1069 = vmul.f32 %v23, %v1059
  %v1070 = vmul.f32 %v24, %v1059
  %v1071 = vmul.f32 %v25, %v1059
  %v1072 = vmul.f32 %v26, %v1059
  %v1073 = vmul.f32 %v27, %v1059
  %v1074 = vmul.f32 %v28, %v1059
  %v1075 = vmul.f32 %v29, %v1059
  %v1076 = vmul.f32 %v30, %v1059
  %v1077 = vmul.f32 %v31, %v1059
  %v1078 = vmul.f32 %v32, %v1059
  %v1079 = vmul.f32 %v33, %v1059
  %v1080 = vmul.f32 %v34, %v1059
  %v1081 = vmul.f32 %v35, %v1059
  %v1082 = vmul.f32 %v36, %v1059
  %v1083 = vmul.f32 %v37, %v1059
  %v1084 = vmul.f32 %v38, %v1059
  %v1085 = vmul.f32 %v39, %v1059
  %v1086 = vmul.f32 %v40, %v1059
  %v1087 = vmul.f32 %v41, %v1059
  %v1088 = vmul.f32 %v42, %v1059
  %v1089 = vmul.f32 %v43, %v1059
  %v1090 = vmul.f32 %v44, %v1059
  %v1091 = vmul.f32 %v45, %v1059
  %v1092 = vsel %vm83, %v1060, 0.0
  %1093 = vadd.xlane.f32.xlu0 %v1092
  %v1094 = vpop.xlane.xlu0 %1093
  %v1095 = vsel %vm83, %v1061, 0.0
  %1096 = vadd.xlane.f32.xlu0 %v1095
  %v1097 = vpop.xlane.xlu0 %1096
  %v1098 = vsel %vm83, %v1062, 0.0
  %1099 = vadd.xlane.f32.xlu0 %v1098
  %v1100 = vpop.xlane.xlu0 %1099
  %v1101 = vsel %vm83, %v1063, 0.0
  %1102 = vadd.xlane.f32.xlu0 %v1101
  %v1103 = vpop.xlane.xlu0 %1102
  %v1104 = vsel %vm83, %v1064, 0.0
  %1105 = vadd.xlane.f32.xlu0 %v1104
  %v1106 = vpop.xlane.xlu0 %1105
  %v1107 = vsel %vm83, %v1065, 0.0
  %1108 = vadd.xlane.f32.xlu0 %v1107
  %v1109 = vpop.xlane.xlu0 %1108
  %v1110 = vsel %vm83, %v1066, 0.0
  %1111 = vadd.xlane.f32.xlu0 %v1110
  %v1112 = vpop.xlane.xlu0 %1111
  %v1113 = vsel %vm83, %v1067, 0.0
  %1114 = vadd.xlane.f32.xlu0 %v1113
  %v1115 = vpop.xlane.xlu0 %1114
  %v1116 = vsel %vm83, %v1068, 0.0
  %1117 = vadd.xlane.f32.xlu0 %v1116
  %v1118 = vpop.xlane.xlu0 %1117
  %v1119 = vsel %vm83, %v1069, 0.0
  %1120 = vadd.xlane.f32.xlu0 %v1119
  %v1121 = vpop.xlane.xlu0 %1120
  %v1122 = vsel %vm83, %v1070, 0.0
  %1123 = vadd.xlane.f32.xlu0 %v1122
  %v1124 = vpop.xlane.xlu0 %1123
  %v1125 = vsel %vm83, %v1071, 0.0
  %1126 = vadd.xlane.f32.xlu0 %v1125
  %v1127 = vpop.xlane.xlu0 %1126
  %v1128 = vsel %vm83, %v1072, 0.0
  %1129 = vadd.xlane.f32.xlu0 %v1128
  %v1130 = vpop.xlane.xlu0 %1129
  %v1131 = vsel %vm83, %v1073, 0.0
  %1132 = vadd.xlane.f32.xlu0 %v1131
  %v1133 = vpop.xlane.xlu0 %1132
  %v1134 = vsel %vm83, %v1074, 0.0
  %1135 = vadd.xlane.f32.xlu0 %v1134
  %v1136 = vpop.xlane.xlu0 %1135
  %v1137 = vsel %vm83, %v1075, 0.0
  %1138 = vadd.xlane.f32.xlu0 %v1137
  %v1139 = vpop.xlane.xlu0 %1138
  %v1140 = vsel %vm83, %v1076, 0.0
  %1141 = vadd.xlane.f32.xlu0 %v1140
  %v1142 = vpop.xlane.xlu0 %1141
  %v1143 = vsel %vm83, %v1077, 0.0
  %1144 = vadd.xlane.f32.xlu0 %v1143
  %v1145 = vpop.xlane.xlu0 %1144
  %v1146 = vsel %vm83, %v1078, 0.0
  %1147 = vadd.xlane.f32.xlu0 %v1146
  %v1148 = vpop.xlane.xlu0 %1147
  %v1149 = vsel %vm83, %v1079, 0.0
  %1150 = vadd.xlane.f32.xlu0 %v1149
  %v1151 = vpop.xlane.xlu0 %1150
  %v1152 = vsel %vm83, %v1080, 0.0
  %1153 = vadd.xlane.f32.xlu0 %v1152
  %v1154 = vpop.xlane.xlu0 %1153
  %v1155 = vsel %vm83, %v1081, 0.0
  %1156 = vadd.xlane.f32.xlu0 %v1155
  %v1157 = vpop.xlane.xlu0 %1156
  %v1158 = vsel %vm83, %v1082, 0.0
  %1159 = vadd.xlane.f32.xlu0 %v1158
  %v1160 = vpop.xlane.xlu0 %1159
  %v1161 = vsel %vm83, %v1083, 0.0
  %1162 = vadd.xlane.f32.xlu0 %v1161
  %v1163 = vpop.xlane.xlu0 %1162
  %v1164 = vsel %vm83, %v1084, 0.0
  %1165 = vadd.xlane.f32.xlu0 %v1164
  %v1166 = vpop.xlane.xlu0 %1165
  %v1167 = vsel %vm83, %v1085, 0.0
  %1168 = vadd.xlane.f32.xlu0 %v1167
  %v1169 = vpop.xlane.xlu0 %1168
  %v1170 = vsel %vm83, %v1086, 0.0
  %1171 = vadd.xlane.f32.xlu0 %v1170
  %v1172 = vpop.xlane.xlu0 %1171
  %v1173 = vsel %vm83, %v1087, 0.0
  %1174 = vadd.xlane.f32.xlu0 %v1173
  %v1175 = vpop.xlane.xlu0 %1174
  %v1176 = vsel %vm83, %v1088, 0.0
  %1177 = vadd.xlane.f32.xlu0 %v1176
  %v1178 = vpop.xlane.xlu0 %1177
  %v1179 = vsel %vm83, %v1089, 0.0
  %1180 = vadd.xlane.f32.xlu0 %v1179
  %v1181 = vpop.xlane.xlu0 %1180
  %v1182 = vsel %vm83, %v1090, 0.0
  %1183 = vadd.xlane.f32.xlu0 %v1182
  %v1184 = vpop.xlane.xlu0 %1183
  %v1185 = vsel %vm83, %v1091, 0.0
  %1186 = vadd.xlane.f32.xlu0 %v1185
  %v1187 = vpop.xlane.xlu0 %1186
  %s1188 = scalar_lea.vmem %s2, 2
  %v1189 = vld [vmem:[%s1188] sm:$0x1]
  %v1191 = vlaneseq
  %v1192 = vshrl.u32 %v1191, 7
  %v1193 = vsub.s32 0, %v1192
  %v1194 = vrot.slane %v1189, %v1193
  %1195 = vset.pattern.permute.xlu0 0
  %1196 = vperm.xlu0 %1195, %v1194
  %v1197 = vpop.permute.xlu0 %1196
  %v1199 = vadd.f32 %v1094, %v1197
  %v1200 = vadd.f32 %v1097, %v1197
  %v1201 = vadd.f32 %v1100, %v1197
  %v1202 = vadd.f32 %v1103, %v1197
  %v1203 = vadd.f32 %v1106, %v1197
  %v1204 = vadd.f32 %v1109, %v1197
  %v1205 = vadd.f32 %v1112, %v1197
  %v1206 = vadd.f32 %v1115, %v1197
  %v1207 = vadd.f32 %v1118, %v1197
  %v1208 = vadd.f32 %v1121, %v1197
  %v1209 = vadd.f32 %v1124, %v1197
  %v1210 = vadd.f32 %v1127, %v1197
  %v1211 = vadd.f32 %v1130, %v1197
  %v1212 = vadd.f32 %v1133, %v1197
  %v1213 = vadd.f32 %v1136, %v1197
  %v1214 = vadd.f32 %v1139, %v1197
  %v1215 = vadd.f32 %v1142, %v1197
  %v1216 = vadd.f32 %v1145, %v1197
  %v1217 = vadd.f32 %v1148, %v1197
  %v1218 = vadd.f32 %v1151, %v1197
  %v1219 = vadd.f32 %v1154, %v1197
  %v1220 = vadd.f32 %v1157, %v1197
  %v1221 = vadd.f32 %v1160, %v1197
  %v1222 = vadd.f32 %v1163, %v1197
  %v1223 = vadd.f32 %v1166, %v1197
  %v1224 = vadd.f32 %v1169, %v1197
  %v1225 = vadd.f32 %v1172, %v1197
  %v1226 = vadd.f32 %v1175, %v1197
  %v1227 = vadd.f32 %v1178, %v1197
  %v1228 = vadd.f32 %v1181, %v1197
  %v1229 = vadd.f32 %v1184, %v1197
  %v1230 = vadd.f32 %v1187, %v1197
  %v1231 = vmax.f32 %v1199, 0.0
  %v1232 = vmax.f32 %v1200, 0.0
  %v1233 = vmax.f32 %v1201, 0.0
  %v1234 = vmax.f32 %v1202, 0.0
  %v1235 = vmax.f32 %v1203, 0.0
  %v1236 = vmax.f32 %v1204, 0.0
  %v1237 = vmax.f32 %v1205, 0.0
  %v1238 = vmax.f32 %v1206, 0.0
  %v1239 = vmax.f32 %v1207, 0.0
  %v1240 = vmax.f32 %v1208, 0.0
  %v1241 = vmax.f32 %v1209, 0.0
  %v1242 = vmax.f32 %v1210, 0.0
  %v1243 = vmax.f32 %v1211, 0.0
  %v1244 = vmax.f32 %v1212, 0.0
  %v1245 = vmax.f32 %v1213, 0.0
  %v1246 = vmax.f32 %v1214, 0.0
  %v1247 = vmax.f32 %v1215, 0.0
  %v1248 = vmax.f32 %v1216, 0.0
  %v1249 = vmax.f32 %v1217, 0.0
  %v1250 = vmax.f32 %v1218, 0.0
  %v1251 = vmax.f32 %v1219, 0.0
  %v1252 = vmax.f32 %v1220, 0.0
  %v1253 = vmax.f32 %v1221, 0.0
  %v1254 = vmax.f32 %v1222, 0.0
  %v1255 = vmax.f32 %v1223, 0.0
  %v1256 = vmax.f32 %v1224, 0.0
  %v1257 = vmax.f32 %v1225, 0.0
  %v1258 = vmax.f32 %v1226, 0.0
  %v1259 = vmax.f32 %v1227, 0.0
  %v1260 = vmax.f32 %v1228, 0.0
  %v1261 = vmax.f32 %v1229, 0.0
  %v1262 = vmax.f32 %v1230, 0.0
  %v1263 = vmax.f32 %v1231, 1e-06
  %v1264 = vmax.f32 %v1232, 1e-06
  %v1265 = vmax.f32 %v1233, 1e-06
  %v1266 = vmax.f32 %v1234, 1e-06
  %v1267 = vmax.f32 %v1235, 1e-06
  %v1268 = vmax.f32 %v1236, 1e-06
  %v1269 = vmax.f32 %v1237, 1e-06
  %v1270 = vmax.f32 %v1238, 1e-06
  %v1271 = vmax.f32 %v1239, 1e-06
  %v1272 = vmax.f32 %v1240, 1e-06
  %v1273 = vmax.f32 %v1241, 1e-06
  %v1274 = vmax.f32 %v1242, 1e-06
  %v1275 = vmax.f32 %v1243, 1e-06
  %v1276 = vmax.f32 %v1244, 1e-06
  %v1277 = vmax.f32 %v1245, 1e-06
  %v1278 = vmax.f32 %v1246, 1e-06
  %v1279 = vmax.f32 %v1247, 1e-06
  %v1280 = vmax.f32 %v1248, 1e-06
  %v1281 = vmax.f32 %v1249, 1e-06
  %v1282 = vmax.f32 %v1250, 1e-06
  %v1283 = vmax.f32 %v1251, 1e-06
  %v1284 = vmax.f32 %v1252, 1e-06
  %v1285 = vmax.f32 %v1253, 1e-06
  %v1286 = vmax.f32 %v1254, 1e-06
  %v1287 = vmax.f32 %v1255, 1e-06
  %v1288 = vmax.f32 %v1256, 1e-06
  %v1289 = vmax.f32 %v1257, 1e-06
  %v1290 = vmax.f32 %v1258, 1e-06
  %v1291 = vmax.f32 %v1259, 1e-06
  %v1292 = vmax.f32 %v1260, 1e-06
  %v1293 = vmax.f32 %v1261, 1e-06
  %v1294 = vmax.f32 %v1262, 1e-06
  %v1295 = vlog2.pop %v1263
  %v1296 = vmul.f32 %v1295, 0.6931472
  %v1297 = vlog2.pop %v1264
  %v1298 = vmul.f32 %v1297, 0.6931472
  %v1299 = vlog2.pop %v1265
  %v1300 = vmul.f32 %v1299, 0.6931472
  %v1301 = vlog2.pop %v1266
  %v1302 = vmul.f32 %v1301, 0.6931472
  %v1303 = vlog2.pop %v1267
  %v1304 = vmul.f32 %v1303, 0.6931472
  %v1305 = vlog2.pop %v1268
  %v1306 = vmul.f32 %v1305, 0.6931472
  %v1307 = vlog2.pop %v1269
  %v1308 = vmul.f32 %v1307, 0.6931472
  %v1309 = vlog2.pop %v1270
  %v1310 = vmul.f32 %v1309, 0.6931472
  %v1311 = vlog2.pop %v1271
  %v1312 = vmul.f32 %v1311, 0.6931472
  %v1313 = vlog2.pop %v1272
  %v1314 = vmul.f32 %v1313, 0.6931472
  %v1315 = vlog2.pop %v1273
  %v1316 = vmul.f32 %v1315, 0.6931472
  %v1317 = vlog2.pop %v1274
  %v1318 = vmul.f32 %v1317, 0.6931472
  %v1319 = vlog2.pop %v1275
  %v1320 = vmul.f32 %v1319, 0.6931472
  %v1321 = vlog2.pop %v1276
  %v1322 = vmul.f32 %v1321, 0.6931472
  %v1323 = vlog2.pop %v1277
  %v1324 = vmul.f32 %v1323, 0.6931472
  %v1325 = vlog2.pop %v1278
  %v1326 = vmul.f32 %v1325, 0.6931472
  %v1327 = vlog2.pop %v1279
  %v1328 = vmul.f32 %v1327, 0.6931472
  %v1329 = vlog2.pop %v1280
  %v1330 = vmul.f32 %v1329, 0.6931472
  %v1331 = vlog2.pop %v1281
  %v1332 = vmul.f32 %v1331, 0.6931472
  %v1333 = vlog2.pop %v1282
  %v1334 = vmul.f32 %v1333, 0.6931472
  %v1335 = vlog2.pop %v1283
  %v1336 = vmul.f32 %v1335, 0.6931472
  %v1337 = vlog2.pop %v1284
  %v1338 = vmul.f32 %v1337, 0.6931472
  %v1339 = vlog2.pop %v1285
  %v1340 = vmul.f32 %v1339, 0.6931472
  %v1341 = vlog2.pop %v1286
  %v1342 = vmul.f32 %v1341, 0.6931472
  %v1343 = vlog2.pop %v1287
  %v1344 = vmul.f32 %v1343, 0.6931472
  %v1345 = vlog2.pop %v1288
  %v1346 = vmul.f32 %v1345, 0.6931472
  %v1347 = vlog2.pop %v1289
  %v1348 = vmul.f32 %v1347, 0.6931472
  %v1349 = vlog2.pop %v1290
  %v1350 = vmul.f32 %v1349, 0.6931472
  %v1351 = vlog2.pop %v1291
  %v1352 = vmul.f32 %v1351, 0.6931472
  %v1353 = vlog2.pop %v1292
  %v1354 = vmul.f32 %v1353, 0.6931472
  %v1355 = vlog2.pop %v1293
  %v1356 = vmul.f32 %v1355, 0.6931472
  %v1357 = vlog2.pop %v1294
  %v1358 = vmul.f32 %v1357, 0.6931472
  %v1391 = vlaneseq
  %v1392 = vshrl.u32 %v1391, 7
  %v1393 = vsub.s32 %v383, %v1392
  %v1394 = vrot.slane %v1296, %v1393
  %v1395 = vlaneseq
  %v1396 = vshrl.u32 %v1395, 7
  %v1397 = vsub.s32 %v388, %v1396
  %v1398 = vrot.slane %v1298, %v1397
  %v1399 = vsel %vm393, %v1398, %v1394
  %v1400 = vlaneseq
  %v1401 = vshrl.u32 %v1400, 7
  %v1402 = vsub.s32 %v383, %v1401
  %v1403 = vrot.slane %v1300, %v1402
  %v1404 = vlaneseq
  %v1405 = vshrl.u32 %v1404, 7
  %v1406 = vsub.s32 %v388, %v1405
  %v1407 = vrot.slane %v1302, %v1406
  %v1408 = vsel %vm393, %v1407, %v1403
  %v1409 = vlaneseq
  %v1410 = vshrl.u32 %v1409, 7
  %v1411 = vsub.s32 %v383, %v1410
  %v1412 = vrot.slane %v1304, %v1411
  %v1413 = vlaneseq
  %v1414 = vshrl.u32 %v1413, 7
  %v1415 = vsub.s32 %v388, %v1414
  %v1416 = vrot.slane %v1306, %v1415
  %v1417 = vsel %vm393, %v1416, %v1412
  %v1418 = vlaneseq
  %v1419 = vshrl.u32 %v1418, 7
  %v1420 = vsub.s32 %v383, %v1419
  %v1421 = vrot.slane %v1308, %v1420
  %v1422 = vlaneseq
  %v1423 = vshrl.u32 %v1422, 7
  %v1424 = vsub.s32 %v388, %v1423
  %v1425 = vrot.slane %v1310, %v1424
  %v1426 = vsel %vm393, %v1425, %v1421
  %v1427 = vlaneseq
  %v1428 = vshrl.u32 %v1427, 7
  %v1429 = vsub.s32 %v383, %v1428
  %v1430 = vrot.slane %v1312, %v1429
  %v1431 = vlaneseq
  %v1432 = vshrl.u32 %v1431, 7
  %v1433 = vsub.s32 %v388, %v1432
  %v1434 = vrot.slane %v1314, %v1433
  %v1435 = vsel %vm393, %v1434, %v1430
  %v1436 = vlaneseq
  %v1437 = vshrl.u32 %v1436, 7
  %v1438 = vsub.s32 %v383, %v1437
  %v1439 = vrot.slane %v1316, %v1438
  %v1440 = vlaneseq
  %v1441 = vshrl.u32 %v1440, 7
  %v1442 = vsub.s32 %v388, %v1441
  %v1443 = vrot.slane %v1318, %v1442
  %v1444 = vsel %vm393, %v1443, %v1439
  %v1445 = vlaneseq
  %v1446 = vshrl.u32 %v1445, 7
  %v1447 = vsub.s32 %v383, %v1446
  %v1448 = vrot.slane %v1320, %v1447
  %v1449 = vlaneseq
  %v1450 = vshrl.u32 %v1449, 7
  %v1451 = vsub.s32 %v388, %v1450
  %v1452 = vrot.slane %v1322, %v1451
  %v1453 = vsel %vm393, %v1452, %v1448
  %v1454 = vlaneseq
  %v1455 = vshrl.u32 %v1454, 7
  %v1456 = vsub.s32 %v383, %v1455
  %v1457 = vrot.slane %v1324, %v1456
  %v1458 = vlaneseq
  %v1459 = vshrl.u32 %v1458, 7
  %v1460 = vsub.s32 %v388, %v1459
  %v1461 = vrot.slane %v1326, %v1460
  %v1462 = vsel %vm393, %v1461, %v1457
  %v1463 = vlaneseq
  %v1464 = vshrl.u32 %v1463, 7
  %v1465 = vsub.s32 %v383, %v1464
  %v1466 = vrot.slane %v1328, %v1465
  %v1467 = vlaneseq
  %v1468 = vshrl.u32 %v1467, 7
  %v1469 = vsub.s32 %v388, %v1468
  %v1470 = vrot.slane %v1330, %v1469
  %v1471 = vsel %vm393, %v1470, %v1466
  %v1472 = vlaneseq
  %v1473 = vshrl.u32 %v1472, 7
  %v1474 = vsub.s32 %v383, %v1473
  %v1475 = vrot.slane %v1332, %v1474
  %v1476 = vlaneseq
  %v1477 = vshrl.u32 %v1476, 7
  %v1478 = vsub.s32 %v388, %v1477
  %v1479 = vrot.slane %v1334, %v1478
  %v1480 = vsel %vm393, %v1479, %v1475
  %v1481 = vlaneseq
  %v1482 = vshrl.u32 %v1481, 7
  %v1483 = vsub.s32 %v383, %v1482
  %v1484 = vrot.slane %v1336, %v1483
  %v1485 = vlaneseq
  %v1486 = vshrl.u32 %v1485, 7
  %v1487 = vsub.s32 %v388, %v1486
  %v1488 = vrot.slane %v1338, %v1487
  %v1489 = vsel %vm393, %v1488, %v1484
  %v1490 = vlaneseq
  %v1491 = vshrl.u32 %v1490, 7
  %v1492 = vsub.s32 %v383, %v1491
  %v1493 = vrot.slane %v1340, %v1492
  %v1494 = vlaneseq
  %v1495 = vshrl.u32 %v1494, 7
  %v1496 = vsub.s32 %v388, %v1495
  %v1497 = vrot.slane %v1342, %v1496
  %v1498 = vsel %vm393, %v1497, %v1493
  %v1499 = vlaneseq
  %v1500 = vshrl.u32 %v1499, 7
  %v1501 = vsub.s32 %v383, %v1500
  %v1502 = vrot.slane %v1344, %v1501
  %v1503 = vlaneseq
  %v1504 = vshrl.u32 %v1503, 7
  %v1505 = vsub.s32 %v388, %v1504
  %v1506 = vrot.slane %v1346, %v1505
  %v1507 = vsel %vm393, %v1506, %v1502
  %v1508 = vlaneseq
  %v1509 = vshrl.u32 %v1508, 7
  %v1510 = vsub.s32 %v383, %v1509
  %v1511 = vrot.slane %v1348, %v1510
  %v1512 = vlaneseq
  %v1513 = vshrl.u32 %v1512, 7
  %v1514 = vsub.s32 %v388, %v1513
  %v1515 = vrot.slane %v1350, %v1514
  %v1516 = vsel %vm393, %v1515, %v1511
  %v1517 = vlaneseq
  %v1518 = vshrl.u32 %v1517, 7
  %v1519 = vsub.s32 %v383, %v1518
  %v1520 = vrot.slane %v1352, %v1519
  %v1521 = vlaneseq
  %v1522 = vshrl.u32 %v1521, 7
  %v1523 = vsub.s32 %v388, %v1522
  %v1524 = vrot.slane %v1354, %v1523
  %v1525 = vsel %vm393, %v1524, %v1520
  %v1526 = vlaneseq
  %v1527 = vshrl.u32 %v1526, 7
  %v1528 = vsub.s32 %v383, %v1527
  %v1529 = vrot.slane %v1356, %v1528
  %v1530 = vlaneseq
  %v1531 = vshrl.u32 %v1530, 7
  %v1532 = vsub.s32 %v388, %v1531
  %v1533 = vrot.slane %v1358, %v1532
  %v1534 = vsel %vm393, %v1533, %v1529
  %v1535 = vsel %vm530, %v1408, %v1399
  %v1536 = vsel %vm532, %v1417, %v1535
  %v1537 = vsel %vm534, %v1426, %v1536
  %v1538 = vsel %vm536, %v1435, %v1537
  %v1539 = vsel %vm538, %v1444, %v1538
  %v1540 = vsel %vm540, %v1453, %v1539
  %v1541 = vsel %vm542, %v1462, %v1540
  %v1542 = vsel %vm530, %v1480, %v1471
  %v1543 = vsel %vm532, %v1489, %v1542
  %v1544 = vsel %vm534, %v1498, %v1543
  %v1545 = vsel %vm536, %v1507, %v1544
  %v1546 = vsel %vm538, %v1516, %v1545
  %v1547 = vsel %vm540, %v1525, %v1546
  %v1548 = vsel %vm542, %v1534, %v1547
  %s1551 = scalar_lea.vmem %s3, 32
  %1552 = vst.msk [vmem:[%s1551] sm:$0xff] %vm553, %v1541
  %1553 = vst.msk [vmem:[%s1551 + $0x8] sm:$0xff] %vm553, %v1548
  %v1554 = vld [vmem:[%s1 + $0x3] sm:$0x1]
  %v1555 = vlaneseq
  %v1556 = vshrl.u32 %v1555, 7
  %v1557 = vsub.s32 0, %v1556
  %v1558 = vrot.slane %v1554, %v1557
  %v1559 = vmul.f32 %v14, %v1558
  %v1560 = vmul.f32 %v15, %v1558
  %v1561 = vmul.f32 %v16, %v1558
  %v1562 = vmul.f32 %v17, %v1558
  %v1563 = vmul.f32 %v18, %v1558
  %v1564 = vmul.f32 %v19, %v1558
  %v1565 = vmul.f32 %v20, %v1558
  %v1566 = vmul.f32 %v21, %v1558
  %v1567 = vmul.f32 %v22, %v1558
  %v1568 = vmul.f32 %v23, %v1558
  %v1569 = vmul.f32 %v24, %v1558
  %v1570 = vmul.f32 %v25, %v1558
  %v1571 = vmul.f32 %v26, %v1558
  %v1572 = vmul.f32 %v27, %v1558
  %v1573 = vmul.f32 %v28, %v1558
  %v1574 = vmul.f32 %v29, %v1558
  %v1575 = vmul.f32 %v30, %v1558
  %v1576 = vmul.f32 %v31, %v1558
  %v1577 = vmul.f32 %v32, %v1558
  %v1578 = vmul.f32 %v33, %v1558
  %v1579 = vmul.f32 %v34, %v1558
  %v1580 = vmul.f32 %v35, %v1558
  %v1581 = vmul.f32 %v36, %v1558
  %v1582 = vmul.f32 %v37, %v1558
  %v1583 = vmul.f32 %v38, %v1558
  %v1584 = vmul.f32 %v39, %v1558
  %v1585 = vmul.f32 %v40, %v1558
  %v1586 = vmul.f32 %v41, %v1558
  %v1587 = vmul.f32 %v42, %v1558
  %v1588 = vmul.f32 %v43, %v1558
  %v1589 = vmul.f32 %v44, %v1558
  %v1590 = vmul.f32 %v45, %v1558
  %v1591 = vsel %vm83, %v1559, 0.0
  %1592 = vadd.xlane.f32.xlu0 %v1591
  %v1593 = vpop.xlane.xlu0 %1592
  %v1594 = vsel %vm83, %v1560, 0.0
  %1595 = vadd.xlane.f32.xlu0 %v1594
  %v1596 = vpop.xlane.xlu0 %1595
  %v1597 = vsel %vm83, %v1561, 0.0
  %1598 = vadd.xlane.f32.xlu0 %v1597
  %v1599 = vpop.xlane.xlu0 %1598
  %v1600 = vsel %vm83, %v1562, 0.0
  %1601 = vadd.xlane.f32.xlu0 %v1600
  %v1602 = vpop.xlane.xlu0 %1601
  %v1603 = vsel %vm83, %v1563, 0.0
  %1604 = vadd.xlane.f32.xlu0 %v1603
  %v1605 = vpop.xlane.xlu0 %1604
  %v1606 = vsel %vm83, %v1564, 0.0
  %1607 = vadd.xlane.f32.xlu0 %v1606
  %v1608 = vpop.xlane.xlu0 %1607
  %v1609 = vsel %vm83, %v1565, 0.0
  %1610 = vadd.xlane.f32.xlu0 %v1609
  %v1611 = vpop.xlane.xlu0 %1610
  %v1612 = vsel %vm83, %v1566, 0.0
  %1613 = vadd.xlane.f32.xlu0 %v1612
  %v1614 = vpop.xlane.xlu0 %1613
  %v1615 = vsel %vm83, %v1567, 0.0
  %1616 = vadd.xlane.f32.xlu0 %v1615
  %v1617 = vpop.xlane.xlu0 %1616
  %v1618 = vsel %vm83, %v1568, 0.0
  %1619 = vadd.xlane.f32.xlu0 %v1618
  %v1620 = vpop.xlane.xlu0 %1619
  %v1621 = vsel %vm83, %v1569, 0.0
  %1622 = vadd.xlane.f32.xlu0 %v1621
  %v1623 = vpop.xlane.xlu0 %1622
  %v1624 = vsel %vm83, %v1570, 0.0
  %1625 = vadd.xlane.f32.xlu0 %v1624
  %v1626 = vpop.xlane.xlu0 %1625
  %v1627 = vsel %vm83, %v1571, 0.0
  %1628 = vadd.xlane.f32.xlu0 %v1627
  %v1629 = vpop.xlane.xlu0 %1628
  %v1630 = vsel %vm83, %v1572, 0.0
  %1631 = vadd.xlane.f32.xlu0 %v1630
  %v1632 = vpop.xlane.xlu0 %1631
  %v1633 = vsel %vm83, %v1573, 0.0
  %1634 = vadd.xlane.f32.xlu0 %v1633
  %v1635 = vpop.xlane.xlu0 %1634
  %v1636 = vsel %vm83, %v1574, 0.0
  %1637 = vadd.xlane.f32.xlu0 %v1636
  %v1638 = vpop.xlane.xlu0 %1637
  %v1639 = vsel %vm83, %v1575, 0.0
  %1640 = vadd.xlane.f32.xlu0 %v1639
  %v1641 = vpop.xlane.xlu0 %1640
  %v1642 = vsel %vm83, %v1576, 0.0
  %1643 = vadd.xlane.f32.xlu0 %v1642
  %v1644 = vpop.xlane.xlu0 %1643
  %v1645 = vsel %vm83, %v1577, 0.0
  %1646 = vadd.xlane.f32.xlu0 %v1645
  %v1647 = vpop.xlane.xlu0 %1646
  %v1648 = vsel %vm83, %v1578, 0.0
  %1649 = vadd.xlane.f32.xlu0 %v1648
  %v1650 = vpop.xlane.xlu0 %1649
  %v1651 = vsel %vm83, %v1579, 0.0
  %1652 = vadd.xlane.f32.xlu0 %v1651
  %v1653 = vpop.xlane.xlu0 %1652
  %v1654 = vsel %vm83, %v1580, 0.0
  %1655 = vadd.xlane.f32.xlu0 %v1654
  %v1656 = vpop.xlane.xlu0 %1655
  %v1657 = vsel %vm83, %v1581, 0.0
  %1658 = vadd.xlane.f32.xlu0 %v1657
  %v1659 = vpop.xlane.xlu0 %1658
  %v1660 = vsel %vm83, %v1582, 0.0
  %1661 = vadd.xlane.f32.xlu0 %v1660
  %v1662 = vpop.xlane.xlu0 %1661
  %v1663 = vsel %vm83, %v1583, 0.0
  %1664 = vadd.xlane.f32.xlu0 %v1663
  %v1665 = vpop.xlane.xlu0 %1664
  %v1666 = vsel %vm83, %v1584, 0.0
  %1667 = vadd.xlane.f32.xlu0 %v1666
  %v1668 = vpop.xlane.xlu0 %1667
  %v1669 = vsel %vm83, %v1585, 0.0
  %1670 = vadd.xlane.f32.xlu0 %v1669
  %v1671 = vpop.xlane.xlu0 %1670
  %v1672 = vsel %vm83, %v1586, 0.0
  %1673 = vadd.xlane.f32.xlu0 %v1672
  %v1674 = vpop.xlane.xlu0 %1673
  %v1675 = vsel %vm83, %v1587, 0.0
  %1676 = vadd.xlane.f32.xlu0 %v1675
  %v1677 = vpop.xlane.xlu0 %1676
  %v1678 = vsel %vm83, %v1588, 0.0
  %1679 = vadd.xlane.f32.xlu0 %v1678
  %v1680 = vpop.xlane.xlu0 %1679
  %v1681 = vsel %vm83, %v1589, 0.0
  %1682 = vadd.xlane.f32.xlu0 %v1681
  %v1683 = vpop.xlane.xlu0 %1682
  %v1684 = vsel %vm83, %v1590, 0.0
  %1685 = vadd.xlane.f32.xlu0 %v1684
  %v1686 = vpop.xlane.xlu0 %1685
  %s1687 = scalar_lea.vmem %s2, 3
  %v1688 = vld [vmem:[%s1687] sm:$0x1]
  %v1690 = vlaneseq
  %v1691 = vshrl.u32 %v1690, 7
  %v1692 = vsub.s32 0, %v1691
  %v1693 = vrot.slane %v1688, %v1692
  %1694 = vset.pattern.permute.xlu0 0
  %1695 = vperm.xlu0 %1694, %v1693
  %v1696 = vpop.permute.xlu0 %1695
  %v1698 = vadd.f32 %v1593, %v1696
  %v1699 = vadd.f32 %v1596, %v1696
  %v1700 = vadd.f32 %v1599, %v1696
  %v1701 = vadd.f32 %v1602, %v1696
  %v1702 = vadd.f32 %v1605, %v1696
  %v1703 = vadd.f32 %v1608, %v1696
  %v1704 = vadd.f32 %v1611, %v1696
  %v1705 = vadd.f32 %v1614, %v1696
  %v1706 = vadd.f32 %v1617, %v1696
  %v1707 = vadd.f32 %v1620, %v1696
  %v1708 = vadd.f32 %v1623, %v1696
  %v1709 = vadd.f32 %v1626, %v1696
  %v1710 = vadd.f32 %v1629, %v1696
  %v1711 = vadd.f32 %v1632, %v1696
  %v1712 = vadd.f32 %v1635, %v1696
  %v1713 = vadd.f32 %v1638, %v1696
  %v1714 = vadd.f32 %v1641, %v1696
  %v1715 = vadd.f32 %v1644, %v1696
  %v1716 = vadd.f32 %v1647, %v1696
  %v1717 = vadd.f32 %v1650, %v1696
  %v1718 = vadd.f32 %v1653, %v1696
  %v1719 = vadd.f32 %v1656, %v1696
  %v1720 = vadd.f32 %v1659, %v1696
  %v1721 = vadd.f32 %v1662, %v1696
  %v1722 = vadd.f32 %v1665, %v1696
  %v1723 = vadd.f32 %v1668, %v1696
  %v1724 = vadd.f32 %v1671, %v1696
  %v1725 = vadd.f32 %v1674, %v1696
  %v1726 = vadd.f32 %v1677, %v1696
  %v1727 = vadd.f32 %v1680, %v1696
  %v1728 = vadd.f32 %v1683, %v1696
  %v1729 = vadd.f32 %v1686, %v1696
  %v1730 = vmax.f32 %v1698, 0.0
  %v1731 = vmax.f32 %v1699, 0.0
  %v1732 = vmax.f32 %v1700, 0.0
  %v1733 = vmax.f32 %v1701, 0.0
  %v1734 = vmax.f32 %v1702, 0.0
  %v1735 = vmax.f32 %v1703, 0.0
  %v1736 = vmax.f32 %v1704, 0.0
  %v1737 = vmax.f32 %v1705, 0.0
  %v1738 = vmax.f32 %v1706, 0.0
  %v1739 = vmax.f32 %v1707, 0.0
  %v1740 = vmax.f32 %v1708, 0.0
  %v1741 = vmax.f32 %v1709, 0.0
  %v1742 = vmax.f32 %v1710, 0.0
  %v1743 = vmax.f32 %v1711, 0.0
  %v1744 = vmax.f32 %v1712, 0.0
  %v1745 = vmax.f32 %v1713, 0.0
  %v1746 = vmax.f32 %v1714, 0.0
  %v1747 = vmax.f32 %v1715, 0.0
  %v1748 = vmax.f32 %v1716, 0.0
  %v1749 = vmax.f32 %v1717, 0.0
  %v1750 = vmax.f32 %v1718, 0.0
  %v1751 = vmax.f32 %v1719, 0.0
  %v1752 = vmax.f32 %v1720, 0.0
  %v1753 = vmax.f32 %v1721, 0.0
  %v1754 = vmax.f32 %v1722, 0.0
  %v1755 = vmax.f32 %v1723, 0.0
  %v1756 = vmax.f32 %v1724, 0.0
  %v1757 = vmax.f32 %v1725, 0.0
  %v1758 = vmax.f32 %v1726, 0.0
  %v1759 = vmax.f32 %v1727, 0.0
  %v1760 = vmax.f32 %v1728, 0.0
  %v1761 = vmax.f32 %v1729, 0.0
  %v1762 = vmax.f32 %v1730, 1e-06
  %v1763 = vmax.f32 %v1731, 1e-06
  %v1764 = vmax.f32 %v1732, 1e-06
  %v1765 = vmax.f32 %v1733, 1e-06
  %v1766 = vmax.f32 %v1734, 1e-06
  %v1767 = vmax.f32 %v1735, 1e-06
  %v1768 = vmax.f32 %v1736, 1e-06
  %v1769 = vmax.f32 %v1737, 1e-06
  %v1770 = vmax.f32 %v1738, 1e-06
  %v1771 = vmax.f32 %v1739, 1e-06
  %v1772 = vmax.f32 %v1740, 1e-06
  %v1773 = vmax.f32 %v1741, 1e-06
  %v1774 = vmax.f32 %v1742, 1e-06
  %v1775 = vmax.f32 %v1743, 1e-06
  %v1776 = vmax.f32 %v1744, 1e-06
  %v1777 = vmax.f32 %v1745, 1e-06
  %v1778 = vmax.f32 %v1746, 1e-06
  %v1779 = vmax.f32 %v1747, 1e-06
  %v1780 = vmax.f32 %v1748, 1e-06
  %v1781 = vmax.f32 %v1749, 1e-06
  %v1782 = vmax.f32 %v1750, 1e-06
  %v1783 = vmax.f32 %v1751, 1e-06
  %v1784 = vmax.f32 %v1752, 1e-06
  %v1785 = vmax.f32 %v1753, 1e-06
  %v1786 = vmax.f32 %v1754, 1e-06
  %v1787 = vmax.f32 %v1755, 1e-06
  %v1788 = vmax.f32 %v1756, 1e-06
  %v1789 = vmax.f32 %v1757, 1e-06
  %v1790 = vmax.f32 %v1758, 1e-06
  %v1791 = vmax.f32 %v1759, 1e-06
  %v1792 = vmax.f32 %v1760, 1e-06
  %v1793 = vmax.f32 %v1761, 1e-06
  %v1794 = vlog2.pop %v1762
  %v1795 = vmul.f32 %v1794, 0.6931472
  %v1796 = vlog2.pop %v1763
  %v1797 = vmul.f32 %v1796, 0.6931472
  %v1798 = vlog2.pop %v1764
  %v1799 = vmul.f32 %v1798, 0.6931472
  %v1800 = vlog2.pop %v1765
  %v1801 = vmul.f32 %v1800, 0.6931472
  %v1802 = vlog2.pop %v1766
  %v1803 = vmul.f32 %v1802, 0.6931472
  %v1804 = vlog2.pop %v1767
  %v1805 = vmul.f32 %v1804, 0.6931472
  %v1806 = vlog2.pop %v1768
  %v1807 = vmul.f32 %v1806, 0.6931472
  %v1808 = vlog2.pop %v1769
  %v1809 = vmul.f32 %v1808, 0.6931472
  %v1810 = vlog2.pop %v1770
  %v1811 = vmul.f32 %v1810, 0.6931472
  %v1812 = vlog2.pop %v1771
  %v1813 = vmul.f32 %v1812, 0.6931472
  %v1814 = vlog2.pop %v1772
  %v1815 = vmul.f32 %v1814, 0.6931472
  %v1816 = vlog2.pop %v1773
  %v1817 = vmul.f32 %v1816, 0.6931472
  %v1818 = vlog2.pop %v1774
  %v1819 = vmul.f32 %v1818, 0.6931472
  %v1820 = vlog2.pop %v1775
  %v1821 = vmul.f32 %v1820, 0.6931472
  %v1822 = vlog2.pop %v1776
  %v1823 = vmul.f32 %v1822, 0.6931472
  %v1824 = vlog2.pop %v1777
  %v1825 = vmul.f32 %v1824, 0.6931472
  %v1826 = vlog2.pop %v1778
  %v1827 = vmul.f32 %v1826, 0.6931472
  %v1828 = vlog2.pop %v1779
  %v1829 = vmul.f32 %v1828, 0.6931472
  %v1830 = vlog2.pop %v1780
  %v1831 = vmul.f32 %v1830, 0.6931472
  %v1832 = vlog2.pop %v1781
  %v1833 = vmul.f32 %v1832, 0.6931472
  %v1834 = vlog2.pop %v1782
  %v1835 = vmul.f32 %v1834, 0.6931472
  %v1836 = vlog2.pop %v1783
  %v1837 = vmul.f32 %v1836, 0.6931472
  %v1838 = vlog2.pop %v1784
  %v1839 = vmul.f32 %v1838, 0.6931472
  %v1840 = vlog2.pop %v1785
  %v1841 = vmul.f32 %v1840, 0.6931472
  %v1842 = vlog2.pop %v1786
  %v1843 = vmul.f32 %v1842, 0.6931472
  %v1844 = vlog2.pop %v1787
  %v1845 = vmul.f32 %v1844, 0.6931472
  %v1846 = vlog2.pop %v1788
  %v1847 = vmul.f32 %v1846, 0.6931472
  %v1848 = vlog2.pop %v1789
  %v1849 = vmul.f32 %v1848, 0.6931472
  %v1850 = vlog2.pop %v1790
  %v1851 = vmul.f32 %v1850, 0.6931472
  %v1852 = vlog2.pop %v1791
  %v1853 = vmul.f32 %v1852, 0.6931472
  %v1854 = vlog2.pop %v1792
  %v1855 = vmul.f32 %v1854, 0.6931472
  %v1856 = vlog2.pop %v1793
  %v1857 = vmul.f32 %v1856, 0.6931472
  %v1890 = vlaneseq
  %v1891 = vshrl.u32 %v1890, 7
  %v1892 = vsub.s32 %v383, %v1891
  %v1893 = vrot.slane %v1795, %v1892
  %v1894 = vlaneseq
  %v1895 = vshrl.u32 %v1894, 7
  %v1896 = vsub.s32 %v388, %v1895
  %v1897 = vrot.slane %v1797, %v1896
  %v1898 = vsel %vm393, %v1897, %v1893
  %v1899 = vlaneseq
  %v1900 = vshrl.u32 %v1899, 7
  %v1901 = vsub.s32 %v383, %v1900
  %v1902 = vrot.slane %v1799, %v1901
  %v1903 = vlaneseq
  %v1904 = vshrl.u32 %v1903, 7
  %v1905 = vsub.s32 %v388, %v1904
  %v1906 = vrot.slane %v1801, %v1905
  %v1907 = vsel %vm393, %v1906, %v1902
  %v1908 = vlaneseq
  %v1909 = vshrl.u32 %v1908, 7
  %v1910 = vsub.s32 %v383, %v1909
  %v1911 = vrot.slane %v1803, %v1910
  %v1912 = vlaneseq
  %v1913 = vshrl.u32 %v1912, 7
  %v1914 = vsub.s32 %v388, %v1913
  %v1915 = vrot.slane %v1805, %v1914
  %v1916 = vsel %vm393, %v1915, %v1911
  %v1917 = vlaneseq
  %v1918 = vshrl.u32 %v1917, 7
  %v1919 = vsub.s32 %v383, %v1918
  %v1920 = vrot.slane %v1807, %v1919
  %v1921 = vlaneseq
  %v1922 = vshrl.u32 %v1921, 7
  %v1923 = vsub.s32 %v388, %v1922
  %v1924 = vrot.slane %v1809, %v1923
  %v1925 = vsel %vm393, %v1924, %v1920
  %v1926 = vlaneseq
  %v1927 = vshrl.u32 %v1926, 7
  %v1928 = vsub.s32 %v383, %v1927
  %v1929 = vrot.slane %v1811, %v1928
  %v1930 = vlaneseq
  %v1931 = vshrl.u32 %v1930, 7
  %v1932 = vsub.s32 %v388, %v1931
  %v1933 = vrot.slane %v1813, %v1932
  %v1934 = vsel %vm393, %v1933, %v1929
  %v1935 = vlaneseq
  %v1936 = vshrl.u32 %v1935, 7
  %v1937 = vsub.s32 %v383, %v1936
  %v1938 = vrot.slane %v1815, %v1937
  %v1939 = vlaneseq
  %v1940 = vshrl.u32 %v1939, 7
  %v1941 = vsub.s32 %v388, %v1940
  %v1942 = vrot.slane %v1817, %v1941
  %v1943 = vsel %vm393, %v1942, %v1938
  %v1944 = vlaneseq
  %v1945 = vshrl.u32 %v1944, 7
  %v1946 = vsub.s32 %v383, %v1945
  %v1947 = vrot.slane %v1819, %v1946
  %v1948 = vlaneseq
  %v1949 = vshrl.u32 %v1948, 7
  %v1950 = vsub.s32 %v388, %v1949
  %v1951 = vrot.slane %v1821, %v1950
  %v1952 = vsel %vm393, %v1951, %v1947
  %v1953 = vlaneseq
  %v1954 = vshrl.u32 %v1953, 7
  %v1955 = vsub.s32 %v383, %v1954
  %v1956 = vrot.slane %v1823, %v1955
  %v1957 = vlaneseq
  %v1958 = vshrl.u32 %v1957, 7
  %v1959 = vsub.s32 %v388, %v1958
  %v1960 = vrot.slane %v1825, %v1959
  %v1961 = vsel %vm393, %v1960, %v1956
  %v1962 = vlaneseq
  %v1963 = vshrl.u32 %v1962, 7
  %v1964 = vsub.s32 %v383, %v1963
  %v1965 = vrot.slane %v1827, %v1964
  %v1966 = vlaneseq
  %v1967 = vshrl.u32 %v1966, 7
  %v1968 = vsub.s32 %v388, %v1967
  %v1969 = vrot.slane %v1829, %v1968
  %v1970 = vsel %vm393, %v1969, %v1965
  %v1971 = vlaneseq
  %v1972 = vshrl.u32 %v1971, 7
  %v1973 = vsub.s32 %v383, %v1972
  %v1974 = vrot.slane %v1831, %v1973
  %v1975 = vlaneseq
  %v1976 = vshrl.u32 %v1975, 7
  %v1977 = vsub.s32 %v388, %v1976
  %v1978 = vrot.slane %v1833, %v1977
  %v1979 = vsel %vm393, %v1978, %v1974
  %v1980 = vlaneseq
  %v1981 = vshrl.u32 %v1980, 7
  %v1982 = vsub.s32 %v383, %v1981
  %v1983 = vrot.slane %v1835, %v1982
  %v1984 = vlaneseq
  %v1985 = vshrl.u32 %v1984, 7
  %v1986 = vsub.s32 %v388, %v1985
  %v1987 = vrot.slane %v1837, %v1986
  %v1988 = vsel %vm393, %v1987, %v1983
  %v1989 = vlaneseq
  %v1990 = vshrl.u32 %v1989, 7
  %v1991 = vsub.s32 %v383, %v1990
  %v1992 = vrot.slane %v1839, %v1991
  %v1993 = vlaneseq
  %v1994 = vshrl.u32 %v1993, 7
  %v1995 = vsub.s32 %v388, %v1994
  %v1996 = vrot.slane %v1841, %v1995
  %v1997 = vsel %vm393, %v1996, %v1992
  %v1998 = vlaneseq
  %v1999 = vshrl.u32 %v1998, 7
  %v2000 = vsub.s32 %v383, %v1999
  %v2001 = vrot.slane %v1843, %v2000
  %v2002 = vlaneseq
  %v2003 = vshrl.u32 %v2002, 7
  %v2004 = vsub.s32 %v388, %v2003
  %v2005 = vrot.slane %v1845, %v2004
  %v2006 = vsel %vm393, %v2005, %v2001
  %v2007 = vlaneseq
  %v2008 = vshrl.u32 %v2007, 7
  %v2009 = vsub.s32 %v383, %v2008
  %v2010 = vrot.slane %v1847, %v2009
  %v2011 = vlaneseq
  %v2012 = vshrl.u32 %v2011, 7
  %v2013 = vsub.s32 %v388, %v2012
  %v2014 = vrot.slane %v1849, %v2013
  %v2015 = vsel %vm393, %v2014, %v2010
  %v2016 = vlaneseq
  %v2017 = vshrl.u32 %v2016, 7
  %v2018 = vsub.s32 %v383, %v2017
  %v2019 = vrot.slane %v1851, %v2018
  %v2020 = vlaneseq
  %v2021 = vshrl.u32 %v2020, 7
  %v2022 = vsub.s32 %v388, %v2021
  %v2023 = vrot.slane %v1853, %v2022
  %v2024 = vsel %vm393, %v2023, %v2019
  %v2025 = vlaneseq
  %v2026 = vshrl.u32 %v2025, 7
  %v2027 = vsub.s32 %v383, %v2026
  %v2028 = vrot.slane %v1855, %v2027
  %v2029 = vlaneseq
  %v2030 = vshrl.u32 %v2029, 7
  %v2031 = vsub.s32 %v388, %v2030
  %v2032 = vrot.slane %v1857, %v2031
  %v2033 = vsel %vm393, %v2032, %v2028
  %v2034 = vsel %vm530, %v1907, %v1898
  %v2035 = vsel %vm532, %v1916, %v2034
  %v2036 = vsel %vm534, %v1925, %v2035
  %v2037 = vsel %vm536, %v1934, %v2036
  %v2038 = vsel %vm538, %v1943, %v2037
  %v2039 = vsel %vm540, %v1952, %v2038
  %v2040 = vsel %vm542, %v1961, %v2039
  %v2041 = vsel %vm530, %v1979, %v1970
  %v2042 = vsel %vm532, %v1988, %v2041
  %v2043 = vsel %vm534, %v1997, %v2042
  %v2044 = vsel %vm536, %v2006, %v2043
  %v2045 = vsel %vm538, %v2015, %v2044
  %v2046 = vsel %vm540, %v2024, %v2045
  %v2047 = vsel %vm542, %v2033, %v2046
  %s2050 = scalar_lea.vmem %s3, 48
  %2051 = vst.msk [vmem:[%s2050] sm:$0xff] %vm553, %v2040
  %2052 = vst.msk [vmem:[%s2050 + $0x8] sm:$0xff] %vm553, %v2047
  // Predicated region
  $region14: #{forward_pallas.5} parent=0 // pred_check
    _
  $region15: #{forward_pallas.5} parent=0 // pred_check_branch
    %2054 = sbr.rel (0) target = $region17
  $region16: #{forward_pallas.5} parent=0 // pred_region
    _
  $region17: #{forward_pallas.5} parent=0 // pred_fallthru
    _
  // Predicated region
  $region18: #{forward_pallas.5} parent=0 // pred_check
    _
  $region19: #{forward_pallas.5} parent=0 // pred_check_branch
    %2056 = sbr.rel (0) target = $region21
  $region20: #{forward_pallas.5} parent=0 // pred_region
    _
  $region21: #{forward_pallas.5} parent=0 // pred_fallthru
    _

// kernel: forward_pallas.6
$region0: #{forward_pallas.6}
  #allocation0 [shape = 'u32[]', space=smem, size = 0x4, offset = 0x4, fixed_abs, tag = 'smem constant byte address 0x4 - core index']
  #allocation1 [shape = 'u32[144,128]{1,0:T(1,128)}', space=vmem, size = 0x12000, scoped, tag = 'internal scratch']
  %s0 = inlined_call_operand.vmem [shape: f32[2,16,32], index: 0, kind: input, shape index: {}]
  %s1 = inlined_call_operand.vmem [shape: f32[2,16,32], index: 1, kind: input, shape index: {}]
  %s2 = inlined_call_operand.vmem [shape: f32[4,16,16], index: 2, kind: input, shape index: {}]
  %s3 = inlined_call_operand.vmem [shape: f32[2,1,16], index: 3, kind: input, shape index: {}]
  %s4 = inlined_call_operand.vmem [shape: f32[32,128], index: 4, kind: input, shape index: {}]
  %s5 = inlined_call_operand.vmem [shape: f32[1,128], index: 5, kind: input, shape index: {}]
  %s6 = inlined_call_operand.vmem [shape: f32[32,64], index: 6, kind: input, shape index: {}]
  %s7 = inlined_call_operand.vmem [shape: f32[1,64], index: 7, kind: input, shape index: {}]
  %s8 = inlined_call_operand.vmem [shape: f32[64,32], index: 8, kind: input, shape index: {}]
  %s9 = inlined_call_operand.vmem [shape: f32[1,32], index: 9, kind: input, shape index: {}]
  %s10 = inlined_call_operand.vmem [shape: f32[1,32], index: 10, kind: input, shape index: {}]
  %s11 = inlined_call_operand.vmem [shape: f32[1,32], index: 11, kind: input, shape index: {}]
  %s12 = inlined_call_operand.vmem [shape: f32[1,32], index: 12, kind: input, shape index: {}]
  %s13 = inlined_call_operand.vmem [shape: f32[1,32], index: 13, kind: input, shape index: {}]
  %s14 = inlined_call_operand.vmem [shape: f32[32,64], index: 14, kind: input, shape index: {}]
  %s15 = inlined_call_operand.vmem [shape: f32[1,64], index: 15, kind: input, shape index: {}]
  %s16 = inlined_call_operand.vmem [shape: f32[64,32], index: 16, kind: input, shape index: {}]
  %s17 = inlined_call_operand.vmem [shape: f32[1,32], index: 17, kind: input, shape index: {}]
  %s18 = inlined_call_operand.vmem [shape: f32[1,32], index: 18, kind: input, shape index: {}]
  %s19 = inlined_call_operand.vmem [shape: f32[1,32], index: 19, kind: input, shape index: {}]
  %s20 = inlined_call_operand.vmem [shape: f32[2,16,32], index: 20, kind: output, shape index: {}]
  %s21 = sld [smem:[#allocation0]]
  $region113: #{forward_pallas.6} parent=0
    _
  %s23 = ssub.s32 1, %s21
  %s24 = scalar_select 0, %s23, %s21
  loop: start=0, step=1, limit=4
  $region2: #{forward_pallas.6} parent=0 // loop_pre_header
    _
  $region3: #{forward_pallas.6} parent=0 // loop_header
    %s26 = sphi 0, %s30
    %p27 = scmp.ge.s32.totalorder %s26, 4
    %s36 = sphi 0, %s38
    %s39 = sphi 0, %s36
    %s40 = sphi 0, %s39
    %s56 = sphi 0, %s40
    %s62 = sphi 0, %s64
    %s65 = sphi 0, %s62
    %s66 = sphi 0, %s65
    %s82 = sphi 0, %s66
    %s86 = sphi 0, %s86
    %s88 = sphi 0, %s86
    %s89 = sphi 0, %s88
    %s103 = sphi 0, %s89
    %s109 = sphi 0, %s111
    %s112 = sphi 0, %s109
    %s113 = sphi 0, %s112
    %s129 = sphi 0, %s113
    %s133 = sphi 0, %s133
    %s135 = sphi 0, %s133
    %s136 = sphi 0, %s135
    %s150 = sphi 0, %s136
    %s154 = sphi 0, %s154
    %s156 = sphi 0, %s154
    %s157 = sphi 0, %s156
    %s171 = sphi 0, %s157
    %s175 = sphi 0, %s175
    %s177 = sphi 0, %s175
    %s178 = sphi 0, %s177
    %s192 = sphi 0, %s178
    %s196 = sphi 0, %s196
    %s198 = sphi 0, %s196
    %s199 = sphi 0, %s198
    %s213 = sphi 0, %s199
    %s217 = sphi 0, %s217
    %s219 = sphi 0, %s217
    %s220 = sphi 0, %s219
    %s234 = sphi 0, %s220
    %s238 = sphi 0, %s238
    %s240 = sphi 0, %s238
    %s241 = sphi 0, %s240
    %s255 = sphi 0, %s241
    %s259 = sphi 0, %s259
    %s261 = sphi 0, %s259
    %s262 = sphi 0, %s261
    %s276 = sphi 0, %s262
    %s280 = sphi 0, %s280
    %s282 = sphi 0, %s280
    %s283 = sphi 0, %s282
    %s297 = sphi 0, %s283
    %s301 = sphi 0, %s301
    %s303 = sphi 0, %s301
    %s304 = sphi 0, %s303
    %s318 = sphi 0, %s304
    %s322 = sphi 0, %s322
    %s324 = sphi 0, %s322
    %s325 = sphi 0, %s324
    %s339 = sphi 0, %s325
    %s343 = sphi 0, %s343
    %s345 = sphi 0, %s343
    %s346 = sphi 0, %s345
    %s360 = sphi 0, %s346
    %s364 = sphi 0, %s364
    %s366 = sphi 0, %s364
    %s367 = sphi 0, %s366
    %s381 = sphi 0, %s367
    %s385 = sphi 0, %s385
    %s387 = sphi 0, %s385
    %s388 = sphi 0, %s387
    %s402 = sphi 0, %s388
    %s406 = sphi 0, %s406
    %s408 = sphi 0, %s406
    %s409 = sphi 0, %s408
    %s423 = sphi 0, %s409
    %s427 = sphi 0, %s427
    %s429 = sphi 0, %s427
    %s430 = sphi 0, %s429
    %s444 = sphi 0, %s430
    %s448 = sphi 0, %s448
    %s450 = sphi 0, %s448
    %s451 = sphi 0, %s450
    %s465 = sphi 0, %s451
    %s471 = sphi 0, %s473
    %s474 = sphi 0, %s471
    %s475 = sphi 0, %s474
    %s491 = sphi 0, %s475
  $region4: #{forward_pallas.6} parent=0 // loop_header_branch
    %29 = sbr.rel (%p27) target = $region8
  $region5: #{forward_pallas.6} parent=0 // loop_body
    %s31 = ssub.s32 %s26, 1
    %s32 = ssub.s32 %s26, 2
    %s33 = sadd.s32 %s26, 1
    %s34 = ssub.s32 %s26, %s33
    %p35 = scmp.eq.s32.totalorder %s34, 0
    %s37 = sadd.s32 %s36, 1
    %s38 = scalar_select %p35, %s36, %s37
    %p41 = pneg %p35
    %p42 = scmp.eq.s32.totalorder %s26, 1
    %p43 = por %p41, %p42
    %p44 = scmp.ne.s32.totalorder %s36, %s39
    %p45 = scmp.eq.s32.totalorder %s26, 0
    %p46 = por %p44, %p45
    %p47 = scmp.ne.s32.totalorder %s36, %s39
    %p48 = scmp.eq.s32.totalorder %s31, 1
    %p49 = por %p47, %p48
    %p50 = scmp.ne.s32.totalorder %s39, %s40
    %p51 = scmp.eq.s32.totalorder %s31, 0
    %p52 = por %p50, %p51
    %p53 = scmp.ne.s32.totalorder %s39, %s40
    %p54 = scmp.eq.s32.totalorder %s32, 1
    %p55 = por %p53, %p54
    %p57 = scmp.ne.s32.totalorder %s40, %s56
    %p58 = scmp.eq.s32.totalorder %s32, 0
    %p59 = por %p57, %p58
    %s60 = ssub.s32 %s26, %s33
    %p61 = scmp.eq.s32.totalorder %s60, 0
    %s63 = sadd.s32 %s62, 1
    %s64 = scalar_select %p61, %s62, %s63
    %p67 = pneg %p61
    %p68 = scmp.eq.s32.totalorder %s26, 1
    %p69 = por %p67, %p68
    %p70 = scmp.ne.s32.totalorder %s62, %s65
    %p71 = scmp.eq.s32.totalorder %s26, 0
    %p72 = por %p70, %p71
    %p73 = scmp.ne.s32.totalorder %s62, %s65
    %p74 = scmp.eq.s32.totalorder %s31, 1
    %p75 = por %p73, %p74
    %p76 = scmp.ne.s32.totalorder %s65, %s66
    %p77 = scmp.eq.s32.totalorder %s31, 0
    %p78 = por %p76, %p77
    %p79 = scmp.ne.s32.totalorder %s65, %s66
    %p80 = scmp.eq.s32.totalorder %s32, 1
    %p81 = por %p79, %p80
    %p83 = scmp.ne.s32.totalorder %s66, %s82
    %p84 = scmp.eq.s32.totalorder %s32, 0
    %p85 = por %p83, %p84
    %s87 = sadd.s32 %s86, 1
    %p90 = scmp.eq.s32.totalorder %s26, 1
    %p91 = scmp.ne.s32.totalorder %s86, %s88
    %p92 = scmp.eq.s32.totalorder %s26, 0
    %p93 = por %p91, %p92
    %p94 = scmp.ne.s32.totalorder %s86, %s88
    %p95 = scmp.eq.s32.totalorder %s31, 1
    %p96 = por %p94, %p95
    %p97 = scmp.ne.s32.totalorder %s88, %s89
    %p98 = scmp.eq.s32.totalorder %s31, 0
    %p99 = por %p97, %p98
    %p100 = scmp.ne.s32.totalorder %s88, %s89
    %p101 = scmp.eq.s32.totalorder %s32, 1
    %p102 = por %p100, %p101
    %p104 = scmp.ne.s32.totalorder %s89, %s103
    %p105 = scmp.eq.s32.totalorder %s32, 0
    %p106 = por %p104, %p105
    %s107 = ssub.s32 %s26, %s33
    %p108 = scmp.eq.s32.totalorder %s107, 0
    %s110 = sadd.s32 %s109, 1
    %s111 = scalar_select %p108, %s109, %s110
    %p114 = pneg %p108
    %p115 = scmp.eq.s32.totalorder %s26, 1
    %p116 = por %p114, %p115
    %p117 = scmp.ne.s32.totalorder %s109, %s112
    %p118 = scmp.eq.s32.totalorder %s26, 0
    %p119 = por %p117, %p118
    %p120 = scmp.ne.s32.totalorder %s109, %s112
    %p121 = scmp.eq.s32.totalorder %s31, 1
    %p122 = por %p120, %p121
    %p123 = scmp.ne.s32.totalorder %s112, %s113
    %p124 = scmp.eq.s32.totalorder %s31, 0
    %p125 = por %p123, %p124
    %p126 = scmp.ne.s32.totalorder %s112, %s113
    %p127 = scmp.eq.s32.totalorder %s32, 1
    %p128 = por %p126, %p127
    %p130 = scmp.ne.s32.totalorder %s113, %s129
    %p131 = scmp.eq.s32.totalorder %s32, 0
    %p132 = por %p130, %p131
    %s134 = sadd.s32 %s133, 1
    %p137 = scmp.eq.s32.totalorder %s26, 1
    %p138 = scmp.ne.s32.totalorder %s133, %s135
    %p139 = scmp.eq.s32.totalorder %s26, 0
    %p140 = por %p138, %p139
    %p141 = scmp.ne.s32.totalorder %s133, %s135
    %p142 = scmp.eq.s32.totalorder %s31, 1
    %p143 = por %p141, %p142
    %p144 = scmp.ne.s32.totalorder %s135, %s136
    %p145 = scmp.eq.s32.totalorder %s31, 0
    %p146 = por %p144, %p145
    %p147 = scmp.ne.s32.totalorder %s135, %s136
    %p148 = scmp.eq.s32.totalorder %s32, 1
    %p149 = por %p147, %p148
    %p151 = scmp.ne.s32.totalorder %s136, %s150
    %p152 = scmp.eq.s32.totalorder %s32, 0
    %p153 = por %p151, %p152
    %s155 = sadd.s32 %s154, 1
    %p158 = scmp.eq.s32.totalorder %s26, 1
    %p159 = scmp.ne.s32.totalorder %s154, %s156
    %p160 = scmp.eq.s32.totalorder %s26, 0
    %p161 = por %p159, %p160
    %p162 = scmp.ne.s32.totalorder %s154, %s156
    %p163 = scmp.eq.s32.totalorder %s31, 1
    %p164 = por %p162, %p163
    %p165 = scmp.ne.s32.totalorder %s156, %s157
    %p166 = scmp.eq.s32.totalorder %s31, 0
    %p167 = por %p165, %p166
    %p168 = scmp.ne.s32.totalorder %s156, %s157
    %p169 = scmp.eq.s32.totalorder %s32, 1
    %p170 = por %p168, %p169
    %p172 = scmp.ne.s32.totalorder %s157, %s171
    %p173 = scmp.eq.s32.totalorder %s32, 0
    %p174 = por %p172, %p173
    %s176 = sadd.s32 %s175, 1
    %p179 = scmp.eq.s32.totalorder %s26, 1
    %p180 = scmp.ne.s32.totalorder %s175, %s177
    %p181 = scmp.eq.s32.totalorder %s26, 0
    %p182 = por %p180, %p181
    %p183 = scmp.ne.s32.totalorder %s175, %s177
    %p184 = scmp.eq.s32.totalorder %s31, 1
    %p185 = por %p183, %p184
    %p186 = scmp.ne.s32.totalorder %s177, %s178
    %p187 = scmp.eq.s32.totalorder %s31, 0
    %p188 = por %p186, %p187
    %p189 = scmp.ne.s32.totalorder %s177, %s178
    %p190 = scmp.eq.s32.totalorder %s32, 1
    %p191 = por %p189, %p190
    %p193 = scmp.ne.s32.totalorder %s178, %s192
    %p194 = scmp.eq.s32.totalorder %s32, 0
    %p195 = por %p193, %p194
    %s197 = sadd.s32 %s196, 1
    %p200 = scmp.eq.s32.totalorder %s26, 1
    %p201 = scmp.ne.s32.totalorder %s196, %s198
    %p202 = scmp.eq.s32.totalorder %s26, 0
    %p203 = por %p201, %p202
    %p204 = scmp.ne.s32.totalorder %s196, %s198
    %p205 = scmp.eq.s32.totalorder %s31, 1
    %p206 = por %p204, %p205
    %p207 = scmp.ne.s32.totalorder %s198, %s199
    %p208 = scmp.eq.s32.totalorder %s31, 0
    %p209 = por %p207, %p208
    %p210 = scmp.ne.s32.totalorder %s198, %s199
    %p211 = scmp.eq.s32.totalorder %s32, 1
    %p212 = por %p210, %p211
    %p214 = scmp.ne.s32.totalorder %s199, %s213
    %p215 = scmp.eq.s32.totalorder %s32, 0
    %p216 = por %p214, %p215
    %s218 = sadd.s32 %s217, 1
    %p221 = scmp.eq.s32.totalorder %s26, 1
    %p222 = scmp.ne.s32.totalorder %s217, %s219
    %p223 = scmp.eq.s32.totalorder %s26, 0
    %p224 = por %p222, %p223
    %p225 = scmp.ne.s32.totalorder %s217, %s219
    %p226 = scmp.eq.s32.totalorder %s31, 1
    %p227 = por %p225, %p226
    %p228 = scmp.ne.s32.totalorder %s219, %s220
    %p229 = scmp.eq.s32.totalorder %s31, 0
    %p230 = por %p228, %p229
    %p231 = scmp.ne.s32.totalorder %s219, %s220
    %p232 = scmp.eq.s32.totalorder %s32, 1
    %p233 = por %p231, %p232
    %p235 = scmp.ne.s32.totalorder %s220, %s234
    %p236 = scmp.eq.s32.totalorder %s32, 0
    %p237 = por %p235, %p236
    %s239 = sadd.s32 %s238, 1
    %p242 = scmp.eq.s32.totalorder %s26, 1
    %p243 = scmp.ne.s32.totalorder %s238, %s240
    %p244 = scmp.eq.s32.totalorder %s26, 0
    %p245 = por %p243, %p244
    %p246 = scmp.ne.s32.totalorder %s238, %s240
    %p247 = scmp.eq.s32.totalorder %s31, 1
    %p248 = por %p246, %p247
    %p249 = scmp.ne.s32.totalorder %s240, %s241
    %p250 = scmp.eq.s32.totalorder %s31, 0
    %p251 = por %p249, %p250
    %p252 = scmp.ne.s32.totalorder %s240, %s241
    %p253 = scmp.eq.s32.totalorder %s32, 1
    %p254 = por %p252, %p253
    %p256 = scmp.ne.s32.totalorder %s241, %s255
    %p257 = scmp.eq.s32.totalorder %s32, 0
    %p258 = por %p256, %p257
    %s260 = sadd.s32 %s259, 1
    %p263 = scmp.eq.s32.totalorder %s26, 1
    %p264 = scmp.ne.s32.totalorder %s259, %s261
    %p265 = scmp.eq.s32.totalorder %s26, 0
    %p266 = por %p264, %p265
    %p267 = scmp.ne.s32.totalorder %s259, %s261
    %p268 = scmp.eq.s32.totalorder %s31, 1
    %p269 = por %p267, %p268
    %p270 = scmp.ne.s32.totalorder %s261, %s262
    %p271 = scmp.eq.s32.totalorder %s31, 0
    %p272 = por %p270, %p271
    %p273 = scmp.ne.s32.totalorder %s261, %s262
    %p274 = scmp.eq.s32.totalorder %s32, 1
    %p275 = por %p273, %p274
    %p277 = scmp.ne.s32.totalorder %s262, %s276
    %p278 = scmp.eq.s32.totalorder %s32, 0
    %p279 = por %p277, %p278
    %s281 = sadd.s32 %s280, 1
    %p284 = scmp.eq.s32.totalorder %s26, 1
    %p285 = scmp.ne.s32.totalorder %s280, %s282
    %p286 = scmp.eq.s32.totalorder %s26, 0
    %p287 = por %p285, %p286
    %p288 = scmp.ne.s32.totalorder %s280, %s282
    %p289 = scmp.eq.s32.totalorder %s31, 1
    %p290 = por %p288, %p289
    %p291 = scmp.ne.s32.totalorder %s282, %s283
    %p292 = scmp.eq.s32.totalorder %s31, 0
    %p293 = por %p291, %p292
    %p294 = scmp.ne.s32.totalorder %s282, %s283
    %p295 = scmp.eq.s32.totalorder %s32, 1
    %p296 = por %p294, %p295
    %p298 = scmp.ne.s32.totalorder %s283, %s297
    %p299 = scmp.eq.s32.totalorder %s32, 0
    %p300 = por %p298, %p299
    %s302 = sadd.s32 %s301, 1
    %p305 = scmp.eq.s32.totalorder %s26, 1
    %p306 = scmp.ne.s32.totalorder %s301, %s303
    %p307 = scmp.eq.s32.totalorder %s26, 0
    %p308 = por %p306, %p307
    %p309 = scmp.ne.s32.totalorder %s301, %s303
    %p310 = scmp.eq.s32.totalorder %s31, 1
    %p311 = por %p309, %p310
    %p312 = scmp.ne.s32.totalorder %s303, %s304
    %p313 = scmp.eq.s32.totalorder %s31, 0
    %p314 = por %p312, %p313
    %p315 = scmp.ne.s32.totalorder %s303, %s304
    %p316 = scmp.eq.s32.totalorder %s32, 1
    %p317 = por %p315, %p316
    %p319 = scmp.ne.s32.totalorder %s304, %s318
    %p320 = scmp.eq.s32.totalorder %s32, 0
    %p321 = por %p319, %p320
    %s323 = sadd.s32 %s322, 1
    %p326 = scmp.eq.s32.totalorder %s26, 1
    %p327 = scmp.ne.s32.totalorder %s322, %s324
    %p328 = scmp.eq.s32.totalorder %s26, 0
    %p329 = por %p327, %p328
    %p330 = scmp.ne.s32.totalorder %s322, %s324
    %p331 = scmp.eq.s32.totalorder %s31, 1
    %p332 = por %p330, %p331
    %p333 = scmp.ne.s32.totalorder %s324, %s325
    %p334 = scmp.eq.s32.totalorder %s31, 0
    %p335 = por %p333, %p334
    %p336 = scmp.ne.s32.totalorder %s324, %s325
    %p337 = scmp.eq.s32.totalorder %s32, 1
    %p338 = por %p336, %p337
    %p340 = scmp.ne.s32.totalorder %s325, %s339
    %p341 = scmp.eq.s32.totalorder %s32, 0
    %p342 = por %p340, %p341
    %s344 = sadd.s32 %s343, 1
    %p347 = scmp.eq.s32.totalorder %s26, 1
    %p348 = scmp.ne.s32.totalorder %s343, %s345
    %p349 = scmp.eq.s32.totalorder %s26, 0
    %p350 = por %p348, %p349
    %p351 = scmp.ne.s32.totalorder %s343, %s345
    %p352 = scmp.eq.s32.totalorder %s31, 1
    %p353 = por %p351, %p352
    %p354 = scmp.ne.s32.totalorder %s345, %s346
    %p355 = scmp.eq.s32.totalorder %s31, 0
    %p356 = por %p354, %p355
    %p357 = scmp.ne.s32.totalorder %s345, %s346
    %p358 = scmp.eq.s32.totalorder %s32, 1
    %p359 = por %p357, %p358
    %p361 = scmp.ne.s32.totalorder %s346, %s360
    %p362 = scmp.eq.s32.totalorder %s32, 0
    %p363 = por %p361, %p362
    %s365 = sadd.s32 %s364, 1
    %p368 = scmp.eq.s32.totalorder %s26, 1
    %p369 = scmp.ne.s32.totalorder %s364, %s366
    %p370 = scmp.eq.s32.totalorder %s26, 0
    %p371 = por %p369, %p370
    %p372 = scmp.ne.s32.totalorder %s364, %s366
    %p373 = scmp.eq.s32.totalorder %s31, 1
    %p374 = por %p372, %p373
    %p375 = scmp.ne.s32.totalorder %s366, %s367
    %p376 = scmp.eq.s32.totalorder %s31, 0
    %p377 = por %p375, %p376
    %p378 = scmp.ne.s32.totalorder %s366, %s367
    %p379 = scmp.eq.s32.totalorder %s32, 1
    %p380 = por %p378, %p379
    %p382 = scmp.ne.s32.totalorder %s367, %s381
    %p383 = scmp.eq.s32.totalorder %s32, 0
    %p384 = por %p382, %p383
    %s386 = sadd.s32 %s385, 1
    %p389 = scmp.eq.s32.totalorder %s26, 1
    %p390 = scmp.ne.s32.totalorder %s385, %s387
    %p391 = scmp.eq.s32.totalorder %s26, 0
    %p392 = por %p390, %p391
    %p393 = scmp.ne.s32.totalorder %s385, %s387
    %p394 = scmp.eq.s32.totalorder %s31, 1
    %p395 = por %p393, %p394
    %p396 = scmp.ne.s32.totalorder %s387, %s388
    %p397 = scmp.eq.s32.totalorder %s31, 0
    %p398 = por %p396, %p397
    %p399 = scmp.ne.s32.totalorder %s387, %s388
    %p400 = scmp.eq.s32.totalorder %s32, 1
    %p401 = por %p399, %p400
    %p403 = scmp.ne.s32.totalorder %s388, %s402
    %p404 = scmp.eq.s32.totalorder %s32, 0
    %p405 = por %p403, %p404
    %s407 = sadd.s32 %s406, 1
    %p410 = scmp.eq.s32.totalorder %s26, 1
    %p411 = scmp.ne.s32.totalorder %s406, %s408
    %p412 = scmp.eq.s32.totalorder %s26, 0
    %p413 = por %p411, %p412
    %p414 = scmp.ne.s32.totalorder %s406, %s408
    %p415 = scmp.eq.s32.totalorder %s31, 1
    %p416 = por %p414, %p415
    %p417 = scmp.ne.s32.totalorder %s408, %s409
    %p418 = scmp.eq.s32.totalorder %s31, 0
    %p419 = por %p417, %p418
    %p420 = scmp.ne.s32.totalorder %s408, %s409
    %p421 = scmp.eq.s32.totalorder %s32, 1
    %p422 = por %p420, %p421
    %p424 = scmp.ne.s32.totalorder %s409, %s423
    %p425 = scmp.eq.s32.totalorder %s32, 0
    %p426 = por %p424, %p425
    %s428 = sadd.s32 %s427, 1
    %p431 = scmp.eq.s32.totalorder %s26, 1
    %p432 = scmp.ne.s32.totalorder %s427, %s429
    %p433 = scmp.eq.s32.totalorder %s26, 0
    %p434 = por %p432, %p433
    %p435 = scmp.ne.s32.totalorder %s427, %s429
    %p436 = scmp.eq.s32.totalorder %s31, 1
    %p437 = por %p435, %p436
    %p438 = scmp.ne.s32.totalorder %s429, %s430
    %p439 = scmp.eq.s32.totalorder %s31, 0
    %p440 = por %p438, %p439
    %p441 = scmp.ne.s32.totalorder %s429, %s430
    %p442 = scmp.eq.s32.totalorder %s32, 1
    %p443 = por %p441, %p442
    %p445 = scmp.ne.s32.totalorder %s430, %s444
    %p446 = scmp.eq.s32.totalorder %s32, 0
    %p447 = por %p445, %p446
    %s449 = sadd.s32 %s448, 1
    %p452 = scmp.eq.s32.totalorder %s26, 1
    %p453 = scmp.ne.s32.totalorder %s448, %s450
    %p454 = scmp.eq.s32.totalorder %s26, 0
    %p455 = por %p453, %p454
    %p456 = scmp.ne.s32.totalorder %s448, %s450
    %p457 = scmp.eq.s32.totalorder %s31, 1
    %p458 = por %p456, %p457
    %p459 = scmp.ne.s32.totalorder %s450, %s451
    %p460 = scmp.eq.s32.totalorder %s31, 0
    %p461 = por %p459, %p460
    %p462 = scmp.ne.s32.totalorder %s450, %s451
    %p463 = scmp.eq.s32.totalorder %s32, 1
    %p464 = por %p462, %p463
    %p466 = scmp.ne.s32.totalorder %s451, %s465
    %p467 = scmp.eq.s32.totalorder %s32, 0
    %p468 = por %p466, %p467
    %s469 = ssub.s32 %s26, %s33
    %p470 = scmp.eq.s32.totalorder %s469, 0
    %s472 = sadd.s32 %s471, 1
    %s473 = scalar_select %p470, %s471, %s472
    %p476 = pneg %p470
    %p477 = scmp.eq.s32.totalorder %s26, 1
    %p478 = por %p476, %p477
    %p479 = scmp.ne.s32.totalorder %s471, %s474
    %p480 = scmp.eq.s32.totalorder %s26, 0
    %p481 = por %p479, %p480
    %p482 = scmp.ne.s32.totalorder %s471, %s474
    %p483 = scmp.eq.s32.totalorder %s31, 1
    %p484 = por %p482, %p483
    %p485 = scmp.ne.s32.totalorder %s474, %s475
    %p486 = scmp.eq.s32.totalorder %s31, 0
    %p487 = por %p485, %p486
    %p488 = scmp.ne.s32.totalorder %s474, %s475
    %p489 = scmp.eq.s32.totalorder %s32, 1
    %p490 = por %p488, %p489
    %p492 = scmp.ne.s32.totalorder %s475, %s491
    %p493 = scmp.eq.s32.totalorder %s32, 0
    %p494 = por %p492, %p493
    %p495 = scmp.le.s32.totalorder 1, %s26
    %p496 = scmp.lt.s32.totalorder %s26, 3
    %p497 = pnand %p495, %p496
    %p498 = pneg %p497
    // Predicated region
    $region9: #{forward_pallas.6} parent=5 // pred_check
      _
    $region10: #{forward_pallas.6} parent=5 // pred_check_branch
      %500 = sbr.rel (%p497) target = $region12
    $region11: #{forward_pallas.6} parent=5 // pred_region
      %s501 = ssub.s32 %s26, 1
      // Predicated region
      $region13: #{forward_pallas.6} parent=11 // pred_check
        %p502 = pneg %p99
      $region14: #{forward_pallas.6} parent=11 // pred_check_branch
        %504 = sbr.rel (%p502) target = $region16
      $region15: #{forward_pallas.6} parent=11 // pred_region
        _
      $region16: #{forward_pallas.6} parent=11 // pred_fallthru
        _
      // Predicated region
      $region17: #{forward_pallas.6} parent=11 // pred_check
        %p505 = pneg %p146
      $region18: #{forward_pallas.6} parent=11 // pred_check_branch
        %507 = sbr.rel (%p505) target = $region20
      $region19: #{forward_pallas.6} parent=11 // pred_region
        _
      $region20: #{forward_pallas.6} parent=11 // pred_fallthru
        _
      // Predicated region
      $region21: #{forward_pallas.6} parent=11 // pred_check
        %p508 = pneg %p167
      $region22: #{forward_pallas.6} parent=11 // pred_check_branch
        %510 = sbr.rel (%p508) target = $region24
      $region23: #{forward_pallas.6} parent=11 // pred_region
        _
      $region24: #{forward_pallas.6} parent=11 // pred_fallthru
        _
      // Predicated region
      $region25: #{forward_pallas.6} parent=11 // pred_check
        %p511 = pneg %p188
      $region26: #{forward_pallas.6} parent=11 // pred_check_branch
        %513 = sbr.rel (%p511) target = $region28
      $region27: #{forward_pallas.6} parent=11 // pred_region
        _
      $region28: #{forward_pallas.6} parent=11 // pred_fallthru
        _
      // Predicated region
      $region29: #{forward_pallas.6} parent=11 // pred_check
        %p514 = pneg %p209
      $region30: #{forward_pallas.6} parent=11 // pred_check_branch
        %516 = sbr.rel (%p514) target = $region32
      $region31: #{forward_pallas.6} parent=11 // pred_region
        _
      $region32: #{forward_pallas.6} parent=11 // pred_fallthru
        _
      // Predicated region
      $region33: #{forward_pallas.6} parent=11 // pred_check
        %p517 = pneg %p230
      $region34: #{forward_pallas.6} parent=11 // pred_check_branch
        %519 = sbr.rel (%p517) target = $region36
      $region35: #{forward_pallas.6} parent=11 // pred_region
        _
      $region36: #{forward_pallas.6} parent=11 // pred_fallthru
        _
      // Predicated region
      $region37: #{forward_pallas.6} parent=11 // pred_check
        %p520 = pneg %p251
      $region38: #{forward_pallas.6} parent=11 // pred_check_branch
        %522 = sbr.rel (%p520) target = $region40
      $region39: #{forward_pallas.6} parent=11 // pred_region
        _
      $region40: #{forward_pallas.6} parent=11 // pred_fallthru
        _
      // Predicated region
      $region41: #{forward_pallas.6} parent=11 // pred_check
        %p523 = pneg %p272
      $region42: #{forward_pallas.6} parent=11 // pred_check_branch
        %525 = sbr.rel (%p523) target = $region44
      $region43: #{forward_pallas.6} parent=11 // pred_region
        _
      $region44: #{forward_pallas.6} parent=11 // pred_fallthru
        _
      // Predicated region
      $region45: #{forward_pallas.6} parent=11 // pred_check
        %p526 = pneg %p293
      $region46: #{forward_pallas.6} parent=11 // pred_check_branch
        %528 = sbr.rel (%p526) target = $region48
      $region47: #{forward_pallas.6} parent=11 // pred_region
        _
      $region48: #{forward_pallas.6} parent=11 // pred_fallthru
        _
      // Predicated region
      $region49: #{forward_pallas.6} parent=11 // pred_check
        %p529 = pneg %p314
      $region50: #{forward_pallas.6} parent=11 // pred_check_branch
        %531 = sbr.rel (%p529) target = $region52
      $region51: #{forward_pallas.6} parent=11 // pred_region
        _
      $region52: #{forward_pallas.6} parent=11 // pred_fallthru
        _
      // Predicated region
      $region53: #{forward_pallas.6} parent=11 // pred_check
        %p532 = pneg %p335
      $region54: #{forward_pallas.6} parent=11 // pred_check_branch
        %534 = sbr.rel (%p532) target = $region56
      $region55: #{forward_pallas.6} parent=11 // pred_region
        _
      $region56: #{forward_pallas.6} parent=11 // pred_fallthru
        _
      // Predicated region
      $region57: #{forward_pallas.6} parent=11 // pred_check
        %p535 = pneg %p356
      $region58: #{forward_pallas.6} parent=11 // pred_check_branch
        %537 = sbr.rel (%p535) target = $region60
      $region59: #{forward_pallas.6} parent=11 // pred_region
        _
      $region60: #{forward_pallas.6} parent=11 // pred_fallthru
        _
      // Predicated region
      $region61: #{forward_pallas.6} parent=11 // pred_check
        %p538 = pneg %p377
      $region62: #{forward_pallas.6} parent=11 // pred_check_branch
        %540 = sbr.rel (%p538) target = $region64
      $region63: #{forward_pallas.6} parent=11 // pred_region
        _
      $region64: #{forward_pallas.6} parent=11 // pred_fallthru
        _
      // Predicated region
      $region65: #{forward_pallas.6} parent=11 // pred_check
        %p541 = pneg %p398
      $region66: #{forward_pallas.6} parent=11 // pred_check_branch
        %543 = sbr.rel (%p541) target = $region68
      $region67: #{forward_pallas.6} parent=11 // pred_region
        _
      $region68: #{forward_pallas.6} parent=11 // pred_fallthru
        _
      // Predicated region
      $region69: #{forward_pallas.6} parent=11 // pred_check
        %p544 = pneg %p419
      $region70: #{forward_pallas.6} parent=11 // pred_check_branch
        %546 = sbr.rel (%p544) target = $region72
      $region71: #{forward_pallas.6} parent=11 // pred_region
        _
      $region72: #{forward_pallas.6} parent=11 // pred_fallthru
        _
      // Predicated region
      $region73: #{forward_pallas.6} parent=11 // pred_check
        %p547 = pneg %p440
      $region74: #{forward_pallas.6} parent=11 // pred_check_branch
        %549 = sbr.rel (%p547) target = $region76
      $region75: #{forward_pallas.6} parent=11 // pred_region
        _
      $region76: #{forward_pallas.6} parent=11 // pred_fallthru
        _
      // Predicated region
      $region77: #{forward_pallas.6} parent=11 // pred_check
        %p550 = pneg %p461
      $region78: #{forward_pallas.6} parent=11 // pred_check_branch
        %552 = sbr.rel (%p550) target = $region80
      $region79: #{forward_pallas.6} parent=11 // pred_region
        _
      $region80: #{forward_pallas.6} parent=11 // pred_fallthru
        _
    $region12: #{forward_pallas.6} parent=5 // pred_fallthru
      _
    %p553 = scmp.lt.s32.totalorder %s26, 2
    // Predicated region
    $region81: #{forward_pallas.6} parent=5 // pred_check
      %p554 = pneg %p553
    $region82: #{forward_pallas.6} parent=5 // pred_check_branch
      %556 = sbr.rel (%p554) target = $region84
    $region83: #{forward_pallas.6} parent=5 // pred_region
      // Predicated region
      $region85: #{forward_pallas.6} parent=83 // pred_check
        %p557 = pneg %p46
      $region86: #{forward_pallas.6} parent=83 // pred_check_branch
        %559 = sbr.rel (%p557) target = $region88
      $region87: #{forward_pallas.6} parent=83 // pred_region
        %p560 = scmp.lt.s32.totalorder %s26, 1
        %s561 = scalar_select %p560, %s26, 1
        %s562 = smul.addr %s561, 2
        %s563 = smul.addr %s562, 8
        %s564 = scalar_lea.vmem %s0, %s563
      $region88: #{forward_pallas.6} parent=83 // pred_fallthru
        _
      // Predicated region
      $region89: #{forward_pallas.6} parent=83 // pred_check
        %p565 = pneg %p72
      $region90: #{forward_pallas.6} parent=83 // pred_check_branch
        %567 = sbr.rel (%p565) target = $region92
      $region91: #{forward_pallas.6} parent=83 // pred_region
        %p568 = scmp.lt.s32.totalorder %s26, 1
        %s569 = scalar_select %p568, %s26, 1
        %s570 = smul.addr %s569, 2
        %s571 = smul.addr %s570, 8
        %s572 = scalar_lea.vmem %s1, %s571
      $region92: #{forward_pallas.6} parent=83 // pred_fallthru
        _
      // Predicated region
      $region93: #{forward_pallas.6} parent=83 // pred_check
        %p573 = pneg %p119
      $region94: #{forward_pallas.6} parent=83 // pred_check_branch
        %575 = sbr.rel (%p573) target = $region96
      $region95: #{forward_pallas.6} parent=83 // pred_region
        %p576 = scmp.lt.s32.totalorder %s26, 1
        %s577 = scalar_select %p576, %s26, 1
        %s578 = scalar_lea.vmem %s3, %s577
      $region96: #{forward_pallas.6} parent=83 // pred_fallthru
        _
    $region84: #{forward_pallas.6} parent=5 // pred_fallthru
      _
    %p579 = scmp.le.s32.totalorder 1, %s26
    %p580 = scmp.lt.s32.totalorder %s26, 3
    %p581 = pnand %p579, %p580
    %p582 = pneg %p581
    // Predicated region
    $region97: #{forward_pallas.6} parent=5 // pred_check
      _
    $region98: #{forward_pallas.6} parent=5 // pred_check_branch
      %584 = sbr.rel (%p581) target = $region100
    $region99: #{forward_pallas.6} parent=5 // pred_region
      %s585 = ssub.s32 %s26, 1
      %p586 = scmp.lt.s32.totalorder %s31, 1
      %s587 = scalar_select %p586, %s31, 1
      %s588 = smul.addr %s587, 2
      %s589 = smul.addr %s588, 8
      %s590 = scalar_lea.vmem %s0, %s589
      %p591 = pneg %p52
      %p592 = pneg %p49
      %p593 = scmp.lt.s32.totalorder %s31, 1
      %s594 = scalar_select %p593, %s31, 1
      %s595 = smul.addr %s594, 2
      %s596 = smul.addr %s595, 8
      %s597 = scalar_lea.vmem %s1, %s596
      %p598 = pneg %p78
      %p599 = pneg %p75
      %p600 = pneg %p99
      %p601 = pneg %p96
      %p602 = scmp.lt.s32.totalorder %s31, 1
      %s603 = scalar_select %p602, %s31, 1
      %s604 = scalar_lea.vmem %s3, %s603
      %p605 = pneg %p125
      %p606 = pneg %p122
      %p607 = pneg %p146
      %p608 = pneg %p143
      %p609 = pneg %p167
      %p610 = pneg %p164
      %p611 = pneg %p188
      %p612 = pneg %p185
      %p613 = pneg %p209
      %p614 = pneg %p206
      %p615 = pneg %p230
      %p616 = pneg %p227
      %p617 = pneg %p251
      %p618 = pneg %p248
      %p619 = pneg %p272
      %p620 = pneg %p269
      %p621 = pneg %p293
      %p622 = pneg %p290
      %p623 = pneg %p314
      %p624 = pneg %p311
      %p625 = pneg %p335
      %p626 = pneg %p332
      %p627 = pneg %p356
      %p628 = pneg %p353
      %p629 = pneg %p377
      %p630 = pneg %p374
      %p631 = pneg %p398
      %p632 = pneg %p395
      %p633 = pneg %p419
      %p634 = pneg %p416
      %p635 = pneg %p440
      %p636 = pneg %p437
      %p637 = pneg %p461
      %p638 = pneg %p458
      %p639 = pneg %p487
      %p640 = pneg %p484
      %p641 = scmp.lt.s32.totalorder %s31, 1
      %s642 = scalar_select %p641, %s31, 1
      %s643 = smul.addr %s642, 2
      %s644 = smul.addr %s643, 8
      %s645 = scalar_lea.vmem %s20, %s644
      %p646 = scmp.lt.s32.totalorder %s31, 1
      %s647 = scalar_select %p646, %s31, 1
      %s648 = smul.addr %s647, 2
      %s649 = smul.addr %s648, 8
      %s650 = scalar_lea.vmem %s0, %s649
      %p651 = scmp.lt.s32.totalorder %s31, 1
      %s652 = scalar_select %p651, %s31, 1
      %s653 = smul.addr %s652, 2
      %s654 = smul.addr %s653, 8
      %s655 = scalar_lea.vmem %s1, %s654
      %p656 = scmp.lt.s32.totalorder %s31, 1
      %s657 = scalar_select %p656, %s31, 1
      %s658 = scalar_lea.vmem %s3, %s657
      %p659 = scmp.lt.s32.totalorder %s31, 1
      %s660 = scalar_select %p659, %s31, 1
      %s661 = smul.addr %s660, 2
      %s662 = smul.addr %s661, 8
      %s663 = scalar_lea.vmem %s20, %s662
      %v664 = vld [vmem:[%s650] sm:$0xff]
      %v665 = vld [vmem:[%s650 + $0x8] sm:$0xff]
      %v666 = vld [vmem:[%s655] sm:$0xff]
      %v667 = vld [vmem:[%s655 + $0x8] sm:$0xff]
      %v668 = vadd.f32 %v664, %v666
      %v669 = vadd.f32 %v665, %v667
      %v670 = vld [vmem:[%s658] sm:$0x1]
      %v671 = vld [vmem:[%s4] sm:$0xff]
      %v672 = vld [vmem:[%s4 + $0x8] sm:$0xff]
      %v673 = vld [vmem:[%s4 + $0x10] sm:$0xff]
      %v674 = vld [vmem:[%s4 + $0x18] sm:$0xff]
      %v675 = vld [vmem:[%s5] sm:$0x1]
      %v677 = vlaneseq
      %v678 = vshrl.u32 %v677, 7
      %v679 = vsub.s32 0, %v678
      %v680 = vrot.slane %v675, %v679
      %vm682 = vcmask 261120
      %v684 = vsel %vm682, %v668, 0
      %v687 = vsel %vm682, %v669, 0
      %689 = vmatprep.subr.mxu0 0.0
      %690 = vmatpush1.msra.mxu0 %v671
      %691 = vmatprep.subr.mxu0 0.0
      %692 = vmatpush1.msra.mxu0 %v672
      %693 = vmatprep.subr.mxu0 0.0
      %694 = vmatpush1.msra.mxu0 %v673
      %695 = vmatprep.subr.mxu0 0.0
      %696 = vmatpush1.msra.mxu0 %v674
      %697 = vmatprep.subr.mxu0 0.0
      %698 = vmatpush1.msra.mxu0 0.0
      %699 = vmatprep.subr.mxu0 0.0
      %700 = vmatpush1.msra.mxu0 0.0
      %701 = vmatprep.subr.mxu0 0.0
      %702 = vmatpush1.msra.mxu0 0.0
      %703 = vmatprep.subr.mxu0 0.0
      %704 = vmatpush1.msra.mxu0 0.0
      %705 = vmatprep.subr.mxu0 0.0
      %706 = vmatpush1.msra.mxu0 0.0
      %707 = vmatprep.subr.mxu0 0.0
      %708 = vmatpush1.msra.mxu0 0.0
      %709 = vmatprep.subr.mxu0 0.0
      %710 = vmatpush1.msra.mxu0 0.0
      %711 = vmatprep.subr.mxu0 0.0
      %712 = vmatpush1.msra.mxu0 0.0
      %713 = vmatprep.subr.mxu0 0.0
      %714 = vmatpush1.msra.mxu0 0.0
      %715 = vmatprep.subr.mxu0 0.0
      %716 = vmatpush1.msra.mxu0 0.0
      %717 = vmatprep.subr.mxu0 0.0
      %718 = vmatpush1.msra.mxu0 0.0
      %719 = vmatprep.subr.mxu0 0.0
      %720 = vmatpush1.msra.mxu0 0.0
      %721 = vmatprep.subr.mxu0 0.0
      %722 = vmatpush1.msra.mxu0 0.0
      %723 = vmatprep.subr.mxu0 0.0
      %724 = vmatpush1.msra.mxu0 0.0
      %725 = vmatprep.subr.mxu0 0.0
      %726 = vmatpush1.msra.mxu0 0.0
      %727 = vmatprep.subr.mxu0 0.0
      %728 = vmatpush1.msra.mxu0 0.0
      %729 = vmatprep.subr.mxu0 0.0
      %730 = vmatpush1.msra.mxu0 0.0
      %731 = vmatprep.subr.mxu0 0.0
      %732 = vmatpush1.msra.mxu0 0.0
      %733 = vmatprep.subr.mxu0 0.0
      %734 = vmatpush1.msra.mxu0 0.0
      %735 = vmatprep.subr.mxu0 0.0
      %736 = vmatpush1.msra.mxu0 0.0
      %737 = vmatprep.subr.mxu0 0.0
      %738 = vmatpush1.msra.mxu0 0.0
      %739 = vmatprep.subr.mxu0 0.0
      %740 = vmatpush1.msra.mxu0 0.0
      %741 = vmatprep.subr.mxu0 0.0
      %742 = vmatpush1.msra.mxu0 0.0
      %743 = vmatprep.subr.mxu0 0.0
      %744 = vmatpush1.msra.mxu0 0.0
      %745 = vmatprep.subr.mxu0 0.0
      %746 = vmatpush1.msra.mxu0 0.0
      %747 = vmatprep.subr.mxu0 0.0
      %748 = vmatpush1.msra.mxu0 0.0
      %749 = vmatprep.subr.mxu0 0.0
      %750 = vmatpush1.msra.mxu0 0.0
      %751 = vmatprep.subr.mxu0 0.0
      %752 = vmatpush1.msra.mxu0 0.0
      %753 = vmatprep.mubr.f32.mxu0 0.0
      %754 = vmatmul.mubr.f32.gmra.mrb[0].mxu0 %v684
      %v755 = vpop.f32.mrb[0].mxu0
      %v756 = vadd.f32 %v680, %v755
      %v757 = vpop.f32.mrb[0].mxu0
      %758 = vmatprep.mubr.f32.mxu0 0.0
      %759 = vmatmul.mubr.f32.gmra.mrb[0].mxu0 %v687
      %v760 = vpop.f32.mrb[0].mxu0
      %v761 = vadd.f32 %v680, %v760
      %v762 = vpop.f32.mrb[0].mxu0
      %763 = vdwg.mxu0
      %v764 = vld [vmem:[%s6] sm:$0xff]
      %v765 = vld [vmem:[%s6 + $0x8] sm:$0xff]
      %v766 = vld [vmem:[%s6 + $0x10] sm:$0xff]
      %v767 = vld [vmem:[%s6 + $0x18] sm:$0xff]
      %v768 = vld [vmem:[%s7] sm:$0x1]
      %v770 = vlaneseq
      %v771 = vshrl.u32 %v770, 7
      %v772 = vsub.s32 0, %v771
      %v773 = vrot.slane %v768, %v772
      %v776 = vsel %vm682, %v664, 0
      %v779 = vsel %vm682, %v665, 0
      %781 = vmatprep.subr.mxu0 0.0
      %782 = vmatpush1.msra.mxu0 %v764
      %783 = vmatprep.subr.mxu0 0.0
      %784 = vmatpush1.msra.mxu0 %v765
      %785 = vmatprep.subr.mxu0 0.0
      %786 = vmatpush1.msra.mxu0 %v766
      %787 = vmatprep.subr.mxu0 0.0
      %788 = vmatpush1.msra.mxu0 %v767
      %789 = vmatprep.subr.mxu0 0.0
      %790 = vmatpush1.msra.mxu0 0.0
      %791 = vmatprep.subr.mxu0 0.0
      %792 = vmatpush1.msra.mxu0 0.0
      %793 = vmatprep.subr.mxu0 0.0
      %794 = vmatpush1.msra.mxu0 0.0
      %795 = vmatprep.subr.mxu0 0.0
      %796 = vmatpush1.msra.mxu0 0.0
      %797 = vmatprep.subr.mxu0 0.0
      %798 = vmatpush1.msra.mxu0 0.0
      %799 = vmatprep.subr.mxu0 0.0
      %800 = vmatpush1.msra.mxu0 0.0
      %801 = vmatprep.subr.mxu0 0.0
      %802 = vmatpush1.msra.mxu0 0.0
      %803 = vmatprep.subr.mxu0 0.0
      %804 = vmatpush1.msra.mxu0 0.0
      %805 = vmatprep.subr.mxu0 0.0
      %806 = vmatpush1.msra.mxu0 0.0
      %807 = vmatprep.subr.mxu0 0.0
      %808 = vmatpush1.msra.mxu0 0.0
      %809 = vmatprep.subr.mxu0 0.0
      %810 = vmatpush1.msra.mxu0 0.0
      %811 = vmatprep.subr.mxu0 0.0
      %812 = vmatpush1.msra.mxu0 0.0
      %813 = vmatprep.subr.mxu0 0.0
      %814 = vmatpush1.msra.mxu0 0.0
      %815 = vmatprep.subr.mxu0 0.0
      %816 = vmatpush1.msra.mxu0 0.0
      %817 = vmatprep.subr.mxu0 0.0
      %818 = vmatpush1.msra.mxu0 0.0
      %819 = vmatprep.subr.mxu0 0.0
      %820 = vmatpush1.msra.mxu0 0.0
      %821 = vmatprep.subr.mxu0 0.0
      %822 = vmatpush1.msra.mxu0 0.0
      %823 = vmatprep.subr.mxu0 0.0
      %824 = vmatpush1.msra.mxu0 0.0
      %825 = vmatprep.subr.mxu0 0.0
      %826 = vmatpush1.msra.mxu0 0.0
      %827 = vmatprep.subr.mxu0 0.0
      %828 = vmatpush1.msra.mxu0 0.0
      %829 = vmatprep.subr.mxu0 0.0
      %830 = vmatpush1.msra.mxu0 0.0
      %831 = vmatprep.subr.mxu0 0.0
      %832 = vmatpush1.msra.mxu0 0.0
      %833 = vmatprep.subr.mxu0 0.0
      %834 = vmatpush1.msra.mxu0 0.0
      %835 = vmatprep.subr.mxu0 0.0
      %836 = vmatpush1.msra.mxu0 0.0
      %837 = vmatprep.subr.mxu0 0.0
      %838 = vmatpush1.msra.mxu0 0.0
      %839 = vmatprep.subr.mxu0 0.0
      %840 = vmatpush1.msra.mxu0 0.0
      %841 = vmatprep.subr.mxu0 0.0
      %842 = vmatpush1.msra.mxu0 0.0
      %843 = vmatprep.subr.mxu0 0.0
      %844 = vmatpush1.msra.mxu0 0.0
      %845 = vmatprep.mubr.f32.mxu0 0.0
      %846 = vmatmul.mubr.f32.gmra.mrb[0].mxu0 %v776
      %v847 = vpop.f32.mrb[0].mxu0
      %v848 = vadd.f32 %v773, %v847
      %v849 = vpop.f32.mrb[0].mxu0
      %850 = vmatprep.mubr.f32.mxu0 0.0
      %851 = vmatmul.mubr.f32.gmra.mrb[0].mxu0 %v779
      %v852 = vpop.f32.mrb[0].mxu0
      %v853 = vadd.f32 %v773, %v852
      %v854 = vpop.f32.mrb[0].mxu0
      %855 = vdwg.mxu0
      %858 = vrot.lane.b32.xlu0 %v756, 64
      %v859 = vpop.permute.xlu0 %858
      %860 = vrot.lane.b32.xlu0 %v761, 64
      %v861 = vpop.permute.xlu0 %860
      %vm862 = vcmask 130048
      %v863 = vsel %vm862, %v756, 0
      %v865 = vsel %vm862, %v761, 0
      %v867 = vsel %vm862, %v859, 0
      %v869 = vsel %vm862, %v861, 0
      %871 = vmatprep.subr.mxu0 0.0
      %872 = vmatpush1.xpose.msra.mxu0 %v867
      %873 = vmatprep.subr.mxu0 0.0
      %874 = vmatpush1.xpose.msra.mxu0 %v869
      %875 = vmatprep.subr.mxu0 0.0
      %876 = vmatpush1.xpose.msra.mxu0 0.0
      %877 = vmatprep.subr.mxu0 0.0
      %878 = vmatpush1.xpose.msra.mxu0 0.0
      %879 = vmatprep.subr.mxu0 0.0
      %880 = vmatpush1.xpose.msra.mxu0 0.0
      %881 = vmatprep.subr.mxu0 0.0
      %882 = vmatpush1.xpose.msra.mxu0 0.0
      %883 = vmatprep.subr.mxu0 0.0
      %884 = vmatpush1.xpose.msra.mxu0 0.0
      %885 = vmatprep.subr.mxu0 0.0
      %886 = vmatpush1.xpose.msra.mxu0 0.0
      %887 = vmatprep.subr.mxu0 0.0
      %888 = vmatpush1.xpose.msra.mxu0 0.0
      %889 = vmatprep.subr.mxu0 0.0
      %890 = vmatpush1.xpose.msra.mxu0 0.0
      %891 = vmatprep.subr.mxu0 0.0
      %892 = vmatpush1.xpose.msra.mxu0 0.0
      %893 = vmatprep.subr.mxu0 0.0
      %894 = vmatpush1.xpose.msra.mxu0 0.0
      %895 = vmatprep.subr.mxu0 0.0
      %896 = vmatpush1.xpose.msra.mxu0 0.0
      %897 = vmatprep.subr.mxu0 0.0
      %898 = vmatpush1.xpose.msra.mxu0 0.0
      %899 = vmatprep.subr.mxu0 0.0
      %900 = vmatpush1.xpose.msra.mxu0 0.0
      %901 = vmatprep.subr.mxu0 0.0
      %902 = vmatpush1.xpose.msra.mxu0 0.0
      %903 = vmatprep.subr.mxu0 0.0
      %904 = vmatpush1.xpose.msra.mxu0 0.0
      %905 = vmatprep.subr.mxu0 0.0
      %906 = vmatpush1.xpose.msra.mxu0 0.0
      %907 = vmatprep.subr.mxu0 0.0
      %908 = vmatpush1.xpose.msra.mxu0 0.0
      %909 = vmatprep.subr.mxu0 0.0
      %910 = vmatpush1.xpose.msra.mxu0 0.0
      %911 = vmatprep.subr.mxu0 0.0
      %912 = vmatpush1.xpose.msra.mxu0 0.0
      %913 = vmatprep.subr.mxu0 0.0
      %914 = vmatpush1.xpose.msra.mxu0 0.0
      %915 = vmatprep.subr.mxu0 0.0
      %916 = vmatpush1.xpose.msra.mxu0 0.0
      %917 = vmatprep.subr.mxu0 0.0
      %918 = vmatpush1.xpose.msra.mxu0 0.0
      %919 = vmatprep.subr.mxu0 0.0
      %920 = vmatpush1.xpose.msra.mxu0 0.0
      %921 = vmatprep.subr.mxu0 0.0
      %922 = vmatpush1.xpose.msra.mxu0 0.0
      %923 = vmatprep.subr.mxu0 0.0
      %924 = vmatpush1.xpose.msra.mxu0 0.0
      %925 = vmatprep.subr.mxu0 0.0
      %926 = vmatpush1.xpose.msra.mxu0 0.0
      %927 = vmatprep.subr.mxu0 0.0
      %928 = vmatpush1.xpose.msra.mxu0 0.0
      %929 = vmatprep.subr.mxu0 0.0
      %930 = vmatpush1.xpose.msra.mxu0 0.0
      %931 = vmatprep.subr.mxu0 0.0
      %932 = vmatpush1.xpose.msra.mxu0 0.0
      %933 = vmatprep.subr.mxu0 0.0
      %934 = vmatpush1.xpose.msra.mxu0 0.0
      %935 = vmatprep.mubr.f32.mxu0 0.0
      %936 = vmatmul.mubr.f32.gmra.mrb[0].mxu0 %v863
      %v937 = vpop.f32.mrb[0].mxu0
      %v938 = vadd.f32 0.0, %v937
      %v939 = vpop.f32.mrb[0].mxu0
      %940 = vmatprep.mubr.f32.mxu0 0.0
      %941 = vmatmul.mubr.f32.gmra.mrb[0].mxu0 %v865
      %v942 = vpop.f32.mrb[0].mxu0
      %v943 = vadd.f32 0.0, %v942
      %v944 = vpop.f32.mrb[0].mxu0
      %945 = vdwg.mxu0
      %v946 = vmul.f32 %v938, 0.25
      %v947 = vmul.f32 %v943, 0.25
      %v949 = vlaneseq
      %v950 = vshrl.u32 %v949, 7
      %v951 = vsub.s32 0, %v950
      %v952 = vrot.slane %v670, %v951
      %v954 = vadd.f32 %v946, %v952
      %v955 = vadd.f32 %v947, %v952
      %v956 = vld [vmem:[%s2] sm:$0xff]
      %v957 = vld [vmem:[%s2 + $0x8] sm:$0xff]
      %v958 = vadd.f32 %v954, %v956
      %v959 = vadd.f32 %v955, %v957
      %v960 = vsel %vm862, %v958, -inf
      %961 = vmax.xlane.f32.xlu0 %v960
      %v962 = vpop.xlane.xlu0 %961
      %v963 = vsel %vm862, %v959, -inf
      %964 = vmax.xlane.f32.xlu0 %v963
      %v965 = vpop.xlane.xlu0 %964
      %v966 = vsub.f32 %v958, %v962
      %v967 = vsub.f32 %v959, %v965
      %v968 = vmul.f32 %v966, 1.442695
      %v969 = vpow.pop %v968
      %v970 = vmul.f32 %v967, 1.442695
      %v971 = vpow.pop %v970
      %v972 = vsel %vm862, %v969, 0.0
      %973 = vadd.xlane.f32.xlu0 %v972
      %v974 = vpop.xlane.xlu0 %973
      %v975 = vsel %vm862, %v971, 0.0
      %976 = vadd.xlane.f32.xlu0 %v975
      %v977 = vpop.xlane.xlu0 %976
      %v978 = vrcp.pop %v974
      %v979 = vmul.f32 %v969, %v978
      %v980 = vrcp.pop %v977
      %v981 = vmul.f32 %v971, %v980
      %v983 = vsel %vm862, %v979, 0
      %v986 = vsel %vm862, %v981, 0
      %988 = vmatprep.subr.mxu0 0.0
      %989 = vmatpush1.msra.mxu0 %v848
      %990 = vmatprep.subr.mxu0 0.0
      %991 = vmatpush1.msra.mxu0 %v853
      %992 = vmatprep.subr.mxu0 0.0
      %993 = vmatpush1.msra.mxu0 0.0
      %994 = vmatprep.subr.mxu0 0.0
      %995 = vmatpush1.msra.mxu0 0.0
      %996 = vmatprep.subr.mxu0 0.0
      %997 = vmatpush1.msra.mxu0 0.0
      %998 = vmatprep.subr.mxu0 0.0
      %999 = vmatpush1.msra.mxu0 0.0
      %1000 = vmatprep.subr.mxu0 0.0
      %1001 = vmatpush1.msra.mxu0 0.0
      %1002 = vmatprep.subr.mxu0 0.0
      %1003 = vmatpush1.msra.mxu0 0.0
      %1004 = vmatprep.subr.mxu0 0.0
      %1005 = vmatpush1.msra.mxu0 0.0
      %1006 = vmatprep.subr.mxu0 0.0
      %1007 = vmatpush1.msra.mxu0 0.0
      %1008 = vmatprep.subr.mxu0 0.0
      %1009 = vmatpush1.msra.mxu0 0.0
      %1010 = vmatprep.subr.mxu0 0.0
      %1011 = vmatpush1.msra.mxu0 0.0
      %1012 = vmatprep.subr.mxu0 0.0
      %1013 = vmatpush1.msra.mxu0 0.0
      %1014 = vmatprep.subr.mxu0 0.0
      %1015 = vmatpush1.msra.mxu0 0.0
      %1016 = vmatprep.subr.mxu0 0.0
      %1017 = vmatpush1.msra.mxu0 0.0
      %1018 = vmatprep.subr.mxu0 0.0
      %1019 = vmatpush1.msra.mxu0 0.0
      %1020 = vmatprep.subr.mxu0 0.0
      %1021 = vmatpush1.msra.mxu0 0.0
      %1022 = vmatprep.subr.mxu0 0.0
      %1023 = vmatpush1.msra.mxu0 0.0
      %1024 = vmatprep.subr.mxu0 0.0
      %1025 = vmatpush1.msra.mxu0 0.0
      %1026 = vmatprep.subr.mxu0 0.0
      %1027 = vmatpush1.msra.mxu0 0.0
      %1028 = vmatprep.subr.mxu0 0.0
      %1029 = vmatpush1.msra.mxu0 0.0
      %1030 = vmatprep.subr.mxu0 0.0
      %1031 = vmatpush1.msra.mxu0 0.0
      %1032 = vmatprep.subr.mxu0 0.0
      %1033 = vmatpush1.msra.mxu0 0.0
      %1034 = vmatprep.subr.mxu0 0.0
      %1035 = vmatpush1.msra.mxu0 0.0
      %1036 = vmatprep.subr.mxu0 0.0
      %1037 = vmatpush1.msra.mxu0 0.0
      %1038 = vmatprep.subr.mxu0 0.0
      %1039 = vmatpush1.msra.mxu0 0.0
      %1040 = vmatprep.subr.mxu0 0.0
      %1041 = vmatpush1.msra.mxu0 0.0
      %1042 = vmatprep.subr.mxu0 0.0
      %1043 = vmatpush1.msra.mxu0 0.0
      %1044 = vmatprep.subr.mxu0 0.0
      %1045 = vmatpush1.msra.mxu0 0.0
      %1046 = vmatprep.subr.mxu0 0.0
      %1047 = vmatpush1.msra.mxu0 0.0
      %1048 = vmatprep.subr.mxu0 0.0
      %1049 = vmatpush1.msra.mxu0 0.0
      %1050 = vmatprep.subr.mxu0 0.0
      %1051 = vmatpush1.msra.mxu0 0.0
      %1052 = vmatprep.mubr.f32.mxu0 0.0
      %1053 = vmatmul.mubr.f32.gmra.mrb[0].mxu0 %v983
      %v1054 = vpop.f32.mrb[0].mxu0
      %v1055 = vadd.f32 0.0, %v1054
      %v1056 = vpop.f32.mrb[0].mxu0
      %1057 = vmatprep.mubr.f32.mxu0 0.0
      %1058 = vmatmul.mubr.f32.gmra.mrb[0].mxu0 %v986
      %v1059 = vpop.f32.mrb[0].mxu0
      %v1060 = vadd.f32 0.0, %v1059
      %v1061 = vpop.f32.mrb[0].mxu0
      %1062 = vdwg.mxu0
      %1063 = vrot.lane.b32.xlu0 %v756, 112
      %v1064 = vpop.permute.xlu0 %1063
      %1065 = vrot.lane.b32.xlu0 %v761, 112
      %v1066 = vpop.permute.xlu0 %1065
      %1067 = vrot.lane.b32.xlu0 %v756, 48
      %v1068 = vpop.permute.xlu0 %1067
      %1069 = vrot.lane.b32.xlu0 %v761, 48
      %v1070 = vpop.permute.xlu0 %1069
      %v1071 = vsel %vm862, %v1064, 0
      %v1073 = vsel %vm862, %v1066, 0
      %v1075 = vsel %vm862, %v1068, 0
      %v1077 = vsel %vm862, %v1070, 0
      %1079 = vmatprep.subr.mxu0 0.0
      %1080 = vmatpush1.xpose.msra.mxu0 %v1075
      %1081 = vmatprep.subr.mxu0 0.0
      %1082 = vmatpush1.xpose.msra.mxu0 %v1077
      %1083 = vmatprep.subr.mxu0 0.0
      %1084 = vmatpush1.xpose.msra.mxu0 0.0
      %1085 = vmatprep.subr.mxu0 0.0
      %1086 = vmatpush1.xpose.msra.mxu0 0.0
      %1087 = vmatprep.subr.mxu0 0.0
      %1088 = vmatpush1.xpose.msra.mxu0 0.0
      %1089 = vmatprep.subr.mxu0 0.0
      %1090 = vmatpush1.xpose.msra.mxu0 0.0
      %1091 = vmatprep.subr.mxu0 0.0
      %1092 = vmatpush1.xpose.msra.mxu0 0.0
      %1093 = vmatprep.subr.mxu0 0.0
      %1094 = vmatpush1.xpose.msra.mxu0 0.0
      %1095 = vmatprep.subr.mxu0 0.0
      %1096 = vmatpush1.xpose.msra.mxu0 0.0
      %1097 = vmatprep.subr.mxu0 0.0
      %1098 = vmatpush1.xpose.msra.mxu0 0.0
      %1099 = vmatprep.subr.mxu0 0.0
      %1100 = vmatpush1.xpose.msra.mxu0 0.0
      %1101 = vmatprep.subr.mxu0 0.0
      %1102 = vmatpush1.xpose.msra.mxu0 0.0
      %1103 = vmatprep.subr.mxu0 0.0
      %1104 = vmatpush1.xpose.msra.mxu0 0.0
      %1105 = vmatprep.subr.mxu0 0.0
      %1106 = vmatpush1.xpose.msra.mxu0 0.0
      %1107 = vmatprep.subr.mxu0 0.0
      %1108 = vmatpush1.xpose.msra.mxu0 0.0
      %1109 = vmatprep.subr.mxu0 0.0
      %1110 = vmatpush1.xpose.msra.mxu0 0.0
      %1111 = vmatprep.subr.mxu0 0.0
      %1112 = vmatpush1.xpose.msra.mxu0 0.0
      %1113 = vmatprep.subr.mxu0 0.0
      %1114 = vmatpush1.xpose.msra.mxu0 0.0
      %1115 = vmatprep.subr.mxu0 0.0
      %1116 = vmatpush1.xpose.msra.mxu0 0.0
      %1117 = vmatprep.subr.mxu0 0.0
      %1118 = vmatpush1.xpose.msra.mxu0 0.0
      %1119 = vmatprep.subr.mxu0 0.0
      %1120 = vmatpush1.xpose.msra.mxu0 0.0
      %1121 = vmatprep.subr.mxu0 0.0
      %1122 = vmatpush1.xpose.msra.mxu0 0.0
      %1123 = vmatprep.subr.mxu0 0.0
      %1124 = vmatpush1.xpose.msra.mxu0 0.0
      %1125 = vmatprep.subr.mxu0 0.0
      %1126 = vmatpush1.xpose.msra.mxu0 0.0
      %1127 = vmatprep.subr.mxu0 0.0
      %1128 = vmatpush1.xpose.msra.mxu0 0.0
      %1129 = vmatprep.subr.mxu0 0.0
      %1130 = vmatpush1.xpose.msra.mxu0 0.0
      %1131 = vmatprep.subr.mxu0 0.0
      %1132 = vmatpush1.xpose.msra.mxu0 0.0
      %1133 = vmatprep.subr.mxu0 0.0
      %1134 = vmatpush1.xpose.msra.mxu0 0.0
      %1135 = vmatprep.subr.mxu0 0.0
      %1136 = vmatpush1.xpose.msra.mxu0 0.0
      %1137 = vmatprep.subr.mxu0 0.0
      %1138 = vmatpush1.xpose.msra.mxu0 0.0
      %1139 = vmatprep.subr.mxu0 0.0
      %1140 = vmatpush1.xpose.msra.mxu0 0.0
      %1141 = vmatprep.subr.mxu0 0.0
      %1142 = vmatpush1.xpose.msra.mxu0 0.0
      %1143 = vmatprep.mubr.f32.mxu0 0.0
      %1144 = vmatmul.mubr.f32.gmra.mrb[0].mxu0 %v1071
      %v1145 = vpop.f32.mrb[0].mxu0
      %v1146 = vadd.f32 0.0, %v1145
      %v1147 = vpop.f32.mrb[0].mxu0
      %1148 = vmatprep.mubr.f32.mxu0 0.0
      %1149 = vmatmul.mubr.f32.gmra.mrb[0].mxu0 %v1073
      %v1150 = vpop.f32.mrb[0].mxu0
      %v1151 = vadd.f32 0.0, %v1150
      %v1152 = vpop.f32.mrb[0].mxu0
      %1153 = vdwg.mxu0
      %v1154 = vmul.f32 %v1146, 0.25
      %v1155 = vmul.f32 %v1151, 0.25
      %v1156 = vadd.f32 %v1154, %v952
      %v1157 = vadd.f32 %v1155, %v952
      %s1158 = scalar_lea.vmem %s2, 16
      %v1159 = vld [vmem:[%s1158] sm:$0xff]
      %v1160 = vld [vmem:[%s1158 + $0x8] sm:$0xff]
      %v1161 = vadd.f32 %v1156, %v1159
      %v1162 = vadd.f32 %v1157, %v1160
      %v1163 = vsel %vm862, %v1161, -inf
      %1164 = vmax.xlane.f32.xlu0 %v1163
      %v1165 = vpop.xlane.xlu0 %1164
      %v1166 = vsel %vm862, %v1162, -inf
      %1167 = vmax.xlane.f32.xlu0 %v1166
      %v1168 = vpop.xlane.xlu0 %1167
      %v1169 = vsub.f32 %v1161, %v1165
      %v1170 = vsub.f32 %v1162, %v1168
      %v1171 = vmul.f32 %v1169, 1.442695
      %v1172 = vpow.pop %v1171
      %v1173 = vmul.f32 %v1170, 1.442695
      %v1174 = vpow.pop %v1173
      %v1175 = vsel %vm862, %v1172, 0.0
      %1176 = vadd.xlane.f32.xlu0 %v1175
      %v1177 = vpop.xlane.xlu0 %1176
      %v1178 = vsel %vm862, %v1174, 0.0
      %1179 = vadd.xlane.f32.xlu0 %v1178
      %v1180 = vpop.xlane.xlu0 %1179
      %v1181 = vrcp.pop %v1177
      %v1182 = vmul.f32 %v1172, %v1181
      %v1183 = vrcp.pop %v1180
      %v1184 = vmul.f32 %v1174, %v1183
      %1187 = vrot.lane.b32.xlu0 %v848, 112
      %v1188 = vpop.permute.xlu0 %1187
      %1189 = vrot.lane.b32.xlu0 %v853, 112
      %v1190 = vpop.permute.xlu0 %1189
      %v1194 = vsel %vm862, %v1182, 0
      %v1197 = vsel %vm862, %v1184, 0
      %1199 = vmatprep.subr.mxu0 0.0
      %1200 = vmatpush1.msra.mxu0 %v1188
      %1201 = vmatprep.subr.mxu0 0.0
      %1202 = vmatpush1.msra.mxu0 %v1190
      %1203 = vmatprep.subr.mxu0 0.0
      %1204 = vmatpush1.msra.mxu0 0.0
      %1205 = vmatprep.subr.mxu0 0.0
      %1206 = vmatpush1.msra.mxu0 0.0
      %1207 = vmatprep.subr.mxu0 0.0
      %1208 = vmatpush1.msra.mxu0 0.0
      %1209 = vmatprep.subr.mxu0 0.0
      %1210 = vmatpush1.msra.mxu0 0.0
      %1211 = vmatprep.subr.mxu0 0.0
      %1212 = vmatpush1.msra.mxu0 0.0
      %1213 = vmatprep.subr.mxu0 0.0
      %1214 = vmatpush1.msra.mxu0 0.0
      %1215 = vmatprep.subr.mxu0 0.0
      %1216 = vmatpush1.msra.mxu0 0.0
      %1217 = vmatprep.subr.mxu0 0.0
      %1218 = vmatpush1.msra.mxu0 0.0
      %1219 = vmatprep.subr.mxu0 0.0
      %1220 = vmatpush1.msra.mxu0 0.0
      %1221 = vmatprep.subr.mxu0 0.0
      %1222 = vmatpush1.msra.mxu0 0.0
      %1223 = vmatprep.subr.mxu0 0.0
      %1224 = vmatpush1.msra.mxu0 0.0
      %1225 = vmatprep.subr.mxu0 0.0
      %1226 = vmatpush1.msra.mxu0 0.0
      %1227 = vmatprep.subr.mxu0 0.0
      %1228 = vmatpush1.msra.mxu0 0.0
      %1229 = vmatprep.subr.mxu0 0.0
      %1230 = vmatpush1.msra.mxu0 0.0
      %1231 = vmatprep.subr.mxu0 0.0
      %1232 = vmatpush1.msra.mxu0 0.0
      %1233 = vmatprep.subr.mxu0 0.0
      %1234 = vmatpush1.msra.mxu0 0.0
      %1235 = vmatprep.subr.mxu0 0.0
      %1236 = vmatpush1.msra.mxu0 0.0
      %1237 = vmatprep.subr.mxu0 0.0
      %1238 = vmatpush1.msra.mxu0 0.0
      %1239 = vmatprep.subr.mxu0 0.0
      %1240 = vmatpush1.msra.mxu0 0.0
      %1241 = vmatprep.subr.mxu0 0.0
      %1242 = vmatpush1.msra.mxu0 0.0
      %1243 = vmatprep.subr.mxu0 0.0
      %1244 = vmatpush1.msra.mxu0 0.0
      %1245 = vmatprep.subr.mxu0 0.0
      %1246 = vmatpush1.msra.mxu0 0.0
      %1247 = vmatprep.subr.mxu0 0.0
      %1248 = vmatpush1.msra.mxu0 0.0
      %1249 = vmatprep.subr.mxu0 0.0
      %1250 = vmatpush1.msra.mxu0 0.0
      %1251 = vmatprep.subr.mxu0 0.0
      %1252 = vmatpush1.msra.mxu0 0.0
      %1253 = vmatprep.subr.mxu0 0.0
      %1254 = vmatpush1.msra.mxu0 0.0
      %1255 = vmatprep.subr.mxu0 0.0
      %1256 = vmatpush1.msra.mxu0 0.0
      %1257 = vmatprep.subr.mxu0 0.0
      %1258 = vmatpush1.msra.mxu0 0.0
      %1259 = vmatprep.subr.mxu0 0.0
      %1260 = vmatpush1.msra.mxu0 0.0
      %1261 = vmatprep.subr.mxu0 0.0
      %1262 = vmatpush1.msra.mxu0 0.0
      %1263 = vmatprep.mubr.f32.mxu0 0.0
      %1264 = vmatmul.mubr.f32.gmra.mrb[0].mxu0 %v1194
      %v1265 = vpop.f32.mrb[0].mxu0
      %v1266 = vadd.f32 0.0, %v1265
      %v1267 = vpop.f32.mrb[0].mxu0
      %1268 = vmatprep.mubr.f32.mxu0 0.0
      %1269 = vmatmul.mubr.f32.gmra.mrb[0].mxu0 %v1197
      %v1270 = vpop.f32.mrb[0].mxu0
      %v1271 = vadd.f32 0.0, %v1270
      %v1272 = vpop.f32.mrb[0].mxu0
      %1273 = vdwg.mxu0
      %1274 = vrot.lane.b32.xlu0 %v756, 96
      %v1275 = vpop.permute.xlu0 %1274
      %1276 = vrot.lane.b32.xlu0 %v761, 96
      %v1277 = vpop.permute.xlu0 %1276
      %1278 = vrot.lane.b32.xlu0 %v756, 32
      %v1279 = vpop.permute.xlu0 %1278
      %1280 = vrot.lane.b32.xlu0 %v761, 32
      %v1281 = vpop.permute.xlu0 %1280
      %v1282 = vsel %vm862, %v1275, 0
      %v1284 = vsel %vm862, %v1277, 0
      %v1286 = vsel %vm862, %v1279, 0
      %v1288 = vsel %vm862, %v1281, 0
      %1290 = vmatprep.subr.mxu0 0.0
      %1291 = vmatpush1.xpose.msra.mxu0 %v1286
      %1292 = vmatprep.subr.mxu0 0.0
      %1293 = vmatpush1.xpose.msra.mxu0 %v1288
      %1294 = vmatprep.subr.mxu0 0.0
      %1295 = vmatpush1.xpose.msra.mxu0 0.0
      %1296 = vmatprep.subr.mxu0 0.0
      %1297 = vmatpush1.xpose.msra.mxu0 0.0
      %1298 = vmatprep.subr.mxu0 0.0
      %1299 = vmatpush1.xpose.msra.mxu0 0.0
      %1300 = vmatprep.subr.mxu0 0.0
      %1301 = vmatpush1.xpose.msra.mxu0 0.0
      %1302 = vmatprep.subr.mxu0 0.0
      %1303 = vmatpush1.xpose.msra.mxu0 0.0
      %1304 = vmatprep.subr.mxu0 0.0
      %1305 = vmatpush1.xpose.msra.mxu0 0.0
      %1306 = vmatprep.subr.mxu0 0.0
      %1307 = vmatpush1.xpose.msra.mxu0 0.0
      %1308 = vmatprep.subr.mxu0 0.0
      %1309 = vmatpush1.xpose.msra.mxu0 0.0
      %1310 = vmatprep.subr.mxu0 0.0
      %1311 = vmatpush1.xpose.msra.mxu0 0.0
      %1312 = vmatprep.subr.mxu0 0.0
      %1313 = vmatpush1.xpose.msra.mxu0 0.0
      %1314 = vmatprep.subr.mxu0 0.0
      %1315 = vmatpush1.xpose.msra.mxu0 0.0
      %1316 = vmatprep.subr.mxu0 0.0
      %1317 = vmatpush1.xpose.msra.mxu0 0.0
      %1318 = vmatprep.subr.mxu0 0.0
      %1319 = vmatpush1.xpose.msra.mxu0 0.0
      %1320 = vmatprep.subr.mxu0 0.0
      %1321 = vmatpush1.xpose.msra.mxu0 0.0
      %1322 = vmatprep.subr.mxu0 0.0
      %1323 = vmatpush1.xpose.msra.mxu0 0.0
      %1324 = vmatprep.subr.mxu0 0.0
      %1325 = vmatpush1.xpose.msra.mxu0 0.0
      %1326 = vmatprep.subr.mxu0 0.0
      %1327 = vmatpush1.xpose.msra.mxu0 0.0
      %1328 = vmatprep.subr.mxu0 0.0
      %1329 = vmatpush1.xpose.msra.mxu0 0.0
      %1330 = vmatprep.subr.mxu0 0.0
      %1331 = vmatpush1.xpose.msra.mxu0 0.0
      %1332 = vmatprep.subr.mxu0 0.0
      %1333 = vmatpush1.xpose.msra.mxu0 0.0
      %1334 = vmatprep.subr.mxu0 0.0
      %1335 = vmatpush1.xpose.msra.mxu0 0.0
      %1336 = vmatprep.subr.mxu0 0.0
      %1337 = vmatpush1.xpose.msra.mxu0 0.0
      %1338 = vmatprep.subr.mxu0 0.0
      %1339 = vmatpush1.xpose.msra.mxu0 0.0
      %1340 = vmatprep.subr.mxu0 0.0
      %1341 = vmatpush1.xpose.msra.mxu0 0.0
      %1342 = vmatprep.subr.mxu0 0.0
      %1343 = vmatpush1.xpose.msra.mxu0 0.0
      %1344 = vmatprep.subr.mxu0 0.0
      %1345 = vmatpush1.xpose.msra.mxu0 0.0
      %1346 = vmatprep.subr.mxu0 0.0
      %1347 = vmatpush1.xpose.msra.mxu0 0.0
      %1348 = vmatprep.subr.mxu0 0.0
      %1349 = vmatpush1.xpose.msra.mxu0 0.0
      %1350 = vmatprep.subr.mxu0 0.0
      %1351 = vmatpush1.xpose.msra.mxu0 0.0
      %1352 = vmatprep.subr.mxu0 0.0
      %1353 = vmatpush1.xpose.msra.mxu0 0.0
      %1354 = vmatprep.mubr.f32.mxu0 0.0
      %1355 = vmatmul.mubr.f32.gmra.mrb[0].mxu0 %v1282
      %v1356 = vpop.f32.mrb[0].mxu0
      %v1357 = vadd.f32 0.0, %v1356
      %v1358 = vpop.f32.mrb[0].mxu0
      %1359 = vmatprep.mubr.f32.mxu0 0.0
      %1360 = vmatmul.mubr.f32.gmra.mrb[0].mxu0 %v1284
      %v1361 = vpop.f32.mrb[0].mxu0
      %v1362 = vadd.f32 0.0, %v1361
      %v1363 = vpop.f32.mrb[0].mxu0
      %1364 = vdwg.mxu0
      %v1365 = vmul.f32 %v1357, 0.25
      %v1366 = vmul.f32 %v1362, 0.25
      %v1367 = vadd.f32 %v1365, %v952
      %v1368 = vadd.f32 %v1366, %v952
      %s1369 = scalar_lea.vmem %s2, 32
      %v1370 = vld [vmem:[%s1369] sm:$0xff]
      %v1371 = vld [vmem:[%s1369 + $0x8] sm:$0xff]
      %v1372 = vadd.f32 %v1367, %v1370
      %v1373 = vadd.f32 %v1368, %v1371
      %v1374 = vsel %vm862, %v1372, -inf
      %1375 = vmax.xlane.f32.xlu0 %v1374
      %v1376 = vpop.xlane.xlu0 %1375
      %v1377 = vsel %vm862, %v1373, -inf
      %1378 = vmax.xlane.f32.xlu0 %v1377
      %v1379 = vpop.xlane.xlu0 %1378
      %v1380 = vsub.f32 %v1372, %v1376
      %v1381 = vsub.f32 %v1373, %v1379
      %v1382 = vmul.f32 %v1380, 1.442695
      %v1383 = vpow.pop %v1382
      %v1384 = vmul.f32 %v1381, 1.442695
      %v1385 = vpow.pop %v1384
      %v1386 = vsel %vm862, %v1383, 0.0
      %1387 = vadd.xlane.f32.xlu0 %v1386
      %v1388 = vpop.xlane.xlu0 %1387
      %v1389 = vsel %vm862, %v1385, 0.0
      %1390 = vadd.xlane.f32.xlu0 %v1389
      %v1391 = vpop.xlane.xlu0 %1390
      %v1392 = vrcp.pop %v1388
      %v1393 = vmul.f32 %v1383, %v1392
      %v1394 = vrcp.pop %v1391
      %v1395 = vmul.f32 %v1385, %v1394
      %1396 = vrot.lane.b32.xlu0 %v848, 96
      %v1397 = vpop.permute.xlu0 %1396
      %1398 = vrot.lane.b32.xlu0 %v853, 96
      %v1399 = vpop.permute.xlu0 %1398
      %v1403 = vsel %vm862, %v1393, 0
      %v1406 = vsel %vm862, %v1395, 0
      %1408 = vmatprep.subr.mxu0 0.0
      %1409 = vmatpush1.msra.mxu0 %v1397
      %1410 = vmatprep.subr.mxu0 0.0
      %1411 = vmatpush1.msra.mxu0 %v1399
      %1412 = vmatprep.subr.mxu0 0.0
      %1413 = vmatpush1.msra.mxu0 0.0
      %1414 = vmatprep.subr.mxu0 0.0
      %1415 = vmatpush1.msra.mxu0 0.0
      %1416 = vmatprep.subr.mxu0 0.0
      %1417 = vmatpush1.msra.mxu0 0.0
      %1418 = vmatprep.subr.mxu0 0.0
      %1419 = vmatpush1.msra.mxu0 0.0
      %1420 = vmatprep.subr.mxu0 0.0
      %1421 = vmatpush1.msra.mxu0 0.0
      %1422 = vmatprep.subr.mxu0 0.0
      %1423 = vmatpush1.msra.mxu0 0.0
      %1424 = vmatprep.subr.mxu0 0.0
      %1425 = vmatpush1.msra.mxu0 0.0
      %1426 = vmatprep.subr.mxu0 0.0
      %1427 = vmatpush1.msra.mxu0 0.0
      %1428 = vmatprep.subr.mxu0 0.0
      %1429 = vmatpush1.msra.mxu0 0.0
      %1430 = vmatprep.subr.mxu0 0.0
      %1431 = vmatpush1.msra.mxu0 0.0
      %1432 = vmatprep.subr.mxu0 0.0
      %1433 = vmatpush1.msra.mxu0 0.0
      %1434 = vmatprep.subr.mxu0 0.0
      %1435 = vmatpush1.msra.mxu0 0.0
      %1436 = vmatprep.subr.mxu0 0.0
      %1437 = vmatpush1.msra.mxu0 0.0
      %1438 = vmatprep.subr.mxu0 0.0
      %1439 = vmatpush1.msra.mxu0 0.0
      %1440 = vmatprep.subr.mxu0 0.0
      %1441 = vmatpush1.msra.mxu0 0.0
      %1442 = vmatprep.subr.mxu0 0.0
      %1443 = vmatpush1.msra.mxu0 0.0
      %1444 = vmatprep.subr.mxu0 0.0
      %1445 = vmatpush1.msra.mxu0 0.0
      %1446 = vmatprep.subr.mxu0 0.0
      %1447 = vmatpush1.msra.mxu0 0.0
      %1448 = vmatprep.subr.mxu0 0.0
      %1449 = vmatpush1.msra.mxu0 0.0
      %1450 = vmatprep.subr.mxu0 0.0
      %1451 = vmatpush1.msra.mxu0 0.0
      %1452 = vmatprep.subr.mxu0 0.0
      %1453 = vmatpush1.msra.mxu0 0.0
      %1454 = vmatprep.subr.mxu0 0.0
      %1455 = vmatpush1.msra.mxu0 0.0
      %1456 = vmatprep.subr.mxu0 0.0
      %1457 = vmatpush1.msra.mxu0 0.0
      %1458 = vmatprep.subr.mxu0 0.0
      %1459 = vmatpush1.msra.mxu0 0.0
      %1460 = vmatprep.subr.mxu0 0.0
      %1461 = vmatpush1.msra.mxu0 0.0
      %1462 = vmatprep.subr.mxu0 0.0
      %1463 = vmatpush1.msra.mxu0 0.0
      %1464 = vmatprep.subr.mxu0 0.0
      %1465 = vmatpush1.msra.mxu0 0.0
      %1466 = vmatprep.subr.mxu0 0.0
      %1467 = vmatpush1.msra.mxu0 0.0
      %1468 = vmatprep.subr.mxu0 0.0
      %1469 = vmatpush1.msra.mxu0 0.0
      %1470 = vmatprep.subr.mxu0 0.0
      %1471 = vmatpush1.msra.mxu0 0.0
      %1472 = vmatprep.mubr.f32.mxu0 0.0
      %1473 = vmatmul.mubr.f32.gmra.mrb[0].mxu0 %v1403
      %v1474 = vpop.f32.mrb[0].mxu0
      %v1475 = vadd.f32 0.0, %v1474
      %v1476 = vpop.f32.mrb[0].mxu0
      %1477 = vmatprep.mubr.f32.mxu0 0.0
      %1478 = vmatmul.mubr.f32.gmra.mrb[0].mxu0 %v1406
      %v1479 = vpop.f32.mrb[0].mxu0
      %v1480 = vadd.f32 0.0, %v1479
      %v1481 = vpop.f32.mrb[0].mxu0
      %1482 = vdwg.mxu0
      %1483 = vrot.lane.b32.xlu0 %v756, 80
      %v1484 = vpop.permute.xlu0 %1483
      %1485 = vrot.lane.b32.xlu0 %v761, 80
      %v1486 = vpop.permute.xlu0 %1485
      %1487 = vrot.lane.b32.xlu0 %v756, 16
      %v1488 = vpop.permute.xlu0 %1487
      %1489 = vrot.lane.b32.xlu0 %v761, 16
      %v1490 = vpop.permute.xlu0 %1489
      %v1491 = vsel %vm862, %v1484, 0
      %v1493 = vsel %vm862, %v1486, 0
      %v1495 = vsel %vm862, %v1488, 0
      %v1497 = vsel %vm862, %v1490, 0
      %1499 = vmatprep.subr.mxu0 0.0
      %1500 = vmatpush1.xpose.msra.mxu0 %v1495
      %1501 = vmatprep.subr.mxu0 0.0
      %1502 = vmatpush1.xpose.msra.mxu0 %v1497
      %1503 = vmatprep.subr.mxu0 0.0
      %1504 = vmatpush1.xpose.msra.mxu0 0.0
      %1505 = vmatprep.subr.mxu0 0.0
      %1506 = vmatpush1.xpose.msra.mxu0 0.0
      %1507 = vmatprep.subr.mxu0 0.0
      %1508 = vmatpush1.xpose.msra.mxu0 0.0
      %1509 = vmatprep.subr.mxu0 0.0
      %1510 = vmatpush1.xpose.msra.mxu0 0.0
      %1511 = vmatprep.subr.mxu0 0.0
      %1512 = vmatpush1.xpose.msra.mxu0 0.0
      %1513 = vmatprep.subr.mxu0 0.0
      %1514 = vmatpush1.xpose.msra.mxu0 0.0
      %1515 = vmatprep.subr.mxu0 0.0
      %1516 = vmatpush1.xpose.msra.mxu0 0.0
      %1517 = vmatprep.subr.mxu0 0.0
      %1518 = vmatpush1.xpose.msra.mxu0 0.0
      %1519 = vmatprep.subr.mxu0 0.0
      %1520 = vmatpush1.xpose.msra.mxu0 0.0
      %1521 = vmatprep.subr.mxu0 0.0
      %1522 = vmatpush1.xpose.msra.mxu0 0.0
      %1523 = vmatprep.subr.mxu0 0.0
      %1524 = vmatpush1.xpose.msra.mxu0 0.0
      %1525 = vmatprep.subr.mxu0 0.0
      %1526 = vmatpush1.xpose.msra.mxu0 0.0
      %1527 = vmatprep.subr.mxu0 0.0
      %1528 = vmatpush1.xpose.msra.mxu0 0.0
      %1529 = vmatprep.subr.mxu0 0.0
      %1530 = vmatpush1.xpose.msra.mxu0 0.0
      %1531 = vmatprep.subr.mxu0 0.0
      %1532 = vmatpush1.xpose.msra.mxu0 0.0
      %1533 = vmatprep.subr.mxu0 0.0
      %1534 = vmatpush1.xpose.msra.mxu0 0.0
      %1535 = vmatprep.subr.mxu0 0.0
      %1536 = vmatpush1.xpose.msra.mxu0 0.0
      %1537 = vmatprep.subr.mxu0 0.0
      %1538 = vmatpush1.xpose.msra.mxu0 0.0
      %1539 = vmatprep.subr.mxu0 0.0
      %1540 = vmatpush1.xpose.msra.mxu0 0.0
      %1541 = vmatprep.subr.mxu0 0.0
      %1542 = vmatpush1.xpose.msra.mxu0 0.0
      %1543 = vmatprep.subr.mxu0 0.0
      %1544 = vmatpush1.xpose.msra.mxu0 0.0
      %1545 = vmatprep.subr.mxu0 0.0
      %1546 = vmatpush1.xpose.msra.mxu0 0.0
      %1547 = vmatprep.subr.mxu0 0.0
      %1548 = vmatpush1.xpose.msra.mxu0 0.0
      %1549 = vmatprep.subr.mxu0 0.0
      %1550 = vmatpush1.xpose.msra.mxu0 0.0
      %1551 = vmatprep.subr.mxu0 0.0
      %1552 = vmatpush1.xpose.msra.mxu0 0.0
      %1553 = vmatprep.subr.mxu0 0.0
      %1554 = vmatpush1.xpose.msra.mxu0 0.0
      %1555 = vmatprep.subr.mxu0 0.0
      %1556 = vmatpush1.xpose.msra.mxu0 0.0
      %1557 = vmatprep.subr.mxu0 0.0
      %1558 = vmatpush1.xpose.msra.mxu0 0.0
      %1559 = vmatprep.subr.mxu0 0.0
      %1560 = vmatpush1.xpose.msra.mxu0 0.0
      %1561 = vmatprep.subr.mxu0 0.0
      %1562 = vmatpush1.xpose.msra.mxu0 0.0
      %1563 = vmatprep.mubr.f32.mxu0 0.0
      %1564 = vmatmul.mubr.f32.gmra.mrb[0].mxu0 %v1491
      %v1565 = vpop.f32.mrb[0].mxu0
      %v1566 = vadd.f32 0.0, %v1565
      %v1567 = vpop.f32.mrb[0].mxu0
      %1568 = vmatprep.mubr.f32.mxu0 0.0
      %1569 = vmatmul.mubr.f32.gmra.mrb[0].mxu0 %v1493
      %v1570 = vpop.f32.mrb[0].mxu0
      %v1571 = vadd.f32 0.0, %v1570
      %v1572 = vpop.f32.mrb[0].mxu0
      %1573 = vdwg.mxu0
      %v1574 = vmul.f32 %v1566, 0.25
      %v1575 = vmul.f32 %v1571, 0.25
      %v1576 = vadd.f32 %v1574, %v952
      %v1577 = vadd.f32 %v1575, %v952
      %s1578 = scalar_lea.vmem %s2, 48
      %v1579 = vld [vmem:[%s1578] sm:$0xff]
      %v1580 = vld [vmem:[%s1578 + $0x8] sm:$0xff]
      %v1581 = vadd.f32 %v1576, %v1579
      %v1582 = vadd.f32 %v1577, %v1580
      %v1583 = vsel %vm862, %v1581, -inf
      %1584 = vmax.xlane.f32.xlu0 %v1583
      %v1585 = vpop.xlane.xlu0 %1584
      %v1586 = vsel %vm862, %v1582, -inf
      %1587 = vmax.xlane.f32.xlu0 %v1586
      %v1588 = vpop.xlane.xlu0 %1587
      %v1589 = vsub.f32 %v1581, %v1585
      %v1590 = vsub.f32 %v1582, %v1588
      %v1591 = vmul.f32 %v1589, 1.442695
      %v1592 = vpow.pop %v1591
      %v1593 = vmul.f32 %v1590, 1.442695
      %v1594 = vpow.pop %v1593
      %v1595 = vsel %vm862, %v1592, 0.0
      %1596 = vadd.xlane.f32.xlu0 %v1595
      %v1597 = vpop.xlane.xlu0 %1596
      %v1598 = vsel %vm862, %v1594, 0.0
      %1599 = vadd.xlane.f32.xlu0 %v1598
      %v1600 = vpop.xlane.xlu0 %1599
      %v1601 = vrcp.pop %v1597
      %v1602 = vmul.f32 %v1592, %v1601
      %v1603 = vrcp.pop %v1600
      %v1604 = vmul.f32 %v1594, %v1603
      %1605 = vrot.lane.b32.xlu0 %v848, 80
      %v1606 = vpop.permute.xlu0 %1605
      %1607 = vrot.lane.b32.xlu0 %v853, 80
      %v1608 = vpop.permute.xlu0 %1607
      %v1612 = vsel %vm862, %v1602, 0
      %v1615 = vsel %vm862, %v1604, 0
      %1617 = vmatprep.subr.mxu0 0.0
      %1618 = vmatpush1.msra.mxu0 %v1606
      %1619 = vmatprep.subr.mxu0 0.0
      %1620 = vmatpush1.msra.mxu0 %v1608
      %1621 = vmatprep.subr.mxu0 0.0
      %1622 = vmatpush1.msra.mxu0 0.0
      %1623 = vmatprep.subr.mxu0 0.0
      %1624 = vmatpush1.msra.mxu0 0.0
      %1625 = vmatprep.subr.mxu0 0.0
      %1626 = vmatpush1.msra.mxu0 0.0
      %1627 = vmatprep.subr.mxu0 0.0
      %1628 = vmatpush1.msra.mxu0 0.0
      %1629 = vmatprep.subr.mxu0 0.0
      %1630 = vmatpush1.msra.mxu0 0.0
      %1631 = vmatprep.subr.mxu0 0.0
      %1632 = vmatpush1.msra.mxu0 0.0
      %1633 = vmatprep.subr.mxu0 0.0
      %1634 = vmatpush1.msra.mxu0 0.0
      %1635 = vmatprep.subr.mxu0 0.0
      %1636 = vmatpush1.msra.mxu0 0.0
      %1637 = vmatprep.subr.mxu0 0.0
      %1638 = vmatpush1.msra.mxu0 0.0
      %1639 = vmatprep.subr.mxu0 0.0
      %1640 = vmatpush1.msra.mxu0 0.0
      %1641 = vmatprep.subr.mxu0 0.0
      %1642 = vmatpush1.msra.mxu0 0.0
      %1643 = vmatprep.subr.mxu0 0.0
      %1644 = vmatpush1.msra.mxu0 0.0
      %1645 = vmatprep.subr.mxu0 0.0
      %1646 = vmatpush1.msra.mxu0 0.0
      %1647 = vmatprep.subr.mxu0 0.0
      %1648 = vmatpush1.msra.mxu0 0.0
      %1649 = vmatprep.subr.mxu0 0.0
      %1650 = vmatpush1.msra.mxu0 0.0
      %1651 = vmatprep.subr.mxu0 0.0
      %1652 = vmatpush1.msra.mxu0 0.0
      %1653 = vmatprep.subr.mxu0 0.0
      %1654 = vmatpush1.msra.mxu0 0.0
      %1655 = vmatprep.subr.mxu0 0.0
      %1656 = vmatpush1.msra.mxu0 0.0
      %1657 = vmatprep.subr.mxu0 0.0
      %1658 = vmatpush1.msra.mxu0 0.0
      %1659 = vmatprep.subr.mxu0 0.0
      %1660 = vmatpush1.msra.mxu0 0.0
      %1661 = vmatprep.subr.mxu0 0.0
      %1662 = vmatpush1.msra.mxu0 0.0
      %1663 = vmatprep.subr.mxu0 0.0
      %1664 = vmatpush1.msra.mxu0 0.0
      %1665 = vmatprep.subr.mxu0 0.0
      %1666 = vmatpush1.msra.mxu0 0.0
      %1667 = vmatprep.subr.mxu0 0.0
      %1668 = vmatpush1.msra.mxu0 0.0
      %1669 = vmatprep.subr.mxu0 0.0
      %1670 = vmatpush1.msra.mxu0 0.0
      %1671 = vmatprep.subr.mxu0 0.0
      %1672 = vmatpush1.msra.mxu0 0.0
      %1673 = vmatprep.subr.mxu0 0.0
      %1674 = vmatpush1.msra.mxu0 0.0
      %1675 = vmatprep.subr.mxu0 0.0
      %1676 = vmatpush1.msra.mxu0 0.0
      %1677 = vmatprep.subr.mxu0 0.0
      %1678 = vmatpush1.msra.mxu0 0.0
      %1679 = vmatprep.subr.mxu0 0.0
      %1680 = vmatpush1.msra.mxu0 0.0
      %1681 = vmatprep.mubr.f32.mxu0 0.0
      %1682 = vmatmul.mubr.f32.gmra.mrb[0].mxu0 %v1612
      %v1683 = vpop.f32.mrb[0].mxu0
      %v1684 = vadd.f32 0.0, %v1683
      %v1685 = vpop.f32.mrb[0].mxu0
      %1686 = vmatprep.mubr.f32.mxu0 0.0
      %1687 = vmatmul.mubr.f32.gmra.mrb[0].mxu0 %v1615
      %v1688 = vpop.f32.mrb[0].mxu0
      %v1689 = vadd.f32 0.0, %v1688
      %v1690 = vpop.f32.mrb[0].mxu0
      %1691 = vdwg.mxu0
      %1694 = vrot.lane.b32.xlu0 %v1266, 16
      %v1695 = vpop.permute.xlu0 %1694
      %1696 = vrot.lane.b32.xlu0 %v1271, 16
      %v1697 = vpop.permute.xlu0 %1696
      %1702 = vrot.lane.b32.xlu0 %v1475, 32
      %v1703 = vpop.permute.xlu0 %1702
      %1704 = vrot.lane.b32.xlu0 %v1480, 32
      %v1705 = vpop.permute.xlu0 %1704
      %1710 = vrot.lane.b32.xlu0 %v1684, 48
      %v1711 = vpop.permute.xlu0 %1710
      %1712 = vrot.lane.b32.xlu0 %v1689, 48
      %v1713 = vpop.permute.xlu0 %1712
      %v1716 = vsel %vm862, %v1055, %v1695
      %v1717 = vsel %vm862, %v1060, %v1697
      %v1718 = vsel %vm682, %v1716, %v1703
      %v1719 = vsel %vm682, %v1717, %v1705
      %vm1720 = vcmask 392192
      %v1721 = vsel %vm1720, %v1718, %v1711
      %v1722 = vsel %vm1720, %v1719, %v1713
      %v1723 = vld [vmem:[%s8] sm:$0xff]
      %v1724 = vld [vmem:[%s8 + $0x8] sm:$0xff]
      %v1725 = vld [vmem:[%s8 + $0x10] sm:$0xff]
      %v1726 = vld [vmem:[%s8 + $0x18] sm:$0xff]
      %v1727 = vld [vmem:[%s8 + $0x20] sm:$0xff]
      %v1728 = vld [vmem:[%s8 + $0x28] sm:$0xff]
      %v1729 = vld [vmem:[%s8 + $0x30] sm:$0xff]
      %v1730 = vld [vmem:[%s8 + $0x38] sm:$0xff]
      %v1731 = vld [vmem:[%s9] sm:$0x1]
      %v1733 = vlaneseq
      %v1734 = vshrl.u32 %v1733, 7
      %v1735 = vsub.s32 0, %v1734
      %v1736 = vrot.slane %v1731, %v1735
      %vm1738 = vcmask 523264
      %v1740 = vsel %vm1738, %v1721, 0
      %v1743 = vsel %vm1738, %v1722, 0
      %1745 = vmatprep.subr.mxu0 0.0
      %1746 = vmatpush1.msra.mxu0 %v1723
      %1747 = vmatprep.subr.mxu0 0.0
      %1748 = vmatpush1.msra.mxu0 %v1724
      %1749 = vmatprep.subr.mxu0 0.0
      %1750 = vmatpush1.msra.mxu0 %v1725
      %1751 = vmatprep.subr.mxu0 0.0
      %1752 = vmatpush1.msra.mxu0 %v1726
      %1753 = vmatprep.subr.mxu0 0.0
      %1754 = vmatpush1.msra.mxu0 %v1727
      %1755 = vmatprep.subr.mxu0 0.0
      %1756 = vmatpush1.msra.mxu0 %v1728
      %1757 = vmatprep.subr.mxu0 0.0
      %1758 = vmatpush1.msra.mxu0 %v1729
      %1759 = vmatprep.subr.mxu0 0.0
      %1760 = vmatpush1.msra.mxu0 %v1730
      %1761 = vmatprep.subr.mxu0 0.0
      %1762 = vmatpush1.msra.mxu0 0.0
      %1763 = vmatprep.subr.mxu0 0.0
      %1764 = vmatpush1.msra.mxu0 0.0
      %1765 = vmatprep.subr.mxu0 0.0
      %1766 = vmatpush1.msra.mxu0 0.0
      %1767 = vmatprep.subr.mxu0 0.0
      %1768 = vmatpush1.msra.mxu0 0.0
      %1769 = vmatprep.subr.mxu0 0.0
      %1770 = vmatpush1.msra.mxu0 0.0
      %1771 = vmatprep.subr.mxu0 0.0
      %1772 = vmatpush1.msra.mxu0 0.0
      %1773 = vmatprep.subr.mxu0 0.0
      %1774 = vmatpush1.msra.mxu0 0.0
      %1775 = vmatprep.subr.mxu0 0.0
      %1776 = vmatpush1.msra.mxu0 0.0
      %1777 = vmatprep.subr.mxu0 0.0
      %1778 = vmatpush1.msra.mxu0 0.0
      %1779 = vmatprep.subr.mxu0 0.0
      %1780 = vmatpush1.msra.mxu0 0.0
      %1781 = vmatprep.subr.mxu0 0.0
      %1782 = vmatpush1.msra.mxu0 0.0
      %1783 = vmatprep.subr.mxu0 0.0
      %1784 = vmatpush1.msra.mxu0 0.0
      %1785 = vmatprep.subr.mxu0 0.0
      %1786 = vmatpush1.msra.mxu0 0.0
      %1787 = vmatprep.subr.mxu0 0.0
      %1788 = vmatpush1.msra.mxu0 0.0
      %1789 = vmatprep.subr.mxu0 0.0
      %1790 = vmatpush1.msra.mxu0 0.0
      %1791 = vmatprep.subr.mxu0 0.0
      %1792 = vmatpush1.msra.mxu0 0.0
      %1793 = vmatprep.subr.mxu0 0.0
      %1794 = vmatpush1.msra.mxu0 0.0
      %1795 = vmatprep.subr.mxu0 0.0
      %1796 = vmatpush1.msra.mxu0 0.0
      %1797 = vmatprep.subr.mxu0 0.0
      %1798 = vmatpush1.msra.mxu0 0.0
      %1799 = vmatprep.subr.mxu0 0.0
      %1800 = vmatpush1.msra.mxu0 0.0
      %1801 = vmatprep.subr.mxu0 0.0
      %1802 = vmatpush1.msra.mxu0 0.0
      %1803 = vmatprep.subr.mxu0 0.0
      %1804 = vmatpush1.msra.mxu0 0.0
      %1805 = vmatprep.subr.mxu0 0.0
      %1806 = vmatpush1.msra.mxu0 0.0
      %1807 = vmatprep.subr.mxu0 0.0
      %1808 = vmatpush1.msra.mxu0 0.0
      %1809 = vmatprep.mubr.f32.mxu0 0.0
      %1810 = vmatmul.mubr.f32.gmra.mrb[0].mxu0 %v1740
      %v1811 = vpop.f32.mrb[0].mxu0
      %v1812 = vadd.f32 %v1736, %v1811
      %v1813 = vpop.f32.mrb[0].mxu0
      %1814 = vmatprep.mubr.f32.mxu0 0.0
      %1815 = vmatmul.mubr.f32.gmra.mrb[0].mxu0 %v1743
      %v1816 = vpop.f32.mrb[0].mxu0
      %v1817 = vadd.f32 %v1736, %v1816
      %v1818 = vpop.f32.mrb[0].mxu0
      %1819 = vdwg.mxu0
      %v1820 = vadd.f32 %v1812, %v668
      %v1821 = vadd.f32 %v1817, %v669
      %v1822 = vld [vmem:[%s10] sm:$0x1]
      %v1823 = vld [vmem:[%s11] sm:$0x1]
      %v1824 = vsel %vm682, %v1820, 0.0
      %1825 = vadd.xlane.f32.xlu0 %v1824
      %v1826 = vpop.xlane.xlu0 %1825
      %v1827 = vsel %vm682, %v1821, 0.0
      %1828 = vadd.xlane.f32.xlu0 %v1827
      %v1829 = vpop.xlane.xlu0 %1828
      %v1830 = vrcp.pop 32.0
      %v1831 = vmul.f32 %v1826, %v1830
      %v1832 = vmul.f32 %v1829, %v1830
      %v1833 = vsub.f32 %v1820, %v1831
      %v1834 = vsub.f32 %v1821, %v1832
      %v1835 = vmul.f32 %v1833, %v1833
      %v1836 = vmul.f32 %v1834, %v1834
      %v1837 = vsel %vm682, %v1835, 0.0
      %1838 = vadd.xlane.f32.xlu0 %v1837
      %v1839 = vpop.xlane.xlu0 %1838
      %v1840 = vsel %vm682, %v1836, 0.0
      %1841 = vadd.xlane.f32.xlu0 %v1840
      %v1842 = vpop.xlane.xlu0 %1841
      %v1843 = vmul.f32 %v1839, %v1830
      %v1844 = vmul.f32 %v1842, %v1830
      %v1845 = vadd.f32 %v1843, 1e-05
      %v1846 = vadd.f32 %v1844, 1e-05
      %v1847 = vrsqrt.pop %v1845
      %v1848 = vrsqrt.pop %v1846
      %v1849 = vmul.f32 %v1833, %v1847
      %v1850 = vmul.f32 %v1834, %v1848
      %v1852 = vlaneseq
      %v1853 = vshrl.u32 %v1852, 7
      %v1854 = vsub.s32 0, %v1853
      %v1855 = vrot.slane %v1822, %v1854
      %v1857 = vmul.f32 %v1849, %v1855
      %v1858 = vmul.f32 %v1850, %v1855
      %v1860 = vlaneseq
      %v1861 = vshrl.u32 %v1860, 7
      %v1862 = vsub.s32 0, %v1861
      %v1863 = vrot.slane %v1823, %v1862
      %v1865 = vadd.f32 %v1857, %v1863
      %v1866 = vadd.f32 %v1858, %v1863
      %v1867 = vadd.f32 %v1865, %v664
      %v1868 = vadd.f32 %v1866, %v665
      %v1869 = vld [vmem:[%s12] sm:$0x1]
      %v1870 = vld [vmem:[%s13] sm:$0x1]
      %v1871 = vsel %vm682, %v1867, 0.0
      %1872 = vadd.xlane.f32.xlu0 %v1871
      %v1873 = vpop.xlane.xlu0 %1872
      %v1874 = vsel %vm682, %v1868, 0.0
      %1875 = vadd.xlane.f32.xlu0 %v1874
      %v1876 = vpop.xlane.xlu0 %1875
      %v1877 = vmul.f32 %v1873, %v1830
      %v1878 = vmul.f32 %v1876, %v1830
      %v1879 = vsub.f32 %v1867, %v1877
      %v1880 = vsub.f32 %v1868, %v1878
      %v1881 = vmul.f32 %v1879, %v1879
      %v1882 = vmul.f32 %v1880, %v1880
      %v1883 = vsel %vm682, %v1881, 0.0
      %1884 = vadd.xlane.f32.xlu0 %v1883
      %v1885 = vpop.xlane.xlu0 %1884
      %v1886 = vsel %vm682, %v1882, 0.0
      %1887 = vadd.xlane.f32.xlu0 %v1886
      %v1888 = vpop.xlane.xlu0 %1887
      %v1889 = vmul.f32 %v1885, %v1830
      %v1890 = vmul.f32 %v1888, %v1830
      %v1891 = vadd.f32 %v1889, 1e-05
      %v1892 = vadd.f32 %v1890, 1e-05
      %v1893 = vrsqrt.pop %v1891
      %v1894 = vrsqrt.pop %v1892
      %v1895 = vmul.f32 %v1879, %v1893
      %v1896 = vmul.f32 %v1880, %v1894
      %v1898 = vlaneseq
      %v1899 = vshrl.u32 %v1898, 7
      %v1900 = vsub.s32 0, %v1899
      %v1901 = vrot.slane %v1869, %v1900
      %v1903 = vmul.f32 %v1895, %v1901
      %v1904 = vmul.f32 %v1896, %v1901
      %v1906 = vlaneseq
      %v1907 = vshrl.u32 %v1906, 7
      %v1908 = vsub.s32 0, %v1907
      %v1909 = vrot.slane %v1870, %v1908
      %v1911 = vadd.f32 %v1903, %v1909
      %v1912 = vadd.f32 %v1904, %v1909
      %v1913 = vld [vmem:[%s14] sm:$0xff]
      %v1914 = vld [vmem:[%s14 + $0x8] sm:$0xff]
      %v1915 = vld [vmem:[%s14 + $0x10] sm:$0xff]
      %v1916 = vld [vmem:[%s14 + $0x18] sm:$0xff]
      %v1917 = vld [vmem:[%s15] sm:$0x1]
      %v1919 = vlaneseq
      %v1920 = vshrl.u32 %v1919, 7
      %v1921 = vsub.s32 0, %v1920
      %v1922 = vrot.slane %v1917, %v1921
      %v1925 = vsel %vm682, %v1911, 0
      %v1928 = vsel %vm682, %v1912, 0
      %1930 = vmatprep.subr.mxu0 0.0
      %1931 = vmatpush1.msra.mxu0 %v1913
      %1932 = vmatprep.subr.mxu0 0.0
      %1933 = vmatpush1.msra.mxu0 %v1914
      %1934 = vmatprep.subr.mxu0 0.0
      %1935 = vmatpush1.msra.mxu0 %v1915
      %1936 = vmatprep.subr.mxu0 0.0
      %1937 = vmatpush1.msra.mxu0 %v1916
      %1938 = vmatprep.subr.mxu0 0.0
      %1939 = vmatpush1.msra.mxu0 0.0
      %1940 = vmatprep.subr.mxu0 0.0
      %1941 = vmatpush1.msra.mxu0 0.0
      %1942 = vmatprep.subr.mxu0 0.0
      %1943 = vmatpush1.msra.mxu0 0.0
      %1944 = vmatprep.subr.mxu0 0.0
      %1945 = vmatpush1.msra.mxu0 0.0
      %1946 = vmatprep.subr.mxu0 0.0
      %1947 = vmatpush1.msra.mxu0 0.0
      %1948 = vmatprep.subr.mxu0 0.0
      %1949 = vmatpush1.msra.mxu0 0.0
      %1950 = vmatprep.subr.mxu0 0.0
      %1951 = vmatpush1.msra.mxu0 0.0
      %1952 = vmatprep.subr.mxu0 0.0
      %1953 = vmatpush1.msra.mxu0 0.0
      %1954 = vmatprep.subr.mxu0 0.0
      %1955 = vmatpush1.msra.mxu0 0.0
      %1956 = vmatprep.subr.mxu0 0.0
      %1957 = vmatpush1.msra.mxu0 0.0
      %1958 = vmatprep.subr.mxu0 0.0
      %1959 = vmatpush1.msra.mxu0 0.0
      %1960 = vmatprep.subr.mxu0 0.0
      %1961 = vmatpush1.msra.mxu0 0.0
      %1962 = vmatprep.subr.mxu0 0.0
      %1963 = vmatpush1.msra.mxu0 0.0
      %1964 = vmatprep.subr.mxu0 0.0
      %1965 = vmatpush1.msra.mxu0 0.0
      %1966 = vmatprep.subr.mxu0 0.0
      %1967 = vmatpush1.msra.mxu0 0.0
      %1968 = vmatprep.subr.mxu0 0.0
      %1969 = vmatpush1.msra.mxu0 0.0
      %1970 = vmatprep.subr.mxu0 0.0
      %1971 = vmatpush1.msra.mxu0 0.0
      %1972 = vmatprep.subr.mxu0 0.0
      %1973 = vmatpush1.msra.mxu0 0.0
      %1974 = vmatprep.subr.mxu0 0.0
      %1975 = vmatpush1.msra.mxu0 0.0
      %1976 = vmatprep.subr.mxu0 0.0
      %1977 = vmatpush1.msra.mxu0 0.0
      %1978 = vmatprep.subr.mxu0 0.0
      %1979 = vmatpush1.msra.mxu0 0.0
      %1980 = vmatprep.subr.mxu0 0.0
      %1981 = vmatpush1.msra.mxu0 0.0
      %1982 = vmatprep.subr.mxu0 0.0
      %1983 = vmatpush1.msra.mxu0 0.0
      %1984 = vmatprep.subr.mxu0 0.0
      %1985 = vmatpush1.msra.mxu0 0.0
      %1986 = vmatprep.subr.mxu0 0.0
      %1987 = vmatpush1.msra.mxu0 0.0
      %1988 = vmatprep.subr.mxu0 0.0
      %1989 = vmatpush1.msra.mxu0 0.0
      %1990 = vmatprep.subr.mxu0 0.0
      %1991 = vmatpush1.msra.mxu0 0.0
      %1992 = vmatprep.subr.mxu0 0.0
      %1993 = vmatpush1.msra.mxu0 0.0
      %1994 = vmatprep.mubr.f32.mxu0 0.0
      %1995 = vmatmul.mubr.f32.gmra.mrb[0].mxu0 %v1925
      %v1996 = vpop.f32.mrb[0].mxu0
      %v1997 = vadd.f32 %v1922, %v1996
      %v1998 = vpop.f32.mrb[0].mxu0
      %1999 = vmatprep.mubr.f32.mxu0 0.0
      %2000 = vmatmul.mubr.f32.gmra.mrb[0].mxu0 %v1928
      %v2001 = vpop.f32.mrb[0].mxu0
      %v2002 = vadd.f32 %v1922, %v2001
      %v2003 = vpop.f32.mrb[0].mxu0
      %2004 = vdwg.mxu0
      %v2005 = vmax.f32 %v1997, 0.0
      %v2006 = vmax.f32 %v2002, 0.0
      %v2007 = vld [vmem:[%s16] sm:$0xff]
      %v2008 = vld [vmem:[%s16 + $0x8] sm:$0xff]
      %v2009 = vld [vmem:[%s16 + $0x10] sm:$0xff]
      %v2010 = vld [vmem:[%s16 + $0x18] sm:$0xff]
      %v2011 = vld [vmem:[%s16 + $0x20] sm:$0xff]
      %v2012 = vld [vmem:[%s16 + $0x28] sm:$0xff]
      %v2013 = vld [vmem:[%s16 + $0x30] sm:$0xff]
      %v2014 = vld [vmem:[%s16 + $0x38] sm:$0xff]
      %v2015 = vld [vmem:[%s17] sm:$0x1]
      %v2017 = vlaneseq
      %v2018 = vshrl.u32 %v2017, 7
      %v2019 = vsub.s32 0, %v2018
      %v2020 = vrot.slane %v2015, %v2019
      %v2023 = vsel %vm1738, %v2005, 0
      %v2026 = vsel %vm1738, %v2006, 0
      %2028 = vmatprep.subr.mxu0 0.0
      %2029 = vmatpush1.msra.mxu0 %v2007
      %2030 = vmatprep.subr.mxu0 0.0
      %2031 = vmatpush1.msra.mxu0 %v2008
      %2032 = vmatprep.subr.mxu0 0.0
      %2033 = vmatpush1.msra.mxu0 %v2009
      %2034 = vmatprep.subr.mxu0 0.0
      %2035 = vmatpush1.msra.mxu0 %v2010
      %2036 = vmatprep.subr.mxu0 0.0
      %2037 = vmatpush1.msra.mxu0 %v2011
      %2038 = vmatprep.subr.mxu0 0.0
      %2039 = vmatpush1.msra.mxu0 %v2012
      %2040 = vmatprep.subr.mxu0 0.0
      %2041 = vmatpush1.msra.mxu0 %v2013
      %2042 = vmatprep.subr.mxu0 0.0
      %2043 = vmatpush1.msra.mxu0 %v2014
      %2044 = vmatprep.subr.mxu0 0.0
      %2045 = vmatpush1.msra.mxu0 0.0
      %2046 = vmatprep.subr.mxu0 0.0
      %2047 = vmatpush1.msra.mxu0 0.0
      %2048 = vmatprep.subr.mxu0 0.0
      %2049 = vmatpush1.msra.mxu0 0.0
      %2050 = vmatprep.subr.mxu0 0.0
      %2051 = vmatpush1.msra.mxu0 0.0
      %2052 = vmatprep.subr.mxu0 0.0
      %2053 = vmatpush1.msra.mxu0 0.0
      %2054 = vmatprep.subr.mxu0 0.0
      %2055 = vmatpush1.msra.mxu0 0.0
      %2056 = vmatprep.subr.mxu0 0.0
      %2057 = vmatpush1.msra.mxu0 0.0
      %2058 = vmatprep.subr.mxu0 0.0
      %2059 = vmatpush1.msra.mxu0 0.0
      %2060 = vmatprep.subr.mxu0 0.0
      %2061 = vmatpush1.msra.mxu0 0.0
      %2062 = vmatprep.subr.mxu0 0.0
      %2063 = vmatpush1.msra.mxu0 0.0
      %2064 = vmatprep.subr.mxu0 0.0
      %2065 = vmatpush1.msra.mxu0 0.0
      %2066 = vmatprep.subr.mxu0 0.0
      %2067 = vmatpush1.msra.mxu0 0.0
      %2068 = vmatprep.subr.mxu0 0.0
      %2069 = vmatpush1.msra.mxu0 0.0
      %2070 = vmatprep.subr.mxu0 0.0
      %2071 = vmatpush1.msra.mxu0 0.0
      %2072 = vmatprep.subr.mxu0 0.0
      %2073 = vmatpush1.msra.mxu0 0.0
      %2074 = vmatprep.subr.mxu0 0.0
      %2075 = vmatpush1.msra.mxu0 0.0
      %2076 = vmatprep.subr.mxu0 0.0
      %2077 = vmatpush1.msra.mxu0 0.0
      %2078 = vmatprep.subr.mxu0 0.0
      %2079 = vmatpush1.msra.mxu0 0.0
      %2080 = vmatprep.subr.mxu0 0.0
      %2081 = vmatpush1.msra.mxu0 0.0
      %2082 = vmatprep.subr.mxu0 0.0
      %2083 = vmatpush1.msra.mxu0 0.0
      %2084 = vmatprep.subr.mxu0 0.0
      %2085 = vmatpush1.msra.mxu0 0.0
      %2086 = vmatprep.subr.mxu0 0.0
      %2087 = vmatpush1.msra.mxu0 0.0
      %2088 = vmatprep.subr.mxu0 0.0
      %2089 = vmatpush1.msra.mxu0 0.0
      %2090 = vmatprep.subr.mxu0 0.0
      %2091 = vmatpush1.msra.mxu0 0.0
      %2092 = vmatprep.mubr.f32.mxu0 0.0
      %2093 = vmatmul.mubr.f32.gmra.mrb[0].mxu0 %v2023
      %v2094 = vpop.f32.mrb[0].mxu0
      %v2095 = vadd.f32 %v2020, %v2094
      %v2096 = vpop.f32.mrb[0].mxu0
      %2097 = vmatprep.mubr.f32.mxu0 0.0
      %2098 = vmatmul.mubr.f32.gmra.mrb[0].mxu0 %v2026
      %v2099 = vpop.f32.mrb[0].mxu0
      %v2100 = vadd.f32 %v2020, %v2099
      %v2101 = vpop.f32.mrb[0].mxu0
      %2102 = vdwg.mxu0
      %v2103 = vadd.f32 %v2095, %v1911
      %v2104 = vadd.f32 %v2100, %v1912
      %v2105 = vld [vmem:[%s18] sm:$0x1]
      %v2106 = vld [vmem:[%s19] sm:$0x1]
      %v2107 = vsel %vm682, %v2103, 0.0
      %2108 = vadd.xlane.f32.xlu0 %v2107
      %v2109 = vpop.xlane.xlu0 %2108
      %v2110 = vsel %vm682, %v2104, 0.0
      %2111 = vadd.xlane.f32.xlu0 %v2110
      %v2112 = vpop.xlane.xlu0 %2111
      %v2113 = vmul.f32 %v2109, %v1830
      %v2114 = vmul.f32 %v2112, %v1830
      %v2115 = vsub.f32 %v2103, %v2113
      %v2116 = vsub.f32 %v2104, %v2114
      %v2117 = vmul.f32 %v2115, %v2115
      %v2118 = vmul.f32 %v2116, %v2116
      %v2119 = vsel %vm682, %v2117, 0.0
      %2120 = vadd.xlane.f32.xlu0 %v2119
      %v2121 = vpop.xlane.xlu0 %2120
      %v2122 = vsel %vm682, %v2118, 0.0
      %2123 = vadd.xlane.f32.xlu0 %v2122
      %v2124 = vpop.xlane.xlu0 %2123
      %v2125 = vmul.f32 %v2121, %v1830
      %v2126 = vmul.f32 %v2124, %v1830
      %v2127 = vadd.f32 %v2125, 1e-05
      %v2128 = vadd.f32 %v2126, 1e-05
      %v2129 = vrsqrt.pop %v2127
      %v2130 = vrsqrt.pop %v2128
      %v2131 = vmul.f32 %v2115, %v2129
      %v2132 = vmul.f32 %v2116, %v2130
      %v2134 = vlaneseq
      %v2135 = vshrl.u32 %v2134, 7
      %v2136 = vsub.s32 0, %v2135
      %v2137 = vrot.slane %v2105, %v2136
      %v2139 = vmul.f32 %v2131, %v2137
      %v2140 = vmul.f32 %v2132, %v2137
      %v2142 = vlaneseq
      %v2143 = vshrl.u32 %v2142, 7
      %v2144 = vsub.s32 0, %v2143
      %v2145 = vrot.slane %v2106, %v2144
      %v2147 = vadd.f32 %v2139, %v2145
      %v2148 = vadd.f32 %v2140, %v2145
      %2149 = vst.msk [vmem:[%s663] sm:$0xff] %vm682, %v2147
      %2150 = vst.msk [vmem:[%s663 + $0x8] sm:$0xff] %vm682, %v2148
      %p2151 = scmp.lt.s32.totalorder %s31, 1
      %s2152 = scalar_select %p2151, %s31, 1
      %s2153 = smul.addr %s2152, 2
      %s2154 = smul.addr %s2153, 8
      %s2155 = scalar_lea.vmem %s20, %s2154
      // Predicated region
      $region101: #{forward_pallas.6} parent=99 // pred_check
        %p2156 = pneg %p484
      $region102: #{forward_pallas.6} parent=99 // pred_check_branch
        %2158 = sbr.rel (%p2156) target = $region104
      $region103: #{forward_pallas.6} parent=99 // pred_region
        _
      $region104: #{forward_pallas.6} parent=99 // pred_fallthru
        _
    $region100: #{forward_pallas.6} parent=5 // pred_fallthru
      _
    %p2159 = scmp.le.s32.totalorder 2, %s26
    // Predicated region
    $region105: #{forward_pallas.6} parent=5 // pred_check
      %p2160 = pneg %p2159
    $region106: #{forward_pallas.6} parent=5 // pred_check_branch
      %2162 = sbr.rel (%p2160) target = $region108
    $region107: #{forward_pallas.6} parent=5 // pred_region
      %s2163 = ssub.s32 %s26, 2
      // Predicated region
      $region109: #{forward_pallas.6} parent=107 // pred_check
        %p2164 = pneg %p490
      $region110: #{forward_pallas.6} parent=107 // pred_check_branch
        %2166 = sbr.rel (%p2164) target = $region112
      $region111: #{forward_pallas.6} parent=107 // pred_region
        %p2167 = scmp.lt.s32.totalorder %s32, 1
        %s2168 = scalar_select %p2167, %s32, 1
        %s2169 = smul.addr %s2168, 2
        %s2170 = smul.addr %s2169, 8
        %s2171 = scalar_lea.vmem %s20, %s2170
      $region112: #{forward_pallas.6} parent=107 // pred_fallthru
        _
    $region108: #{forward_pallas.6} parent=5 // pred_fallthru
      _
  $region6: #{forward_pallas.6} parent=0 // loop_footer
    %s30 = sadd.s32 1, %s26
  $region7: #{forward_pallas.6} parent=0 // loop_footer_branch
    %25 = sbr.rel target = $region3
  $region8: #{forward_pallas.6} parent=0 // loop_exit
    _

// kernel: forward_pallas.7
$region0: #{forward_pallas.7}
  #allocation0 [shape = 'u32[]', space=smem, size = 0x4, offset = 0x4, fixed_abs, tag = 'smem constant byte address 0x4 - core index']
  #allocation1 [shape = 'u32[144,128]{1,0:T(1,128)}', space=vmem, size = 0x12000, scoped, tag = 'internal scratch']
  %s0 = inlined_call_operand.vmem [shape: f32[2,16,32], index: 0, kind: input, shape index: {}]
  %s1 = inlined_call_operand.vmem [shape: f32[2,16,32], index: 1, kind: input, shape index: {}]
  %s2 = inlined_call_operand.vmem [shape: f32[4,16,16], index: 2, kind: input, shape index: {}]
  %s3 = inlined_call_operand.vmem [shape: f32[2,1,16], index: 3, kind: input, shape index: {}]
  %s4 = inlined_call_operand.vmem [shape: f32[32,128], index: 4, kind: input, shape index: {}]
  %s5 = inlined_call_operand.vmem [shape: f32[1,128], index: 5, kind: input, shape index: {}]
  %s6 = inlined_call_operand.vmem [shape: f32[32,64], index: 6, kind: input, shape index: {}]
  %s7 = inlined_call_operand.vmem [shape: f32[1,64], index: 7, kind: input, shape index: {}]
  %s8 = inlined_call_operand.vmem [shape: f32[64,32], index: 8, kind: input, shape index: {}]
  %s9 = inlined_call_operand.vmem [shape: f32[1,32], index: 9, kind: input, shape index: {}]
  %s10 = inlined_call_operand.vmem [shape: f32[1,32], index: 10, kind: input, shape index: {}]
  %s11 = inlined_call_operand.vmem [shape: f32[1,32], index: 11, kind: input, shape index: {}]
  %s12 = inlined_call_operand.vmem [shape: f32[1,32], index: 12, kind: input, shape index: {}]
  %s13 = inlined_call_operand.vmem [shape: f32[1,32], index: 13, kind: input, shape index: {}]
  %s14 = inlined_call_operand.vmem [shape: f32[32,64], index: 14, kind: input, shape index: {}]
  %s15 = inlined_call_operand.vmem [shape: f32[1,64], index: 15, kind: input, shape index: {}]
  %s16 = inlined_call_operand.vmem [shape: f32[64,32], index: 16, kind: input, shape index: {}]
  %s17 = inlined_call_operand.vmem [shape: f32[1,32], index: 17, kind: input, shape index: {}]
  %s18 = inlined_call_operand.vmem [shape: f32[1,32], index: 18, kind: input, shape index: {}]
  %s19 = inlined_call_operand.vmem [shape: f32[1,32], index: 19, kind: input, shape index: {}]
  %s20 = inlined_call_operand.hbm [shape: f32[2,16,32], index: 20, kind: output, shape index: {}]
  %s21 = sld [smem:[#allocation0]]
  $region113: #{forward_pallas.7} parent=0
    _
  %s23 = ssub.s32 1, %s21
  %s24 = scalar_select 0, %s23, %s21
  $region1: #{forward_pallas.7} parent=0
    #allocation2 [shape = 'u8[16384]{0}', space=vmem, size = 0x4000, scoped, tag = 'output window, operand 0']
    #allocation3 [shape = 's32[2]{0}', space=sflag, size = 0x8, scoped, tag = 'scoped memory for forward_pallas.7']
    %25 = vsyncpa [#allocation3], 0
    %s26 = scalar_lea.sflag [#allocation3], 1
    %27 = vsyncpa %s26, 0
    loop: start=0, step=1, limit=4
    $region2: #{forward_pallas.7} parent=1 // loop_pre_header
      _
    $region3: #{forward_pallas.7} parent=1 // loop_header
      %s29 = sphi 0, %s33
      %p30 = scmp.ge.s32.totalorder %s29, 4
      %s39 = sphi 0, %s41
      %s42 = sphi 0, %s39
      %s43 = sphi 0, %s42
      %s59 = sphi 0, %s43
      %s65 = sphi 0, %s67
      %s68 = sphi 0, %s65
      %s69 = sphi 0, %s68
      %s85 = sphi 0, %s69
      %s89 = sphi 0, %s89
      %s91 = sphi 0, %s89
      %s92 = sphi 0, %s91
      %s106 = sphi 0, %s92
      %s112 = sphi 0, %s114
      %s115 = sphi 0, %s112
      %s116 = sphi 0, %s115
      %s132 = sphi 0, %s116
      %s136 = sphi 0, %s136
      %s138 = sphi 0, %s136
      %s139 = sphi 0, %s138
      %s153 = sphi 0, %s139
      %s157 = sphi 0, %s157
      %s159 = sphi 0, %s157
      %s160 = sphi 0, %s159
      %s174 = sphi 0, %s160
      %s178 = sphi 0, %s178
      %s180 = sphi 0, %s178
      %s181 = sphi 0, %s180
      %s195 = sphi 0, %s181
      %s199 = sphi 0, %s199
      %s201 = sphi 0, %s199
      %s202 = sphi 0, %s201
      %s216 = sphi 0, %s202
      %s220 = sphi 0, %s220
      %s222 = sphi 0, %s220
      %s223 = sphi 0, %s222
      %s237 = sphi 0, %s223
      %s241 = sphi 0, %s241
      %s243 = sphi 0, %s241
      %s244 = sphi 0, %s243
      %s258 = sphi 0, %s244
      %s262 = sphi 0, %s262
      %s264 = sphi 0, %s262
      %s265 = sphi 0, %s264
      %s279 = sphi 0, %s265
      %s283 = sphi 0, %s283
      %s285 = sphi 0, %s283
      %s286 = sphi 0, %s285
      %s300 = sphi 0, %s286
      %s304 = sphi 0, %s304
      %s306 = sphi 0, %s304
      %s307 = sphi 0, %s306
      %s321 = sphi 0, %s307
      %s325 = sphi 0, %s325
      %s327 = sphi 0, %s325
      %s328 = sphi 0, %s327
      %s342 = sphi 0, %s328
      %s346 = sphi 0, %s346
      %s348 = sphi 0, %s346
      %s349 = sphi 0, %s348
      %s363 = sphi 0, %s349
      %s367 = sphi 0, %s367
      %s369 = sphi 0, %s367
      %s370 = sphi 0, %s369
      %s384 = sphi 0, %s370
      %s388 = sphi 0, %s388
      %s390 = sphi 0, %s388
      %s391 = sphi 0, %s390
      %s405 = sphi 0, %s391
      %s409 = sphi 0, %s409
      %s411 = sphi 0, %s409
      %s412 = sphi 0, %s411
      %s426 = sphi 0, %s412
      %s430 = sphi 0, %s430
      %s432 = sphi 0, %s430
      %s433 = sphi 0, %s432
      %s447 = sphi 0, %s433
      %s451 = sphi 0, %s451
      %s453 = sphi 0, %s451
      %s454 = sphi 0, %s453
      %s468 = sphi 0, %s454
      %s474 = sphi 0, %s476
      %s477 = sphi 0, %s474
      %s478 = sphi 0, %s477
      %s494 = sphi 0, %s478
    $region4: #{forward_pallas.7} parent=1 // loop_header_branch
      %32 = sbr.rel (%p30) target = $region8
    $region5: #{forward_pallas.7} parent=1 // loop_body
      %s34 = ssub.s32 %s29, 1
      %s35 = ssub.s32 %s29, 2
      %s36 = sadd.s32 %s29, 1
      %s37 = ssub.s32 %s29, %s36
      %p38 = scmp.eq.s32.totalorder %s37, 0
      %s40 = sadd.s32 %s39, 1
      %s41 = scalar_select %p38, %s39, %s40
      %p44 = pneg %p38
      %p45 = scmp.eq.s32.totalorder %s29, 1
      %p46 = por %p44, %p45
      %p47 = scmp.ne.s32.totalorder %s39, %s42
      %p48 = scmp.eq.s32.totalorder %s29, 0
      %p49 = por %p47, %p48
      %p50 = scmp.ne.s32.totalorder %s39, %s42
      %p51 = scmp.eq.s32.totalorder %s34, 1
      %p52 = por %p50, %p51
      %p53 = scmp.ne.s32.totalorder %s42, %s43
      %p54 = scmp.eq.s32.totalorder %s34, 0
      %p55 = por %p53, %p54
      %p56 = scmp.ne.s32.totalorder %s42, %s43
      %p57 = scmp.eq.s32.totalorder %s35, 1
      %p58 = por %p56, %p57
      %p60 = scmp.ne.s32.totalorder %s43, %s59
      %p61 = scmp.eq.s32.totalorder %s35, 0
      %p62 = por %p60, %p61
      %s63 = ssub.s32 %s29, %s36
      %p64 = scmp.eq.s32.totalorder %s63, 0
      %s66 = sadd.s32 %s65, 1
      %s67 = scalar_select %p64, %s65, %s66
      %p70 = pneg %p64
      %p71 = scmp.eq.s32.totalorder %s29, 1
      %p72 = por %p70, %p71
      %p73 = scmp.ne.s32.totalorder %s65, %s68
      %p74 = scmp.eq.s32.totalorder %s29, 0
      %p75 = por %p73, %p74
      %p76 = scmp.ne.s32.totalorder %s65, %s68
      %p77 = scmp.eq.s32.totalorder %s34, 1
      %p78 = por %p76, %p77
      %p79 = scmp.ne.s32.totalorder %s68, %s69
      %p80 = scmp.eq.s32.totalorder %s34, 0
      %p81 = por %p79, %p80
      %p82 = scmp.ne.s32.totalorder %s68, %s69
      %p83 = scmp.eq.s32.totalorder %s35, 1
      %p84 = por %p82, %p83
      %p86 = scmp.ne.s32.totalorder %s69, %s85
      %p87 = scmp.eq.s32.totalorder %s35, 0
      %p88 = por %p86, %p87
      %s90 = sadd.s32 %s89, 1
      %p93 = scmp.eq.s32.totalorder %s29, 1
      %p94 = scmp.ne.s32.totalorder %s89, %s91
      %p95 = scmp.eq.s32.totalorder %s29, 0
      %p96 = por %p94, %p95
      %p97 = scmp.ne.s32.totalorder %s89, %s91
      %p98 = scmp.eq.s32.totalorder %s34, 1
      %p99 = por %p97, %p98
      %p100 = scmp.ne.s32.totalorder %s91, %s92
      %p101 = scmp.eq.s32.totalorder %s34, 0
      %p102 = por %p100, %p101
      %p103 = scmp.ne.s32.totalorder %s91, %s92
      %p104 = scmp.eq.s32.totalorder %s35, 1
      %p105 = por %p103, %p104
      %p107 = scmp.ne.s32.totalorder %s92, %s106
      %p108 = scmp.eq.s32.totalorder %s35, 0
      %p109 = por %p107, %p108
      %s110 = ssub.s32 %s29, %s36
      %p111 = scmp.eq.s32.totalorder %s110, 0
      %s113 = sadd.s32 %s112, 1
      %s114 = scalar_select %p111, %s112, %s113
      %p117 = pneg %p111
      %p118 = scmp.eq.s32.totalorder %s29, 1
      %p119 = por %p117, %p118
      %p120 = scmp.ne.s32.totalorder %s112, %s115
      %p121 = scmp.eq.s32.totalorder %s29, 0
      %p122 = por %p120, %p121
      %p123 = scmp.ne.s32.totalorder %s112, %s115
      %p124 = scmp.eq.s32.totalorder %s34, 1
      %p125 = por %p123, %p124
      %p126 = scmp.ne.s32.totalorder %s115, %s116
      %p127 = scmp.eq.s32.totalorder %s34, 0
      %p128 = por %p126, %p127
      %p129 = scmp.ne.s32.totalorder %s115, %s116
      %p130 = scmp.eq.s32.totalorder %s35, 1
      %p131 = por %p129, %p130
      %p133 = scmp.ne.s32.totalorder %s116, %s132
      %p134 = scmp.eq.s32.totalorder %s35, 0
      %p135 = por %p133, %p134
      %s137 = sadd.s32 %s136, 1
      %p140 = scmp.eq.s32.totalorder %s29, 1
      %p141 = scmp.ne.s32.totalorder %s136, %s138
      %p142 = scmp.eq.s32.totalorder %s29, 0
      %p143 = por %p141, %p142
      %p144 = scmp.ne.s32.totalorder %s136, %s138
      %p145 = scmp.eq.s32.totalorder %s34, 1
      %p146 = por %p144, %p145
      %p147 = scmp.ne.s32.totalorder %s138, %s139
      %p148 = scmp.eq.s32.totalorder %s34, 0
      %p149 = por %p147, %p148
      %p150 = scmp.ne.s32.totalorder %s138, %s139
      %p151 = scmp.eq.s32.totalorder %s35, 1
      %p152 = por %p150, %p151
      %p154 = scmp.ne.s32.totalorder %s139, %s153
      %p155 = scmp.eq.s32.totalorder %s35, 0
      %p156 = por %p154, %p155
      %s158 = sadd.s32 %s157, 1
      %p161 = scmp.eq.s32.totalorder %s29, 1
      %p162 = scmp.ne.s32.totalorder %s157, %s159
      %p163 = scmp.eq.s32.totalorder %s29, 0
      %p164 = por %p162, %p163
      %p165 = scmp.ne.s32.totalorder %s157, %s159
      %p166 = scmp.eq.s32.totalorder %s34, 1
      %p167 = por %p165, %p166
      %p168 = scmp.ne.s32.totalorder %s159, %s160
      %p169 = scmp.eq.s32.totalorder %s34, 0
      %p170 = por %p168, %p169
      %p171 = scmp.ne.s32.totalorder %s159, %s160
      %p172 = scmp.eq.s32.totalorder %s35, 1
      %p173 = por %p171, %p172
      %p175 = scmp.ne.s32.totalorder %s160, %s174
      %p176 = scmp.eq.s32.totalorder %s35, 0
      %p177 = por %p175, %p176
      %s179 = sadd.s32 %s178, 1
      %p182 = scmp.eq.s32.totalorder %s29, 1
      %p183 = scmp.ne.s32.totalorder %s178, %s180
      %p184 = scmp.eq.s32.totalorder %s29, 0
      %p185 = por %p183, %p184
      %p186 = scmp.ne.s32.totalorder %s178, %s180
      %p187 = scmp.eq.s32.totalorder %s34, 1
      %p188 = por %p186, %p187
      %p189 = scmp.ne.s32.totalorder %s180, %s181
      %p190 = scmp.eq.s32.totalorder %s34, 0
      %p191 = por %p189, %p190
      %p192 = scmp.ne.s32.totalorder %s180, %s181
      %p193 = scmp.eq.s32.totalorder %s35, 1
      %p194 = por %p192, %p193
      %p196 = scmp.ne.s32.totalorder %s181, %s195
      %p197 = scmp.eq.s32.totalorder %s35, 0
      %p198 = por %p196, %p197
      %s200 = sadd.s32 %s199, 1
      %p203 = scmp.eq.s32.totalorder %s29, 1
      %p204 = scmp.ne.s32.totalorder %s199, %s201
      %p205 = scmp.eq.s32.totalorder %s29, 0
      %p206 = por %p204, %p205
      %p207 = scmp.ne.s32.totalorder %s199, %s201
      %p208 = scmp.eq.s32.totalorder %s34, 1
      %p209 = por %p207, %p208
      %p210 = scmp.ne.s32.totalorder %s201, %s202
      %p211 = scmp.eq.s32.totalorder %s34, 0
      %p212 = por %p210, %p211
      %p213 = scmp.ne.s32.totalorder %s201, %s202
      %p214 = scmp.eq.s32.totalorder %s35, 1
      %p215 = por %p213, %p214
      %p217 = scmp.ne.s32.totalorder %s202, %s216
      %p218 = scmp.eq.s32.totalorder %s35, 0
      %p219 = por %p217, %p218
      %s221 = sadd.s32 %s220, 1
      %p224 = scmp.eq.s32.totalorder %s29, 1
      %p225 = scmp.ne.s32.totalorder %s220, %s222
      %p226 = scmp.eq.s32.totalorder %s29, 0
      %p227 = por %p225, %p226
      %p228 = scmp.ne.s32.totalorder %s220, %s222
      %p229 = scmp.eq.s32.totalorder %s34, 1
      %p230 = por %p228, %p229
      %p231 = scmp.ne.s32.totalorder %s222, %s223
      %p232 = scmp.eq.s32.totalorder %s34, 0
      %p233 = por %p231, %p232
      %p234 = scmp.ne.s32.totalorder %s222, %s223
      %p235 = scmp.eq.s32.totalorder %s35, 1
      %p236 = por %p234, %p235
      %p238 = scmp.ne.s32.totalorder %s223, %s237
      %p239 = scmp.eq.s32.totalorder %s35, 0
      %p240 = por %p238, %p239
      %s242 = sadd.s32 %s241, 1
      %p245 = scmp.eq.s32.totalorder %s29, 1
      %p246 = scmp.ne.s32.totalorder %s241, %s243
      %p247 = scmp.eq.s32.totalorder %s29, 0
      %p248 = por %p246, %p247
      %p249 = scmp.ne.s32.totalorder %s241, %s243
      %p250 = scmp.eq.s32.totalorder %s34, 1
      %p251 = por %p249, %p250
      %p252 = scmp.ne.s32.totalorder %s243, %s244
      %p253 = scmp.eq.s32.totalorder %s34, 0
      %p254 = por %p252, %p253
      %p255 = scmp.ne.s32.totalorder %s243, %s244
      %p256 = scmp.eq.s32.totalorder %s35, 1
      %p257 = por %p255, %p256
      %p259 = scmp.ne.s32.totalorder %s244, %s258
      %p260 = scmp.eq.s32.totalorder %s35, 0
      %p261 = por %p259, %p260
      %s263 = sadd.s32 %s262, 1
      %p266 = scmp.eq.s32.totalorder %s29, 1
      %p267 = scmp.ne.s32.totalorder %s262, %s264
      %p268 = scmp.eq.s32.totalorder %s29, 0
      %p269 = por %p267, %p268
      %p270 = scmp.ne.s32.totalorder %s262, %s264
      %p271 = scmp.eq.s32.totalorder %s34, 1
      %p272 = por %p270, %p271
      %p273 = scmp.ne.s32.totalorder %s264, %s265
      %p274 = scmp.eq.s32.totalorder %s34, 0
      %p275 = por %p273, %p274
      %p276 = scmp.ne.s32.totalorder %s264, %s265
      %p277 = scmp.eq.s32.totalorder %s35, 1
      %p278 = por %p276, %p277
      %p280 = scmp.ne.s32.totalorder %s265, %s279
      %p281 = scmp.eq.s32.totalorder %s35, 0
      %p282 = por %p280, %p281
      %s284 = sadd.s32 %s283, 1
      %p287 = scmp.eq.s32.totalorder %s29, 1
      %p288 = scmp.ne.s32.totalorder %s283, %s285
      %p289 = scmp.eq.s32.totalorder %s29, 0
      %p290 = por %p288, %p289
      %p291 = scmp.ne.s32.totalorder %s283, %s285
      %p292 = scmp.eq.s32.totalorder %s34, 1
      %p293 = por %p291, %p292
      %p294 = scmp.ne.s32.totalorder %s285, %s286
      %p295 = scmp.eq.s32.totalorder %s34, 0
      %p296 = por %p294, %p295
      %p297 = scmp.ne.s32.totalorder %s285, %s286
      %p298 = scmp.eq.s32.totalorder %s35, 1
      %p299 = por %p297, %p298
      %p301 = scmp.ne.s32.totalorder %s286, %s300
      %p302 = scmp.eq.s32.totalorder %s35, 0
      %p303 = por %p301, %p302
      %s305 = sadd.s32 %s304, 1
      %p308 = scmp.eq.s32.totalorder %s29, 1
      %p309 = scmp.ne.s32.totalorder %s304, %s306
      %p310 = scmp.eq.s32.totalorder %s29, 0
      %p311 = por %p309, %p310
      %p312 = scmp.ne.s32.totalorder %s304, %s306
      %p313 = scmp.eq.s32.totalorder %s34, 1
      %p314 = por %p312, %p313
      %p315 = scmp.ne.s32.totalorder %s306, %s307
      %p316 = scmp.eq.s32.totalorder %s34, 0
      %p317 = por %p315, %p316
      %p318 = scmp.ne.s32.totalorder %s306, %s307
      %p319 = scmp.eq.s32.totalorder %s35, 1
      %p320 = por %p318, %p319
      %p322 = scmp.ne.s32.totalorder %s307, %s321
      %p323 = scmp.eq.s32.totalorder %s35, 0
      %p324 = por %p322, %p323
      %s326 = sadd.s32 %s325, 1
      %p329 = scmp.eq.s32.totalorder %s29, 1
      %p330 = scmp.ne.s32.totalorder %s325, %s327
      %p331 = scmp.eq.s32.totalorder %s29, 0
      %p332 = por %p330, %p331
      %p333 = scmp.ne.s32.totalorder %s325, %s327
      %p334 = scmp.eq.s32.totalorder %s34, 1
      %p335 = por %p333, %p334
      %p336 = scmp.ne.s32.totalorder %s327, %s328
      %p337 = scmp.eq.s32.totalorder %s34, 0
      %p338 = por %p336, %p337
      %p339 = scmp.ne.s32.totalorder %s327, %s328
      %p340 = scmp.eq.s32.totalorder %s35, 1
      %p341 = por %p339, %p340
      %p343 = scmp.ne.s32.totalorder %s328, %s342
      %p344 = scmp.eq.s32.totalorder %s35, 0
      %p345 = por %p343, %p344
      %s347 = sadd.s32 %s346, 1
      %p350 = scmp.eq.s32.totalorder %s29, 1
      %p351 = scmp.ne.s32.totalorder %s346, %s348
      %p352 = scmp.eq.s32.totalorder %s29, 0
      %p353 = por %p351, %p352
      %p354 = scmp.ne.s32.totalorder %s346, %s348
      %p355 = scmp.eq.s32.totalorder %s34, 1
      %p356 = por %p354, %p355
      %p357 = scmp.ne.s32.totalorder %s348, %s349
      %p358 = scmp.eq.s32.totalorder %s34, 0
      %p359 = por %p357, %p358
      %p360 = scmp.ne.s32.totalorder %s348, %s349
      %p361 = scmp.eq.s32.totalorder %s35, 1
      %p362 = por %p360, %p361
      %p364 = scmp.ne.s32.totalorder %s349, %s363
      %p365 = scmp.eq.s32.totalorder %s35, 0
      %p366 = por %p364, %p365
      %s368 = sadd.s32 %s367, 1
      %p371 = scmp.eq.s32.totalorder %s29, 1
      %p372 = scmp.ne.s32.totalorder %s367, %s369
      %p373 = scmp.eq.s32.totalorder %s29, 0
      %p374 = por %p372, %p373
      %p375 = scmp.ne.s32.totalorder %s367, %s369
      %p376 = scmp.eq.s32.totalorder %s34, 1
      %p377 = por %p375, %p376
      %p378 = scmp.ne.s32.totalorder %s369, %s370
      %p379 = scmp.eq.s32.totalorder %s34, 0
      %p380 = por %p378, %p379
      %p381 = scmp.ne.s32.totalorder %s369, %s370
      %p382 = scmp.eq.s32.totalorder %s35, 1
      %p383 = por %p381, %p382
      %p385 = scmp.ne.s32.totalorder %s370, %s384
      %p386 = scmp.eq.s32.totalorder %s35, 0
      %p387 = por %p385, %p386
      %s389 = sadd.s32 %s388, 1
      %p392 = scmp.eq.s32.totalorder %s29, 1
      %p393 = scmp.ne.s32.totalorder %s388, %s390
      %p394 = scmp.eq.s32.totalorder %s29, 0
      %p395 = por %p393, %p394
      %p396 = scmp.ne.s32.totalorder %s388, %s390
      %p397 = scmp.eq.s32.totalorder %s34, 1
      %p398 = por %p396, %p397
      %p399 = scmp.ne.s32.totalorder %s390, %s391
      %p400 = scmp.eq.s32.totalorder %s34, 0
      %p401 = por %p399, %p400
      %p402 = scmp.ne.s32.totalorder %s390, %s391
      %p403 = scmp.eq.s32.totalorder %s35, 1
      %p404 = por %p402, %p403
      %p406 = scmp.ne.s32.totalorder %s391, %s405
      %p407 = scmp.eq.s32.totalorder %s35, 0
      %p408 = por %p406, %p407
      %s410 = sadd.s32 %s409, 1
      %p413 = scmp.eq.s32.totalorder %s29, 1
      %p414 = scmp.ne.s32.totalorder %s409, %s411
      %p415 = scmp.eq.s32.totalorder %s29, 0
      %p416 = por %p414, %p415
      %p417 = scmp.ne.s32.totalorder %s409, %s411
      %p418 = scmp.eq.s32.totalorder %s34, 1
      %p419 = por %p417, %p418
      %p420 = scmp.ne.s32.totalorder %s411, %s412
      %p421 = scmp.eq.s32.totalorder %s34, 0
      %p422 = por %p420, %p421
      %p423 = scmp.ne.s32.totalorder %s411, %s412
      %p424 = scmp.eq.s32.totalorder %s35, 1
      %p425 = por %p423, %p424
      %p427 = scmp.ne.s32.totalorder %s412, %s426
      %p428 = scmp.eq.s32.totalorder %s35, 0
      %p429 = por %p427, %p428
      %s431 = sadd.s32 %s430, 1
      %p434 = scmp.eq.s32.totalorder %s29, 1
      %p435 = scmp.ne.s32.totalorder %s430, %s432
      %p436 = scmp.eq.s32.totalorder %s29, 0
      %p437 = por %p435, %p436
      %p438 = scmp.ne.s32.totalorder %s430, %s432
      %p439 = scmp.eq.s32.totalorder %s34, 1
      %p440 = por %p438, %p439
      %p441 = scmp.ne.s32.totalorder %s432, %s433
      %p442 = scmp.eq.s32.totalorder %s34, 0
      %p443 = por %p441, %p442
      %p444 = scmp.ne.s32.totalorder %s432, %s433
      %p445 = scmp.eq.s32.totalorder %s35, 1
      %p446 = por %p444, %p445
      %p448 = scmp.ne.s32.totalorder %s433, %s447
      %p449 = scmp.eq.s32.totalorder %s35, 0
      %p450 = por %p448, %p449
      %s452 = sadd.s32 %s451, 1
      %p455 = scmp.eq.s32.totalorder %s29, 1
      %p456 = scmp.ne.s32.totalorder %s451, %s453
      %p457 = scmp.eq.s32.totalorder %s29, 0
      %p458 = por %p456, %p457
      %p459 = scmp.ne.s32.totalorder %s451, %s453
      %p460 = scmp.eq.s32.totalorder %s34, 1
      %p461 = por %p459, %p460
      %p462 = scmp.ne.s32.totalorder %s453, %s454
      %p463 = scmp.eq.s32.totalorder %s34, 0
      %p464 = por %p462, %p463
      %p465 = scmp.ne.s32.totalorder %s453, %s454
      %p466 = scmp.eq.s32.totalorder %s35, 1
      %p467 = por %p465, %p466
      %p469 = scmp.ne.s32.totalorder %s454, %s468
      %p470 = scmp.eq.s32.totalorder %s35, 0
      %p471 = por %p469, %p470
      %s472 = ssub.s32 %s29, %s36
      %p473 = scmp.eq.s32.totalorder %s472, 0
      %s475 = sadd.s32 %s474, 1
      %s476 = scalar_select %p473, %s474, %s475
      %p479 = pneg %p473
      %p480 = scmp.eq.s32.totalorder %s29, 1
      %p481 = por %p479, %p480
      %p482 = scmp.ne.s32.totalorder %s474, %s477
      %p483 = scmp.eq.s32.totalorder %s29, 0
      %p484 = por %p482, %p483
      %p485 = scmp.ne.s32.totalorder %s474, %s477
      %p486 = scmp.eq.s32.totalorder %s34, 1
      %p487 = por %p485, %p486
      %p488 = scmp.ne.s32.totalorder %s477, %s478
      %p489 = scmp.eq.s32.totalorder %s34, 0
      %p490 = por %p488, %p489
      %p491 = scmp.ne.s32.totalorder %s477, %s478
      %p492 = scmp.eq.s32.totalorder %s35, 1
      %p493 = por %p491, %p492
      %p495 = scmp.ne.s32.totalorder %s478, %s494
      %p496 = scmp.eq.s32.totalorder %s35, 0
      %p497 = por %p495, %p496
      %p498 = scmp.le.s32.totalorder 1, %s29
      %p499 = scmp.lt.s32.totalorder %s29, 3
      %p500 = pnand %p498, %p499
      %p501 = pneg %p500
      // Predicated region
      $region9: #{forward_pallas.7} parent=5 // pred_check
        _
      $region10: #{forward_pallas.7} parent=5 // pred_check_branch
        %503 = sbr.rel (%p500) target = $region12
      $region11: #{forward_pallas.7} parent=5 // pred_region
        %s504 = ssub.s32 %s29, 1
        // Predicated region
        $region13: #{forward_pallas.7} parent=11 // pred_check
          %p505 = pneg %p102
        $region14: #{forward_pallas.7} parent=11 // pred_check_branch
          %507 = sbr.rel (%p505) target = $region16
        $region15: #{forward_pallas.7} parent=11 // pred_region
          _
        $region16: #{forward_pallas.7} parent=11 // pred_fallthru
          _
        // Predicated region
        $region17: #{forward_pallas.7} parent=11 // pred_check
          %p508 = pneg %p149
        $region18: #{forward_pallas.7} parent=11 // pred_check_branch
          %510 = sbr.rel (%p508) target = $region20
        $region19: #{forward_pallas.7} parent=11 // pred_region
          _
        $region20: #{forward_pallas.7} parent=11 // pred_fallthru
          _
        // Predicated region
        $region21: #{forward_pallas.7} parent=11 // pred_check
          %p511 = pneg %p170
        $region22: #{forward_pallas.7} parent=11 // pred_check_branch
          %513 = sbr.rel (%p511) target = $region24
        $region23: #{forward_pallas.7} parent=11 // pred_region
          _
        $region24: #{forward_pallas.7} parent=11 // pred_fallthru
          _
        // Predicated region
        $region25: #{forward_pallas.7} parent=11 // pred_check
          %p514 = pneg %p191
        $region26: #{forward_pallas.7} parent=11 // pred_check_branch
          %516 = sbr.rel (%p514) target = $region28
        $region27: #{forward_pallas.7} parent=11 // pred_region
          _
        $region28: #{forward_pallas.7} parent=11 // pred_fallthru
          _
        // Predicated region
        $region29: #{forward_pallas.7} parent=11 // pred_check
          %p517 = pneg %p212
        $region30: #{forward_pallas.7} parent=11 // pred_check_branch
          %519 = sbr.rel (%p517) target = $region32
        $region31: #{forward_pallas.7} parent=11 // pred_region
          _
        $region32: #{forward_pallas.7} parent=11 // pred_fallthru
          _
        // Predicated region
        $region33: #{forward_pallas.7} parent=11 // pred_check
          %p520 = pneg %p233
        $region34: #{forward_pallas.7} parent=11 // pred_check_branch
          %522 = sbr.rel (%p520) target = $region36
        $region35: #{forward_pallas.7} parent=11 // pred_region
          _
        $region36: #{forward_pallas.7} parent=11 // pred_fallthru
          _
        // Predicated region
        $region37: #{forward_pallas.7} parent=11 // pred_check
          %p523 = pneg %p254
        $region38: #{forward_pallas.7} parent=11 // pred_check_branch
          %525 = sbr.rel (%p523) target = $region40
        $region39: #{forward_pallas.7} parent=11 // pred_region
          _
        $region40: #{forward_pallas.7} parent=11 // pred_fallthru
          _
        // Predicated region
        $region41: #{forward_pallas.7} parent=11 // pred_check
          %p526 = pneg %p275
        $region42: #{forward_pallas.7} parent=11 // pred_check_branch
          %528 = sbr.rel (%p526) target = $region44
        $region43: #{forward_pallas.7} parent=11 // pred_region
          _
        $region44: #{forward_pallas.7} parent=11 // pred_fallthru
          _
        // Predicated region
        $region45: #{forward_pallas.7} parent=11 // pred_check
          %p529 = pneg %p296
        $region46: #{forward_pallas.7} parent=11 // pred_check_branch
          %531 = sbr.rel (%p529) target = $region48
        $region47: #{forward_pallas.7} parent=11 // pred_region
          _
        $region48: #{forward_pallas.7} parent=11 // pred_fallthru
          _
        // Predicated region
        $region49: #{forward_pallas.7} parent=11 // pred_check
          %p532 = pneg %p317
        $region50: #{forward_pallas.7} parent=11 // pred_check_branch
          %534 = sbr.rel (%p532) target = $region52
        $region51: #{forward_pallas.7} parent=11 // pred_region
          _
        $region52: #{forward_pallas.7} parent=11 // pred_fallthru
          _
        // Predicated region
        $region53: #{forward_pallas.7} parent=11 // pred_check
          %p535 = pneg %p338
        $region54: #{forward_pallas.7} parent=11 // pred_check_branch
          %537 = sbr.rel (%p535) target = $region56
        $region55: #{forward_pallas.7} parent=11 // pred_region
          _
        $region56: #{forward_pallas.7} parent=11 // pred_fallthru
          _
        // Predicated region
        $region57: #{forward_pallas.7} parent=11 // pred_check
          %p538 = pneg %p359
        $region58: #{forward_pallas.7} parent=11 // pred_check_branch
          %540 = sbr.rel (%p538) target = $region60
        $region59: #{forward_pallas.7} parent=11 // pred_region
          _
        $region60: #{forward_pallas.7} parent=11 // pred_fallthru
          _
        // Predicated region
        $region61: #{forward_pallas.7} parent=11 // pred_check
          %p541 = pneg %p380
        $region62: #{forward_pallas.7} parent=11 // pred_check_branch
          %543 = sbr.rel (%p541) target = $region64
        $region63: #{forward_pallas.7} parent=11 // pred_region
          _
        $region64: #{forward_pallas.7} parent=11 // pred_fallthru
          _
        // Predicated region
        $region65: #{forward_pallas.7} parent=11 // pred_check
          %p544 = pneg %p401
        $region66: #{forward_pallas.7} parent=11 // pred_check_branch
          %546 = sbr.rel (%p544) target = $region68
        $region67: #{forward_pallas.7} parent=11 // pred_region
          _
        $region68: #{forward_pallas.7} parent=11 // pred_fallthru
          _
        // Predicated region
        $region69: #{forward_pallas.7} parent=11 // pred_check
          %p547 = pneg %p422
        $region70: #{forward_pallas.7} parent=11 // pred_check_branch
          %549 = sbr.rel (%p547) target = $region72
        $region71: #{forward_pallas.7} parent=11 // pred_region
          _
        $region72: #{forward_pallas.7} parent=11 // pred_fallthru
          _
        // Predicated region
        $region73: #{forward_pallas.7} parent=11 // pred_check
          %p550 = pneg %p443
        $region74: #{forward_pallas.7} parent=11 // pred_check_branch
          %552 = sbr.rel (%p550) target = $region76
        $region75: #{forward_pallas.7} parent=11 // pred_region
          _
        $region76: #{forward_pallas.7} parent=11 // pred_fallthru
          _
        // Predicated region
        $region77: #{forward_pallas.7} parent=11 // pred_check
          %p553 = pneg %p464
        $region78: #{forward_pallas.7} parent=11 // pred_check_branch
          %555 = sbr.rel (%p553) target = $region80
        $region79: #{forward_pallas.7} parent=11 // pred_region
          _
        $region80: #{forward_pallas.7} parent=11 // pred_fallthru
          _
      $region12: #{forward_pallas.7} parent=5 // pred_fallthru
        _
      %p556 = scmp.lt.s32.totalorder %s29, 2
      // Predicated region
      $region81: #{forward_pallas.7} parent=5 // pred_check
        %p557 = pneg %p556
      $region82: #{forward_pallas.7} parent=5 // pred_check_branch
        %559 = sbr.rel (%p557) target = $region84
      $region83: #{forward_pallas.7} parent=5 // pred_region
        // Predicated region
        $region85: #{forward_pallas.7} parent=83 // pred_check
          %p560 = pneg %p49
        $region86: #{forward_pallas.7} parent=83 // pred_check_branch
          %562 = sbr.rel (%p560) target = $region88
        $region87: #{forward_pallas.7} parent=83 // pred_region
          %p563 = scmp.lt.s32.totalorder %s29, 1
          %s564 = scalar_select %p563, %s29, 1
          %s565 = smul.addr %s564, 2
          %s566 = smul.addr %s565, 8
          %s567 = scalar_lea.vmem %s0, %s566
        $region88: #{forward_pallas.7} parent=83 // pred_fallthru
          _
        // Predicated region
        $region89: #{forward_pallas.7} parent=83 // pred_check
          %p568 = pneg %p75
        $region90: #{forward_pallas.7} parent=83 // pred_check_branch
          %570 = sbr.rel (%p568) target = $region92
        $region91: #{forward_pallas.7} parent=83 // pred_region
          %p571 = scmp.lt.s32.totalorder %s29, 1
          %s572 = scalar_select %p571, %s29, 1
          %s573 = smul.addr %s572, 2
          %s574 = smul.addr %s573, 8
          %s575 = scalar_lea.vmem %s1, %s574
        $region92: #{forward_pallas.7} parent=83 // pred_fallthru
          _
        // Predicated region
        $region93: #{forward_pallas.7} parent=83 // pred_check
          %p576 = pneg %p122
        $region94: #{forward_pallas.7} parent=83 // pred_check_branch
          %578 = sbr.rel (%p576) target = $region96
        $region95: #{forward_pallas.7} parent=83 // pred_region
          %p579 = scmp.lt.s32.totalorder %s29, 1
          %s580 = scalar_select %p579, %s29, 1
          %s581 = scalar_lea.vmem %s3, %s580
        $region96: #{forward_pallas.7} parent=83 // pred_fallthru
          _
      $region84: #{forward_pallas.7} parent=5 // pred_fallthru
        _
      %p582 = scmp.le.s32.totalorder 1, %s29
      %p583 = scmp.lt.s32.totalorder %s29, 3
      %p584 = pnand %p582, %p583
      %p585 = pneg %p584
      // Predicated region
      $region97: #{forward_pallas.7} parent=5 // pred_check
        _
      $region98: #{forward_pallas.7} parent=5 // pred_check_branch
        %587 = sbr.rel (%p584) target = $region100
      $region99: #{forward_pallas.7} parent=5 // pred_region
        %s588 = ssub.s32 %s29, 1
        %p589 = scmp.lt.s32.totalorder %s34, 1
        %s590 = scalar_select %p589, %s34, 1
        %s591 = smul.addr %s590, 2
        %s592 = smul.addr %s591, 8
        %s593 = scalar_lea.vmem %s0, %s592
        %p594 = pneg %p55
        %p595 = pneg %p52
        %p596 = scmp.lt.s32.totalorder %s34, 1
        %s597 = scalar_select %p596, %s34, 1
        %s598 = smul.addr %s597, 2
        %s599 = smul.addr %s598, 8
        %s600 = scalar_lea.vmem %s1, %s599
        %p601 = pneg %p81
        %p602 = pneg %p78
        %p603 = pneg %p102
        %p604 = pneg %p99
        %p605 = scmp.lt.s32.totalorder %s34, 1
        %s606 = scalar_select %p605, %s34, 1
        %s607 = scalar_lea.vmem %s3, %s606
        %p608 = pneg %p128
        %p609 = pneg %p125
        %p610 = pneg %p149
        %p611 = pneg %p146
        %p612 = pneg %p170
        %p613 = pneg %p167
        %p614 = pneg %p191
        %p615 = pneg %p188
        %p616 = pneg %p212
        %p617 = pneg %p209
        %p618 = pneg %p233
        %p619 = pneg %p230
        %p620 = pneg %p254
        %p621 = pneg %p251
        %p622 = pneg %p275
        %p623 = pneg %p272
        %p624 = pneg %p296
        %p625 = pneg %p293
        %p626 = pneg %p317
        %p627 = pneg %p314
        %p628 = pneg %p338
        %p629 = pneg %p335
        %p630 = pneg %p359
        %p631 = pneg %p356
        %p632 = pneg %p380
        %p633 = pneg %p377
        %p634 = pneg %p401
        %p635 = pneg %p398
        %p636 = pneg %p422
        %p637 = pneg %p419
        %p638 = pneg %p443
        %p639 = pneg %p440
        %p640 = pneg %p464
        %p641 = pneg %p461
        %p642 = pneg %p490
        %p643 = pneg %p487
        %s644 = sand.u32 %s477, 1
        %s645 = scalar_lea.sflag [#allocation3], %s644
        %s646 = sand.u32 %s477, 1
        %s647 = smul.addr %s646, 16
        %s648 = scalar_lea.vmem [#allocation2], %s647
        %p649 = scmp.lt.s32.totalorder %s34, 1
        %s650 = scalar_select %p649, %s34, 1
        %s651 = smul.addr %s650, 2
        %s652 = smul.addr %s651, 8
        %s653 = scalar_lea.vmem %s0, %s652
        %p654 = scmp.lt.s32.totalorder %s34, 1
        %s655 = scalar_select %p654, %s34, 1
        %s656 = smul.addr %s655, 2
        %s657 = smul.addr %s656, 8
        %s658 = scalar_lea.vmem %s1, %s657
        %p659 = scmp.lt.s32.totalorder %s34, 1
        %s660 = scalar_select %p659, %s34, 1
        %s661 = scalar_lea.vmem %s3, %s660
        %v662 = vld [vmem:[%s653] sm:$0xff]
        %v663 = vld [vmem:[%s653 + $0x8] sm:$0xff]
        %v664 = vld [vmem:[%s658] sm:$0xff]
        %v665 = vld [vmem:[%s658 + $0x8] sm:$0xff]
        %v666 = vadd.f32 %v662, %v664
        %v667 = vadd.f32 %v663, %v665
        %v668 = vld [vmem:[%s661] sm:$0x1]
        %v669 = vld [vmem:[%s4] sm:$0xff]
        %v670 = vld [vmem:[%s4 + $0x8] sm:$0xff]
        %v671 = vld [vmem:[%s4 + $0x10] sm:$0xff]
        %v672 = vld [vmem:[%s4 + $0x18] sm:$0xff]
        %v673 = vld [vmem:[%s5] sm:$0x1]
        %v675 = vlaneseq
        %v676 = vshrl.u32 %v675, 7
        %v677 = vsub.s32 0, %v676
        %v678 = vrot.slane %v673, %v677
        %vm680 = vcmask 261120
        %v682 = vsel %vm680, %v666, 0
        %v685 = vsel %vm680, %v667, 0
        %687 = vmatprep.subr.mxu0 0.0
        %688 = vmatpush1.msra.mxu0 %v669
        %689 = vmatprep.subr.mxu0 0.0
        %690 = vmatpush1.msra.mxu0 %v670
        %691 = vmatprep.subr.mxu0 0.0
        %692 = vmatpush1.msra.mxu0 %v671
        %693 = vmatprep.subr.mxu0 0.0
        %694 = vmatpush1.msra.mxu0 %v672
        %695 = vmatprep.subr.mxu0 0.0
        %696 = vmatpush1.msra.mxu0 0.0
        %697 = vmatprep.subr.mxu0 0.0
        %698 = vmatpush1.msra.mxu0 0.0
        %699 = vmatprep.subr.mxu0 0.0
        %700 = vmatpush1.msra.mxu0 0.0
        %701 = vmatprep.subr.mxu0 0.0
        %702 = vmatpush1.msra.mxu0 0.0
        %703 = vmatprep.subr.mxu0 0.0
        %704 = vmatpush1.msra.mxu0 0.0
        %705 = vmatprep.subr.mxu0 0.0
        %706 = vmatpush1.msra.mxu0 0.0
        %707 = vmatprep.subr.mxu0 0.0
        %708 = vmatpush1.msra.mxu0 0.0
        %709 = vmatprep.subr.mxu0 0.0
        %710 = vmatpush1.msra.mxu0 0.0
        %711 = vmatprep.subr.mxu0 0.0
        %712 = vmatpush1.msra.mxu0 0.0
        %713 = vmatprep.subr.mxu0 0.0
        %714 = vmatpush1.msra.mxu0 0.0
        %715 = vmatprep.subr.mxu0 0.0
        %716 = vmatpush1.msra.mxu0 0.0
        %717 = vmatprep.subr.mxu0 0.0
        %718 = vmatpush1.msra.mxu0 0.0
        %719 = vmatprep.subr.mxu0 0.0
        %720 = vmatpush1.msra.mxu0 0.0
        %721 = vmatprep.subr.mxu0 0.0
        %722 = vmatpush1.msra.mxu0 0.0
        %723 = vmatprep.subr.mxu0 0.0
        %724 = vmatpush1.msra.mxu0 0.0
        %725 = vmatprep.subr.mxu0 0.0
        %726 = vmatpush1.msra.mxu0 0.0
        %727 = vmatprep.subr.mxu0 0.0
        %728 = vmatpush1.msra.mxu0 0.0
        %729 = vmatprep.subr.mxu0 0.0
        %730 = vmatpush1.msra.mxu0 0.0
        %731 = vmatprep.subr.mxu0 0.0
        %732 = vmatpush1.msra.mxu0 0.0
        %733 = vmatprep.subr.mxu0 0.0
        %734 = vmatpush1.msra.mxu0 0.0
        %735 = vmatprep.subr.mxu0 0.0
        %736 = vmatpush1.msra.mxu0 0.0
        %737 = vmatprep.subr.mxu0 0.0
        %738 = vmatpush1.msra.mxu0 0.0
        %739 = vmatprep.subr.mxu0 0.0
        %740 = vmatpush1.msra.mxu0 0.0
        %741 = vmatprep.subr.mxu0 0.0
        %742 = vmatpush1.msra.mxu0 0.0
        %743 = vmatprep.subr.mxu0 0.0
        %744 = vmatpush1.msra.mxu0 0.0
        %745 = vmatprep.subr.mxu0 0.0
        %746 = vmatpush1.msra.mxu0 0.0
        %747 = vmatprep.subr.mxu0 0.0
        %748 = vmatpush1.msra.mxu0 0.0
        %749 = vmatprep.subr.mxu0 0.0
        %750 = vmatpush1.msra.mxu0 0.0
        %751 = vmatprep.mubr.f32.mxu0 0.0
        %752 = vmatmul.mubr.f32.gmra.mrb[0].mxu0 %v682
        %v753 = vpop.f32.mrb[0].mxu0
        %v754 = vadd.f32 %v678, %v753
        %v755 = vpop.f32.mrb[0].mxu0
        %756 = vmatprep.mubr.f32.mxu0 0.0
        %757 = vmatmul.mubr.f32.gmra.mrb[0].mxu0 %v685
        %v758 = vpop.f32.mrb[0].mxu0
        %v759 = vadd.f32 %v678, %v758
        %v760 = vpop.f32.mrb[0].mxu0
        %761 = vdwg.mxu0
        %v762 = vld [vmem:[%s6] sm:$0xff]
        %v763 = vld [vmem:[%s6 + $0x8] sm:$0xff]
        %v764 = vld [vmem:[%s6 + $0x10] sm:$0xff]
        %v765 = vld [vmem:[%s6 + $0x18] sm:$0xff]
        %v766 = vld [vmem:[%s7] sm:$0x1]
        %v768 = vlaneseq
        %v769 = vshrl.u32 %v768, 7
        %v770 = vsub.s32 0, %v769
        %v771 = vrot.slane %v766, %v770
        %v774 = vsel %vm680, %v662, 0
        %v777 = vsel %vm680, %v663, 0
        %779 = vmatprep.subr.mxu0 0.0
        %780 = vmatpush1.msra.mxu0 %v762
        %781 = vmatprep.subr.mxu0 0.0
        %782 = vmatpush1.msra.mxu0 %v763
        %783 = vmatprep.subr.mxu0 0.0
        %784 = vmatpush1.msra.mxu0 %v764
        %785 = vmatprep.subr.mxu0 0.0
        %786 = vmatpush1.msra.mxu0 %v765
        %787 = vmatprep.subr.mxu0 0.0
        %788 = vmatpush1.msra.mxu0 0.0
        %789 = vmatprep.subr.mxu0 0.0
        %790 = vmatpush1.msra.mxu0 0.0
        %791 = vmatprep.subr.mxu0 0.0
        %792 = vmatpush1.msra.mxu0 0.0
        %793 = vmatprep.subr.mxu0 0.0
        %794 = vmatpush1.msra.mxu0 0.0
        %795 = vmatprep.subr.mxu0 0.0
        %796 = vmatpush1.msra.mxu0 0.0
        %797 = vmatprep.subr.mxu0 0.0
        %798 = vmatpush1.msra.mxu0 0.0
        %799 = vmatprep.subr.mxu0 0.0
        %800 = vmatpush1.msra.mxu0 0.0
        %801 = vmatprep.subr.mxu0 0.0
        %802 = vmatpush1.msra.mxu0 0.0
        %803 = vmatprep.subr.mxu0 0.0
        %804 = vmatpush1.msra.mxu0 0.0
        %805 = vmatprep.subr.mxu0 0.0
        %806 = vmatpush1.msra.mxu0 0.0
        %807 = vmatprep.subr.mxu0 0.0
        %808 = vmatpush1.msra.mxu0 0.0
        %809 = vmatprep.subr.mxu0 0.0
        %810 = vmatpush1.msra.mxu0 0.0
        %811 = vmatprep.subr.mxu0 0.0
        %812 = vmatpush1.msra.mxu0 0.0
        %813 = vmatprep.subr.mxu0 0.0
        %814 = vmatpush1.msra.mxu0 0.0
        %815 = vmatprep.subr.mxu0 0.0
        %816 = vmatpush1.msra.mxu0 0.0
        %817 = vmatprep.subr.mxu0 0.0
        %818 = vmatpush1.msra.mxu0 0.0
        %819 = vmatprep.subr.mxu0 0.0
        %820 = vmatpush1.msra.mxu0 0.0
        %821 = vmatprep.subr.mxu0 0.0
        %822 = vmatpush1.msra.mxu0 0.0
        %823 = vmatprep.subr.mxu0 0.0
        %824 = vmatpush1.msra.mxu0 0.0
        %825 = vmatprep.subr.mxu0 0.0
        %826 = vmatpush1.msra.mxu0 0.0
        %827 = vmatprep.subr.mxu0 0.0
        %828 = vmatpush1.msra.mxu0 0.0
        %829 = vmatprep.subr.mxu0 0.0
        %830 = vmatpush1.msra.mxu0 0.0
        %831 = vmatprep.subr.mxu0 0.0
        %832 = vmatpush1.msra.mxu0 0.0
        %833 = vmatprep.subr.mxu0 0.0
        %834 = vmatpush1.msra.mxu0 0.0
        %835 = vmatprep.subr.mxu0 0.0
        %836 = vmatpush1.msra.mxu0 0.0
        %837 = vmatprep.subr.mxu0 0.0
        %838 = vmatpush1.msra.mxu0 0.0
        %839 = vmatprep.subr.mxu0 0.0
        %840 = vmatpush1.msra.mxu0 0.0
        %841 = vmatprep.subr.mxu0 0.0
        %842 = vmatpush1.msra.mxu0 0.0
        %843 = vmatprep.mubr.f32.mxu0 0.0
        %844 = vmatmul.mubr.f32.gmra.mrb[0].mxu0 %v774
        %v845 = vpop.f32.mrb[0].mxu0
        %v846 = vadd.f32 %v771, %v845
        %v847 = vpop.f32.mrb[0].mxu0
        %848 = vmatprep.mubr.f32.mxu0 0.0
        %849 = vmatmul.mubr.f32.gmra.mrb[0].mxu0 %v777
        %v850 = vpop.f32.mrb[0].mxu0
        %v851 = vadd.f32 %v771, %v850
        %v852 = vpop.f32.mrb[0].mxu0
        %853 = vdwg.mxu0
        %856 = vrot.lane.b32.xlu0 %v754, 64
        %v857 = vpop.permute.xlu0 %856
        %858 = vrot.lane.b32.xlu0 %v759, 64
        %v859 = vpop.permute.xlu0 %858
        %vm860 = vcmask 130048
        %v861 = vsel %vm860, %v754, 0
        %v863 = vsel %vm860, %v759, 0
        %v865 = vsel %vm860, %v857, 0
        %v867 = vsel %vm860, %v859, 0
        %869 = vmatprep.subr.mxu0 0.0
        %870 = vmatpush1.xpose.msra.mxu0 %v865
        %871 = vmatprep.subr.mxu0 0.0
        %872 = vmatpush1.xpose.msra.mxu0 %v867
        %873 = vmatprep.subr.mxu0 0.0
        %874 = vmatpush1.xpose.msra.mxu0 0.0
        %875 = vmatprep.subr.mxu0 0.0
        %876 = vmatpush1.xpose.msra.mxu0 0.0
        %877 = vmatprep.subr.mxu0 0.0
        %878 = vmatpush1.xpose.msra.mxu0 0.0
        %879 = vmatprep.subr.mxu0 0.0
        %880 = vmatpush1.xpose.msra.mxu0 0.0
        %881 = vmatprep.subr.mxu0 0.0
        %882 = vmatpush1.xpose.msra.mxu0 0.0
        %883 = vmatprep.subr.mxu0 0.0
        %884 = vmatpush1.xpose.msra.mxu0 0.0
        %885 = vmatprep.subr.mxu0 0.0
        %886 = vmatpush1.xpose.msra.mxu0 0.0
        %887 = vmatprep.subr.mxu0 0.0
        %888 = vmatpush1.xpose.msra.mxu0 0.0
        %889 = vmatprep.subr.mxu0 0.0
        %890 = vmatpush1.xpose.msra.mxu0 0.0
        %891 = vmatprep.subr.mxu0 0.0
        %892 = vmatpush1.xpose.msra.mxu0 0.0
        %893 = vmatprep.subr.mxu0 0.0
        %894 = vmatpush1.xpose.msra.mxu0 0.0
        %895 = vmatprep.subr.mxu0 0.0
        %896 = vmatpush1.xpose.msra.mxu0 0.0
        %897 = vmatprep.subr.mxu0 0.0
        %898 = vmatpush1.xpose.msra.mxu0 0.0
        %899 = vmatprep.subr.mxu0 0.0
        %900 = vmatpush1.xpose.msra.mxu0 0.0
        %901 = vmatprep.subr.mxu0 0.0
        %902 = vmatpush1.xpose.msra.mxu0 0.0
        %903 = vmatprep.subr.mxu0 0.0
        %904 = vmatpush1.xpose.msra.mxu0 0.0
        %905 = vmatprep.subr.mxu0 0.0
        %906 = vmatpush1.xpose.msra.mxu0 0.0
        %907 = vmatprep.subr.mxu0 0.0
        %908 = vmatpush1.xpose.msra.mxu0 0.0
        %909 = vmatprep.subr.mxu0 0.0
        %910 = vmatpush1.xpose.msra.mxu0 0.0
        %911 = vmatprep.subr.mxu0 0.0
        %912 = vmatpush1.xpose.msra.mxu0 0.0
        %913 = vmatprep.subr.mxu0 0.0
        %914 = vmatpush1.xpose.msra.mxu0 0.0
        %915 = vmatprep.subr.mxu0 0.0
        %916 = vmatpush1.xpose.msra.mxu0 0.0
        %917 = vmatprep.subr.mxu0 0.0
        %918 = vmatpush1.xpose.msra.mxu0 0.0
        %919 = vmatprep.subr.mxu0 0.0
        %920 = vmatpush1.xpose.msra.mxu0 0.0
        %921 = vmatprep.subr.mxu0 0.0
        %922 = vmatpush1.xpose.msra.mxu0 0.0
        %923 = vmatprep.subr.mxu0 0.0
        %924 = vmatpush1.xpose.msra.mxu0 0.0
        %925 = vmatprep.subr.mxu0 0.0
        %926 = vmatpush1.xpose.msra.mxu0 0.0
        %927 = vmatprep.subr.mxu0 0.0
        %928 = vmatpush1.xpose.msra.mxu0 0.0
        %929 = vmatprep.subr.mxu0 0.0
        %930 = vmatpush1.xpose.msra.mxu0 0.0
        %931 = vmatprep.subr.mxu0 0.0
        %932 = vmatpush1.xpose.msra.mxu0 0.0
        %933 = vmatprep.mubr.f32.mxu0 0.0
        %934 = vmatmul.mubr.f32.gmra.mrb[0].mxu0 %v861
        %v935 = vpop.f32.mrb[0].mxu0
        %v936 = vadd.f32 0.0, %v935
        %v937 = vpop.f32.mrb[0].mxu0
        %938 = vmatprep.mubr.f32.mxu0 0.0
        %939 = vmatmul.mubr.f32.gmra.mrb[0].mxu0 %v863
        %v940 = vpop.f32.mrb[0].mxu0
        %v941 = vadd.f32 0.0, %v940
        %v942 = vpop.f32.mrb[0].mxu0
        %943 = vdwg.mxu0
        %v944 = vmul.f32 %v936, 0.25
        %v945 = vmul.f32 %v941, 0.25
        %v947 = vlaneseq
        %v948 = vshrl.u32 %v947, 7
        %v949 = vsub.s32 0, %v948
        %v950 = vrot.slane %v668, %v949
        %v952 = vadd.f32 %v944, %v950
        %v953 = vadd.f32 %v945, %v950
        %v954 = vld [vmem:[%s2] sm:$0xff]
        %v955 = vld [vmem:[%s2 + $0x8] sm:$0xff]
        %v956 = vadd.f32 %v952, %v954
        %v957 = vadd.f32 %v953, %v955
        %v958 = vsel %vm860, %v956, -inf
        %959 = vmax.xlane.f32.xlu0 %v958
        %v960 = vpop.xlane.xlu0 %959
        %v961 = vsel %vm860, %v957, -inf
        %962 = vmax.xlane.f32.xlu0 %v961
        %v963 = vpop.xlane.xlu0 %962
        %v964 = vsub.f32 %v956, %v960
        %v965 = vsub.f32 %v957, %v963
        %v966 = vmul.f32 %v964, 1.442695
        %v967 = vpow.pop %v966
        %v968 = vmul.f32 %v965, 1.442695
        %v969 = vpow.pop %v968
        %v970 = vsel %vm860, %v967, 0.0
        %971 = vadd.xlane.f32.xlu0 %v970
        %v972 = vpop.xlane.xlu0 %971
        %v973 = vsel %vm860, %v969, 0.0
        %974 = vadd.xlane.f32.xlu0 %v973
        %v975 = vpop.xlane.xlu0 %974
        %v976 = vrcp.pop %v972
        %v977 = vmul.f32 %v967, %v976
        %v978 = vrcp.pop %v975
        %v979 = vmul.f32 %v969, %v978
        %v981 = vsel %vm860, %v977, 0
        %v984 = vsel %vm860, %v979, 0
        %986 = vmatprep.subr.mxu0 0.0
        %987 = vmatpush1.msra.mxu0 %v846
        %988 = vmatprep.subr.mxu0 0.0
        %989 = vmatpush1.msra.mxu0 %v851
        %990 = vmatprep.subr.mxu0 0.0
        %991 = vmatpush1.msra.mxu0 0.0
        %992 = vmatprep.subr.mxu0 0.0
        %993 = vmatpush1.msra.mxu0 0.0
        %994 = vmatprep.subr.mxu0 0.0
        %995 = vmatpush1.msra.mxu0 0.0
        %996 = vmatprep.subr.mxu0 0.0
        %997 = vmatpush1.msra.mxu0 0.0
        %998 = vmatprep.subr.mxu0 0.0
        %999 = vmatpush1.msra.mxu0 0.0
        %1000 = vmatprep.subr.mxu0 0.0
        %1001 = vmatpush1.msra.mxu0 0.0
        %1002 = vmatprep.subr.mxu0 0.0
        %1003 = vmatpush1.msra.mxu0 0.0
        %1004 = vmatprep.subr.mxu0 0.0
        %1005 = vmatpush1.msra.mxu0 0.0
        %1006 = vmatprep.subr.mxu0 0.0
        %1007 = vmatpush1.msra.mxu0 0.0
        %1008 = vmatprep.subr.mxu0 0.0
        %1009 = vmatpush1.msra.mxu0 0.0
        %1010 = vmatprep.subr.mxu0 0.0
        %1011 = vmatpush1.msra.mxu0 0.0
        %1012 = vmatprep.subr.mxu0 0.0
        %1013 = vmatpush1.msra.mxu0 0.0
        %1014 = vmatprep.subr.mxu0 0.0
        %1015 = vmatpush1.msra.mxu0 0.0
        %1016 = vmatprep.subr.mxu0 0.0
        %1017 = vmatpush1.msra.mxu0 0.0
        %1018 = vmatprep.subr.mxu0 0.0
        %1019 = vmatpush1.msra.mxu0 0.0
        %1020 = vmatprep.subr.mxu0 0.0
        %1021 = vmatpush1.msra.mxu0 0.0
        %1022 = vmatprep.subr.mxu0 0.0
        %1023 = vmatpush1.msra.mxu0 0.0
        %1024 = vmatprep.subr.mxu0 0.0
        %1025 = vmatpush1.msra.mxu0 0.0
        %1026 = vmatprep.subr.mxu0 0.0
        %1027 = vmatpush1.msra.mxu0 0.0
        %1028 = vmatprep.subr.mxu0 0.0
        %1029 = vmatpush1.msra.mxu0 0.0
        %1030 = vmatprep.subr.mxu0 0.0
        %1031 = vmatpush1.msra.mxu0 0.0
        %1032 = vmatprep.subr.mxu0 0.0
        %1033 = vmatpush1.msra.mxu0 0.0
        %1034 = vmatprep.subr.mxu0 0.0
        %1035 = vmatpush1.msra.mxu0 0.0
        %1036 = vmatprep.subr.mxu0 0.0
        %1037 = vmatpush1.msra.mxu0 0.0
        %1038 = vmatprep.subr.mxu0 0.0
        %1039 = vmatpush1.msra.mxu0 0.0
        %1040 = vmatprep.subr.mxu0 0.0
        %1041 = vmatpush1.msra.mxu0 0.0
        %1042 = vmatprep.subr.mxu0 0.0
        %1043 = vmatpush1.msra.mxu0 0.0
        %1044 = vmatprep.subr.mxu0 0.0
        %1045 = vmatpush1.msra.mxu0 0.0
        %1046 = vmatprep.subr.mxu0 0.0
        %1047 = vmatpush1.msra.mxu0 0.0
        %1048 = vmatprep.subr.mxu0 0.0
        %1049 = vmatpush1.msra.mxu0 0.0
        %1050 = vmatprep.mubr.f32.mxu0 0.0
        %1051 = vmatmul.mubr.f32.gmra.mrb[0].mxu0 %v981
        %v1052 = vpop.f32.mrb[0].mxu0
        %v1053 = vadd.f32 0.0, %v1052
        %v1054 = vpop.f32.mrb[0].mxu0
        %1055 = vmatprep.mubr.f32.mxu0 0.0
        %1056 = vmatmul.mubr.f32.gmra.mrb[0].mxu0 %v984
        %v1057 = vpop.f32.mrb[0].mxu0
        %v1058 = vadd.f32 0.0, %v1057
        %v1059 = vpop.f32.mrb[0].mxu0
        %1060 = vdwg.mxu0
        %1061 = vrot.lane.b32.xlu0 %v754, 112
        %v1062 = vpop.permute.xlu0 %1061
        %1063 = vrot.lane.b32.xlu0 %v759, 112
        %v1064 = vpop.permute.xlu0 %1063
        %1065 = vrot.lane.b32.xlu0 %v754, 48
        %v1066 = vpop.permute.xlu0 %1065
        %1067 = vrot.lane.b32.xlu0 %v759, 48
        %v1068 = vpop.permute.xlu0 %1067
        %v1069 = vsel %vm860, %v1062, 0
        %v1071 = vsel %vm860, %v1064, 0
        %v1073 = vsel %vm860, %v1066, 0
        %v1075 = vsel %vm860, %v1068, 0
        %1077 = vmatprep.subr.mxu0 0.0
        %1078 = vmatpush1.xpose.msra.mxu0 %v1073
        %1079 = vmatprep.subr.mxu0 0.0
        %1080 = vmatpush1.xpose.msra.mxu0 %v1075
        %1081 = vmatprep.subr.mxu0 0.0
        %1082 = vmatpush1.xpose.msra.mxu0 0.0
        %1083 = vmatprep.subr.mxu0 0.0
        %1084 = vmatpush1.xpose.msra.mxu0 0.0
        %1085 = vmatprep.subr.mxu0 0.0
        %1086 = vmatpush1.xpose.msra.mxu0 0.0
        %1087 = vmatprep.subr.mxu0 0.0
        %1088 = vmatpush1.xpose.msra.mxu0 0.0
        %1089 = vmatprep.subr.mxu0 0.0
        %1090 = vmatpush1.xpose.msra.mxu0 0.0
        %1091 = vmatprep.subr.mxu0 0.0
        %1092 = vmatpush1.xpose.msra.mxu0 0.0
        %1093 = vmatprep.subr.mxu0 0.0
        %1094 = vmatpush1.xpose.msra.mxu0 0.0
        %1095 = vmatprep.subr.mxu0 0.0
        %1096 = vmatpush1.xpose.msra.mxu0 0.0
        %1097 = vmatprep.subr.mxu0 0.0
        %1098 = vmatpush1.xpose.msra.mxu0 0.0
        %1099 = vmatprep.subr.mxu0 0.0
        %1100 = vmatpush1.xpose.msra.mxu0 0.0
        %1101 = vmatprep.subr.mxu0 0.0
        %1102 = vmatpush1.xpose.msra.mxu0 0.0
        %1103 = vmatprep.subr.mxu0 0.0
        %1104 = vmatpush1.xpose.msra.mxu0 0.0
        %1105 = vmatprep.subr.mxu0 0.0
        %1106 = vmatpush1.xpose.msra.mxu0 0.0
        %1107 = vmatprep.subr.mxu0 0.0
        %1108 = vmatpush1.xpose.msra.mxu0 0.0
        %1109 = vmatprep.subr.mxu0 0.0
        %1110 = vmatpush1.xpose.msra.mxu0 0.0
        %1111 = vmatprep.subr.mxu0 0.0
        %1112 = vmatpush1.xpose.msra.mxu0 0.0
        %1113 = vmatprep.subr.mxu0 0.0
        %1114 = vmatpush1.xpose.msra.mxu0 0.0
        %1115 = vmatprep.subr.mxu0 0.0
        %1116 = vmatpush1.xpose.msra.mxu0 0.0
        %1117 = vmatprep.subr.mxu0 0.0
        %1118 = vmatpush1.xpose.msra.mxu0 0.0
        %1119 = vmatprep.subr.mxu0 0.0
        %1120 = vmatpush1.xpose.msra.mxu0 0.0
        %1121 = vmatprep.subr.mxu0 0.0
        %1122 = vmatpush1.xpose.msra.mxu0 0.0
        %1123 = vmatprep.subr.mxu0 0.0
        %1124 = vmatpush1.xpose.msra.mxu0 0.0
        %1125 = vmatprep.subr.mxu0 0.0
        %1126 = vmatpush1.xpose.msra.mxu0 0.0
        %1127 = vmatprep.subr.mxu0 0.0
        %1128 = vmatpush1.xpose.msra.mxu0 0.0
        %1129 = vmatprep.subr.mxu0 0.0
        %1130 = vmatpush1.xpose.msra.mxu0 0.0
        %1131 = vmatprep.subr.mxu0 0.0
        %1132 = vmatpush1.xpose.msra.mxu0 0.0
        %1133 = vmatprep.subr.mxu0 0.0
        %1134 = vmatpush1.xpose.msra.mxu0 0.0
        %1135 = vmatprep.subr.mxu0 0.0
        %1136 = vmatpush1.xpose.msra.mxu0 0.0
        %1137 = vmatprep.subr.mxu0 0.0
        %1138 = vmatpush1.xpose.msra.mxu0 0.0
        %1139 = vmatprep.subr.mxu0 0.0
        %1140 = vmatpush1.xpose.msra.mxu0 0.0
        %1141 = vmatprep.mubr.f32.mxu0 0.0
        %1142 = vmatmul.mubr.f32.gmra.mrb[0].mxu0 %v1069
        %v1143 = vpop.f32.mrb[0].mxu0
        %v1144 = vadd.f32 0.0, %v1143
        %v1145 = vpop.f32.mrb[0].mxu0
        %1146 = vmatprep.mubr.f32.mxu0 0.0
        %1147 = vmatmul.mubr.f32.gmra.mrb[0].mxu0 %v1071
        %v1148 = vpop.f32.mrb[0].mxu0
        %v1149 = vadd.f32 0.0, %v1148
        %v1150 = vpop.f32.mrb[0].mxu0
        %1151 = vdwg.mxu0
        %v1152 = vmul.f32 %v1144, 0.25
        %v1153 = vmul.f32 %v1149, 0.25
        %v1154 = vadd.f32 %v1152, %v950
        %v1155 = vadd.f32 %v1153, %v950
        %s1156 = scalar_lea.vmem %s2, 16
        %v1157 = vld [vmem:[%s1156] sm:$0xff]
        %v1158 = vld [vmem:[%s1156 + $0x8] sm:$0xff]
        %v1159 = vadd.f32 %v1154, %v1157
        %v1160 = vadd.f32 %v1155, %v1158
        %v1161 = vsel %vm860, %v1159, -inf
        %1162 = vmax.xlane.f32.xlu0 %v1161
        %v1163 = vpop.xlane.xlu0 %1162
        %v1164 = vsel %vm860, %v1160, -inf
        %1165 = vmax.xlane.f32.xlu0 %v1164
        %v1166 = vpop.xlane.xlu0 %1165
        %v1167 = vsub.f32 %v1159, %v1163
        %v1168 = vsub.f32 %v1160, %v1166
        %v1169 = vmul.f32 %v1167, 1.442695
        %v1170 = vpow.pop %v1169
        %v1171 = vmul.f32 %v1168, 1.442695
        %v1172 = vpow.pop %v1171
        %v1173 = vsel %vm860, %v1170, 0.0
        %1174 = vadd.xlane.f32.xlu0 %v1173
        %v1175 = vpop.xlane.xlu0 %1174
        %v1176 = vsel %vm860, %v1172, 0.0
        %1177 = vadd.xlane.f32.xlu0 %v1176
        %v1178 = vpop.xlane.xlu0 %1177
        %v1179 = vrcp.pop %v1175
        %v1180 = vmul.f32 %v1170, %v1179
        %v1181 = vrcp.pop %v1178
        %v1182 = vmul.f32 %v1172, %v1181
        %1185 = vrot.lane.b32.xlu0 %v846, 112
        %v1186 = vpop.permute.xlu0 %1185
        %1187 = vrot.lane.b32.xlu0 %v851, 112
        %v1188 = vpop.permute.xlu0 %1187
        %v1192 = vsel %vm860, %v1180, 0
        %v1195 = vsel %vm860, %v1182, 0
        %1197 = vmatprep.subr.mxu0 0.0
        %1198 = vmatpush1.msra.mxu0 %v1186
        %1199 = vmatprep.subr.mxu0 0.0
        %1200 = vmatpush1.msra.mxu0 %v1188
        %1201 = vmatprep.subr.mxu0 0.0
        %1202 = vmatpush1.msra.mxu0 0.0
        %1203 = vmatprep.subr.mxu0 0.0
        %1204 = vmatpush1.msra.mxu0 0.0
        %1205 = vmatprep.subr.mxu0 0.0
        %1206 = vmatpush1.msra.mxu0 0.0
        %1207 = vmatprep.subr.mxu0 0.0
        %1208 = vmatpush1.msra.mxu0 0.0
        %1209 = vmatprep.subr.mxu0 0.0
        %1210 = vmatpush1.msra.mxu0 0.0
        %1211 = vmatprep.subr.mxu0 0.0
        %1212 = vmatpush1.msra.mxu0 0.0
        %1213 = vmatprep.subr.mxu0 0.0
        %1214 = vmatpush1.msra.mxu0 0.0
        %1215 = vmatprep.subr.mxu0 0.0
        %1216 = vmatpush1.msra.mxu0 0.0
        %1217 = vmatprep.subr.mxu0 0.0
        %1218 = vmatpush1.msra.mxu0 0.0
        %1219 = vmatprep.subr.mxu0 0.0
        %1220 = vmatpush1.msra.mxu0 0.0
        %1221 = vmatprep.subr.mxu0 0.0
        %1222 = vmatpush1.msra.mxu0 0.0
        %1223 = vmatprep.subr.mxu0 0.0
        %1224 = vmatpush1.msra.mxu0 0.0
        %1225 = vmatprep.subr.mxu0 0.0
        %1226 = vmatpush1.msra.mxu0 0.0
        %1227 = vmatprep.subr.mxu0 0.0
        %1228 = vmatpush1.msra.mxu0 0.0
        %1229 = vmatprep.subr.mxu0 0.0
        %1230 = vmatpush1.msra.mxu0 0.0
        %1231 = vmatprep.subr.mxu0 0.0
        %1232 = vmatpush1.msra.mxu0 0.0
        %1233 = vmatprep.subr.mxu0 0.0
        %1234 = vmatpush1.msra.mxu0 0.0
        %1235 = vmatprep.subr.mxu0 0.0
        %1236 = vmatpush1.msra.mxu0 0.0
        %1237 = vmatprep.subr.mxu0 0.0
        %1238 = vmatpush1.msra.mxu0 0.0
        %1239 = vmatprep.subr.mxu0 0.0
        %1240 = vmatpush1.msra.mxu0 0.0
        %1241 = vmatprep.subr.mxu0 0.0
        %1242 = vmatpush1.msra.mxu0 0.0
        %1243 = vmatprep.subr.mxu0 0.0
        %1244 = vmatpush1.msra.mxu0 0.0
        %1245 = vmatprep.subr.mxu0 0.0
        %1246 = vmatpush1.msra.mxu0 0.0
        %1247 = vmatprep.subr.mxu0 0.0
        %1248 = vmatpush1.msra.mxu0 0.0
        %1249 = vmatprep.subr.mxu0 0.0
        %1250 = vmatpush1.msra.mxu0 0.0
        %1251 = vmatprep.subr.mxu0 0.0
        %1252 = vmatpush1.msra.mxu0 0.0
        %1253 = vmatprep.subr.mxu0 0.0
        %1254 = vmatpush1.msra.mxu0 0.0
        %1255 = vmatprep.subr.mxu0 0.0
        %1256 = vmatpush1.msra.mxu0 0.0
        %1257 = vmatprep.subr.mxu0 0.0
        %1258 = vmatpush1.msra.mxu0 0.0
        %1259 = vmatprep.subr.mxu0 0.0
        %1260 = vmatpush1.msra.mxu0 0.0
        %1261 = vmatprep.mubr.f32.mxu0 0.0
        %1262 = vmatmul.mubr.f32.gmra.mrb[0].mxu0 %v1192
        %v1263 = vpop.f32.mrb[0].mxu0
        %v1264 = vadd.f32 0.0, %v1263
        %v1265 = vpop.f32.mrb[0].mxu0
        %1266 = vmatprep.mubr.f32.mxu0 0.0
        %1267 = vmatmul.mubr.f32.gmra.mrb[0].mxu0 %v1195
        %v1268 = vpop.f32.mrb[0].mxu0
        %v1269 = vadd.f32 0.0, %v1268
        %v1270 = vpop.f32.mrb[0].mxu0
        %1271 = vdwg.mxu0
        %1272 = vrot.lane.b32.xlu0 %v754, 96
        %v1273 = vpop.permute.xlu0 %1272
        %1274 = vrot.lane.b32.xlu0 %v759, 96
        %v1275 = vpop.permute.xlu0 %1274
        %1276 = vrot.lane.b32.xlu0 %v754, 32
        %v1277 = vpop.permute.xlu0 %1276
        %1278 = vrot.lane.b32.xlu0 %v759, 32
        %v1279 = vpop.permute.xlu0 %1278
        %v1280 = vsel %vm860, %v1273, 0
        %v1282 = vsel %vm860, %v1275, 0
        %v1284 = vsel %vm860, %v1277, 0
        %v1286 = vsel %vm860, %v1279, 0
        %1288 = vmatprep.subr.mxu0 0.0
        %1289 = vmatpush1.xpose.msra.mxu0 %v1284
        %1290 = vmatprep.subr.mxu0 0.0
        %1291 = vmatpush1.xpose.msra.mxu0 %v1286
        %1292 = vmatprep.subr.mxu0 0.0
        %1293 = vmatpush1.xpose.msra.mxu0 0.0
        %1294 = vmatprep.subr.mxu0 0.0
        %1295 = vmatpush1.xpose.msra.mxu0 0.0
        %1296 = vmatprep.subr.mxu0 0.0
        %1297 = vmatpush1.xpose.msra.mxu0 0.0
        %1298 = vmatprep.subr.mxu0 0.0
        %1299 = vmatpush1.xpose.msra.mxu0 0.0
        %1300 = vmatprep.subr.mxu0 0.0
        %1301 = vmatpush1.xpose.msra.mxu0 0.0
        %1302 = vmatprep.subr.mxu0 0.0
        %1303 = vmatpush1.xpose.msra.mxu0 0.0
        %1304 = vmatprep.subr.mxu0 0.0
        %1305 = vmatpush1.xpose.msra.mxu0 0.0
        %1306 = vmatprep.subr.mxu0 0.0
        %1307 = vmatpush1.xpose.msra.mxu0 0.0
        %1308 = vmatprep.subr.mxu0 0.0
        %1309 = vmatpush1.xpose.msra.mxu0 0.0
        %1310 = vmatprep.subr.mxu0 0.0
        %1311 = vmatpush1.xpose.msra.mxu0 0.0
        %1312 = vmatprep.subr.mxu0 0.0
        %1313 = vmatpush1.xpose.msra.mxu0 0.0
        %1314 = vmatprep.subr.mxu0 0.0
        %1315 = vmatpush1.xpose.msra.mxu0 0.0
        %1316 = vmatprep.subr.mxu0 0.0
        %1317 = vmatpush1.xpose.msra.mxu0 0.0
        %1318 = vmatprep.subr.mxu0 0.0
        %1319 = vmatpush1.xpose.msra.mxu0 0.0
        %1320 = vmatprep.subr.mxu0 0.0
        %1321 = vmatpush1.xpose.msra.mxu0 0.0
        %1322 = vmatprep.subr.mxu0 0.0
        %1323 = vmatpush1.xpose.msra.mxu0 0.0
        %1324 = vmatprep.subr.mxu0 0.0
        %1325 = vmatpush1.xpose.msra.mxu0 0.0
        %1326 = vmatprep.subr.mxu0 0.0
        %1327 = vmatpush1.xpose.msra.mxu0 0.0
        %1328 = vmatprep.subr.mxu0 0.0
        %1329 = vmatpush1.xpose.msra.mxu0 0.0
        %1330 = vmatprep.subr.mxu0 0.0
        %1331 = vmatpush1.xpose.msra.mxu0 0.0
        %1332 = vmatprep.subr.mxu0 0.0
        %1333 = vmatpush1.xpose.msra.mxu0 0.0
        %1334 = vmatprep.subr.mxu0 0.0
        %1335 = vmatpush1.xpose.msra.mxu0 0.0
        %1336 = vmatprep.subr.mxu0 0.0
        %1337 = vmatpush1.xpose.msra.mxu0 0.0
        %1338 = vmatprep.subr.mxu0 0.0
        %1339 = vmatpush1.xpose.msra.mxu0 0.0
        %1340 = vmatprep.subr.mxu0 0.0
        %1341 = vmatpush1.xpose.msra.mxu0 0.0
        %1342 = vmatprep.subr.mxu0 0.0
        %1343 = vmatpush1.xpose.msra.mxu0 0.0
        %1344 = vmatprep.subr.mxu0 0.0
        %1345 = vmatpush1.xpose.msra.mxu0 0.0
        %1346 = vmatprep.subr.mxu0 0.0
        %1347 = vmatpush1.xpose.msra.mxu0 0.0
        %1348 = vmatprep.subr.mxu0 0.0
        %1349 = vmatpush1.xpose.msra.mxu0 0.0
        %1350 = vmatprep.subr.mxu0 0.0
        %1351 = vmatpush1.xpose.msra.mxu0 0.0
        %1352 = vmatprep.mubr.f32.mxu0 0.0
        %1353 = vmatmul.mubr.f32.gmra.mrb[0].mxu0 %v1280
        %v1354 = vpop.f32.mrb[0].mxu0
        %v1355 = vadd.f32 0.0, %v1354
        %v1356 = vpop.f32.mrb[0].mxu0
        %1357 = vmatprep.mubr.f32.mxu0 0.0
        %1358 = vmatmul.mubr.f32.gmra.mrb[0].mxu0 %v1282
        %v1359 = vpop.f32.mrb[0].mxu0
        %v1360 = vadd.f32 0.0, %v1359
        %v1361 = vpop.f32.mrb[0].mxu0
        %1362 = vdwg.mxu0
        %v1363 = vmul.f32 %v1355, 0.25
        %v1364 = vmul.f32 %v1360, 0.25
        %v1365 = vadd.f32 %v1363, %v950
        %v1366 = vadd.f32 %v1364, %v950
        %s1367 = scalar_lea.vmem %s2, 32
        %v1368 = vld [vmem:[%s1367] sm:$0xff]
        %v1369 = vld [vmem:[%s1367 + $0x8] sm:$0xff]
        %v1370 = vadd.f32 %v1365, %v1368
        %v1371 = vadd.f32 %v1366, %v1369
        %v1372 = vsel %vm860, %v1370, -inf
        %1373 = vmax.xlane.f32.xlu0 %v1372
        %v1374 = vpop.xlane.xlu0 %1373
        %v1375 = vsel %vm860, %v1371, -inf
        %1376 = vmax.xlane.f32.xlu0 %v1375
        %v1377 = vpop.xlane.xlu0 %1376
        %v1378 = vsub.f32 %v1370, %v1374
        %v1379 = vsub.f32 %v1371, %v1377
        %v1380 = vmul.f32 %v1378, 1.442695
        %v1381 = vpow.pop %v1380
        %v1382 = vmul.f32 %v1379, 1.442695
        %v1383 = vpow.pop %v1382
        %v1384 = vsel %vm860, %v1381, 0.0
        %1385 = vadd.xlane.f32.xlu0 %v1384
        %v1386 = vpop.xlane.xlu0 %1385
        %v1387 = vsel %vm860, %v1383, 0.0
        %1388 = vadd.xlane.f32.xlu0 %v1387
        %v1389 = vpop.xlane.xlu0 %1388
        %v1390 = vrcp.pop %v1386
        %v1391 = vmul.f32 %v1381, %v1390
        %v1392 = vrcp.pop %v1389
        %v1393 = vmul.f32 %v1383, %v1392
        %1394 = vrot.lane.b32.xlu0 %v846, 96
        %v1395 = vpop.permute.xlu0 %1394
        %1396 = vrot.lane.b32.xlu0 %v851, 96
        %v1397 = vpop.permute.xlu0 %1396
        %v1401 = vsel %vm860, %v1391, 0
        %v1404 = vsel %vm860, %v1393, 0
        %1406 = vmatprep.subr.mxu0 0.0
        %1407 = vmatpush1.msra.mxu0 %v1395
        %1408 = vmatprep.subr.mxu0 0.0
        %1409 = vmatpush1.msra.mxu0 %v1397
        %1410 = vmatprep.subr.mxu0 0.0
        %1411 = vmatpush1.msra.mxu0 0.0
        %1412 = vmatprep.subr.mxu0 0.0
        %1413 = vmatpush1.msra.mxu0 0.0
        %1414 = vmatprep.subr.mxu0 0.0
        %1415 = vmatpush1.msra.mxu0 0.0
        %1416 = vmatprep.subr.mxu0 0.0
        %1417 = vmatpush1.msra.mxu0 0.0
        %1418 = vmatprep.subr.mxu0 0.0
        %1419 = vmatpush1.msra.mxu0 0.0
        %1420 = vmatprep.subr.mxu0 0.0
        %1421 = vmatpush1.msra.mxu0 0.0
        %1422 = vmatprep.subr.mxu0 0.0
        %1423 = vmatpush1.msra.mxu0 0.0
        %1424 = vmatprep.subr.mxu0 0.0
        %1425 = vmatpush1.msra.mxu0 0.0
        %1426 = vmatprep.subr.mxu0 0.0
        %1427 = vmatpush1.msra.mxu0 0.0
        %1428 = vmatprep.subr.mxu0 0.0
        %1429 = vmatpush1.msra.mxu0 0.0
        %1430 = vmatprep.subr.mxu0 0.0
        %1431 = vmatpush1.msra.mxu0 0.0
        %1432 = vmatprep.subr.mxu0 0.0
        %1433 = vmatpush1.msra.mxu0 0.0
        %1434 = vmatprep.subr.mxu0 0.0
        %1435 = vmatpush1.msra.mxu0 0.0
        %1436 = vmatprep.subr.mxu0 0.0
        %1437 = vmatpush1.msra.mxu0 0.0
        %1438 = vmatprep.subr.mxu0 0.0
        %1439 = vmatpush1.msra.mxu0 0.0
        %1440 = vmatprep.subr.mxu0 0.0
        %1441 = vmatpush1.msra.mxu0 0.0
        %1442 = vmatprep.subr.mxu0 0.0
        %1443 = vmatpush1.msra.mxu0 0.0
        %1444 = vmatprep.subr.mxu0 0.0
        %1445 = vmatpush1.msra.mxu0 0.0
        %1446 = vmatprep.subr.mxu0 0.0
        %1447 = vmatpush1.msra.mxu0 0.0
        %1448 = vmatprep.subr.mxu0 0.0
        %1449 = vmatpush1.msra.mxu0 0.0
        %1450 = vmatprep.subr.mxu0 0.0
        %1451 = vmatpush1.msra.mxu0 0.0
        %1452 = vmatprep.subr.mxu0 0.0
        %1453 = vmatpush1.msra.mxu0 0.0
        %1454 = vmatprep.subr.mxu0 0.0
        %1455 = vmatpush1.msra.mxu0 0.0
        %1456 = vmatprep.subr.mxu0 0.0
        %1457 = vmatpush1.msra.mxu0 0.0
        %1458 = vmatprep.subr.mxu0 0.0
        %1459 = vmatpush1.msra.mxu0 0.0
        %1460 = vmatprep.subr.mxu0 0.0
        %1461 = vmatpush1.msra.mxu0 0.0
        %1462 = vmatprep.subr.mxu0 0.0
        %1463 = vmatpush1.msra.mxu0 0.0
        %1464 = vmatprep.subr.mxu0 0.0
        %1465 = vmatpush1.msra.mxu0 0.0
        %1466 = vmatprep.subr.mxu0 0.0
        %1467 = vmatpush1.msra.mxu0 0.0
        %1468 = vmatprep.subr.mxu0 0.0
        %1469 = vmatpush1.msra.mxu0 0.0
        %1470 = vmatprep.mubr.f32.mxu0 0.0
        %1471 = vmatmul.mubr.f32.gmra.mrb[0].mxu0 %v1401
        %v1472 = vpop.f32.mrb[0].mxu0
        %v1473 = vadd.f32 0.0, %v1472
        %v1474 = vpop.f32.mrb[0].mxu0
        %1475 = vmatprep.mubr.f32.mxu0 0.0
        %1476 = vmatmul.mubr.f32.gmra.mrb[0].mxu0 %v1404
        %v1477 = vpop.f32.mrb[0].mxu0
        %v1478 = vadd.f32 0.0, %v1477
        %v1479 = vpop.f32.mrb[0].mxu0
        %1480 = vdwg.mxu0
        %1481 = vrot.lane.b32.xlu0 %v754, 80
        %v1482 = vpop.permute.xlu0 %1481
        %1483 = vrot.lane.b32.xlu0 %v759, 80
        %v1484 = vpop.permute.xlu0 %1483
        %1485 = vrot.lane.b32.xlu0 %v754, 16
        %v1486 = vpop.permute.xlu0 %1485
        %1487 = vrot.lane.b32.xlu0 %v759, 16
        %v1488 = vpop.permute.xlu0 %1487
        %v1489 = vsel %vm860, %v1482, 0
        %v1491 = vsel %vm860, %v1484, 0
        %v1493 = vsel %vm860, %v1486, 0
        %v1495 = vsel %vm860, %v1488, 0
        %1497 = vmatprep.subr.mxu0 0.0
        %1498 = vmatpush1.xpose.msra.mxu0 %v1493
        %1499 = vmatprep.subr.mxu0 0.0
        %1500 = vmatpush1.xpose.msra.mxu0 %v1495
        %1501 = vmatprep.subr.mxu0 0.0
        %1502 = vmatpush1.xpose.msra.mxu0 0.0
        %1503 = vmatprep.subr.mxu0 0.0
        %1504 = vmatpush1.xpose.msra.mxu0 0.0
        %1505 = vmatprep.subr.mxu0 0.0
        %1506 = vmatpush1.xpose.msra.mxu0 0.0
        %1507 = vmatprep.subr.mxu0 0.0
        %1508 = vmatpush1.xpose.msra.mxu0 0.0
        %1509 = vmatprep.subr.mxu0 0.0
        %1510 = vmatpush1.xpose.msra.mxu0 0.0
        %1511 = vmatprep.subr.mxu0 0.0
        %1512 = vmatpush1.xpose.msra.mxu0 0.0
        %1513 = vmatprep.subr.mxu0 0.0
        %1514 = vmatpush1.xpose.msra.mxu0 0.0
        %1515 = vmatprep.subr.mxu0 0.0
        %1516 = vmatpush1.xpose.msra.mxu0 0.0
        %1517 = vmatprep.subr.mxu0 0.0
        %1518 = vmatpush1.xpose.msra.mxu0 0.0
        %1519 = vmatprep.subr.mxu0 0.0
        %1520 = vmatpush1.xpose.msra.mxu0 0.0
        %1521 = vmatprep.subr.mxu0 0.0
        %1522 = vmatpush1.xpose.msra.mxu0 0.0
        %1523 = vmatprep.subr.mxu0 0.0
        %1524 = vmatpush1.xpose.msra.mxu0 0.0
        %1525 = vmatprep.subr.mxu0 0.0
        %1526 = vmatpush1.xpose.msra.mxu0 0.0
        %1527 = vmatprep.subr.mxu0 0.0
        %1528 = vmatpush1.xpose.msra.mxu0 0.0
        %1529 = vmatprep.subr.mxu0 0.0
        %1530 = vmatpush1.xpose.msra.mxu0 0.0
        %1531 = vmatprep.subr.mxu0 0.0
        %1532 = vmatpush1.xpose.msra.mxu0 0.0
        %1533 = vmatprep.subr.mxu0 0.0
        %1534 = vmatpush1.xpose.msra.mxu0 0.0
        %1535 = vmatprep.subr.mxu0 0.0
        %1536 = vmatpush1.xpose.msra.mxu0 0.0
        %1537 = vmatprep.subr.mxu0 0.0
        %1538 = vmatpush1.xpose.msra.mxu0 0.0
        %1539 = vmatprep.subr.mxu0 0.0
        %1540 = vmatpush1.xpose.msra.mxu0 0.0
        %1541 = vmatprep.subr.mxu0 0.0
        %1542 = vmatpush1.xpose.msra.mxu0 0.0
        %1543 = vmatprep.subr.mxu0 0.0
        %1544 = vmatpush1.xpose.msra.mxu0 0.0
        %1545 = vmatprep.subr.mxu0 0.0
        %1546 = vmatpush1.xpose.msra.mxu0 0.0
        %1547 = vmatprep.subr.mxu0 0.0
        %1548 = vmatpush1.xpose.msra.mxu0 0.0
        %1549 = vmatprep.subr.mxu0 0.0
        %1550 = vmatpush1.xpose.msra.mxu0 0.0
        %1551 = vmatprep.subr.mxu0 0.0
        %1552 = vmatpush1.xpose.msra.mxu0 0.0
        %1553 = vmatprep.subr.mxu0 0.0
        %1554 = vmatpush1.xpose.msra.mxu0 0.0
        %1555 = vmatprep.subr.mxu0 0.0
        %1556 = vmatpush1.xpose.msra.mxu0 0.0
        %1557 = vmatprep.subr.mxu0 0.0
        %1558 = vmatpush1.xpose.msra.mxu0 0.0
        %1559 = vmatprep.subr.mxu0 0.0
        %1560 = vmatpush1.xpose.msra.mxu0 0.0
        %1561 = vmatprep.mubr.f32.mxu0 0.0
        %1562 = vmatmul.mubr.f32.gmra.mrb[0].mxu0 %v1489
        %v1563 = vpop.f32.mrb[0].mxu0
        %v1564 = vadd.f32 0.0, %v1563
        %v1565 = vpop.f32.mrb[0].mxu0
        %1566 = vmatprep.mubr.f32.mxu0 0.0
        %1567 = vmatmul.mubr.f32.gmra.mrb[0].mxu0 %v1491
        %v1568 = vpop.f32.mrb[0].mxu0
        %v1569 = vadd.f32 0.0, %v1568
        %v1570 = vpop.f32.mrb[0].mxu0
        %1571 = vdwg.mxu0
        %v1572 = vmul.f32 %v1564, 0.25
        %v1573 = vmul.f32 %v1569, 0.25
        %v1574 = vadd.f32 %v1572, %v950
        %v1575 = vadd.f32 %v1573, %v950
        %s1576 = scalar_lea.vmem %s2, 48
        %v1577 = vld [vmem:[%s1576] sm:$0xff]
        %v1578 = vld [vmem:[%s1576 + $0x8] sm:$0xff]
        %v1579 = vadd.f32 %v1574, %v1577
        %v1580 = vadd.f32 %v1575, %v1578
        %v1581 = vsel %vm860, %v1579, -inf
        %1582 = vmax.xlane.f32.xlu0 %v1581
        %v1583 = vpop.xlane.xlu0 %1582
        %v1584 = vsel %vm860, %v1580, -inf
        %1585 = vmax.xlane.f32.xlu0 %v1584
        %v1586 = vpop.xlane.xlu0 %1585
        %v1587 = vsub.f32 %v1579, %v1583
        %v1588 = vsub.f32 %v1580, %v1586
        %v1589 = vmul.f32 %v1587, 1.442695
        %v1590 = vpow.pop %v1589
        %v1591 = vmul.f32 %v1588, 1.442695
        %v1592 = vpow.pop %v1591
        %v1593 = vsel %vm860, %v1590, 0.0
        %1594 = vadd.xlane.f32.xlu0 %v1593
        %v1595 = vpop.xlane.xlu0 %1594
        %v1596 = vsel %vm860, %v1592, 0.0
        %1597 = vadd.xlane.f32.xlu0 %v1596
        %v1598 = vpop.xlane.xlu0 %1597
        %v1599 = vrcp.pop %v1595
        %v1600 = vmul.f32 %v1590, %v1599
        %v1601 = vrcp.pop %v1598
        %v1602 = vmul.f32 %v1592, %v1601
        %1603 = vrot.lane.b32.xlu0 %v846, 80
        %v1604 = vpop.permute.xlu0 %1603
        %1605 = vrot.lane.b32.xlu0 %v851, 80
        %v1606 = vpop.permute.xlu0 %1605
        %v1610 = vsel %vm860, %v1600, 0
        %v1613 = vsel %vm860, %v1602, 0
        %1615 = vmatprep.subr.mxu0 0.0
        %1616 = vmatpush1.msra.mxu0 %v1604
        %1617 = vmatprep.subr.mxu0 0.0
        %1618 = vmatpush1.msra.mxu0 %v1606
        %1619 = vmatprep.subr.mxu0 0.0
        %1620 = vmatpush1.msra.mxu0 0.0
        %1621 = vmatprep.subr.mxu0 0.0
        %1622 = vmatpush1.msra.mxu0 0.0
        %1623 = vmatprep.subr.mxu0 0.0
        %1624 = vmatpush1.msra.mxu0 0.0
        %1625 = vmatprep.subr.mxu0 0.0
        %1626 = vmatpush1.msra.mxu0 0.0
        %1627 = vmatprep.subr.mxu0 0.0
        %1628 = vmatpush1.msra.mxu0 0.0
        %1629 = vmatprep.subr.mxu0 0.0
        %1630 = vmatpush1.msra.mxu0 0.0
        %1631 = vmatprep.subr.mxu0 0.0
        %1632 = vmatpush1.msra.mxu0 0.0
        %1633 = vmatprep.subr.mxu0 0.0
        %1634 = vmatpush1.msra.mxu0 0.0
        %1635 = vmatprep.subr.mxu0 0.0
        %1636 = vmatpush1.msra.mxu0 0.0
        %1637 = vmatprep.subr.mxu0 0.0
        %1638 = vmatpush1.msra.mxu0 0.0
        %1639 = vmatprep.subr.mxu0 0.0
        %1640 = vmatpush1.msra.mxu0 0.0
        %1641 = vmatprep.subr.mxu0 0.0
        %1642 = vmatpush1.msra.mxu0 0.0
        %1643 = vmatprep.subr.mxu0 0.0
        %1644 = vmatpush1.msra.mxu0 0.0
        %1645 = vmatprep.subr.mxu0 0.0
        %1646 = vmatpush1.msra.mxu0 0.0
        %1647 = vmatprep.subr.mxu0 0.0
        %1648 = vmatpush1.msra.mxu0 0.0
        %1649 = vmatprep.subr.mxu0 0.0
        %1650 = vmatpush1.msra.mxu0 0.0
        %1651 = vmatprep.subr.mxu0 0.0
        %1652 = vmatpush1.msra.mxu0 0.0
        %1653 = vmatprep.subr.mxu0 0.0
        %1654 = vmatpush1.msra.mxu0 0.0
        %1655 = vmatprep.subr.mxu0 0.0
        %1656 = vmatpush1.msra.mxu0 0.0
        %1657 = vmatprep.subr.mxu0 0.0
        %1658 = vmatpush1.msra.mxu0 0.0
        %1659 = vmatprep.subr.mxu0 0.0
        %1660 = vmatpush1.msra.mxu0 0.0
        %1661 = vmatprep.subr.mxu0 0.0
        %1662 = vmatpush1.msra.mxu0 0.0
        %1663 = vmatprep.subr.mxu0 0.0
        %1664 = vmatpush1.msra.mxu0 0.0
        %1665 = vmatprep.subr.mxu0 0.0
        %1666 = vmatpush1.msra.mxu0 0.0
        %1667 = vmatprep.subr.mxu0 0.0
        %1668 = vmatpush1.msra.mxu0 0.0
        %1669 = vmatprep.subr.mxu0 0.0
        %1670 = vmatpush1.msra.mxu0 0.0
        %1671 = vmatprep.subr.mxu0 0.0
        %1672 = vmatpush1.msra.mxu0 0.0
        %1673 = vmatprep.subr.mxu0 0.0
        %1674 = vmatpush1.msra.mxu0 0.0
        %1675 = vmatprep.subr.mxu0 0.0
        %1676 = vmatpush1.msra.mxu0 0.0
        %1677 = vmatprep.subr.mxu0 0.0
        %1678 = vmatpush1.msra.mxu0 0.0
        %1679 = vmatprep.mubr.f32.mxu0 0.0
        %1680 = vmatmul.mubr.f32.gmra.mrb[0].mxu0 %v1610
        %v1681 = vpop.f32.mrb[0].mxu0
        %v1682 = vadd.f32 0.0, %v1681
        %v1683 = vpop.f32.mrb[0].mxu0
        %1684 = vmatprep.mubr.f32.mxu0 0.0
        %1685 = vmatmul.mubr.f32.gmra.mrb[0].mxu0 %v1613
        %v1686 = vpop.f32.mrb[0].mxu0
        %v1687 = vadd.f32 0.0, %v1686
        %v1688 = vpop.f32.mrb[0].mxu0
        %1689 = vdwg.mxu0
        %1692 = vrot.lane.b32.xlu0 %v1264, 16
        %v1693 = vpop.permute.xlu0 %1692
        %1694 = vrot.lane.b32.xlu0 %v1269, 16
        %v1695 = vpop.permute.xlu0 %1694
        %1700 = vrot.lane.b32.xlu0 %v1473, 32
        %v1701 = vpop.permute.xlu0 %1700
        %1702 = vrot.lane.b32.xlu0 %v1478, 32
        %v1703 = vpop.permute.xlu0 %1702
        %1708 = vrot.lane.b32.xlu0 %v1682, 48
        %v1709 = vpop.permute.xlu0 %1708
        %1710 = vrot.lane.b32.xlu0 %v1687, 48
        %v1711 = vpop.permute.xlu0 %1710
        %v1714 = vsel %vm860, %v1053, %v1693
        %v1715 = vsel %vm860, %v1058, %v1695
        %v1716 = vsel %vm680, %v1714, %v1701
        %v1717 = vsel %vm680, %v1715, %v1703
        %vm1718 = vcmask 392192
        %v1719 = vsel %vm1718, %v1716, %v1709
        %v1720 = vsel %vm1718, %v1717, %v1711
        %v1721 = vld [vmem:[%s8] sm:$0xff]
        %v1722 = vld [vmem:[%s8 + $0x8] sm:$0xff]
        %v1723 = vld [vmem:[%s8 + $0x10] sm:$0xff]
        %v1724 = vld [vmem:[%s8 + $0x18] sm:$0xff]
        %v1725 = vld [vmem:[%s8 + $0x20] sm:$0xff]
        %v1726 = vld [vmem:[%s8 + $0x28] sm:$0xff]
        %v1727 = vld [vmem:[%s8 + $0x30] sm:$0xff]
        %v1728 = vld [vmem:[%s8 + $0x38] sm:$0xff]
        %v1729 = vld [vmem:[%s9] sm:$0x1]
        %v1731 = vlaneseq
        %v1732 = vshrl.u32 %v1731, 7
        %v1733 = vsub.s32 0, %v1732
        %v1734 = vrot.slane %v1729, %v1733
        %vm1736 = vcmask 523264
        %v1738 = vsel %vm1736, %v1719, 0
        %v1741 = vsel %vm1736, %v1720, 0
        %1743 = vmatprep.subr.mxu0 0.0
        %1744 = vmatpush1.msra.mxu0 %v1721
        %1745 = vmatprep.subr.mxu0 0.0
        %1746 = vmatpush1.msra.mxu0 %v1722
        %1747 = vmatprep.subr.mxu0 0.0
        %1748 = vmatpush1.msra.mxu0 %v1723
        %1749 = vmatprep.subr.mxu0 0.0
        %1750 = vmatpush1.msra.mxu0 %v1724
        %1751 = vmatprep.subr.mxu0 0.0
        %1752 = vmatpush1.msra.mxu0 %v1725
        %1753 = vmatprep.subr.mxu0 0.0
        %1754 = vmatpush1.msra.mxu0 %v1726
        %1755 = vmatprep.subr.mxu0 0.0
        %1756 = vmatpush1.msra.mxu0 %v1727
        %1757 = vmatprep.subr.mxu0 0.0
        %1758 = vmatpush1.msra.mxu0 %v1728
        %1759 = vmatprep.subr.mxu0 0.0
        %1760 = vmatpush1.msra.mxu0 0.0
        %1761 = vmatprep.subr.mxu0 0.0
        %1762 = vmatpush1.msra.mxu0 0.0
        %1763 = vmatprep.subr.mxu0 0.0
        %1764 = vmatpush1.msra.mxu0 0.0
        %1765 = vmatprep.subr.mxu0 0.0
        %1766 = vmatpush1.msra.mxu0 0.0
        %1767 = vmatprep.subr.mxu0 0.0
        %1768 = vmatpush1.msra.mxu0 0.0
        %1769 = vmatprep.subr.mxu0 0.0
        %1770 = vmatpush1.msra.mxu0 0.0
        %1771 = vmatprep.subr.mxu0 0.0
        %1772 = vmatpush1.msra.mxu0 0.0
        %1773 = vmatprep.subr.mxu0 0.0
        %1774 = vmatpush1.msra.mxu0 0.0
        %1775 = vmatprep.subr.mxu0 0.0
        %1776 = vmatpush1.msra.mxu0 0.0
        %1777 = vmatprep.subr.mxu0 0.0
        %1778 = vmatpush1.msra.mxu0 0.0
        %1779 = vmatprep.subr.mxu0 0.0
        %1780 = vmatpush1.msra.mxu0 0.0
        %1781 = vmatprep.subr.mxu0 0.0
        %1782 = vmatpush1.msra.mxu0 0.0
        %1783 = vmatprep.subr.mxu0 0.0
        %1784 = vmatpush1.msra.mxu0 0.0
        %1785 = vmatprep.subr.mxu0 0.0
        %1786 = vmatpush1.msra.mxu0 0.0
        %1787 = vmatprep.subr.mxu0 0.0
        %1788 = vmatpush1.msra.mxu0 0.0
        %1789 = vmatprep.subr.mxu0 0.0
        %1790 = vmatpush1.msra.mxu0 0.0
        %1791 = vmatprep.subr.mxu0 0.0
        %1792 = vmatpush1.msra.mxu0 0.0
        %1793 = vmatprep.subr.mxu0 0.0
        %1794 = vmatpush1.msra.mxu0 0.0
        %1795 = vmatprep.subr.mxu0 0.0
        %1796 = vmatpush1.msra.mxu0 0.0
        %1797 = vmatprep.subr.mxu0 0.0
        %1798 = vmatpush1.msra.mxu0 0.0
        %1799 = vmatprep.subr.mxu0 0.0
        %1800 = vmatpush1.msra.mxu0 0.0
        %1801 = vmatprep.subr.mxu0 0.0
        %1802 = vmatpush1.msra.mxu0 0.0
        %1803 = vmatprep.subr.mxu0 0.0
        %1804 = vmatpush1.msra.mxu0 0.0
        %1805 = vmatprep.subr.mxu0 0.0
        %1806 = vmatpush1.msra.mxu0 0.0
        %1807 = vmatprep.mubr.f32.mxu0 0.0
        %1808 = vmatmul.mubr.f32.gmra.mrb[0].mxu0 %v1738
        %v1809 = vpop.f32.mrb[0].mxu0
        %v1810 = vadd.f32 %v1734, %v1809
        %v1811 = vpop.f32.mrb[0].mxu0
        %1812 = vmatprep.mubr.f32.mxu0 0.0
        %1813 = vmatmul.mubr.f32.gmra.mrb[0].mxu0 %v1741
        %v1814 = vpop.f32.mrb[0].mxu0
        %v1815 = vadd.f32 %v1734, %v1814
        %v1816 = vpop.f32.mrb[0].mxu0
        %1817 = vdwg.mxu0
        %v1818 = vadd.f32 %v1810, %v666
        %v1819 = vadd.f32 %v1815, %v667
        %v1820 = vld [vmem:[%s10] sm:$0x1]
        %v1821 = vld [vmem:[%s11] sm:$0x1]
        %v1822 = vsel %vm680, %v1818, 0.0
        %1823 = vadd.xlane.f32.xlu0 %v1822
        %v1824 = vpop.xlane.xlu0 %1823
        %v1825 = vsel %vm680, %v1819, 0.0
        %1826 = vadd.xlane.f32.xlu0 %v1825
        %v1827 = vpop.xlane.xlu0 %1826
        %v1828 = vrcp.pop 32.0
        %v1829 = vmul.f32 %v1824, %v1828
        %v1830 = vmul.f32 %v1827, %v1828
        %v1831 = vsub.f32 %v1818, %v1829
        %v1832 = vsub.f32 %v1819, %v1830
        %v1833 = vmul.f32 %v1831, %v1831
        %v1834 = vmul.f32 %v1832, %v1832
        %v1835 = vsel %vm680, %v1833, 0.0
        %1836 = vadd.xlane.f32.xlu0 %v1835
        %v1837 = vpop.xlane.xlu0 %1836
        %v1838 = vsel %vm680, %v1834, 0.0
        %1839 = vadd.xlane.f32.xlu0 %v1838
        %v1840 = vpop.xlane.xlu0 %1839
        %v1841 = vmul.f32 %v1837, %v1828
        %v1842 = vmul.f32 %v1840, %v1828
        %v1843 = vadd.f32 %v1841, 1e-05
        %v1844 = vadd.f32 %v1842, 1e-05
        %v1845 = vrsqrt.pop %v1843
        %v1846 = vrsqrt.pop %v1844
        %v1847 = vmul.f32 %v1831, %v1845
        %v1848 = vmul.f32 %v1832, %v1846
        %v1850 = vlaneseq
        %v1851 = vshrl.u32 %v1850, 7
        %v1852 = vsub.s32 0, %v1851
        %v1853 = vrot.slane %v1820, %v1852
        %v1855 = vmul.f32 %v1847, %v1853
        %v1856 = vmul.f32 %v1848, %v1853
        %v1858 = vlaneseq
        %v1859 = vshrl.u32 %v1858, 7
        %v1860 = vsub.s32 0, %v1859
        %v1861 = vrot.slane %v1821, %v1860
        %v1863 = vadd.f32 %v1855, %v1861
        %v1864 = vadd.f32 %v1856, %v1861
        %v1865 = vadd.f32 %v1863, %v662
        %v1866 = vadd.f32 %v1864, %v663
        %v1867 = vld [vmem:[%s12] sm:$0x1]
        %v1868 = vld [vmem:[%s13] sm:$0x1]
        %v1869 = vsel %vm680, %v1865, 0.0
        %1870 = vadd.xlane.f32.xlu0 %v1869
        %v1871 = vpop.xlane.xlu0 %1870
        %v1872 = vsel %vm680, %v1866, 0.0
        %1873 = vadd.xlane.f32.xlu0 %v1872
        %v1874 = vpop.xlane.xlu0 %1873
        %v1875 = vmul.f32 %v1871, %v1828
        %v1876 = vmul.f32 %v1874, %v1828
        %v1877 = vsub.f32 %v1865, %v1875
        %v1878 = vsub.f32 %v1866, %v1876
        %v1879 = vmul.f32 %v1877, %v1877
        %v1880 = vmul.f32 %v1878, %v1878
        %v1881 = vsel %vm680, %v1879, 0.0
        %1882 = vadd.xlane.f32.xlu0 %v1881
        %v1883 = vpop.xlane.xlu0 %1882
        %v1884 = vsel %vm680, %v1880, 0.0
        %1885 = vadd.xlane.f32.xlu0 %v1884
        %v1886 = vpop.xlane.xlu0 %1885
        %v1887 = vmul.f32 %v1883, %v1828
        %v1888 = vmul.f32 %v1886, %v1828
        %v1889 = vadd.f32 %v1887, 1e-05
        %v1890 = vadd.f32 %v1888, 1e-05
        %v1891 = vrsqrt.pop %v1889
        %v1892 = vrsqrt.pop %v1890
        %v1893 = vmul.f32 %v1877, %v1891
        %v1894 = vmul.f32 %v1878, %v1892
        %v1896 = vlaneseq
        %v1897 = vshrl.u32 %v1896, 7
        %v1898 = vsub.s32 0, %v1897
        %v1899 = vrot.slane %v1867, %v1898
        %v1901 = vmul.f32 %v1893, %v1899
        %v1902 = vmul.f32 %v1894, %v1899
        %v1904 = vlaneseq
        %v1905 = vshrl.u32 %v1904, 7
        %v1906 = vsub.s32 0, %v1905
        %v1907 = vrot.slane %v1868, %v1906
        %v1909 = vadd.f32 %v1901, %v1907
        %v1910 = vadd.f32 %v1902, %v1907
        %v1911 = vld [vmem:[%s14] sm:$0xff]
        %v1912 = vld [vmem:[%s14 + $0x8] sm:$0xff]
        %v1913 = vld [vmem:[%s14 + $0x10] sm:$0xff]
        %v1914 = vld [vmem:[%s14 + $0x18] sm:$0xff]
        %v1915 = vld [vmem:[%s15] sm:$0x1]
        %v1917 = vlaneseq
        %v1918 = vshrl.u32 %v1917, 7
        %v1919 = vsub.s32 0, %v1918
        %v1920 = vrot.slane %v1915, %v1919
        %v1923 = vsel %vm680, %v1909, 0
        %v1926 = vsel %vm680, %v1910, 0
        %1928 = vmatprep.subr.mxu0 0.0
        %1929 = vmatpush1.msra.mxu0 %v1911
        %1930 = vmatprep.subr.mxu0 0.0
        %1931 = vmatpush1.msra.mxu0 %v1912
        %1932 = vmatprep.subr.mxu0 0.0
        %1933 = vmatpush1.msra.mxu0 %v1913
        %1934 = vmatprep.subr.mxu0 0.0
        %1935 = vmatpush1.msra.mxu0 %v1914
        %1936 = vmatprep.subr.mxu0 0.0
        %1937 = vmatpush1.msra.mxu0 0.0
        %1938 = vmatprep.subr.mxu0 0.0
        %1939 = vmatpush1.msra.mxu0 0.0
        %1940 = vmatprep.subr.mxu0 0.0
        %1941 = vmatpush1.msra.mxu0 0.0
        %1942 = vmatprep.subr.mxu0 0.0
        %1943 = vmatpush1.msra.mxu0 0.0
        %1944 = vmatprep.subr.mxu0 0.0
        %1945 = vmatpush1.msra.mxu0 0.0
        %1946 = vmatprep.subr.mxu0 0.0
        %1947 = vmatpush1.msra.mxu0 0.0
        %1948 = vmatprep.subr.mxu0 0.0
        %1949 = vmatpush1.msra.mxu0 0.0
        %1950 = vmatprep.subr.mxu0 0.0
        %1951 = vmatpush1.msra.mxu0 0.0
        %1952 = vmatprep.subr.mxu0 0.0
        %1953 = vmatpush1.msra.mxu0 0.0
        %1954 = vmatprep.subr.mxu0 0.0
        %1955 = vmatpush1.msra.mxu0 0.0
        %1956 = vmatprep.subr.mxu0 0.0
        %1957 = vmatpush1.msra.mxu0 0.0
        %1958 = vmatprep.subr.mxu0 0.0
        %1959 = vmatpush1.msra.mxu0 0.0
        %1960 = vmatprep.subr.mxu0 0.0
        %1961 = vmatpush1.msra.mxu0 0.0
        %1962 = vmatprep.subr.mxu0 0.0
        %1963 = vmatpush1.msra.mxu0 0.0
        %1964 = vmatprep.subr.mxu0 0.0
        %1965 = vmatpush1.msra.mxu0 0.0
        %1966 = vmatprep.subr.mxu0 0.0
        %1967 = vmatpush1.msra.mxu0 0.0
        %1968 = vmatprep.subr.mxu0 0.0
        %1969 = vmatpush1.msra.mxu0 0.0
        %1970 = vmatprep.subr.mxu0 0.0
        %1971 = vmatpush1.msra.mxu0 0.0
        %1972 = vmatprep.subr.mxu0 0.0
        %1973 = vmatpush1.msra.mxu0 0.0
        %1974 = vmatprep.subr.mxu0 0.0
        %1975 = vmatpush1.msra.mxu0 0.0
        %1976 = vmatprep.subr.mxu0 0.0
        %1977 = vmatpush1.msra.mxu0 0.0
        %1978 = vmatprep.subr.mxu0 0.0
        %1979 = vmatpush1.msra.mxu0 0.0
        %1980 = vmatprep.subr.mxu0 0.0
        %1981 = vmatpush1.msra.mxu0 0.0
        %1982 = vmatprep.subr.mxu0 0.0
        %1983 = vmatpush1.msra.mxu0 0.0
        %1984 = vmatprep.subr.mxu0 0.0
        %1985 = vmatpush1.msra.mxu0 0.0
        %1986 = vmatprep.subr.mxu0 0.0
        %1987 = vmatpush1.msra.mxu0 0.0
        %1988 = vmatprep.subr.mxu0 0.0
        %1989 = vmatpush1.msra.mxu0 0.0
        %1990 = vmatprep.subr.mxu0 0.0
        %1991 = vmatpush1.msra.mxu0 0.0
        %1992 = vmatprep.mubr.f32.mxu0 0.0
        %1993 = vmatmul.mubr.f32.gmra.mrb[0].mxu0 %v1923
        %v1994 = vpop.f32.mrb[0].mxu0
        %v1995 = vadd.f32 %v1920, %v1994
        %v1996 = vpop.f32.mrb[0].mxu0
        %1997 = vmatprep.mubr.f32.mxu0 0.0
        %1998 = vmatmul.mubr.f32.gmra.mrb[0].mxu0 %v1926
        %v1999 = vpop.f32.mrb[0].mxu0
        %v2000 = vadd.f32 %v1920, %v1999
        %v2001 = vpop.f32.mrb[0].mxu0
        %2002 = vdwg.mxu0
        %v2003 = vmax.f32 %v1995, 0.0
        %v2004 = vmax.f32 %v2000, 0.0
        %v2005 = vld [vmem:[%s16] sm:$0xff]
        %v2006 = vld [vmem:[%s16 + $0x8] sm:$0xff]
        %v2007 = vld [vmem:[%s16 + $0x10] sm:$0xff]
        %v2008 = vld [vmem:[%s16 + $0x18] sm:$0xff]
        %v2009 = vld [vmem:[%s16 + $0x20] sm:$0xff]
        %v2010 = vld [vmem:[%s16 + $0x28] sm:$0xff]
        %v2011 = vld [vmem:[%s16 + $0x30] sm:$0xff]
        %v2012 = vld [vmem:[%s16 + $0x38] sm:$0xff]
        %v2013 = vld [vmem:[%s17] sm:$0x1]
        %v2015 = vlaneseq
        %v2016 = vshrl.u32 %v2015, 7
        %v2017 = vsub.s32 0, %v2016
        %v2018 = vrot.slane %v2013, %v2017
        %v2021 = vsel %vm1736, %v2003, 0
        %v2024 = vsel %vm1736, %v2004, 0
        %2026 = vmatprep.subr.mxu0 0.0
        %2027 = vmatpush1.msra.mxu0 %v2005
        %2028 = vmatprep.subr.mxu0 0.0
        %2029 = vmatpush1.msra.mxu0 %v2006
        %2030 = vmatprep.subr.mxu0 0.0
        %2031 = vmatpush1.msra.mxu0 %v2007
        %2032 = vmatprep.subr.mxu0 0.0
        %2033 = vmatpush1.msra.mxu0 %v2008
        %2034 = vmatprep.subr.mxu0 0.0
        %2035 = vmatpush1.msra.mxu0 %v2009
        %2036 = vmatprep.subr.mxu0 0.0
        %2037 = vmatpush1.msra.mxu0 %v2010
        %2038 = vmatprep.subr.mxu0 0.0
        %2039 = vmatpush1.msra.mxu0 %v2011
        %2040 = vmatprep.subr.mxu0 0.0
        %2041 = vmatpush1.msra.mxu0 %v2012
        %2042 = vmatprep.subr.mxu0 0.0
        %2043 = vmatpush1.msra.mxu0 0.0
        %2044 = vmatprep.subr.mxu0 0.0
        %2045 = vmatpush1.msra.mxu0 0.0
        %2046 = vmatprep.subr.mxu0 0.0
        %2047 = vmatpush1.msra.mxu0 0.0
        %2048 = vmatprep.subr.mxu0 0.0
        %2049 = vmatpush1.msra.mxu0 0.0
        %2050 = vmatprep.subr.mxu0 0.0
        %2051 = vmatpush1.msra.mxu0 0.0
        %2052 = vmatprep.subr.mxu0 0.0
        %2053 = vmatpush1.msra.mxu0 0.0
        %2054 = vmatprep.subr.mxu0 0.0
        %2055 = vmatpush1.msra.mxu0 0.0
        %2056 = vmatprep.subr.mxu0 0.0
        %2057 = vmatpush1.msra.mxu0 0.0
        %2058 = vmatprep.subr.mxu0 0.0
        %2059 = vmatpush1.msra.mxu0 0.0
        %2060 = vmatprep.subr.mxu0 0.0
        %2061 = vmatpush1.msra.mxu0 0.0
        %2062 = vmatprep.subr.mxu0 0.0
        %2063 = vmatpush1.msra.mxu0 0.0
        %2064 = vmatprep.subr.mxu0 0.0
        %2065 = vmatpush1.msra.mxu0 0.0
        %2066 = vmatprep.subr.mxu0 0.0
        %2067 = vmatpush1.msra.mxu0 0.0
        %2068 = vmatprep.subr.mxu0 0.0
        %2069 = vmatpush1.msra.mxu0 0.0
        %2070 = vmatprep.subr.mxu0 0.0
        %2071 = vmatpush1.msra.mxu0 0.0
        %2072 = vmatprep.subr.mxu0 0.0
        %2073 = vmatpush1.msra.mxu0 0.0
        %2074 = vmatprep.subr.mxu0 0.0
        %2075 = vmatpush1.msra.mxu0 0.0
        %2076 = vmatprep.subr.mxu0 0.0
        %2077 = vmatpush1.msra.mxu0 0.0
        %2078 = vmatprep.subr.mxu0 0.0
        %2079 = vmatpush1.msra.mxu0 0.0
        %2080 = vmatprep.subr.mxu0 0.0
        %2081 = vmatpush1.msra.mxu0 0.0
        %2082 = vmatprep.subr.mxu0 0.0
        %2083 = vmatpush1.msra.mxu0 0.0
        %2084 = vmatprep.subr.mxu0 0.0
        %2085 = vmatpush1.msra.mxu0 0.0
        %2086 = vmatprep.subr.mxu0 0.0
        %2087 = vmatpush1.msra.mxu0 0.0
        %2088 = vmatprep.subr.mxu0 0.0
        %2089 = vmatpush1.msra.mxu0 0.0
        %2090 = vmatprep.mubr.f32.mxu0 0.0
        %2091 = vmatmul.mubr.f32.gmra.mrb[0].mxu0 %v2021
        %v2092 = vpop.f32.mrb[0].mxu0
        %v2093 = vadd.f32 %v2018, %v2092
        %v2094 = vpop.f32.mrb[0].mxu0
        %2095 = vmatprep.mubr.f32.mxu0 0.0
        %2096 = vmatmul.mubr.f32.gmra.mrb[0].mxu0 %v2024
        %v2097 = vpop.f32.mrb[0].mxu0
        %v2098 = vadd.f32 %v2018, %v2097
        %v2099 = vpop.f32.mrb[0].mxu0
        %2100 = vdwg.mxu0
        %v2101 = vadd.f32 %v2093, %v1909
        %v2102 = vadd.f32 %v2098, %v1910
        %v2103 = vld [vmem:[%s18] sm:$0x1]
        %v2104 = vld [vmem:[%s19] sm:$0x1]
        %v2105 = vsel %vm680, %v2101, 0.0
        %2106 = vadd.xlane.f32.xlu0 %v2105
        %v2107 = vpop.xlane.xlu0 %2106
        %v2108 = vsel %vm680, %v2102, 0.0
        %2109 = vadd.xlane.f32.xlu0 %v2108
        %v2110 = vpop.xlane.xlu0 %2109
        %v2111 = vmul.f32 %v2107, %v1828
        %v2112 = vmul.f32 %v2110, %v1828
        %v2113 = vsub.f32 %v2101, %v2111
        %v2114 = vsub.f32 %v2102, %v2112
        %v2115 = vmul.f32 %v2113, %v2113
        %v2116 = vmul.f32 %v2114, %v2114
        %v2117 = vsel %vm680, %v2115, 0.0
        %2118 = vadd.xlane.f32.xlu0 %v2117
        %v2119 = vpop.xlane.xlu0 %2118
        %v2120 = vsel %vm680, %v2116, 0.0
        %2121 = vadd.xlane.f32.xlu0 %v2120
        %v2122 = vpop.xlane.xlu0 %2121
        %v2123 = vmul.f32 %v2119, %v1828
        %v2124 = vmul.f32 %v2122, %v1828
        %v2125 = vadd.f32 %v2123, 1e-05
        %v2126 = vadd.f32 %v2124, 1e-05
        %v2127 = vrsqrt.pop %v2125
        %v2128 = vrsqrt.pop %v2126
        %v2129 = vmul.f32 %v2113, %v2127
        %v2130 = vmul.f32 %v2114, %v2128
        %v2132 = vlaneseq
        %v2133 = vshrl.u32 %v2132, 7
        %v2134 = vsub.s32 0, %v2133
        %v2135 = vrot.slane %v2103, %v2134
        %v2137 = vmul.f32 %v2129, %v2135
        %v2138 = vmul.f32 %v2130, %v2135
        %v2140 = vlaneseq
        %v2141 = vshrl.u32 %v2140, 7
        %v2142 = vsub.s32 0, %v2141
        %v2143 = vrot.slane %v2104, %v2142
        %v2145 = vadd.f32 %v2137, %v2143
        %v2146 = vadd.f32 %v2138, %v2143
        %2147 = vst.msk [vmem:[%s648] sm:$0xff] %vm680, %v2145
        %2148 = vst.msk [vmem:[%s648 + $0x8] sm:$0xff] %vm680, %v2146
        %s2149 = sand.u32 %s477, 1
        %s2150 = scalar_lea.sflag [#allocation3], %s2149
        %s2151 = sand.u32 %s477, 1
        %s2152 = smul.addr %s2151, 16
        %s2153 = scalar_lea.vmem [#allocation2], %s2152
        // Predicated region
        $region101: #{forward_pallas.7} parent=99 // pred_check
          %p2154 = pneg %p487
        $region102: #{forward_pallas.7} parent=99 // pred_check_branch
          %2156 = sbr.rel (%p2154) target = $region104
        $region103: #{forward_pallas.7} parent=99 // pred_region
          %s2158 = ssub.s32 256, 256
          %2159 = vsyncadd %s2150, %s2158
          %s2160 = smul.addr %s34, 2
          %s2161 = smul.addr %s2160, 128
          %s2162 = scalar_lea.hbm %s20, %s2161
          %s2163 = sshll.u32 %s2153, 4
          %s2164 = int_to_ptr.vmem [resolvable:$true] %s2163
          %2169 = dma.vmem_to_hbm [thread:$0]  %s2164, 256, %s2162, %s2150, 128, 128, 8
        $region104: #{forward_pallas.7} parent=99 // pred_fallthru
          _
      $region100: #{forward_pallas.7} parent=5 // pred_fallthru
        _
      %p2170 = scmp.le.s32.totalorder 2, %s29
      // Predicated region
      $region105: #{forward_pallas.7} parent=5 // pred_check
        %p2171 = pneg %p2170
      $region106: #{forward_pallas.7} parent=5 // pred_check_branch
        %2173 = sbr.rel (%p2171) target = $region108
      $region107: #{forward_pallas.7} parent=5 // pred_region
        %s2174 = ssub.s32 %s29, 2
        // Predicated region
        $region109: #{forward_pallas.7} parent=107 // pred_check
          %p2175 = pneg %p493
        $region110: #{forward_pallas.7} parent=107 // pred_check_branch
          %2177 = sbr.rel (%p2175) target = $region112
        $region111: #{forward_pallas.7} parent=107 // pred_region
          %s2178 = sand.u32 %s478, 1
          %s2179 = scalar_lea.sflag [#allocation3], %s2178
          %s2180 = sand.u32 %s478, 1
          %s2181 = smul.addr %s2180, 16
          %s2182 = scalar_lea.vmem [#allocation2], %s2181
          %2183 = dma.done %s2179, 256
        $region112: #{forward_pallas.7} parent=107 // pred_fallthru
          _
      $region108: #{forward_pallas.7} parent=5 // pred_fallthru
        _
    $region6: #{forward_pallas.7} parent=1 // loop_footer
      %s33 = sadd.s32 1, %s29
    $region7: #{forward_pallas.7} parent=1 // loop_footer_branch
      %28 = sbr.rel target = $region3
    $region8: #{forward_pallas.7} parent=1 // loop_exit
      _
    %2184 = vsyncpa [#allocation3], 1
    %s2185 = scalar_lea.sflag [#allocation3], 1
    %2186 = vsyncpa %s2185, 1

</llo_original>
